<compile_context>
chip_gen: v7x
topology: tpu7x:2x2x1
jax: 0.10.0
libtpu: 0.0.40
codegen_flags: <defaults>
</compile_context>

<pallas_src>
import jax
import jax.numpy as jnp
from jax import lax
from jax.experimental import pallas as pl
from jax.experimental.pallas import tpu as pltpu


# ------------------------------ Pallas kernel --------------------------------

def _projnet_fused_kernel(x_ref, w_ref, b_ref, out_ref, xpad_ref):
    """Whole ProjnetM forward for one batch element, fully in VMEM.

    x_ref   : (1, H, W, C)        activation block (NHWC, one batch element)
    w_ref   : (T, 2, 9*C, C)      all conv weights, tap-major rows, VMEM-resident
    b_ref   : (T, 2, 1, C)        all biases (always f32)
    out_ref : (1, H, W, C)
    xpad_ref: (H+2, W+2, C) f32   scratch holding the halo-padded conv input
    """
    _, H, W, C = out_ref.shape
    T = w_ref.shape[0]
    mxu_dtype = w_ref.dtype   # f32 everywhere, or bf16 operands on v6e/v7x

    # Zero once: establishes the zero halo; the interior is overwritten before
    # every conv, so no jnp.pad / extra HBM pass is ever needed.
    xpad_ref[...] = jnp.zeros_like(xpad_ref)

    def conv3x3(w, b):
        # Single wide-K matmul: concat the 9 shifted taps along channels and
        # do (H*W, 9C) @ (9C, C) with f32 accumulation.
        cols = [
            xpad_ref[ky:ky + H, kx:kx + W, :].reshape(H * W, C)
            for ky in range(3) for kx in range(3)
        ]
        xcat = jnp.concatenate(cols, axis=-1).astype(mxu_dtype)
        return jnp.dot(xcat, w, preferred_element_type=jnp.float32) + b

    cur = x_ref[0].astype(jnp.float32)                      # (H, W, C)
    for t in range(T):                                      # T is static
        # conv1 -> ReLU
        xpad_ref[1:H + 1, 1:W + 1, :] = cur
        h = jnp.maximum(conv3x3(w_ref[t, 0], b_ref[t, 0]), 0.0)
        # conv2 -> + residual (residual add stays f32)
        xpad_ref[1:H + 1, 1:W + 1, :] = h.reshape(H, W, C)
        cur = cur + conv3x3(w_ref[t, 1], b_ref[t, 1]).reshape(H, W, C)

    out_ref[0] = cur.astype(out_ref.dtype)
    # TODO(synk): for large H*W, add a second grid axis tiling H rows with a
    # 2*T-row halo so a batch element need not fit VMEM whole; for C << 128 a
    # lane-dense (W*C-last) VPU channel-mix formulation would beat the MXU.


# ------------------------------ JAX wrappers ---------------------------------

def _torch_weight_to_taps(w_oihw):
    """(Cout, Cin, 3, 3) -> (9*Cin, Cout), rows ordered (ky, kx, cin)."""
    c_out, c_in, kh, kw = w_oihw.shape
    return jnp.transpose(w_oihw, (2, 3, 1, 0)).reshape(kh * kw * c_in, c_out)


def pack_params(params, mxu_dtype=jnp.float32):
    """Pack all T blocks' params ONCE (outside the forward) into two stacks.

    Returns:
      w_stack: (T, 2, 9*C, C) in mxu_dtype (bf16 halves weight traffic and
               doubles MXU rate on v6e/v7x).
      b_stack: (T, 2, 1, C) f32 (bias / residual path stays f32).
    """
    w_stack = jnp.stack([
        jnp.stack([_torch_weight_to_taps(w1), _torch_weight_to_taps(w2)])
        for (w1, _b1, w2, _b2) in params
    ]).astype(mxu_dtype)
    b_stack = jnp.stack([
        jnp.stack([b1.reshape(1, -1), b2.reshape(1, -1)])
        for (_w1, b1, _w2, b2) in params
    ]).astype(jnp.float32)
    return w_stack, b_stack


@jax.jit
def projnet_m_forward(x_nchw, w_stack, b_stack):
    """Forward pass equivalent to ProjnetM.forward.  x_nchw: (N, C, H, W)."""
    N, C, H, W = x_nchw.shape
    T = w_stack.shape[0]
    x = jnp.transpose(x_nchw, (0, 2, 3, 1))                 # NCHW -> NHWC
    # TODO(synk): accept NHWC at the API to drop these two boundary transposes.

    y = pl.pallas_call(
        _projnet_fused_kernel,
        out_shape=jax.ShapeDtypeStruct((N, H, W, C), x.dtype),
        grid_spec=pltpu.PrefetchScalarGridSpec(
            num_scalar_prefetch=0,
            grid=(N,),
            in_specs=[
                pl.BlockSpec((1, H, W, C), lambda n: (n, 0, 0, 0)),
                # Constant index_map -> weights/biases DMA'd once, VMEM-resident
                # across the whole grid.
                pl.BlockSpec((T, 2, 9 * C, C), lambda n: (0, 0, 0, 0)),
                pl.BlockSpec((T, 2, 1, C), lambda n: (0, 0, 0, 0)),
            ],
            out_specs=pl.BlockSpec((1, H, W, C), lambda n: (n, 0, 0, 0)),
            scratch_shapes=[pltpu.VMEM((H + 2, W + 2, C), jnp.float32)],
        ),
        compiler_params=pltpu.CompilerParams(
            # Batch axis is embarrassingly parallel -> both TensorCores on v7x.
            dimension_semantics=("parallel",),
            # Explicit scoped-VMEM budget (v5e default is only 16 MiB).
            vmem_limit_bytes=32 * 1024 * 1024,
        ),
    )(x, w_stack, b_stack)

    return jnp.transpose(y, (0, 3, 1, 2))                   # NHWC -> NCHW


# ------------------------- init + XLA reference ------------------------------

def init_projnet_params(key, channel, T):
    """Deterministic parameter init matching PyTorch Conv2d shapes."""
    params = []
    fan_in = channel * 3 * 3
    bound = 1.0 / jnp.sqrt(float(fan_in))
    for _ in range(T):
        key, k1, k2, k3, k4 = jax.random.split(key, 5)
        w1 = jax.random.uniform(k1, (channel, channel, 3, 3), jnp.float32,
                                minval=-bound, maxval=bound)
        b1 = jax.random.uniform(k2, (channel,), jnp.float32,
                                minval=-bound, maxval=bound)
        w2 = jax.random.uniform(k3, (channel, channel, 3, 3), jnp.float32,
                                minval=-bound, maxval=bound)
        b2 = jax.random.uniform(k4, (channel,), jnp.float32,
                                minval=-bound, maxval=bound)
        params.append((w1, b1, w2, b2))
    return params


def _conv3x3_ref(x_nchw, w, b):
    y = lax.conv_general_dilated(
        x_nchw, w, window_strides=(1, 1), padding=((1, 1), (1, 1)),
        dimension_numbers=("NCHW", "OIHW", "NCHW"))
    return y + b.reshape(1, -1, 1, 1)


def projnet_m_reference(x_nchw, params):
    x = x_nchw
    for (w1, b1, w2, b2) in params:
        h = jax.nn.relu(_conv3x3_ref(x, w1, b1))
        x = x + _conv3x3_ref(h, w2, b2)
    return x


# ----------------------------------- main ------------------------------------

if __name__ == "__main__":
    key = jax.random.PRNGKey(0)
    k_x, k_p = jax.random.split(key)

    N, C, H, W = 2, 4, 16, 16
    T = 2

    x = jax.random.normal(k_x, (N, C, H, W), jnp.float32)
    params = init_projnet_params(k_p, C, T)
    ref = projnet_m_reference(x, params)

    # f32 MXU-operand path (matches the XLA conv reference tightly).
    w32, b32 = pack_params(params, jnp.float32)
    out = jax.block_until_ready(projnet_m_forward(x, w32, b32))
    assert out.shape == (N, C, H, W)
    assert jnp.allclose(out, ref, rtol=1e-3, atol=1e-3), \
        "f32 mismatch vs XLA conv reference"

    # bf16 MXU-operand fast path (v6e/v7x); accumulation/bias/residual in f32.
    wbf, bbf = pack_params(params, jnp.bfloat16)
    out_bf = jax.block_until_ready(projnet_m_forward(x, wbf, bbf))
    assert jnp.allclose(out_bf, ref, rtol=5e-2, atol=5e-2), \
        "bf16 mismatch vs XLA conv reference"

    print("KERNEL_OK")
</pallas_src>

<mosaic_0001>
module attributes {stable_mosaic.version = 11 : i64} {
  func.func @_projnet_fused_kernel(%arg0: i32, %arg1: memref<1x16x16x4xf32, #tpu.memory_space<vmem>>, %arg2: memref<2x2x36x4xf32, #tpu.memory_space<vmem>>, %arg3: memref<2x2x1x4xf32, #tpu.memory_space<vmem>>, %arg4: memref<1x16x16x4xf32, #tpu.memory_space<vmem>>, %arg5: memref<18x18x4xf32, #tpu.memory_space<vmem>>) attributes {dimension_semantics = [#tpu.dimension_semantics<parallel>], iteration_bounds = array<i64: 2>, scalar_prefetch = 0 : i64, scratch_operands = 1 : i64, tpu.core_type = #tpu.core_type<tc>, window_params = [{transform_indices = @transform_0, window_bounds = array<i64: 1, 16, 16, 4>}, {pipeline_mode = #tpu.pipeline_mode<synchronous>, transform_indices = @transform_1, window_bounds = array<i64: 2, 2, 36, 4>}, {pipeline_mode = #tpu.pipeline_mode<synchronous>, transform_indices = @transform_2, window_bounds = array<i64: 2, 2, 1, 4>}, {transform_indices = @transform_3, window_bounds = array<i64: 1, 16, 16, 4>}]} {
    %cst = arith.constant 0.000000e+00 : f32
    %0 = vector.broadcast %cst : f32 to vector<18x18x4xf32>
    %c0 = arith.constant 0 : index
    %c0_0 = arith.constant 0 : index
    %c0_1 = arith.constant 0 : index
    %1 = vector.load %arg5[%c0, %c0_0, %c0_1] : memref<18x18x4xf32, #tpu.memory_space<vmem>>, vector<18x18x4xf32>
    tpu.vector_store %arg5[%c0, %c0_0, %c0_1], %0 {strides = array<i32>} : memref<18x18x4xf32, #tpu.memory_space<vmem>>, vector<18x18x4xf32>,
    %c0_2 = arith.constant 0 : index
    %c0_3 = arith.constant 0 : index
    %c0_4 = arith.constant 0 : index
    %c0_5 = arith.constant 0 : index
    %2 = vector.load %arg1[%c0_2, %c0_3, %c0_4, %c0_5] : memref<1x16x16x4xf32, #tpu.memory_space<vmem>>, vector<1x16x16x4xf32>
    %3 = vector.shape_cast %2 : vector<1x16x16x4xf32> to vector<16x16x4xf32>
    %c1 = arith.constant 1 : index
    %c1_6 = arith.constant 1 : index
    %c0_7 = arith.constant 0 : index
    %4 = vector.load %arg5[%c1, %c1_6, %c0_7] : memref<18x18x4xf32, #tpu.memory_space<vmem>>, vector<16x16x4xf32>
    tpu.vector_store %arg5[%c1, %c1_6, %c0_7], %3 {strides = array<i32>} : memref<18x18x4xf32, #tpu.memory_space<vmem>>, vector<16x16x4xf32>,
    %c0_8 = arith.constant 0 : index
    %c0_9 = arith.constant 0 : index
    %c0_10 = arith.constant 0 : index
    %c0_11 = arith.constant 0 : index
    %5 = vector.load %arg2[%c0_8, %c0_9, %c0_10, %c0_11] : memref<2x2x36x4xf32, #tpu.memory_space<vmem>>, vector<1x1x36x4xf32>
    %6 = vector.shape_cast %5 : vector<1x1x36x4xf32> to vector<36x4xf32>
    %c0_12 = arith.constant 0 : index
    %c0_13 = arith.constant 0 : index
    %c0_14 = arith.constant 0 : index
    %c0_15 = arith.constant 0 : index
    %7 = vector.load %arg3[%c0_12, %c0_13, %c0_14, %c0_15] : memref<2x2x1x4xf32, #tpu.memory_space<vmem>>, vector<1x1x1x4xf32>
    %8 = vector.shape_cast %7 : vector<1x1x1x4xf32> to vector<1x4xf32>
    %c0_16 = arith.constant 0 : index
    %c0_17 = arith.constant 0 : index
    %c0_18 = arith.constant 0 : index
    %9 = vector.load %arg5[%c0_16, %c0_17, %c0_18] : memref<18x18x4xf32, #tpu.memory_space<vmem>>, vector<16x16x4xf32>
    %10 = vector.shape_cast %9 : vector<16x16x4xf32> to vector<256x4xf32>
    %c0_19 = arith.constant 0 : index
    %c1_20 = arith.constant 1 : index
    %c0_21 = arith.constant 0 : index
    %11 = vector.load %arg5[%c0_19, %c1_20, %c0_21] : memref<18x18x4xf32, #tpu.memory_space<vmem>>, vector<16x16x4xf32>
    %12 = vector.shape_cast %11 : vector<16x16x4xf32> to vector<256x4xf32>
    %c0_22 = arith.constant 0 : index
    %c2 = arith.constant 2 : index
    %c0_23 = arith.constant 0 : index
    %13 = vector.load %arg5[%c0_22, %c2, %c0_23] : memref<18x18x4xf32, #tpu.memory_space<vmem>>, vector<16x16x4xf32>
    %14 = vector.shape_cast %13 : vector<16x16x4xf32> to vector<256x4xf32>
    %c1_24 = arith.constant 1 : index
    %c0_25 = arith.constant 0 : index
    %c0_26 = arith.constant 0 : index
    %15 = vector.load %arg5[%c1_24, %c0_25, %c0_26] : memref<18x18x4xf32, #tpu.memory_space<vmem>>, vector<16x16x4xf32>
    %16 = vector.shape_cast %15 : vector<16x16x4xf32> to vector<256x4xf32>
    %c1_27 = arith.constant 1 : index
    %c1_28 = arith.constant 1 : index
    %c0_29 = arith.constant 0 : index
    %17 = vector.load %arg5[%c1_27, %c1_28, %c0_29] : memref<18x18x4xf32, #tpu.memory_space<vmem>>, vector<16x16x4xf32>
    %18 = vector.shape_cast %17 : vector<16x16x4xf32> to vector<256x4xf32>
    %c1_30 = arith.constant 1 : index
    %c2_31 = arith.constant 2 : index
    %c0_32 = arith.constant 0 : index
    %19 = vector.load %arg5[%c1_30, %c2_31, %c0_32] : memref<18x18x4xf32, #tpu.memory_space<vmem>>, vector<16x16x4xf32>
    %20 = vector.shape_cast %19 : vector<16x16x4xf32> to vector<256x4xf32>
    %c2_33 = arith.constant 2 : index
    %c0_34 = arith.constant 0 : index
    %c0_35 = arith.constant 0 : index
    %21 = vector.load %arg5[%c2_33, %c0_34, %c0_35] : memref<18x18x4xf32, #tpu.memory_space<vmem>>, vector<16x16x4xf32>
    %22 = vector.shape_cast %21 : vector<16x16x4xf32> to vector<256x4xf32>
    %c2_36 = arith.constant 2 : index
    %c1_37 = arith.constant 1 : index
    %c0_38 = arith.constant 0 : index
    %23 = vector.load %arg5[%c2_36, %c1_37, %c0_38] : memref<18x18x4xf32, #tpu.memory_space<vmem>>, vector<16x16x4xf32>
    %24 = vector.shape_cast %23 : vector<16x16x4xf32> to vector<256x4xf32>
    %c2_39 = arith.constant 2 : index
    %c2_40 = arith.constant 2 : index
    %c0_41 = arith.constant 0 : index
    %25 = vector.load %arg5[%c2_39, %c2_40, %c0_41] : memref<18x18x4xf32, #tpu.memory_space<vmem>>, vector<16x16x4xf32>
    %26 = vector.shape_cast %25 : vector<16x16x4xf32> to vector<256x4xf32>
    %27 = tpu.concatenate %10, %12, %14, %16, %18, %20, %22, %24, %26 in 1 : vector<256x4xf32>, vector<256x4xf32>, vector<256x4xf32>, vector<256x4xf32>, vector<256x4xf32>, vector<256x4xf32>, vector<256x4xf32>, vector<256x4xf32>, vector<256x4xf32> -> vector<256x36xf32>
    %cst_42 = arith.constant dense<0.000000e+00> : vector<256x4xf32>
    %28 = tpu.matmul %27, %6, %cst_42 {dimension_numbers = #tpu.dot_dimension_numbers<[1], [0], [0], [1], [0, 0, 1, 1], [], []>} : vector<256x36xf32>, vector<36x4xf32>, vector<256x4xf32> -> vector<256x4xf32>
    %29 = vector.broadcast %8 : vector<1x4xf32> to vector<256x4xf32>
    %30 = arith.addf %28, %29 : vector<256x4xf32>
    %cst_43 = arith.constant 0.000000e+00 : f32
    %31 = vector.broadcast %cst_43 : f32 to vector<256x4xf32>
    %32 = arith.maximumf %30, %31 : vector<256x4xf32>
    %33 = vector.shape_cast %32 : vector<256x4xf32> to vector<16x16x4xf32>
    %c1_44 = arith.constant 1 : index
    %c1_45 = arith.constant 1 : index
    %c0_46 = arith.constant 0 : index
    %34 = vector.load %arg5[%c1_44, %c1_45, %c0_46] : memref<18x18x4xf32, #tpu.memory_space<vmem>>, vector<16x16x4xf32>
    tpu.vector_store %arg5[%c1_44, %c1_45, %c0_46], %33 {strides = array<i32>} : memref<18x18x4xf32, #tpu.memory_space<vmem>>, vector<16x16x4xf32>,
    %c0_47 = arith.constant 0 : index
    %c1_48 = arith.constant 1 : index
    %c0_49 = arith.constant 0 : index
    %c0_50 = arith.constant 0 : index
    %35 = vector.load %arg2[%c0_47, %c1_48, %c0_49, %c0_50] : memref<2x2x36x4xf32, #tpu.memory_space<vmem>>, vector<1x1x36x4xf32>
    %36 = vector.shape_cast %35 : vector<1x1x36x4xf32> to vector<36x4xf32>
    %c0_51 = arith.constant 0 : index
    %c1_52 = arith.constant 1 : index
    %c0_53 = arith.constant 0 : index
    %c0_54 = arith.constant 0 : index
    %37 = vector.load %arg3[%c0_51, %c1_52, %c0_53, %c0_54] : memref<2x2x1x4xf32, #tpu.memory_space<vmem>>, vector<1x1x1x4xf32>
    %38 = vector.shape_cast %37 : vector<1x1x1x4xf32> to vector<1x4xf32>
    %c0_55 = arith.constant 0 : index
    %c0_56 = arith.constant 0 : index
    %c0_57 = arith.constant 0 : index
    %39 = vector.load %arg5[%c0_55, %c0_56, %c0_57] : memref<18x18x4xf32, #tpu.memory_space<vmem>>, vector<16x16x4xf32>
    %40 = vector.shape_cast %39 : vector<16x16x4xf32> to vector<256x4xf32>
    %c0_58 = arith.constant 0 : index
    %c1_59 = arith.constant 1 : index
    %c0_60 = arith.constant 0 : index
    %41 = vector.load %arg5[%c0_58, %c1_59, %c0_60] : memref<18x18x4xf32, #tpu.memory_space<vmem>>, vector<16x16x4xf32>
    %42 = vector.shape_cast %41 : vector<16x16x4xf32> to vector<256x4xf32>
    %c0_61 = arith.constant 0 : index
    %c2_62 = arith.constant 2 : index
    %c0_63 = arith.constant 0 : index
    %43 = vector.load %arg5[%c0_61, %c2_62, %c0_63] : memref<18x18x4xf32, #tpu.memory_space<vmem>>, vector<16x16x4xf32>
    %44 = vector.shape_cast %43 : vector<16x16x4xf32> to vector<256x4xf32>
    %c1_64 = arith.constant 1 : index
    %c0_65 = arith.constant 0 : index
    %c0_66 = arith.constant 0 : index
    %45 = vector.load %arg5[%c1_64, %c0_65, %c0_66] : memref<18x18x4xf32, #tpu.memory_space<vmem>>, vector<16x16x4xf32>
    %46 = vector.shape_cast %45 : vector<16x16x4xf32> to vector<256x4xf32>
    %c1_67 = arith.constant 1 : index
    %c1_68 = arith.constant 1 : index
    %c0_69 = arith.constant 0 : index
    %47 = vector.load %arg5[%c1_67, %c1_68, %c0_69] : memref<18x18x4xf32, #tpu.memory_space<vmem>>, vector<16x16x4xf32>
    %48 = vector.shape_cast %47 : vector<16x16x4xf32> to vector<256x4xf32>
    %c1_70 = arith.constant 1 : index
    %c2_71 = arith.constant 2 : index
    %c0_72 = arith.constant 0 : index
    %49 = vector.load %arg5[%c1_70, %c2_71, %c0_72] : memref<18x18x4xf32, #tpu.memory_space<vmem>>, vector<16x16x4xf32>
    %50 = vector.shape_cast %49 : vector<16x16x4xf32> to vector<256x4xf32>
    %c2_73 = arith.constant 2 : index
    %c0_74 = arith.constant 0 : index
    %c0_75 = arith.constant 0 : index
    %51 = vector.load %arg5[%c2_73, %c0_74, %c0_75] : memref<18x18x4xf32, #tpu.memory_space<vmem>>, vector<16x16x4xf32>
    %52 = vector.shape_cast %51 : vector<16x16x4xf32> to vector<256x4xf32>
    %c2_76 = arith.constant 2 : index
    %c1_77 = arith.constant 1 : index
    %c0_78 = arith.constant 0 : index
    %53 = vector.load %arg5[%c2_76, %c1_77, %c0_78] : memref<18x18x4xf32, #tpu.memory_space<vmem>>, vector<16x16x4xf32>
    %54 = vector.shape_cast %53 : vector<16x16x4xf32> to vector<256x4xf32>
    %c2_79 = arith.constant 2 : index
    %c2_80 = arith.constant 2 : index
    %c0_81 = arith.constant 0 : index
    %55 = vector.load %arg5[%c2_79, %c2_80, %c0_81] : memref<18x18x4xf32, #tpu.memory_space<vmem>>, vector<16x16x4xf32>
    %56 = vector.shape_cast %55 : vector<16x16x4xf32> to vector<256x4xf32>
    %57 = tpu.concatenate %40, %42, %44, %46, %48, %50, %52, %54, %56 in 1 : vector<256x4xf32>, vector<256x4xf32>, vector<256x4xf32>, vector<256x4xf32>, vector<256x4xf32>, vector<256x4xf32>, vector<256x4xf32>, vector<256x4xf32>, vector<256x4xf32> -> vector<256x36xf32>
    %cst_82 = arith.constant dense<0.000000e+00> : vector<256x4xf32>
    %58 = tpu.matmul %57, %36, %cst_82 {dimension_numbers = #tpu.dot_dimension_numbers<[1], [0], [0], [1], [0, 0, 1, 1], [], []>} : vector<256x36xf32>, vector<36x4xf32>, vector<256x4xf32> -> vector<256x4xf32>
    %59 = vector.broadcast %38 : vector<1x4xf32> to vector<256x4xf32>
    %60 = arith.addf %58, %59 : vector<256x4xf32>
    %61 = vector.shape_cast %60 : vector<256x4xf32> to vector<16x16x4xf32>
    %62 = arith.addf %3, %61 : vector<16x16x4xf32>
    %c1_83 = arith.constant 1 : index
    %c1_84 = arith.constant 1 : index
    %c0_85 = arith.constant 0 : index
    %63 = vector.load %arg5[%c1_83, %c1_84, %c0_85] : memref<18x18x4xf32, #tpu.memory_space<vmem>>, vector<16x16x4xf32>
    tpu.vector_store %arg5[%c1_83, %c1_84, %c0_85], %62 {strides = array<i32>} : memref<18x18x4xf32, #tpu.memory_space<vmem>>, vector<16x16x4xf32>,
    %c1_86 = arith.constant 1 : index
    %c0_87 = arith.constant 0 : index
    %c0_88 = arith.constant 0 : index
    %c0_89 = arith.constant 0 : index
    %64 = vector.load %arg2[%c1_86, %c0_87, %c0_88, %c0_89] : memref<2x2x36x4xf32, #tpu.memory_space<vmem>>, vector<1x1x36x4xf32>
    %65 = vector.shape_cast %64 : vector<1x1x36x4xf32> to vector<36x4xf32>
    %c1_90 = arith.constant 1 : index
    %c0_91 = arith.constant 0 : index
    %c0_92 = arith.constant 0 : index
    %c0_93 = arith.constant 0 : index
    %66 = vector.load %arg3[%c1_90, %c0_91, %c0_92, %c0_93] : memref<2x2x1x4xf32, #tpu.memory_space<vmem>>, vector<1x1x1x4xf32>
    %67 = vector.shape_cast %66 : vector<1x1x1x4xf32> to vector<1x4xf32>
    %c0_94 = arith.constant 0 : index
    %c0_95 = arith.constant 0 : index
    %c0_96 = arith.constant 0 : index
    %68 = vector.load %arg5[%c0_94, %c0_95, %c0_96] : memref<18x18x4xf32, #tpu.memory_space<vmem>>, vector<16x16x4xf32>
    %69 = vector.shape_cast %68 : vector<16x16x4xf32> to vector<256x4xf32>
    %c0_97 = arith.constant 0 : index
    %c1_98 = arith.constant 1 : index
    %c0_99 = arith.constant 0 : index
    %70 = vector.load %arg5[%c0_97, %c1_98, %c0_99] : memref<18x18x4xf32, #tpu.memory_space<vmem>>, vector<16x16x4xf32>
    %71 = vector.shape_cast %70 : vector<16x16x4xf32> to vector<256x4xf32>
    %c0_100 = arith.constant 0 : index
    %c2_101 = arith.constant 2 : index
    %c0_102 = arith.constant 0 : index
    %72 = vector.load %arg5[%c0_100, %c2_101, %c0_102] : memref<18x18x4xf32, #tpu.memory_space<vmem>>, vector<16x16x4xf32>
    %73 = vector.shape_cast %72 : vector<16x16x4xf32> to vector<256x4xf32>
    %c1_103 = arith.constant 1 : index
    %c0_104 = arith.constant 0 : index
    %c0_105 = arith.constant 0 : index
    %74 = vector.load %arg5[%c1_103, %c0_104, %c0_105] : memref<18x18x4xf32, #tpu.memory_space<vmem>>, vector<16x16x4xf32>
    %75 = vector.shape_cast %74 : vector<16x16x4xf32> to vector<256x4xf32>
    %c1_106 = arith.constant 1 : index
    %c1_107 = arith.constant 1 : index
    %c0_108 = arith.constant 0 : index
    %76 = vector.load %arg5[%c1_106, %c1_107, %c0_108] : memref<18x18x4xf32, #tpu.memory_space<vmem>>, vector<16x16x4xf32>
    %77 = vector.shape_cast %76 : vector<16x16x4xf32> to vector<256x4xf32>
    %c1_109 = arith.constant 1 : index
    %c2_110 = arith.constant 2 : index
    %c0_111 = arith.constant 0 : index
    %78 = vector.load %arg5[%c1_109, %c2_110, %c0_111] : memref<18x18x4xf32, #tpu.memory_space<vmem>>, vector<16x16x4xf32>
    %79 = vector.shape_cast %78 : vector<16x16x4xf32> to vector<256x4xf32>
    %c2_112 = arith.constant 2 : index
    %c0_113 = arith.constant 0 : index
    %c0_114 = arith.constant 0 : index
    %80 = vector.load %arg5[%c2_112, %c0_113, %c0_114] : memref<18x18x4xf32, #tpu.memory_space<vmem>>, vector<16x16x4xf32>
    %81 = vector.shape_cast %80 : vector<16x16x4xf32> to vector<256x4xf32>
    %c2_115 = arith.constant 2 : index
    %c1_116 = arith.constant 1 : index
    %c0_117 = arith.constant 0 : index
    %82 = vector.load %arg5[%c2_115, %c1_116, %c0_117] : memref<18x18x4xf32, #tpu.memory_space<vmem>>, vector<16x16x4xf32>
    %83 = vector.shape_cast %82 : vector<16x16x4xf32> to vector<256x4xf32>
    %c2_118 = arith.constant 2 : index
    %c2_119 = arith.constant 2 : index
    %c0_120 = arith.constant 0 : index
    %84 = vector.load %arg5[%c2_118, %c2_119, %c0_120] : memref<18x18x4xf32, #tpu.memory_space<vmem>>, vector<16x16x4xf32>
    %85 = vector.shape_cast %84 : vector<16x16x4xf32> to vector<256x4xf32>
    %86 = tpu.concatenate %69, %71, %73, %75, %77, %79, %81, %83, %85 in 1 : vector<256x4xf32>, vector<256x4xf32>, vector<256x4xf32>, vector<256x4xf32>, vector<256x4xf32>, vector<256x4xf32>, vector<256x4xf32>, vector<256x4xf32>, vector<256x4xf32> -> vector<256x36xf32>
    %cst_121 = arith.constant dense<0.000000e+00> : vector<256x4xf32>
    %87 = tpu.matmul %86, %65, %cst_121 {dimension_numbers = #tpu.dot_dimension_numbers<[1], [0], [0], [1], [0, 0, 1, 1], [], []>} : vector<256x36xf32>, vector<36x4xf32>, vector<256x4xf32> -> vector<256x4xf32>
    %88 = vector.broadcast %67 : vector<1x4xf32> to vector<256x4xf32>
    %89 = arith.addf %87, %88 : vector<256x4xf32>
    %cst_122 = arith.constant 0.000000e+00 : f32
    %90 = vector.broadcast %cst_122 : f32 to vector<256x4xf32>
    %91 = arith.maximumf %89, %90 : vector<256x4xf32>
    %92 = vector.shape_cast %91 : vector<256x4xf32> to vector<16x16x4xf32>
    %c1_123 = arith.constant 1 : index
    %c1_124 = arith.constant 1 : index
    %c0_125 = arith.constant 0 : index
    %93 = vector.load %arg5[%c1_123, %c1_124, %c0_125] : memref<18x18x4xf32, #tpu.memory_space<vmem>>, vector<16x16x4xf32>
    tpu.vector_store %arg5[%c1_123, %c1_124, %c0_125], %92 {strides = array<i32>} : memref<18x18x4xf32, #tpu.memory_space<vmem>>, vector<16x16x4xf32>,
    %c1_126 = arith.constant 1 : index
    %c1_127 = arith.constant 1 : index
    %c0_128 = arith.constant 0 : index
    %c0_129 = arith.constant 0 : index
    %94 = vector.load %arg2[%c1_126, %c1_127, %c0_128, %c0_129] : memref<2x2x36x4xf32, #tpu.memory_space<vmem>>, vector<1x1x36x4xf32>
    %95 = vector.shape_cast %94 : vector<1x1x36x4xf32> to vector<36x4xf32>
    %c1_130 = arith.constant 1 : index
    %c1_131 = arith.constant 1 : index
    %c0_132 = arith.constant 0 : index
    %c0_133 = arith.constant 0 : index
    %96 = vector.load %arg3[%c1_130, %c1_131, %c0_132, %c0_133] : memref<2x2x1x4xf32, #tpu.memory_space<vmem>>, vector<1x1x1x4xf32>
    %97 = vector.shape_cast %96 : vector<1x1x1x4xf32> to vector<1x4xf32>
    %c0_134 = arith.constant 0 : index
    %c0_135 = arith.constant 0 : index
    %c0_136 = arith.constant 0 : index
    %98 = vector.load %arg5[%c0_134, %c0_135, %c0_136] : memref<18x18x4xf32, #tpu.memory_space<vmem>>, vector<16x16x4xf32>
    %99 = vector.shape_cast %98 : vector<16x16x4xf32> to vector<256x4xf32>
    %c0_137 = arith.constant 0 : index
    %c1_138 = arith.constant 1 : index
    %c0_139 = arith.constant 0 : index
    %100 = vector.load %arg5[%c0_137, %c1_138, %c0_139] : memref<18x18x4xf32, #tpu.memory_space<vmem>>, vector<16x16x4xf32>
    %101 = vector.shape_cast %100 : vector<16x16x4xf32> to vector<256x4xf32>
    %c0_140 = arith.constant 0 : index
    %c2_141 = arith.constant 2 : index
    %c0_142 = arith.constant 0 : index
    %102 = vector.load %arg5[%c0_140, %c2_141, %c0_142] : memref<18x18x4xf32, #tpu.memory_space<vmem>>, vector<16x16x4xf32>
    %103 = vector.shape_cast %102 : vector<16x16x4xf32> to vector<256x4xf32>
    %c1_143 = arith.constant 1 : index
    %c0_144 = arith.constant 0 : index
    %c0_145 = arith.constant 0 : index
    %104 = vector.load %arg5[%c1_143, %c0_144, %c0_145] : memref<18x18x4xf32, #tpu.memory_space<vmem>>, vector<16x16x4xf32>
    %105 = vector.shape_cast %104 : vector<16x16x4xf32> to vector<256x4xf32>
    %c1_146 = arith.constant 1 : index
    %c1_147 = arith.constant 1 : index
    %c0_148 = arith.constant 0 : index
    %106 = vector.load %arg5[%c1_146, %c1_147, %c0_148] : memref<18x18x4xf32, #tpu.memory_space<vmem>>, vector<16x16x4xf32>
    %107 = vector.shape_cast %106 : vector<16x16x4xf32> to vector<256x4xf32>
    %c1_149 = arith.constant 1 : index
    %c2_150 = arith.constant 2 : index
    %c0_151 = arith.constant 0 : index
    %108 = vector.load %arg5[%c1_149, %c2_150, %c0_151] : memref<18x18x4xf32, #tpu.memory_space<vmem>>, vector<16x16x4xf32>
    %109 = vector.shape_cast %108 : vector<16x16x4xf32> to vector<256x4xf32>
    %c2_152 = arith.constant 2 : index
    %c0_153 = arith.constant 0 : index
    %c0_154 = arith.constant 0 : index
    %110 = vector.load %arg5[%c2_152, %c0_153, %c0_154] : memref<18x18x4xf32, #tpu.memory_space<vmem>>, vector<16x16x4xf32>
    %111 = vector.shape_cast %110 : vector<16x16x4xf32> to vector<256x4xf32>
    %c2_155 = arith.constant 2 : index
    %c1_156 = arith.constant 1 : index
    %c0_157 = arith.constant 0 : index
    %112 = vector.load %arg5[%c2_155, %c1_156, %c0_157] : memref<18x18x4xf32, #tpu.memory_space<vmem>>, vector<16x16x4xf32>
    %113 = vector.shape_cast %112 : vector<16x16x4xf32> to vector<256x4xf32>
    %c2_158 = arith.constant 2 : index
    %c2_159 = arith.constant 2 : index
    %c0_160 = arith.constant 0 : index
    %114 = vector.load %arg5[%c2_158, %c2_159, %c0_160] : memref<18x18x4xf32, #tpu.memory_space<vmem>>, vector<16x16x4xf32>
    %115 = vector.shape_cast %114 : vector<16x16x4xf32> to vector<256x4xf32>
    %116 = tpu.concatenate %99, %101, %103, %105, %107, %109, %111, %113, %115 in 1 : vector<256x4xf32>, vector<256x4xf32>, vector<256x4xf32>, vector<256x4xf32>, vector<256x4xf32>, vector<256x4xf32>, vector<256x4xf32>, vector<256x4xf32>, vector<256x4xf32> -> vector<256x36xf32>
    %cst_161 = arith.constant dense<0.000000e+00> : vector<256x4xf32>
    %117 = tpu.matmul %116, %95, %cst_161 {dimension_numbers = #tpu.dot_dimension_numbers<[1], [0], [0], [1], [0, 0, 1, 1], [], []>} : vector<256x36xf32>, vector<36x4xf32>, vector<256x4xf32> -> vector<256x4xf32>
    %118 = vector.broadcast %97 : vector<1x4xf32> to vector<256x4xf32>
    %119 = arith.addf %117, %118 : vector<256x4xf32>
    %120 = vector.shape_cast %119 : vector<256x4xf32> to vector<16x16x4xf32>
    %121 = arith.addf %62, %120 : vector<16x16x4xf32>
    %c0_162 = arith.constant 0 : index
    %c0_163 = arith.constant 0 : index
    %c0_164 = arith.constant 0 : index
    %c0_165 = arith.constant 0 : index
    %122 = vector.load %arg4[%c0_162, %c0_163, %c0_164, %c0_165] : memref<1x16x16x4xf32, #tpu.memory_space<vmem>>, vector<1x16x16x4xf32>
    %123 = vector.shape_cast %122 : vector<1x16x16x4xf32> to vector<16x16x4xf32>
    %124 = vector.shape_cast %121 : vector<16x16x4xf32> to vector<1x16x16x4xf32>
    tpu.vector_store %arg4[%c0_162, %c0_163, %c0_164, %c0_165], %124 {strides = array<i32>} : memref<1x16x16x4xf32, #tpu.memory_space<vmem>>, vector<1x16x16x4xf32>,
    return
  }
  func.func @transform_0(%arg0: i32) -> (i32, i32, i32, i32) {
    %c0_i32 = arith.constant 0 : i32
    %c0_i32_0 = arith.constant 0 : i32
    %c0_i32_1 = arith.constant 0 : i32
    %c0_i32_2 = arith.constant 0 : i32
    return %arg0, %c0_i32, %c0_i32_0, %c0_i32_1 : i32, i32, i32, i32
  }
  func.func @transform_1(%arg0: i32) -> (i32, i32, i32, i32) {
    %c0_i32 = arith.constant 0 : i32
    %c0_i32_0 = arith.constant 0 : i32
    %c0_i32_1 = arith.constant 0 : i32
    %c0_i32_2 = arith.constant 0 : i32
    %c0_i32_3 = arith.constant 0 : i32
    return %c0_i32, %c0_i32_0, %c0_i32_1, %c0_i32_2 : i32, i32, i32, i32
  }
  func.func @transform_2(%arg0: i32) -> (i32, i32, i32, i32) {
    %c0_i32 = arith.constant 0 : i32
    %c0_i32_0 = arith.constant 0 : i32
    %c0_i32_1 = arith.constant 0 : i32
    %c0_i32_2 = arith.constant 0 : i32
    %c0_i32_3 = arith.constant 0 : i32
    return %c0_i32, %c0_i32_0, %c0_i32_1, %c0_i32_2 : i32, i32, i32, i32
  }
  func.func @transform_3(%arg0: i32) -> (i32, i32, i32, i32) {
    %c0_i32 = arith.constant 0 : i32
    %c0_i32_0 = arith.constant 0 : i32
    %c0_i32_1 = arith.constant 0 : i32
    %c0_i32_2 = arith.constant 0 : i32
    return %arg0, %c0_i32, %c0_i32_0, %c0_i32_1 : i32, i32, i32, i32
  }
}

</mosaic_0001>

<llo_original>
// kernel: projnet_m_forward.1
$region0: #{projnet_m_forward.1}
  #allocation0 [shape = 'u32[]', space=smem, size = 0x4, offset = 0x4, fixed_abs, tag = 'smem constant byte address 0x4 - core index']
  #allocation1 [shape = 'u32[144,128]{1,0:T(1,128)}', space=vmem, size = 0x12000, scoped, tag = 'internal scratch']
  #allocation2 [shape = 'f32[18,18,4]{2,1,0:T(8,128)}', space=vmem, size = 0x36000, scoped, tag = 'scratch operand']
  %s0 = inlined_call_operand.vmem [shape: f32[2,16,16,4], index: 0, kind: input, shape index: {}]
  %s1 = inlined_call_operand.vmem [shape: f32[2,2,36,4], index: 1, kind: input, shape index: {}]
  %s2 = inlined_call_operand.vmem [shape: f32[2,2,1,4], index: 2, kind: input, shape index: {}]
  %s3 = inlined_call_operand.vmem [shape: f32[2,16,16,4], index: 3, kind: output, shape index: {}]
  %s4 = sld [smem:[#allocation0]]
  $region45: #{projnet_m_forward.1} parent=0
    _
  %s6 = ssub.s32 1, %s4
  %s7 = scalar_select 0, %s6, %s4
  loop: start=0, step=1, limit=4
  $region2: #{projnet_m_forward.1} parent=0 // loop_pre_header
    _
  $region3: #{projnet_m_forward.1} parent=0 // loop_header
    %s9 = sphi 0, %s13
    %p10 = scmp.ge.s32.totalorder %s9, 4
    %s19 = sphi 0, %s21
    %s22 = sphi 0, %s19
    %s23 = sphi 0, %s22
    %s39 = sphi 0, %s23
    %s43 = sphi 0, %s43
    %s45 = sphi 0, %s43
    %s46 = sphi 0, %s45
    %s60 = sphi 0, %s46
    %s64 = sphi 0, %s64
    %s66 = sphi 0, %s64
    %s67 = sphi 0, %s66
    %s81 = sphi 0, %s67
    %s87 = sphi 0, %s89
    %s90 = sphi 0, %s87
    %s91 = sphi 0, %s90
    %s107 = sphi 0, %s91
  $region4: #{projnet_m_forward.1} parent=0 // loop_header_branch
    %12 = sbr.rel (%p10) target = $region8
  $region5: #{projnet_m_forward.1} parent=0 // loop_body
    %s14 = ssub.s32 %s9, 1
    %s15 = ssub.s32 %s9, 2
    %s16 = sadd.s32 %s9, 1
    %s17 = ssub.s32 %s9, %s16
    %p18 = scmp.eq.s32.totalorder %s17, 0
    %s20 = sadd.s32 %s19, 1
    %s21 = scalar_select %p18, %s19, %s20
    %p24 = pneg %p18
    %p25 = scmp.eq.s32.totalorder %s9, 1
    %p26 = por %p24, %p25
    %p27 = scmp.ne.s32.totalorder %s19, %s22
    %p28 = scmp.eq.s32.totalorder %s9, 0
    %p29 = por %p27, %p28
    %p30 = scmp.ne.s32.totalorder %s19, %s22
    %p31 = scmp.eq.s32.totalorder %s14, 1
    %p32 = por %p30, %p31
    %p33 = scmp.ne.s32.totalorder %s22, %s23
    %p34 = scmp.eq.s32.totalorder %s14, 0
    %p35 = por %p33, %p34
    %p36 = scmp.ne.s32.totalorder %s22, %s23
    %p37 = scmp.eq.s32.totalorder %s15, 1
    %p38 = por %p36, %p37
    %p40 = scmp.ne.s32.totalorder %s23, %s39
    %p41 = scmp.eq.s32.totalorder %s15, 0
    %p42 = por %p40, %p41
    %s44 = sadd.s32 %s43, 1
    %p47 = scmp.eq.s32.totalorder %s9, 1
    %p48 = scmp.ne.s32.totalorder %s43, %s45
    %p49 = scmp.eq.s32.totalorder %s9, 0
    %p50 = por %p48, %p49
    %p51 = scmp.ne.s32.totalorder %s43, %s45
    %p52 = scmp.eq.s32.totalorder %s14, 1
    %p53 = por %p51, %p52
    %p54 = scmp.ne.s32.totalorder %s45, %s46
    %p55 = scmp.eq.s32.totalorder %s14, 0
    %p56 = por %p54, %p55
    %p57 = scmp.ne.s32.totalorder %s45, %s46
    %p58 = scmp.eq.s32.totalorder %s15, 1
    %p59 = por %p57, %p58
    %p61 = scmp.ne.s32.totalorder %s46, %s60
    %p62 = scmp.eq.s32.totalorder %s15, 0
    %p63 = por %p61, %p62
    %s65 = sadd.s32 %s64, 1
    %p68 = scmp.eq.s32.totalorder %s9, 1
    %p69 = scmp.ne.s32.totalorder %s64, %s66
    %p70 = scmp.eq.s32.totalorder %s9, 0
    %p71 = por %p69, %p70
    %p72 = scmp.ne.s32.totalorder %s64, %s66
    %p73 = scmp.eq.s32.totalorder %s14, 1
    %p74 = por %p72, %p73
    %p75 = scmp.ne.s32.totalorder %s66, %s67
    %p76 = scmp.eq.s32.totalorder %s14, 0
    %p77 = por %p75, %p76
    %p78 = scmp.ne.s32.totalorder %s66, %s67
    %p79 = scmp.eq.s32.totalorder %s15, 1
    %p80 = por %p78, %p79
    %p82 = scmp.ne.s32.totalorder %s67, %s81
    %p83 = scmp.eq.s32.totalorder %s15, 0
    %p84 = por %p82, %p83
    %s85 = ssub.s32 %s9, %s16
    %p86 = scmp.eq.s32.totalorder %s85, 0
    %s88 = sadd.s32 %s87, 1
    %s89 = scalar_select %p86, %s87, %s88
    %p92 = pneg %p86
    %p93 = scmp.eq.s32.totalorder %s9, 1
    %p94 = por %p92, %p93
    %p95 = scmp.ne.s32.totalorder %s87, %s90
    %p96 = scmp.eq.s32.totalorder %s9, 0
    %p97 = por %p95, %p96
    %p98 = scmp.ne.s32.totalorder %s87, %s90
    %p99 = scmp.eq.s32.totalorder %s14, 1
    %p100 = por %p98, %p99
    %p101 = scmp.ne.s32.totalorder %s90, %s91
    %p102 = scmp.eq.s32.totalorder %s14, 0
    %p103 = por %p101, %p102
    %p104 = scmp.ne.s32.totalorder %s90, %s91
    %p105 = scmp.eq.s32.totalorder %s15, 1
    %p106 = por %p104, %p105
    %p108 = scmp.ne.s32.totalorder %s91, %s107
    %p109 = scmp.eq.s32.totalorder %s15, 0
    %p110 = por %p108, %p109
    %p111 = scmp.le.s32.totalorder 1, %s9
    %p112 = scmp.lt.s32.totalorder %s9, 3
    %p113 = pnand %p111, %p112
    %p114 = pneg %p113
    // Predicated region
    $region9: #{projnet_m_forward.1} parent=5 // pred_check
      _
    $region10: #{projnet_m_forward.1} parent=5 // pred_check_branch
      %116 = sbr.rel (%p113) target = $region12
    $region11: #{projnet_m_forward.1} parent=5 // pred_region
      %s117 = ssub.s32 %s9, 1
      // Predicated region
      $region13: #{projnet_m_forward.1} parent=11 // pred_check
        %p118 = pneg %p56
      $region14: #{projnet_m_forward.1} parent=11 // pred_check_branch
        %120 = sbr.rel (%p118) target = $region16
      $region15: #{projnet_m_forward.1} parent=11 // pred_region
        _
      $region16: #{projnet_m_forward.1} parent=11 // pred_fallthru
        _
      // Predicated region
      $region17: #{projnet_m_forward.1} parent=11 // pred_check
        %p121 = pneg %p77
      $region18: #{projnet_m_forward.1} parent=11 // pred_check_branch
        %123 = sbr.rel (%p121) target = $region20
      $region19: #{projnet_m_forward.1} parent=11 // pred_region
        _
      $region20: #{projnet_m_forward.1} parent=11 // pred_fallthru
        _
    $region12: #{projnet_m_forward.1} parent=5 // pred_fallthru
      _
    %p124 = scmp.lt.s32.totalorder %s9, 2
    // Predicated region
    $region21: #{projnet_m_forward.1} parent=5 // pred_check
      %p125 = pneg %p124
    $region22: #{projnet_m_forward.1} parent=5 // pred_check_branch
      %127 = sbr.rel (%p125) target = $region24
    $region23: #{projnet_m_forward.1} parent=5 // pred_region
      // Predicated region
      $region25: #{projnet_m_forward.1} parent=23 // pred_check
        %p128 = pneg %p29
      $region26: #{projnet_m_forward.1} parent=23 // pred_check_branch
        %130 = sbr.rel (%p128) target = $region28
      $region27: #{projnet_m_forward.1} parent=23 // pred_region
        %p131 = scmp.lt.s32.totalorder %s9, 1
        %s132 = scalar_select %p131, %s9, 1
        %s133 = smul.addr %s132, 32
        %s134 = smul.addr %s133, 8
        %s135 = scalar_lea.vmem %s0, %s134
      $region28: #{projnet_m_forward.1} parent=23 // pred_fallthru
        _
    $region24: #{projnet_m_forward.1} parent=5 // pred_fallthru
      _
    %p136 = scmp.le.s32.totalorder 1, %s9
    %p137 = scmp.lt.s32.totalorder %s9, 3
    %p138 = pnand %p136, %p137
    %p139 = pneg %p138
    // Predicated region
    $region29: #{projnet_m_forward.1} parent=5 // pred_check
      _
    $region30: #{projnet_m_forward.1} parent=5 // pred_check_branch
      %141 = sbr.rel (%p138) target = $region32
    $region31: #{projnet_m_forward.1} parent=5 // pred_region
      %s142 = ssub.s32 %s9, 1
      %p143 = scmp.lt.s32.totalorder %s14, 1
      %s144 = scalar_select %p143, %s14, 1
      %s145 = smul.addr %s144, 32
      %s146 = smul.addr %s145, 8
      %s147 = scalar_lea.vmem %s0, %s146
      %p148 = pneg %p35
      %p149 = pneg %p32
      %p150 = pneg %p56
      %p151 = pneg %p53
      %p152 = pneg %p77
      %p153 = pneg %p74
      %p154 = pneg %p103
      %p155 = pneg %p100
      %p156 = scmp.lt.s32.totalorder %s14, 1
      %s157 = scalar_select %p156, %s14, 1
      %s158 = smul.addr %s157, 32
      %s159 = smul.addr %s158, 8
      %s160 = scalar_lea.vmem %s3, %s159
      %p161 = scmp.lt.s32.totalorder %s14, 1
      %s162 = scalar_select %p161, %s14, 1
      %s163 = smul.addr %s162, 32
      %s164 = smul.addr %s163, 8
      %s165 = scalar_lea.vmem %s0, %s164
      %p166 = scmp.lt.s32.totalorder %s14, 1
      %s167 = scalar_select %p166, %s14, 1
      %s168 = smul.addr %s167, 32
      %s169 = smul.addr %s168, 8
      %s170 = scalar_lea.vmem %s3, %s169
      %vm171 = vcmask 31744
      %172 = vst.msk [vmem:[#allocation2] sm:$0xff] %vm171, 0.0
      %173 = vst.msk [vmem:[#allocation2 + $0x8] sm:$0xff] %vm171, 0.0
      %vm174 = vcmask 25600
      %175 = vst.msk [vmem:[#allocation2 + $0x10] sm:$0x3] %vm174, 0.0
      %176 = vst.msk [vmem:[#allocation2 + $0x18] sm:$0xff] %vm171, 0.0
      %177 = vst.msk [vmem:[#allocation2 + $0x20] sm:$0xff] %vm171, 0.0
      %178 = vst.msk [vmem:[#allocation2 + $0x28] sm:$0x3] %vm174, 0.0
      %179 = vst.msk [vmem:[#allocation2 + $0x30] sm:$0xff] %vm171, 0.0
      %180 = vst.msk [vmem:[#allocation2 + $0x38] sm:$0xff] %vm171, 0.0
      %181 = vst.msk [vmem:[#allocation2 + $0x40] sm:$0x3] %vm174, 0.0
      %182 = vst.msk [vmem:[#allocation2 + $0x48] sm:$0xff] %vm171, 0.0
      %183 = vst.msk [vmem:[#allocation2 + $0x50] sm:$0xff] %vm171, 0.0
      %184 = vst.msk [vmem:[#allocation2 + $0x58] sm:$0x3] %vm174, 0.0
      %185 = vst.msk [vmem:[#allocation2 + $0x60] sm:$0xff] %vm171, 0.0
      %186 = vst.msk [vmem:[#allocation2 + $0x68] sm:$0xff] %vm171, 0.0
      %187 = vst.msk [vmem:[#allocation2 + $0x70] sm:$0x3] %vm174, 0.0
      %188 = vst.msk [vmem:[#allocation2 + $0x78] sm:$0xff] %vm171, 0.0
      %189 = vst.msk [vmem:[#allocation2 + $0x80] sm:$0xff] %vm171, 0.0
      %190 = vst.msk [vmem:[#allocation2 + $0x88] sm:$0x3] %vm174, 0.0
      %191 = vst.msk [vmem:[#allocation2 + $0x90] sm:$0xff] %vm171, 0.0
      %192 = vst.msk [vmem:[#allocation2 + $0x98] sm:$0xff] %vm171, 0.0
      %193 = vst.msk [vmem:[#allocation2 + $0xa0] sm:$0x3] %vm174, 0.0
      %194 = vst.msk [vmem:[#allocation2 + $0xa8] sm:$0xff] %vm171, 0.0
      %195 = vst.msk [vmem:[#allocation2 + $0xb0] sm:$0xff] %vm171, 0.0
      %196 = vst.msk [vmem:[#allocation2 + $0xb8] sm:$0x3] %vm174, 0.0
      %197 = vst.msk [vmem:[#allocation2 + $0xc0] sm:$0xff] %vm171, 0.0
      %198 = vst.msk [vmem:[#allocation2 + $0xc8] sm:$0xff] %vm171, 0.0
      %199 = vst.msk [vmem:[#allocation2 + $0xd0] sm:$0x3] %vm174, 0.0
      %200 = vst.msk [vmem:[#allocation2 + $0xd8] sm:$0xff] %vm171, 0.0
      %201 = vst.msk [vmem:[#allocation2 + $0xe0] sm:$0xff] %vm171, 0.0
      %202 = vst.msk [vmem:[#allocation2 + $0xe8] sm:$0x3] %vm174, 0.0
      %203 = vst.msk [vmem:[#allocation2 + $0xf0] sm:$0xff] %vm171, 0.0
      %204 = vst.msk [vmem:[#allocation2 + $0xf8] sm:$0xff] %vm171, 0.0
      %205 = vst.msk [vmem:[#allocation2 + $0x100] sm:$0x3] %vm174, 0.0
      %206 = vst.msk [vmem:[#allocation2 + $0x108] sm:$0xff] %vm171, 0.0
      %207 = vst.msk [vmem:[#allocation2 + $0x110] sm:$0xff] %vm171, 0.0
      %208 = vst.msk [vmem:[#allocation2 + $0x118] sm:$0x3] %vm174, 0.0
      %209 = vst.msk [vmem:[#allocation2 + $0x120] sm:$0xff] %vm171, 0.0
      %210 = vst.msk [vmem:[#allocation2 + $0x128] sm:$0xff] %vm171, 0.0
      %211 = vst.msk [vmem:[#allocation2 + $0x130] sm:$0x3] %vm174, 0.0
      %212 = vst.msk [vmem:[#allocation2 + $0x138] sm:$0xff] %vm171, 0.0
      %213 = vst.msk [vmem:[#allocation2 + $0x140] sm:$0xff] %vm171, 0.0
      %214 = vst.msk [vmem:[#allocation2 + $0x148] sm:$0x3] %vm174, 0.0
      %215 = vst.msk [vmem:[#allocation2 + $0x150] sm:$0xff] %vm171, 0.0
      %216 = vst.msk [vmem:[#allocation2 + $0x158] sm:$0xff] %vm171, 0.0
      %217 = vst.msk [vmem:[#allocation2 + $0x160] sm:$0x3] %vm174, 0.0
      %218 = vst.msk [vmem:[#allocation2 + $0x168] sm:$0xff] %vm171, 0.0
      %219 = vst.msk [vmem:[#allocation2 + $0x170] sm:$0xff] %vm171, 0.0
      %220 = vst.msk [vmem:[#allocation2 + $0x178] sm:$0x3] %vm174, 0.0
      %221 = vst.msk [vmem:[#allocation2 + $0x180] sm:$0xff] %vm171, 0.0
      %222 = vst.msk [vmem:[#allocation2 + $0x188] sm:$0xff] %vm171, 0.0
      %223 = vst.msk [vmem:[#allocation2 + $0x190] sm:$0x3] %vm174, 0.0
      %224 = vst.msk [vmem:[#allocation2 + $0x198] sm:$0xff] %vm171, 0.0
      %225 = vst.msk [vmem:[#allocation2 + $0x1a0] sm:$0xff] %vm171, 0.0
      %226 = vst.msk [vmem:[#allocation2 + $0x1a8] sm:$0x3] %vm174, 0.0
      %v227 = vld [vmem:[%s165] sm:$0xff]
      %v228 = vld [vmem:[%s165 + $0x8] sm:$0xff]
      %v229 = vld [vmem:[%s165 + $0x10] sm:$0xff]
      %v230 = vld [vmem:[%s165 + $0x18] sm:$0xff]
      %v231 = vld [vmem:[%s165 + $0x20] sm:$0xff]
      %v232 = vld [vmem:[%s165 + $0x28] sm:$0xff]
      %v233 = vld [vmem:[%s165 + $0x30] sm:$0xff]
      %v234 = vld [vmem:[%s165 + $0x38] sm:$0xff]
      %v235 = vld [vmem:[%s165 + $0x40] sm:$0xff]
      %v236 = vld [vmem:[%s165 + $0x48] sm:$0xff]
      %v237 = vld [vmem:[%s165 + $0x50] sm:$0xff]
      %v238 = vld [vmem:[%s165 + $0x58] sm:$0xff]
      %v239 = vld [vmem:[%s165 + $0x60] sm:$0xff]
      %v240 = vld [vmem:[%s165 + $0x68] sm:$0xff]
      %v241 = vld [vmem:[%s165 + $0x70] sm:$0xff]
      %v242 = vld [vmem:[%s165 + $0x78] sm:$0xff]
      %v243 = vld [vmem:[%s165 + $0x80] sm:$0xff]
      %v244 = vld [vmem:[%s165 + $0x88] sm:$0xff]
      %v245 = vld [vmem:[%s165 + $0x90] sm:$0xff]
      %v246 = vld [vmem:[%s165 + $0x98] sm:$0xff]
      %v247 = vld [vmem:[%s165 + $0xa0] sm:$0xff]
      %v248 = vld [vmem:[%s165 + $0xa8] sm:$0xff]
      %v249 = vld [vmem:[%s165 + $0xb0] sm:$0xff]
      %v250 = vld [vmem:[%s165 + $0xb8] sm:$0xff]
      %v251 = vld [vmem:[%s165 + $0xc0] sm:$0xff]
      %v252 = vld [vmem:[%s165 + $0xc8] sm:$0xff]
      %v253 = vld [vmem:[%s165 + $0xd0] sm:$0xff]
      %v254 = vld [vmem:[%s165 + $0xd8] sm:$0xff]
      %v255 = vld [vmem:[%s165 + $0xe0] sm:$0xff]
      %v256 = vld [vmem:[%s165 + $0xe8] sm:$0xff]
      %v257 = vld [vmem:[%s165 + $0xf0] sm:$0xff]
      %v258 = vld [vmem:[%s165 + $0xf8] sm:$0xff]
      %s259 = scalar_lea.vmem [#allocation2], 24
      %260 = vst.msk [vmem:[%s259 + $0x1] sm:$0xff] %vm171, %v227
      %261 = vst.msk [vmem:[%s259 + $0x9] sm:$0xff] %vm171, %v228
      %262 = vst.msk [vmem:[%s259 + $0x19] sm:$0xff] %vm171, %v229
      %263 = vst.msk [vmem:[%s259 + $0x21] sm:$0xff] %vm171, %v230
      %264 = vst.msk [vmem:[%s259 + $0x31] sm:$0xff] %vm171, %v231
      %265 = vst.msk [vmem:[%s259 + $0x39] sm:$0xff] %vm171, %v232
      %266 = vst.msk [vmem:[%s259 + $0x49] sm:$0xff] %vm171, %v233
      %267 = vst.msk [vmem:[%s259 + $0x51] sm:$0xff] %vm171, %v234
      %268 = vst.msk [vmem:[%s259 + $0x61] sm:$0xff] %vm171, %v235
      %269 = vst.msk [vmem:[%s259 + $0x69] sm:$0xff] %vm171, %v236
      %270 = vst.msk [vmem:[%s259 + $0x79] sm:$0xff] %vm171, %v237
      %271 = vst.msk [vmem:[%s259 + $0x81] sm:$0xff] %vm171, %v238
      %272 = vst.msk [vmem:[%s259 + $0x91] sm:$0xff] %vm171, %v239
      %273 = vst.msk [vmem:[%s259 + $0x99] sm:$0xff] %vm171, %v240
      %274 = vst.msk [vmem:[%s259 + $0xa9] sm:$0xff] %vm171, %v241
      %275 = vst.msk [vmem:[%s259 + $0xb1] sm:$0xff] %vm171, %v242
      %276 = vst.msk [vmem:[%s259 + $0xc1] sm:$0xff] %vm171, %v243
      %277 = vst.msk [vmem:[%s259 + $0xc9] sm:$0xff] %vm171, %v244
      %278 = vst.msk [vmem:[%s259 + $0xd9] sm:$0xff] %vm171, %v245
      %279 = vst.msk [vmem:[%s259 + $0xe1] sm:$0xff] %vm171, %v246
      %280 = vst.msk [vmem:[%s259 + $0xf1] sm:$0xff] %vm171, %v247
      %281 = vst.msk [vmem:[%s259 + $0xf9] sm:$0xff] %vm171, %v248
      %282 = vst.msk [vmem:[%s259 + $0x109] sm:$0xff] %vm171, %v249
      %283 = vst.msk [vmem:[%s259 + $0x111] sm:$0xff] %vm171, %v250
      %284 = vst.msk [vmem:[%s259 + $0x121] sm:$0xff] %vm171, %v251
      %285 = vst.msk [vmem:[%s259 + $0x129] sm:$0xff] %vm171, %v252
      %286 = vst.msk [vmem:[%s259 + $0x139] sm:$0xff] %vm171, %v253
      %287 = vst.msk [vmem:[%s259 + $0x141] sm:$0xff] %vm171, %v254
      %288 = vst.msk [vmem:[%s259 + $0x151] sm:$0xff] %vm171, %v255
      %289 = vst.msk [vmem:[%s259 + $0x159] sm:$0xff] %vm171, %v256
      %290 = vst.msk [vmem:[%s259 + $0x169] sm:$0xff] %vm171, %v257
      %291 = vst.msk [vmem:[%s259 + $0x171] sm:$0xff] %vm171, %v258
      %v292 = vld [vmem:[%s1] sm:$0xff]
      %v293 = vld [vmem:[%s1 + $0x8] sm:$0xff]
      %v294 = vld [vmem:[%s1 + $0x10] sm:$0xff]
      %v295 = vld [vmem:[%s1 + $0x18] sm:$0xff]
      %v296 = vld [vmem:[%s1 + $0x20] sm:$0xf]
      %v297 = vld [vmem:[%s2] sm:$0x1]
      %v298 = vld [vmem:[#allocation2] sm:$0xff]
      %v299 = vld [vmem:[#allocation2 + $0x8] sm:$0xff]
      %v300 = vld [vmem:[#allocation2 + $0x18] sm:$0xff]
      %v301 = vld [vmem:[#allocation2 + $0x20] sm:$0xff]
      %v302 = vld [vmem:[#allocation2 + $0x30] sm:$0xff]
      %v303 = vld [vmem:[#allocation2 + $0x38] sm:$0xff]
      %v304 = vld [vmem:[#allocation2 + $0x48] sm:$0xff]
      %v305 = vld [vmem:[#allocation2 + $0x50] sm:$0xff]
      %v306 = vld [vmem:[#allocation2 + $0x60] sm:$0xff]
      %v307 = vld [vmem:[#allocation2 + $0x68] sm:$0xff]
      %v308 = vld [vmem:[#allocation2 + $0x78] sm:$0xff]
      %v309 = vld [vmem:[#allocation2 + $0x80] sm:$0xff]
      %v310 = vld [vmem:[#allocation2 + $0x90] sm:$0xff]
      %v311 = vld [vmem:[#allocation2 + $0x98] sm:$0xff]
      %v312 = vld [vmem:[#allocation2 + $0xa8] sm:$0xff]
      %v313 = vld [vmem:[#allocation2 + $0xb0] sm:$0xff]
      %v314 = vld [vmem:[#allocation2 + $0xc0] sm:$0xff]
      %v315 = vld [vmem:[#allocation2 + $0xc8] sm:$0xff]
      %v316 = vld [vmem:[#allocation2 + $0xd8] sm:$0xff]
      %v317 = vld [vmem:[#allocation2 + $0xe0] sm:$0xff]
      %v318 = vld [vmem:[#allocation2 + $0xf0] sm:$0xff]
      %v319 = vld [vmem:[#allocation2 + $0xf8] sm:$0xff]
      %v320 = vld [vmem:[#allocation2 + $0x108] sm:$0xff]
      %v321 = vld [vmem:[#allocation2 + $0x110] sm:$0xff]
      %v322 = vld [vmem:[#allocation2 + $0x120] sm:$0xff]
      %v323 = vld [vmem:[#allocation2 + $0x128] sm:$0xff]
      %v324 = vld [vmem:[#allocation2 + $0x138] sm:$0xff]
      %v325 = vld [vmem:[#allocation2 + $0x140] sm:$0xff]
      %v326 = vld [vmem:[#allocation2 + $0x150] sm:$0xff]
      %v327 = vld [vmem:[#allocation2 + $0x158] sm:$0xff]
      %v328 = vld [vmem:[#allocation2 + $0x168] sm:$0xff]
      %v329 = vld [vmem:[#allocation2 + $0x170] sm:$0xff]
      %v330 = vld [vmem:[#allocation2 + $0x1] sm:$0xff]
      %v331 = vld [vmem:[#allocation2 + $0x9] sm:$0xff]
      %v332 = vld [vmem:[#allocation2 + $0x19] sm:$0xff]
      %v333 = vld [vmem:[#allocation2 + $0x21] sm:$0xff]
      %v334 = vld [vmem:[#allocation2 + $0x31] sm:$0xff]
      %v335 = vld [vmem:[#allocation2 + $0x39] sm:$0xff]
      %v336 = vld [vmem:[#allocation2 + $0x49] sm:$0xff]
      %v337 = vld [vmem:[#allocation2 + $0x51] sm:$0xff]
      %v338 = vld [vmem:[#allocation2 + $0x61] sm:$0xff]
      %v339 = vld [vmem:[#allocation2 + $0x69] sm:$0xff]
      %v340 = vld [vmem:[#allocation2 + $0x79] sm:$0xff]
      %v341 = vld [vmem:[#allocation2 + $0x81] sm:$0xff]
      %v342 = vld [vmem:[#allocation2 + $0x91] sm:$0xff]
      %v343 = vld [vmem:[#allocation2 + $0x99] sm:$0xff]
      %v344 = vld [vmem:[#allocation2 + $0xa9] sm:$0xff]
      %v345 = vld [vmem:[#allocation2 + $0xb1] sm:$0xff]
      %v346 = vld [vmem:[#allocation2 + $0xc1] sm:$0xff]
      %v347 = vld [vmem:[#allocation2 + $0xc9] sm:$0xff]
      %v348 = vld [vmem:[#allocation2 + $0xd9] sm:$0xff]
      %v349 = vld [vmem:[#allocation2 + $0xe1] sm:$0xff]
      %v350 = vld [vmem:[#allocation2 + $0xf1] sm:$0xff]
      %v351 = vld [vmem:[#allocation2 + $0xf9] sm:$0xff]
      %v352 = vld [vmem:[#allocation2 + $0x109] sm:$0xff]
      %v353 = vld [vmem:[#allocation2 + $0x111] sm:$0xff]
      %v354 = vld [vmem:[#allocation2 + $0x121] sm:$0xff]
      %v355 = vld [vmem:[#allocation2 + $0x129] sm:$0xff]
      %v356 = vld [vmem:[#allocation2 + $0x139] sm:$0xff]
      %v357 = vld [vmem:[#allocation2 + $0x141] sm:$0xff]
      %v358 = vld [vmem:[#allocation2 + $0x151] sm:$0xff]
      %v359 = vld [vmem:[#allocation2 + $0x159] sm:$0xff]
      %v360 = vld [vmem:[#allocation2 + $0x169] sm:$0xff]
      %v361 = vld [vmem:[#allocation2 + $0x171] sm:$0xff]
      %v362 = vld [vmem:[#allocation2 + $0x2] sm:$0xff]
      %v363 = vld [vmem:[#allocation2 + $0xa] sm:$0xff]
      %v364 = vld [vmem:[#allocation2 + $0x1a] sm:$0xff]
      %v365 = vld [vmem:[#allocation2 + $0x22] sm:$0xff]
      %v366 = vld [vmem:[#allocation2 + $0x32] sm:$0xff]
      %v367 = vld [vmem:[#allocation2 + $0x3a] sm:$0xff]
      %v368 = vld [vmem:[#allocation2 + $0x4a] sm:$0xff]
      %v369 = vld [vmem:[#allocation2 + $0x52] sm:$0xff]
      %v370 = vld [vmem:[#allocation2 + $0x62] sm:$0xff]
      %v371 = vld [vmem:[#allocation2 + $0x6a] sm:$0xff]
      %v372 = vld [vmem:[#allocation2 + $0x7a] sm:$0xff]
      %v373 = vld [vmem:[#allocation2 + $0x82] sm:$0xff]
      %v374 = vld [vmem:[#allocation2 + $0x92] sm:$0xff]
      %v375 = vld [vmem:[#allocation2 + $0x9a] sm:$0xff]
      %v376 = vld [vmem:[#allocation2 + $0xaa] sm:$0xff]
      %v377 = vld [vmem:[#allocation2 + $0xb2] sm:$0xff]
      %v378 = vld [vmem:[#allocation2 + $0xc2] sm:$0xff]
      %v379 = vld [vmem:[#allocation2 + $0xca] sm:$0xff]
      %v380 = vld [vmem:[#allocation2 + $0xda] sm:$0xff]
      %v381 = vld [vmem:[#allocation2 + $0xe2] sm:$0xff]
      %v382 = vld [vmem:[#allocation2 + $0xf2] sm:$0xff]
      %v383 = vld [vmem:[#allocation2 + $0xfa] sm:$0xff]
      %v384 = vld [vmem:[#allocation2 + $0x10a] sm:$0xff]
      %v385 = vld [vmem:[#allocation2 + $0x112] sm:$0xff]
      %v386 = vld [vmem:[#allocation2 + $0x122] sm:$0xff]
      %v387 = vld [vmem:[#allocation2 + $0x12a] sm:$0xff]
      %v388 = vld [vmem:[#allocation2 + $0x13a] sm:$0xff]
      %v389 = vld [vmem:[#allocation2 + $0x142] sm:$0xff]
      %v390 = vld [vmem:[#allocation2 + $0x152] sm:$0xff]
      %v391 = vld [vmem:[#allocation2 + $0x15a] sm:$0xff]
      %v392 = vld [vmem:[#allocation2 + $0x16a] sm:$0xff]
      %v393 = vld [vmem:[#allocation2 + $0x172] sm:$0xff]
      %v394 = vld [vmem:[%s259] sm:$0xff]
      %v395 = vld [vmem:[%s259 + $0x8] sm:$0xff]
      %v396 = vld [vmem:[%s259 + $0x18] sm:$0xff]
      %v397 = vld [vmem:[%s259 + $0x20] sm:$0xff]
      %v398 = vld [vmem:[%s259 + $0x30] sm:$0xff]
      %v399 = vld [vmem:[%s259 + $0x38] sm:$0xff]
      %v400 = vld [vmem:[%s259 + $0x48] sm:$0xff]
      %v401 = vld [vmem:[%s259 + $0x50] sm:$0xff]
      %v402 = vld [vmem:[%s259 + $0x60] sm:$0xff]
      %v403 = vld [vmem:[%s259 + $0x68] sm:$0xff]
      %v404 = vld [vmem:[%s259 + $0x78] sm:$0xff]
      %v405 = vld [vmem:[%s259 + $0x80] sm:$0xff]
      %v406 = vld [vmem:[%s259 + $0x90] sm:$0xff]
      %v407 = vld [vmem:[%s259 + $0x98] sm:$0xff]
      %v408 = vld [vmem:[%s259 + $0xa8] sm:$0xff]
      %v409 = vld [vmem:[%s259 + $0xb0] sm:$0xff]
      %v410 = vld [vmem:[%s259 + $0xc0] sm:$0xff]
      %v411 = vld [vmem:[%s259 + $0xc8] sm:$0xff]
      %v412 = vld [vmem:[%s259 + $0xd8] sm:$0xff]
      %v413 = vld [vmem:[%s259 + $0xe0] sm:$0xff]
      %v414 = vld [vmem:[%s259 + $0xf0] sm:$0xff]
      %v415 = vld [vmem:[%s259 + $0xf8] sm:$0xff]
      %v416 = vld [vmem:[%s259 + $0x108] sm:$0xff]
      %v417 = vld [vmem:[%s259 + $0x110] sm:$0xff]
      %v418 = vld [vmem:[%s259 + $0x120] sm:$0xff]
      %v419 = vld [vmem:[%s259 + $0x128] sm:$0xff]
      %v420 = vld [vmem:[%s259 + $0x138] sm:$0xff]
      %v421 = vld [vmem:[%s259 + $0x140] sm:$0xff]
      %v422 = vld [vmem:[%s259 + $0x150] sm:$0xff]
      %v423 = vld [vmem:[%s259 + $0x158] sm:$0xff]
      %v424 = vld [vmem:[%s259 + $0x168] sm:$0xff]
      %v425 = vld [vmem:[%s259 + $0x170] sm:$0xff]
      %v426 = vld [vmem:[%s259 + $0x1] sm:$0xff]
      %v427 = vld [vmem:[%s259 + $0x9] sm:$0xff]
      %v428 = vld [vmem:[%s259 + $0x19] sm:$0xff]
      %v429 = vld [vmem:[%s259 + $0x21] sm:$0xff]
      %v430 = vld [vmem:[%s259 + $0x31] sm:$0xff]
      %v431 = vld [vmem:[%s259 + $0x39] sm:$0xff]
      %v432 = vld [vmem:[%s259 + $0x49] sm:$0xff]
      %v433 = vld [vmem:[%s259 + $0x51] sm:$0xff]
      %v434 = vld [vmem:[%s259 + $0x61] sm:$0xff]
      %v435 = vld [vmem:[%s259 + $0x69] sm:$0xff]
      %v436 = vld [vmem:[%s259 + $0x79] sm:$0xff]
      %v437 = vld [vmem:[%s259 + $0x81] sm:$0xff]
      %v438 = vld [vmem:[%s259 + $0x91] sm:$0xff]
      %v439 = vld [vmem:[%s259 + $0x99] sm:$0xff]
      %v440 = vld [vmem:[%s259 + $0xa9] sm:$0xff]
      %v441 = vld [vmem:[%s259 + $0xb1] sm:$0xff]
      %v442 = vld [vmem:[%s259 + $0xc1] sm:$0xff]
      %v443 = vld [vmem:[%s259 + $0xc9] sm:$0xff]
      %v444 = vld [vmem:[%s259 + $0xd9] sm:$0xff]
      %v445 = vld [vmem:[%s259 + $0xe1] sm:$0xff]
      %v446 = vld [vmem:[%s259 + $0xf1] sm:$0xff]
      %v447 = vld [vmem:[%s259 + $0xf9] sm:$0xff]
      %v448 = vld [vmem:[%s259 + $0x109] sm:$0xff]
      %v449 = vld [vmem:[%s259 + $0x111] sm:$0xff]
      %v450 = vld [vmem:[%s259 + $0x121] sm:$0xff]
      %v451 = vld [vmem:[%s259 + $0x129] sm:$0xff]
      %v452 = vld [vmem:[%s259 + $0x139] sm:$0xff]
      %v453 = vld [vmem:[%s259 + $0x141] sm:$0xff]
      %v454 = vld [vmem:[%s259 + $0x151] sm:$0xff]
      %v455 = vld [vmem:[%s259 + $0x159] sm:$0xff]
      %v456 = vld [vmem:[%s259 + $0x169] sm:$0xff]
      %v457 = vld [vmem:[%s259 + $0x171] sm:$0xff]
      %v458 = vld [vmem:[%s259 + $0x2] sm:$0xff]
      %v459 = vld [vmem:[%s259 + $0xa] sm:$0xff]
      %v460 = vld [vmem:[%s259 + $0x1a] sm:$0xff]
      %v461 = vld [vmem:[%s259 + $0x22] sm:$0xff]
      %v462 = vld [vmem:[%s259 + $0x32] sm:$0xff]
      %v463 = vld [vmem:[%s259 + $0x3a] sm:$0xff]
      %v464 = vld [vmem:[%s259 + $0x4a] sm:$0xff]
      %v465 = vld [vmem:[%s259 + $0x52] sm:$0xff]
      %v466 = vld [vmem:[%s259 + $0x62] sm:$0xff]
      %v467 = vld [vmem:[%s259 + $0x6a] sm:$0xff]
      %v468 = vld [vmem:[%s259 + $0x7a] sm:$0xff]
      %v469 = vld [vmem:[%s259 + $0x82] sm:$0xff]
      %v470 = vld [vmem:[%s259 + $0x92] sm:$0xff]
      %v471 = vld [vmem:[%s259 + $0x9a] sm:$0xff]
      %v472 = vld [vmem:[%s259 + $0xaa] sm:$0xff]
      %v473 = vld [vmem:[%s259 + $0xb2] sm:$0xff]
      %v474 = vld [vmem:[%s259 + $0xc2] sm:$0xff]
      %v475 = vld [vmem:[%s259 + $0xca] sm:$0xff]
      %v476 = vld [vmem:[%s259 + $0xda] sm:$0xff]
      %v477 = vld [vmem:[%s259 + $0xe2] sm:$0xff]
      %v478 = vld [vmem:[%s259 + $0xf2] sm:$0xff]
      %v479 = vld [vmem:[%s259 + $0xfa] sm:$0xff]
      %v480 = vld [vmem:[%s259 + $0x10a] sm:$0xff]
      %v481 = vld [vmem:[%s259 + $0x112] sm:$0xff]
      %v482 = vld [vmem:[%s259 + $0x122] sm:$0xff]
      %v483 = vld [vmem:[%s259 + $0x12a] sm:$0xff]
      %v484 = vld [vmem:[%s259 + $0x13a] sm:$0xff]
      %v485 = vld [vmem:[%s259 + $0x142] sm:$0xff]
      %v486 = vld [vmem:[%s259 + $0x152] sm:$0xff]
      %v487 = vld [vmem:[%s259 + $0x15a] sm:$0xff]
      %v488 = vld [vmem:[%s259 + $0x16a] sm:$0xff]
      %v489 = vld [vmem:[%s259 + $0x172] sm:$0xff]
      %s490 = scalar_lea.vmem [#allocation2], 48
      %v491 = vld [vmem:[%s490] sm:$0xff]
      %v492 = vld [vmem:[%s490 + $0x8] sm:$0xff]
      %v493 = vld [vmem:[%s490 + $0x18] sm:$0xff]
      %v494 = vld [vmem:[%s490 + $0x20] sm:$0xff]
      %v495 = vld [vmem:[%s490 + $0x30] sm:$0xff]
      %v496 = vld [vmem:[%s490 + $0x38] sm:$0xff]
      %v497 = vld [vmem:[%s490 + $0x48] sm:$0xff]
      %v498 = vld [vmem:[%s490 + $0x50] sm:$0xff]
      %v499 = vld [vmem:[%s490 + $0x60] sm:$0xff]
      %v500 = vld [vmem:[%s490 + $0x68] sm:$0xff]
      %v501 = vld [vmem:[%s490 + $0x78] sm:$0xff]
      %v502 = vld [vmem:[%s490 + $0x80] sm:$0xff]
      %v503 = vld [vmem:[%s490 + $0x90] sm:$0xff]
      %v504 = vld [vmem:[%s490 + $0x98] sm:$0xff]
      %v505 = vld [vmem:[%s490 + $0xa8] sm:$0xff]
      %v506 = vld [vmem:[%s490 + $0xb0] sm:$0xff]
      %v507 = vld [vmem:[%s490 + $0xc0] sm:$0xff]
      %v508 = vld [vmem:[%s490 + $0xc8] sm:$0xff]
      %v509 = vld [vmem:[%s490 + $0xd8] sm:$0xff]
      %v510 = vld [vmem:[%s490 + $0xe0] sm:$0xff]
      %v511 = vld [vmem:[%s490 + $0xf0] sm:$0xff]
      %v512 = vld [vmem:[%s490 + $0xf8] sm:$0xff]
      %v513 = vld [vmem:[%s490 + $0x108] sm:$0xff]
      %v514 = vld [vmem:[%s490 + $0x110] sm:$0xff]
      %v515 = vld [vmem:[%s490 + $0x120] sm:$0xff]
      %v516 = vld [vmem:[%s490 + $0x128] sm:$0xff]
      %v517 = vld [vmem:[%s490 + $0x138] sm:$0xff]
      %v518 = vld [vmem:[%s490 + $0x140] sm:$0xff]
      %v519 = vld [vmem:[%s490 + $0x150] sm:$0xff]
      %v520 = vld [vmem:[%s490 + $0x158] sm:$0xff]
      %v521 = vld [vmem:[%s490 + $0x168] sm:$0xff]
      %v522 = vld [vmem:[%s490 + $0x170] sm:$0xff]
      %v523 = vld [vmem:[%s490 + $0x1] sm:$0xff]
      %v524 = vld [vmem:[%s490 + $0x9] sm:$0xff]
      %v525 = vld [vmem:[%s490 + $0x19] sm:$0xff]
      %v526 = vld [vmem:[%s490 + $0x21] sm:$0xff]
      %v527 = vld [vmem:[%s490 + $0x31] sm:$0xff]
      %v528 = vld [vmem:[%s490 + $0x39] sm:$0xff]
      %v529 = vld [vmem:[%s490 + $0x49] sm:$0xff]
      %v530 = vld [vmem:[%s490 + $0x51] sm:$0xff]
      %v531 = vld [vmem:[%s490 + $0x61] sm:$0xff]
      %v532 = vld [vmem:[%s490 + $0x69] sm:$0xff]
      %v533 = vld [vmem:[%s490 + $0x79] sm:$0xff]
      %v534 = vld [vmem:[%s490 + $0x81] sm:$0xff]
      %v535 = vld [vmem:[%s490 + $0x91] sm:$0xff]
      %v536 = vld [vmem:[%s490 + $0x99] sm:$0xff]
      %v537 = vld [vmem:[%s490 + $0xa9] sm:$0xff]
      %v538 = vld [vmem:[%s490 + $0xb1] sm:$0xff]
      %v539 = vld [vmem:[%s490 + $0xc1] sm:$0xff]
      %v540 = vld [vmem:[%s490 + $0xc9] sm:$0xff]
      %v541 = vld [vmem:[%s490 + $0xd9] sm:$0xff]
      %v542 = vld [vmem:[%s490 + $0xe1] sm:$0xff]
      %v543 = vld [vmem:[%s490 + $0xf1] sm:$0xff]
      %v544 = vld [vmem:[%s490 + $0xf9] sm:$0xff]
      %v545 = vld [vmem:[%s490 + $0x109] sm:$0xff]
      %v546 = vld [vmem:[%s490 + $0x111] sm:$0xff]
      %v547 = vld [vmem:[%s490 + $0x121] sm:$0xff]
      %v548 = vld [vmem:[%s490 + $0x129] sm:$0xff]
      %v549 = vld [vmem:[%s490 + $0x139] sm:$0xff]
      %v550 = vld [vmem:[%s490 + $0x141] sm:$0xff]
      %v551 = vld [vmem:[%s490 + $0x151] sm:$0xff]
      %v552 = vld [vmem:[%s490 + $0x159] sm:$0xff]
      %v553 = vld [vmem:[%s490 + $0x169] sm:$0xff]
      %v554 = vld [vmem:[%s490 + $0x171] sm:$0xff]
      %v555 = vld [vmem:[%s490 + $0x2] sm:$0xff]
      %v556 = vld [vmem:[%s490 + $0xa] sm:$0xff]
      %v557 = vld [vmem:[%s490 + $0x1a] sm:$0xff]
      %v558 = vld [vmem:[%s490 + $0x22] sm:$0xff]
      %v559 = vld [vmem:[%s490 + $0x32] sm:$0xff]
      %v560 = vld [vmem:[%s490 + $0x3a] sm:$0xff]
      %v561 = vld [vmem:[%s490 + $0x4a] sm:$0xff]
      %v562 = vld [vmem:[%s490 + $0x52] sm:$0xff]
      %v563 = vld [vmem:[%s490 + $0x62] sm:$0xff]
      %v564 = vld [vmem:[%s490 + $0x6a] sm:$0xff]
      %v565 = vld [vmem:[%s490 + $0x7a] sm:$0xff]
      %v566 = vld [vmem:[%s490 + $0x82] sm:$0xff]
      %v567 = vld [vmem:[%s490 + $0x92] sm:$0xff]
      %v568 = vld [vmem:[%s490 + $0x9a] sm:$0xff]
      %v569 = vld [vmem:[%s490 + $0xaa] sm:$0xff]
      %v570 = vld [vmem:[%s490 + $0xb2] sm:$0xff]
      %v571 = vld [vmem:[%s490 + $0xc2] sm:$0xff]
      %v572 = vld [vmem:[%s490 + $0xca] sm:$0xff]
      %v573 = vld [vmem:[%s490 + $0xda] sm:$0xff]
      %v574 = vld [vmem:[%s490 + $0xe2] sm:$0xff]
      %v575 = vld [vmem:[%s490 + $0xf2] sm:$0xff]
      %v576 = vld [vmem:[%s490 + $0xfa] sm:$0xff]
      %v577 = vld [vmem:[%s490 + $0x10a] sm:$0xff]
      %v578 = vld [vmem:[%s490 + $0x112] sm:$0xff]
      %v579 = vld [vmem:[%s490 + $0x122] sm:$0xff]
      %v580 = vld [vmem:[%s490 + $0x12a] sm:$0xff]
      %v581 = vld [vmem:[%s490 + $0x13a] sm:$0xff]
      %v582 = vld [vmem:[%s490 + $0x142] sm:$0xff]
      %v583 = vld [vmem:[%s490 + $0x152] sm:$0xff]
      %v584 = vld [vmem:[%s490 + $0x15a] sm:$0xff]
      %v585 = vld [vmem:[%s490 + $0x16a] sm:$0xff]
      %v586 = vld [vmem:[%s490 + $0x172] sm:$0xff]
      %619 = vrot.lane.b32.xlu0 %v330, 4
      %v620 = vpop.permute.xlu0 %619
      %621 = vrot.lane.b32.xlu0 %v331, 4
      %v622 = vpop.permute.xlu0 %621
      %623 = vrot.lane.b32.xlu0 %v332, 4
      %v624 = vpop.permute.xlu0 %623
      %625 = vrot.lane.b32.xlu0 %v333, 4
      %v626 = vpop.permute.xlu0 %625
      %627 = vrot.lane.b32.xlu0 %v334, 4
      %v628 = vpop.permute.xlu0 %627
      %629 = vrot.lane.b32.xlu0 %v335, 4
      %v630 = vpop.permute.xlu0 %629
      %631 = vrot.lane.b32.xlu0 %v336, 4
      %v632 = vpop.permute.xlu0 %631
      %633 = vrot.lane.b32.xlu0 %v337, 4
      %v634 = vpop.permute.xlu0 %633
      %635 = vrot.lane.b32.xlu0 %v338, 4
      %v636 = vpop.permute.xlu0 %635
      %637 = vrot.lane.b32.xlu0 %v339, 4
      %v638 = vpop.permute.xlu0 %637
      %639 = vrot.lane.b32.xlu0 %v340, 4
      %v640 = vpop.permute.xlu0 %639
      %641 = vrot.lane.b32.xlu0 %v341, 4
      %v642 = vpop.permute.xlu0 %641
      %643 = vrot.lane.b32.xlu0 %v342, 4
      %v644 = vpop.permute.xlu0 %643
      %645 = vrot.lane.b32.xlu0 %v343, 4
      %v646 = vpop.permute.xlu0 %645
      %647 = vrot.lane.b32.xlu0 %v344, 4
      %v648 = vpop.permute.xlu0 %647
      %649 = vrot.lane.b32.xlu0 %v345, 4
      %v650 = vpop.permute.xlu0 %649
      %651 = vrot.lane.b32.xlu0 %v346, 4
      %v652 = vpop.permute.xlu0 %651
      %653 = vrot.lane.b32.xlu0 %v347, 4
      %v654 = vpop.permute.xlu0 %653
      %655 = vrot.lane.b32.xlu0 %v348, 4
      %v656 = vpop.permute.xlu0 %655
      %657 = vrot.lane.b32.xlu0 %v349, 4
      %v658 = vpop.permute.xlu0 %657
      %659 = vrot.lane.b32.xlu0 %v350, 4
      %v660 = vpop.permute.xlu0 %659
      %661 = vrot.lane.b32.xlu0 %v351, 4
      %v662 = vpop.permute.xlu0 %661
      %663 = vrot.lane.b32.xlu0 %v352, 4
      %v664 = vpop.permute.xlu0 %663
      %665 = vrot.lane.b32.xlu0 %v353, 4
      %v666 = vpop.permute.xlu0 %665
      %667 = vrot.lane.b32.xlu0 %v354, 4
      %v668 = vpop.permute.xlu0 %667
      %669 = vrot.lane.b32.xlu0 %v355, 4
      %v670 = vpop.permute.xlu0 %669
      %671 = vrot.lane.b32.xlu0 %v356, 4
      %v672 = vpop.permute.xlu0 %671
      %673 = vrot.lane.b32.xlu0 %v357, 4
      %v674 = vpop.permute.xlu0 %673
      %675 = vrot.lane.b32.xlu0 %v358, 4
      %v676 = vpop.permute.xlu0 %675
      %677 = vrot.lane.b32.xlu0 %v359, 4
      %v678 = vpop.permute.xlu0 %677
      %679 = vrot.lane.b32.xlu0 %v360, 4
      %v680 = vpop.permute.xlu0 %679
      %681 = vrot.lane.b32.xlu0 %v361, 4
      %v682 = vpop.permute.xlu0 %681
      %747 = vrot.lane.b32.xlu0 %v362, 8
      %v748 = vpop.permute.xlu0 %747
      %749 = vrot.lane.b32.xlu0 %v363, 8
      %v750 = vpop.permute.xlu0 %749
      %751 = vrot.lane.b32.xlu0 %v364, 8
      %v752 = vpop.permute.xlu0 %751
      %753 = vrot.lane.b32.xlu0 %v365, 8
      %v754 = vpop.permute.xlu0 %753
      %755 = vrot.lane.b32.xlu0 %v366, 8
      %v756 = vpop.permute.xlu0 %755
      %757 = vrot.lane.b32.xlu0 %v367, 8
      %v758 = vpop.permute.xlu0 %757
      %759 = vrot.lane.b32.xlu0 %v368, 8
      %v760 = vpop.permute.xlu0 %759
      %761 = vrot.lane.b32.xlu0 %v369, 8
      %v762 = vpop.permute.xlu0 %761
      %763 = vrot.lane.b32.xlu0 %v370, 8
      %v764 = vpop.permute.xlu0 %763
      %765 = vrot.lane.b32.xlu0 %v371, 8
      %v766 = vpop.permute.xlu0 %765
      %767 = vrot.lane.b32.xlu0 %v372, 8
      %v768 = vpop.permute.xlu0 %767
      %769 = vrot.lane.b32.xlu0 %v373, 8
      %v770 = vpop.permute.xlu0 %769
      %771 = vrot.lane.b32.xlu0 %v374, 8
      %v772 = vpop.permute.xlu0 %771
      %773 = vrot.lane.b32.xlu0 %v375, 8
      %v774 = vpop.permute.xlu0 %773
      %775 = vrot.lane.b32.xlu0 %v376, 8
      %v776 = vpop.permute.xlu0 %775
      %777 = vrot.lane.b32.xlu0 %v377, 8
      %v778 = vpop.permute.xlu0 %777
      %779 = vrot.lane.b32.xlu0 %v378, 8
      %v780 = vpop.permute.xlu0 %779
      %781 = vrot.lane.b32.xlu0 %v379, 8
      %v782 = vpop.permute.xlu0 %781
      %783 = vrot.lane.b32.xlu0 %v380, 8
      %v784 = vpop.permute.xlu0 %783
      %785 = vrot.lane.b32.xlu0 %v381, 8
      %v786 = vpop.permute.xlu0 %785
      %787 = vrot.lane.b32.xlu0 %v382, 8
      %v788 = vpop.permute.xlu0 %787
      %789 = vrot.lane.b32.xlu0 %v383, 8
      %v790 = vpop.permute.xlu0 %789
      %791 = vrot.lane.b32.xlu0 %v384, 8
      %v792 = vpop.permute.xlu0 %791
      %793 = vrot.lane.b32.xlu0 %v385, 8
      %v794 = vpop.permute.xlu0 %793
      %795 = vrot.lane.b32.xlu0 %v386, 8
      %v796 = vpop.permute.xlu0 %795
      %797 = vrot.lane.b32.xlu0 %v387, 8
      %v798 = vpop.permute.xlu0 %797
      %799 = vrot.lane.b32.xlu0 %v388, 8
      %v800 = vpop.permute.xlu0 %799
      %801 = vrot.lane.b32.xlu0 %v389, 8
      %v802 = vpop.permute.xlu0 %801
      %803 = vrot.lane.b32.xlu0 %v390, 8
      %v804 = vpop.permute.xlu0 %803
      %805 = vrot.lane.b32.xlu0 %v391, 8
      %v806 = vpop.permute.xlu0 %805
      %807 = vrot.lane.b32.xlu0 %v392, 8
      %v808 = vpop.permute.xlu0 %807
      %809 = vrot.lane.b32.xlu0 %v393, 8
      %v810 = vpop.permute.xlu0 %809
      %875 = vrot.lane.b32.xlu0 %v394, 12
      %v876 = vpop.permute.xlu0 %875
      %877 = vrot.lane.b32.xlu0 %v395, 12
      %v878 = vpop.permute.xlu0 %877
      %879 = vrot.lane.b32.xlu0 %v396, 12
      %v880 = vpop.permute.xlu0 %879
      %881 = vrot.lane.b32.xlu0 %v397, 12
      %v882 = vpop.permute.xlu0 %881
      %883 = vrot.lane.b32.xlu0 %v398, 12
      %v884 = vpop.permute.xlu0 %883
      %885 = vrot.lane.b32.xlu0 %v399, 12
      %v886 = vpop.permute.xlu0 %885
      %887 = vrot.lane.b32.xlu0 %v400, 12
      %v888 = vpop.permute.xlu0 %887
      %889 = vrot.lane.b32.xlu0 %v401, 12
      %v890 = vpop.permute.xlu0 %889
      %891 = vrot.lane.b32.xlu0 %v402, 12
      %v892 = vpop.permute.xlu0 %891
      %893 = vrot.lane.b32.xlu0 %v403, 12
      %v894 = vpop.permute.xlu0 %893
      %895 = vrot.lane.b32.xlu0 %v404, 12
      %v896 = vpop.permute.xlu0 %895
      %897 = vrot.lane.b32.xlu0 %v405, 12
      %v898 = vpop.permute.xlu0 %897
      %899 = vrot.lane.b32.xlu0 %v406, 12
      %v900 = vpop.permute.xlu0 %899
      %901 = vrot.lane.b32.xlu0 %v407, 12
      %v902 = vpop.permute.xlu0 %901
      %903 = vrot.lane.b32.xlu0 %v408, 12
      %v904 = vpop.permute.xlu0 %903
      %905 = vrot.lane.b32.xlu0 %v409, 12
      %v906 = vpop.permute.xlu0 %905
      %907 = vrot.lane.b32.xlu0 %v410, 12
      %v908 = vpop.permute.xlu0 %907
      %909 = vrot.lane.b32.xlu0 %v411, 12
      %v910 = vpop.permute.xlu0 %909
      %911 = vrot.lane.b32.xlu0 %v412, 12
      %v912 = vpop.permute.xlu0 %911
      %913 = vrot.lane.b32.xlu0 %v413, 12
      %v914 = vpop.permute.xlu0 %913
      %915 = vrot.lane.b32.xlu0 %v414, 12
      %v916 = vpop.permute.xlu0 %915
      %917 = vrot.lane.b32.xlu0 %v415, 12
      %v918 = vpop.permute.xlu0 %917
      %919 = vrot.lane.b32.xlu0 %v416, 12
      %v920 = vpop.permute.xlu0 %919
      %921 = vrot.lane.b32.xlu0 %v417, 12
      %v922 = vpop.permute.xlu0 %921
      %923 = vrot.lane.b32.xlu0 %v418, 12
      %v924 = vpop.permute.xlu0 %923
      %925 = vrot.lane.b32.xlu0 %v419, 12
      %v926 = vpop.permute.xlu0 %925
      %927 = vrot.lane.b32.xlu0 %v420, 12
      %v928 = vpop.permute.xlu0 %927
      %929 = vrot.lane.b32.xlu0 %v421, 12
      %v930 = vpop.permute.xlu0 %929
      %931 = vrot.lane.b32.xlu0 %v422, 12
      %v932 = vpop.permute.xlu0 %931
      %933 = vrot.lane.b32.xlu0 %v423, 12
      %v934 = vpop.permute.xlu0 %933
      %935 = vrot.lane.b32.xlu0 %v424, 12
      %v936 = vpop.permute.xlu0 %935
      %937 = vrot.lane.b32.xlu0 %v425, 12
      %v938 = vpop.permute.xlu0 %937
      %1003 = vrot.lane.b32.xlu0 %v426, 16
      %v1004 = vpop.permute.xlu0 %1003
      %1005 = vrot.lane.b32.xlu0 %v427, 16
      %v1006 = vpop.permute.xlu0 %1005
      %1007 = vrot.lane.b32.xlu0 %v428, 16
      %v1008 = vpop.permute.xlu0 %1007
      %1009 = vrot.lane.b32.xlu0 %v429, 16
      %v1010 = vpop.permute.xlu0 %1009
      %1011 = vrot.lane.b32.xlu0 %v430, 16
      %v1012 = vpop.permute.xlu0 %1011
      %1013 = vrot.lane.b32.xlu0 %v431, 16
      %v1014 = vpop.permute.xlu0 %1013
      %1015 = vrot.lane.b32.xlu0 %v432, 16
      %v1016 = vpop.permute.xlu0 %1015
      %1017 = vrot.lane.b32.xlu0 %v433, 16
      %v1018 = vpop.permute.xlu0 %1017
      %1019 = vrot.lane.b32.xlu0 %v434, 16
      %v1020 = vpop.permute.xlu0 %1019
      %1021 = vrot.lane.b32.xlu0 %v435, 16
      %v1022 = vpop.permute.xlu0 %1021
      %1023 = vrot.lane.b32.xlu0 %v436, 16
      %v1024 = vpop.permute.xlu0 %1023
      %1025 = vrot.lane.b32.xlu0 %v437, 16
      %v1026 = vpop.permute.xlu0 %1025
      %1027 = vrot.lane.b32.xlu0 %v438, 16
      %v1028 = vpop.permute.xlu0 %1027
      %1029 = vrot.lane.b32.xlu0 %v439, 16
      %v1030 = vpop.permute.xlu0 %1029
      %1031 = vrot.lane.b32.xlu0 %v440, 16
      %v1032 = vpop.permute.xlu0 %1031
      %1033 = vrot.lane.b32.xlu0 %v441, 16
      %v1034 = vpop.permute.xlu0 %1033
      %1035 = vrot.lane.b32.xlu0 %v442, 16
      %v1036 = vpop.permute.xlu0 %1035
      %1037 = vrot.lane.b32.xlu0 %v443, 16
      %v1038 = vpop.permute.xlu0 %1037
      %1039 = vrot.lane.b32.xlu0 %v444, 16
      %v1040 = vpop.permute.xlu0 %1039
      %1041 = vrot.lane.b32.xlu0 %v445, 16
      %v1042 = vpop.permute.xlu0 %1041
      %1043 = vrot.lane.b32.xlu0 %v446, 16
      %v1044 = vpop.permute.xlu0 %1043
      %1045 = vrot.lane.b32.xlu0 %v447, 16
      %v1046 = vpop.permute.xlu0 %1045
      %1047 = vrot.lane.b32.xlu0 %v448, 16
      %v1048 = vpop.permute.xlu0 %1047
      %1049 = vrot.lane.b32.xlu0 %v449, 16
      %v1050 = vpop.permute.xlu0 %1049
      %1051 = vrot.lane.b32.xlu0 %v450, 16
      %v1052 = vpop.permute.xlu0 %1051
      %1053 = vrot.lane.b32.xlu0 %v451, 16
      %v1054 = vpop.permute.xlu0 %1053
      %1055 = vrot.lane.b32.xlu0 %v452, 16
      %v1056 = vpop.permute.xlu0 %1055
      %1057 = vrot.lane.b32.xlu0 %v453, 16
      %v1058 = vpop.permute.xlu0 %1057
      %1059 = vrot.lane.b32.xlu0 %v454, 16
      %v1060 = vpop.permute.xlu0 %1059
      %1061 = vrot.lane.b32.xlu0 %v455, 16
      %v1062 = vpop.permute.xlu0 %1061
      %1063 = vrot.lane.b32.xlu0 %v456, 16
      %v1064 = vpop.permute.xlu0 %1063
      %1065 = vrot.lane.b32.xlu0 %v457, 16
      %v1066 = vpop.permute.xlu0 %1065
      %1131 = vrot.lane.b32.xlu0 %v458, 20
      %v1132 = vpop.permute.xlu0 %1131
      %1133 = vrot.lane.b32.xlu0 %v459, 20
      %v1134 = vpop.permute.xlu0 %1133
      %1135 = vrot.lane.b32.xlu0 %v460, 20
      %v1136 = vpop.permute.xlu0 %1135
      %1137 = vrot.lane.b32.xlu0 %v461, 20
      %v1138 = vpop.permute.xlu0 %1137
      %1139 = vrot.lane.b32.xlu0 %v462, 20
      %v1140 = vpop.permute.xlu0 %1139
      %1141 = vrot.lane.b32.xlu0 %v463, 20
      %v1142 = vpop.permute.xlu0 %1141
      %1143 = vrot.lane.b32.xlu0 %v464, 20
      %v1144 = vpop.permute.xlu0 %1143
      %1145 = vrot.lane.b32.xlu0 %v465, 20
      %v1146 = vpop.permute.xlu0 %1145
      %1147 = vrot.lane.b32.xlu0 %v466, 20
      %v1148 = vpop.permute.xlu0 %1147
      %1149 = vrot.lane.b32.xlu0 %v467, 20
      %v1150 = vpop.permute.xlu0 %1149
      %1151 = vrot.lane.b32.xlu0 %v468, 20
      %v1152 = vpop.permute.xlu0 %1151
      %1153 = vrot.lane.b32.xlu0 %v469, 20
      %v1154 = vpop.permute.xlu0 %1153
      %1155 = vrot.lane.b32.xlu0 %v470, 20
      %v1156 = vpop.permute.xlu0 %1155
      %1157 = vrot.lane.b32.xlu0 %v471, 20
      %v1158 = vpop.permute.xlu0 %1157
      %1159 = vrot.lane.b32.xlu0 %v472, 20
      %v1160 = vpop.permute.xlu0 %1159
      %1161 = vrot.lane.b32.xlu0 %v473, 20
      %v1162 = vpop.permute.xlu0 %1161
      %1163 = vrot.lane.b32.xlu0 %v474, 20
      %v1164 = vpop.permute.xlu0 %1163
      %1165 = vrot.lane.b32.xlu0 %v475, 20
      %v1166 = vpop.permute.xlu0 %1165
      %1167 = vrot.lane.b32.xlu0 %v476, 20
      %v1168 = vpop.permute.xlu0 %1167
      %1169 = vrot.lane.b32.xlu0 %v477, 20
      %v1170 = vpop.permute.xlu0 %1169
      %1171 = vrot.lane.b32.xlu0 %v478, 20
      %v1172 = vpop.permute.xlu0 %1171
      %1173 = vrot.lane.b32.xlu0 %v479, 20
      %v1174 = vpop.permute.xlu0 %1173
      %1175 = vrot.lane.b32.xlu0 %v480, 20
      %v1176 = vpop.permute.xlu0 %1175
      %1177 = vrot.lane.b32.xlu0 %v481, 20
      %v1178 = vpop.permute.xlu0 %1177
      %1179 = vrot.lane.b32.xlu0 %v482, 20
      %v1180 = vpop.permute.xlu0 %1179
      %1181 = vrot.lane.b32.xlu0 %v483, 20
      %v1182 = vpop.permute.xlu0 %1181
      %1183 = vrot.lane.b32.xlu0 %v484, 20
      %v1184 = vpop.permute.xlu0 %1183
      %1185 = vrot.lane.b32.xlu0 %v485, 20
      %v1186 = vpop.permute.xlu0 %1185
      %1187 = vrot.lane.b32.xlu0 %v486, 20
      %v1188 = vpop.permute.xlu0 %1187
      %1189 = vrot.lane.b32.xlu0 %v487, 20
      %v1190 = vpop.permute.xlu0 %1189
      %1191 = vrot.lane.b32.xlu0 %v488, 20
      %v1192 = vpop.permute.xlu0 %1191
      %1193 = vrot.lane.b32.xlu0 %v489, 20
      %v1194 = vpop.permute.xlu0 %1193
      %1259 = vrot.lane.b32.xlu0 %v491, 24
      %v1260 = vpop.permute.xlu0 %1259
      %1261 = vrot.lane.b32.xlu0 %v492, 24
      %v1262 = vpop.permute.xlu0 %1261
      %1263 = vrot.lane.b32.xlu0 %v493, 24
      %v1264 = vpop.permute.xlu0 %1263
      %1265 = vrot.lane.b32.xlu0 %v494, 24
      %v1266 = vpop.permute.xlu0 %1265
      %1267 = vrot.lane.b32.xlu0 %v495, 24
      %v1268 = vpop.permute.xlu0 %1267
      %1269 = vrot.lane.b32.xlu0 %v496, 24
      %v1270 = vpop.permute.xlu0 %1269
      %1271 = vrot.lane.b32.xlu0 %v497, 24
      %v1272 = vpop.permute.xlu0 %1271
      %1273 = vrot.lane.b32.xlu0 %v498, 24
      %v1274 = vpop.permute.xlu0 %1273
      %1275 = vrot.lane.b32.xlu0 %v499, 24
      %v1276 = vpop.permute.xlu0 %1275
      %1277 = vrot.lane.b32.xlu0 %v500, 24
      %v1278 = vpop.permute.xlu0 %1277
      %1279 = vrot.lane.b32.xlu0 %v501, 24
      %v1280 = vpop.permute.xlu0 %1279
      %1281 = vrot.lane.b32.xlu0 %v502, 24
      %v1282 = vpop.permute.xlu0 %1281
      %1283 = vrot.lane.b32.xlu0 %v503, 24
      %v1284 = vpop.permute.xlu0 %1283
      %1285 = vrot.lane.b32.xlu0 %v504, 24
      %v1286 = vpop.permute.xlu0 %1285
      %1287 = vrot.lane.b32.xlu0 %v505, 24
      %v1288 = vpop.permute.xlu0 %1287
      %1289 = vrot.lane.b32.xlu0 %v506, 24
      %v1290 = vpop.permute.xlu0 %1289
      %1291 = vrot.lane.b32.xlu0 %v507, 24
      %v1292 = vpop.permute.xlu0 %1291
      %1293 = vrot.lane.b32.xlu0 %v508, 24
      %v1294 = vpop.permute.xlu0 %1293
      %1295 = vrot.lane.b32.xlu0 %v509, 24
      %v1296 = vpop.permute.xlu0 %1295
      %1297 = vrot.lane.b32.xlu0 %v510, 24
      %v1298 = vpop.permute.xlu0 %1297
      %1299 = vrot.lane.b32.xlu0 %v511, 24
      %v1300 = vpop.permute.xlu0 %1299
      %1301 = vrot.lane.b32.xlu0 %v512, 24
      %v1302 = vpop.permute.xlu0 %1301
      %1303 = vrot.lane.b32.xlu0 %v513, 24
      %v1304 = vpop.permute.xlu0 %1303
      %1305 = vrot.lane.b32.xlu0 %v514, 24
      %v1306 = vpop.permute.xlu0 %1305
      %1307 = vrot.lane.b32.xlu0 %v515, 24
      %v1308 = vpop.permute.xlu0 %1307
      %1309 = vrot.lane.b32.xlu0 %v516, 24
      %v1310 = vpop.permute.xlu0 %1309
      %1311 = vrot.lane.b32.xlu0 %v517, 24
      %v1312 = vpop.permute.xlu0 %1311
      %1313 = vrot.lane.b32.xlu0 %v518, 24
      %v1314 = vpop.permute.xlu0 %1313
      %1315 = vrot.lane.b32.xlu0 %v519, 24
      %v1316 = vpop.permute.xlu0 %1315
      %1317 = vrot.lane.b32.xlu0 %v520, 24
      %v1318 = vpop.permute.xlu0 %1317
      %1319 = vrot.lane.b32.xlu0 %v521, 24
      %v1320 = vpop.permute.xlu0 %1319
      %1321 = vrot.lane.b32.xlu0 %v522, 24
      %v1322 = vpop.permute.xlu0 %1321
      %1387 = vrot.lane.b32.xlu0 %v523, 28
      %v1388 = vpop.permute.xlu0 %1387
      %1389 = vrot.lane.b32.xlu0 %v524, 28
      %v1390 = vpop.permute.xlu0 %1389
      %1391 = vrot.lane.b32.xlu0 %v525, 28
      %v1392 = vpop.permute.xlu0 %1391
      %1393 = vrot.lane.b32.xlu0 %v526, 28
      %v1394 = vpop.permute.xlu0 %1393
      %1395 = vrot.lane.b32.xlu0 %v527, 28
      %v1396 = vpop.permute.xlu0 %1395
      %1397 = vrot.lane.b32.xlu0 %v528, 28
      %v1398 = vpop.permute.xlu0 %1397
      %1399 = vrot.lane.b32.xlu0 %v529, 28
      %v1400 = vpop.permute.xlu0 %1399
      %1401 = vrot.lane.b32.xlu0 %v530, 28
      %v1402 = vpop.permute.xlu0 %1401
      %1403 = vrot.lane.b32.xlu0 %v531, 28
      %v1404 = vpop.permute.xlu0 %1403
      %1405 = vrot.lane.b32.xlu0 %v532, 28
      %v1406 = vpop.permute.xlu0 %1405
      %1407 = vrot.lane.b32.xlu0 %v533, 28
      %v1408 = vpop.permute.xlu0 %1407
      %1409 = vrot.lane.b32.xlu0 %v534, 28
      %v1410 = vpop.permute.xlu0 %1409
      %1411 = vrot.lane.b32.xlu0 %v535, 28
      %v1412 = vpop.permute.xlu0 %1411
      %1413 = vrot.lane.b32.xlu0 %v536, 28
      %v1414 = vpop.permute.xlu0 %1413
      %1415 = vrot.lane.b32.xlu0 %v537, 28
      %v1416 = vpop.permute.xlu0 %1415
      %1417 = vrot.lane.b32.xlu0 %v538, 28
      %v1418 = vpop.permute.xlu0 %1417
      %1419 = vrot.lane.b32.xlu0 %v539, 28
      %v1420 = vpop.permute.xlu0 %1419
      %1421 = vrot.lane.b32.xlu0 %v540, 28
      %v1422 = vpop.permute.xlu0 %1421
      %1423 = vrot.lane.b32.xlu0 %v541, 28
      %v1424 = vpop.permute.xlu0 %1423
      %1425 = vrot.lane.b32.xlu0 %v542, 28
      %v1426 = vpop.permute.xlu0 %1425
      %1427 = vrot.lane.b32.xlu0 %v543, 28
      %v1428 = vpop.permute.xlu0 %1427
      %1429 = vrot.lane.b32.xlu0 %v544, 28
      %v1430 = vpop.permute.xlu0 %1429
      %1431 = vrot.lane.b32.xlu0 %v545, 28
      %v1432 = vpop.permute.xlu0 %1431
      %1433 = vrot.lane.b32.xlu0 %v546, 28
      %v1434 = vpop.permute.xlu0 %1433
      %1435 = vrot.lane.b32.xlu0 %v547, 28
      %v1436 = vpop.permute.xlu0 %1435
      %1437 = vrot.lane.b32.xlu0 %v548, 28
      %v1438 = vpop.permute.xlu0 %1437
      %1439 = vrot.lane.b32.xlu0 %v549, 28
      %v1440 = vpop.permute.xlu0 %1439
      %1441 = vrot.lane.b32.xlu0 %v550, 28
      %v1442 = vpop.permute.xlu0 %1441
      %1443 = vrot.lane.b32.xlu0 %v551, 28
      %v1444 = vpop.permute.xlu0 %1443
      %1445 = vrot.lane.b32.xlu0 %v552, 28
      %v1446 = vpop.permute.xlu0 %1445
      %1447 = vrot.lane.b32.xlu0 %v553, 28
      %v1448 = vpop.permute.xlu0 %1447
      %1449 = vrot.lane.b32.xlu0 %v554, 28
      %v1450 = vpop.permute.xlu0 %1449
      %1515 = vrot.lane.b32.xlu0 %v555, 32
      %v1516 = vpop.permute.xlu0 %1515
      %1517 = vrot.lane.b32.xlu0 %v556, 32
      %v1518 = vpop.permute.xlu0 %1517
      %1519 = vrot.lane.b32.xlu0 %v557, 32
      %v1520 = vpop.permute.xlu0 %1519
      %1521 = vrot.lane.b32.xlu0 %v558, 32
      %v1522 = vpop.permute.xlu0 %1521
      %1523 = vrot.lane.b32.xlu0 %v559, 32
      %v1524 = vpop.permute.xlu0 %1523
      %1525 = vrot.lane.b32.xlu0 %v560, 32
      %v1526 = vpop.permute.xlu0 %1525
      %1527 = vrot.lane.b32.xlu0 %v561, 32
      %v1528 = vpop.permute.xlu0 %1527
      %1529 = vrot.lane.b32.xlu0 %v562, 32
      %v1530 = vpop.permute.xlu0 %1529
      %1531 = vrot.lane.b32.xlu0 %v563, 32
      %v1532 = vpop.permute.xlu0 %1531
      %1533 = vrot.lane.b32.xlu0 %v564, 32
      %v1534 = vpop.permute.xlu0 %1533
      %1535 = vrot.lane.b32.xlu0 %v565, 32
      %v1536 = vpop.permute.xlu0 %1535
      %1537 = vrot.lane.b32.xlu0 %v566, 32
      %v1538 = vpop.permute.xlu0 %1537
      %1539 = vrot.lane.b32.xlu0 %v567, 32
      %v1540 = vpop.permute.xlu0 %1539
      %1541 = vrot.lane.b32.xlu0 %v568, 32
      %v1542 = vpop.permute.xlu0 %1541
      %1543 = vrot.lane.b32.xlu0 %v569, 32
      %v1544 = vpop.permute.xlu0 %1543
      %1545 = vrot.lane.b32.xlu0 %v570, 32
      %v1546 = vpop.permute.xlu0 %1545
      %1547 = vrot.lane.b32.xlu0 %v571, 32
      %v1548 = vpop.permute.xlu0 %1547
      %1549 = vrot.lane.b32.xlu0 %v572, 32
      %v1550 = vpop.permute.xlu0 %1549
      %1551 = vrot.lane.b32.xlu0 %v573, 32
      %v1552 = vpop.permute.xlu0 %1551
      %1553 = vrot.lane.b32.xlu0 %v574, 32
      %v1554 = vpop.permute.xlu0 %1553
      %1555 = vrot.lane.b32.xlu0 %v575, 32
      %v1556 = vpop.permute.xlu0 %1555
      %1557 = vrot.lane.b32.xlu0 %v576, 32
      %v1558 = vpop.permute.xlu0 %1557
      %1559 = vrot.lane.b32.xlu0 %v577, 32
      %v1560 = vpop.permute.xlu0 %1559
      %1561 = vrot.lane.b32.xlu0 %v578, 32
      %v1562 = vpop.permute.xlu0 %1561
      %1563 = vrot.lane.b32.xlu0 %v579, 32
      %v1564 = vpop.permute.xlu0 %1563
      %1565 = vrot.lane.b32.xlu0 %v580, 32
      %v1566 = vpop.permute.xlu0 %1565
      %1567 = vrot.lane.b32.xlu0 %v581, 32
      %v1568 = vpop.permute.xlu0 %1567
      %1569 = vrot.lane.b32.xlu0 %v582, 32
      %v1570 = vpop.permute.xlu0 %1569
      %1571 = vrot.lane.b32.xlu0 %v583, 32
      %v1572 = vpop.permute.xlu0 %1571
      %1573 = vrot.lane.b32.xlu0 %v584, 32
      %v1574 = vpop.permute.xlu0 %1573
      %1575 = vrot.lane.b32.xlu0 %v585, 32
      %v1576 = vpop.permute.xlu0 %1575
      %1577 = vrot.lane.b32.xlu0 %v586, 32
      %v1578 = vpop.permute.xlu0 %1577
      %v1611 = vsel %vm171, %v298, %v620
      %v1612 = vsel %vm171, %v299, %v622
      %v1613 = vsel %vm171, %v300, %v624
      %v1614 = vsel %vm171, %v301, %v626
      %v1615 = vsel %vm171, %v302, %v628
      %v1616 = vsel %vm171, %v303, %v630
      %v1617 = vsel %vm171, %v304, %v632
      %v1618 = vsel %vm171, %v305, %v634
      %v1619 = vsel %vm171, %v306, %v636
      %v1620 = vsel %vm171, %v307, %v638
      %v1621 = vsel %vm171, %v308, %v640
      %v1622 = vsel %vm171, %v309, %v642
      %v1623 = vsel %vm171, %v310, %v644
      %v1624 = vsel %vm171, %v311, %v646
      %v1625 = vsel %vm171, %v312, %v648
      %v1626 = vsel %vm171, %v313, %v650
      %v1627 = vsel %vm171, %v314, %v652
      %v1628 = vsel %vm171, %v315, %v654
      %v1629 = vsel %vm171, %v316, %v656
      %v1630 = vsel %vm171, %v317, %v658
      %v1631 = vsel %vm171, %v318, %v660
      %v1632 = vsel %vm171, %v319, %v662
      %v1633 = vsel %vm171, %v320, %v664
      %v1634 = vsel %vm171, %v321, %v666
      %v1635 = vsel %vm171, %v322, %v668
      %v1636 = vsel %vm171, %v323, %v670
      %v1637 = vsel %vm171, %v324, %v672
      %v1638 = vsel %vm171, %v325, %v674
      %v1639 = vsel %vm171, %v326, %v676
      %v1640 = vsel %vm171, %v327, %v678
      %v1641 = vsel %vm171, %v328, %v680
      %v1642 = vsel %vm171, %v329, %v682
      %vm1643 = vcmask 64512
      %v1644 = vsel %vm1643, %v1611, %v748
      %v1645 = vsel %vm1643, %v1612, %v750
      %v1646 = vsel %vm1643, %v1613, %v752
      %v1647 = vsel %vm1643, %v1614, %v754
      %v1648 = vsel %vm1643, %v1615, %v756
      %v1649 = vsel %vm1643, %v1616, %v758
      %v1650 = vsel %vm1643, %v1617, %v760
      %v1651 = vsel %vm1643, %v1618, %v762
      %v1652 = vsel %vm1643, %v1619, %v764
      %v1653 = vsel %vm1643, %v1620, %v766
      %v1654 = vsel %vm1643, %v1621, %v768
      %v1655 = vsel %vm1643, %v1622, %v770
      %v1656 = vsel %vm1643, %v1623, %v772
      %v1657 = vsel %vm1643, %v1624, %v774
      %v1658 = vsel %vm1643, %v1625, %v776
      %v1659 = vsel %vm1643, %v1626, %v778
      %v1660 = vsel %vm1643, %v1627, %v780
      %v1661 = vsel %vm1643, %v1628, %v782
      %v1662 = vsel %vm1643, %v1629, %v784
      %v1663 = vsel %vm1643, %v1630, %v786
      %v1664 = vsel %vm1643, %v1631, %v788
      %v1665 = vsel %vm1643, %v1632, %v790
      %v1666 = vsel %vm1643, %v1633, %v792
      %v1667 = vsel %vm1643, %v1634, %v794
      %v1668 = vsel %vm1643, %v1635, %v796
      %v1669 = vsel %vm1643, %v1636, %v798
      %v1670 = vsel %vm1643, %v1637, %v800
      %v1671 = vsel %vm1643, %v1638, %v802
      %v1672 = vsel %vm1643, %v1639, %v804
      %v1673 = vsel %vm1643, %v1640, %v806
      %v1674 = vsel %vm1643, %v1641, %v808
      %v1675 = vsel %vm1643, %v1642, %v810
      %vm1676 = vcmask 97280
      %v1677 = vsel %vm1676, %v1644, %v876
      %v1678 = vsel %vm1676, %v1645, %v878
      %v1679 = vsel %vm1676, %v1646, %v880
      %v1680 = vsel %vm1676, %v1647, %v882
      %v1681 = vsel %vm1676, %v1648, %v884
      %v1682 = vsel %vm1676, %v1649, %v886
      %v1683 = vsel %vm1676, %v1650, %v888
      %v1684 = vsel %vm1676, %v1651, %v890
      %v1685 = vsel %vm1676, %v1652, %v892
      %v1686 = vsel %vm1676, %v1653, %v894
      %v1687 = vsel %vm1676, %v1654, %v896
      %v1688 = vsel %vm1676, %v1655, %v898
      %v1689 = vsel %vm1676, %v1656, %v900
      %v1690 = vsel %vm1676, %v1657, %v902
      %v1691 = vsel %vm1676, %v1658, %v904
      %v1692 = vsel %vm1676, %v1659, %v906
      %v1693 = vsel %vm1676, %v1660, %v908
      %v1694 = vsel %vm1676, %v1661, %v910
      %v1695 = vsel %vm1676, %v1662, %v912
      %v1696 = vsel %vm1676, %v1663, %v914
      %v1697 = vsel %vm1676, %v1664, %v916
      %v1698 = vsel %vm1676, %v1665, %v918
      %v1699 = vsel %vm1676, %v1666, %v920
      %v1700 = vsel %vm1676, %v1667, %v922
      %v1701 = vsel %vm1676, %v1668, %v924
      %v1702 = vsel %vm1676, %v1669, %v926
      %v1703 = vsel %vm1676, %v1670, %v928
      %v1704 = vsel %vm1676, %v1671, %v930
      %v1705 = vsel %vm1676, %v1672, %v932
      %v1706 = vsel %vm1676, %v1673, %v934
      %v1707 = vsel %vm1676, %v1674, %v936
      %v1708 = vsel %vm1676, %v1675, %v938
      %vm1709 = vcmask 130048
      %v1710 = vsel %vm1709, %v1677, %v1004
      %v1711 = vsel %vm1709, %v1678, %v1006
      %v1712 = vsel %vm1709, %v1679, %v1008
      %v1713 = vsel %vm1709, %v1680, %v1010
      %v1714 = vsel %vm1709, %v1681, %v1012
      %v1715 = vsel %vm1709, %v1682, %v1014
      %v1716 = vsel %vm1709, %v1683, %v1016
      %v1717 = vsel %vm1709, %v1684, %v1018
      %v1718 = vsel %vm1709, %v1685, %v1020
      %v1719 = vsel %vm1709, %v1686, %v1022
      %v1720 = vsel %vm1709, %v1687, %v1024
      %v1721 = vsel %vm1709, %v1688, %v1026
      %v1722 = vsel %vm1709, %v1689, %v1028
      %v1723 = vsel %vm1709, %v1690, %v1030
      %v1724 = vsel %vm1709, %v1691, %v1032
      %v1725 = vsel %vm1709, %v1692, %v1034
      %v1726 = vsel %vm1709, %v1693, %v1036
      %v1727 = vsel %vm1709, %v1694, %v1038
      %v1728 = vsel %vm1709, %v1695, %v1040
      %v1729 = vsel %vm1709, %v1696, %v1042
      %v1730 = vsel %vm1709, %v1697, %v1044
      %v1731 = vsel %vm1709, %v1698, %v1046
      %v1732 = vsel %vm1709, %v1699, %v1048
      %v1733 = vsel %vm1709, %v1700, %v1050
      %v1734 = vsel %vm1709, %v1701, %v1052
      %v1735 = vsel %vm1709, %v1702, %v1054
      %v1736 = vsel %vm1709, %v1703, %v1056
      %v1737 = vsel %vm1709, %v1704, %v1058
      %v1738 = vsel %vm1709, %v1705, %v1060
      %v1739 = vsel %vm1709, %v1706, %v1062
      %v1740 = vsel %vm1709, %v1707, %v1064
      %v1741 = vsel %vm1709, %v1708, %v1066
      %vm1742 = vcmask 162816
      %v1743 = vsel %vm1742, %v1710, %v1132
      %v1744 = vsel %vm1742, %v1711, %v1134
      %v1745 = vsel %vm1742, %v1712, %v1136
      %v1746 = vsel %vm1742, %v1713, %v1138
      %v1747 = vsel %vm1742, %v1714, %v1140
      %v1748 = vsel %vm1742, %v1715, %v1142
      %v1749 = vsel %vm1742, %v1716, %v1144
      %v1750 = vsel %vm1742, %v1717, %v1146
      %v1751 = vsel %vm1742, %v1718, %v1148
      %v1752 = vsel %vm1742, %v1719, %v1150
      %v1753 = vsel %vm1742, %v1720, %v1152
      %v1754 = vsel %vm1742, %v1721, %v1154
      %v1755 = vsel %vm1742, %v1722, %v1156
      %v1756 = vsel %vm1742, %v1723, %v1158
      %v1757 = vsel %vm1742, %v1724, %v1160
      %v1758 = vsel %vm1742, %v1725, %v1162
      %v1759 = vsel %vm1742, %v1726, %v1164
      %v1760 = vsel %vm1742, %v1727, %v1166
      %v1761 = vsel %vm1742, %v1728, %v1168
      %v1762 = vsel %vm1742, %v1729, %v1170
      %v1763 = vsel %vm1742, %v1730, %v1172
      %v1764 = vsel %vm1742, %v1731, %v1174
      %v1765 = vsel %vm1742, %v1732, %v1176
      %v1766 = vsel %vm1742, %v1733, %v1178
      %v1767 = vsel %vm1742, %v1734, %v1180
      %v1768 = vsel %vm1742, %v1735, %v1182
      %v1769 = vsel %vm1742, %v1736, %v1184
      %v1770 = vsel %vm1742, %v1737, %v1186
      %v1771 = vsel %vm1742, %v1738, %v1188
      %v1772 = vsel %vm1742, %v1739, %v1190
      %v1773 = vsel %vm1742, %v1740, %v1192
      %v1774 = vsel %vm1742, %v1741, %v1194
      %vm1775 = vcmask 195584
      %v1776 = vsel %vm1775, %v1743, %v1260
      %v1777 = vsel %vm1775, %v1744, %v1262
      %v1778 = vsel %vm1775, %v1745, %v1264
      %v1779 = vsel %vm1775, %v1746, %v1266
      %v1780 = vsel %vm1775, %v1747, %v1268
      %v1781 = vsel %vm1775, %v1748, %v1270
      %v1782 = vsel %vm1775, %v1749, %v1272
      %v1783 = vsel %vm1775, %v1750, %v1274
      %v1784 = vsel %vm1775, %v1751, %v1276
      %v1785 = vsel %vm1775, %v1752, %v1278
      %v1786 = vsel %vm1775, %v1753, %v1280
      %v1787 = vsel %vm1775, %v1754, %v1282
      %v1788 = vsel %vm1775, %v1755, %v1284
      %v1789 = vsel %vm1775, %v1756, %v1286
      %v1790 = vsel %vm1775, %v1757, %v1288
      %v1791 = vsel %vm1775, %v1758, %v1290
      %v1792 = vsel %vm1775, %v1759, %v1292
      %v1793 = vsel %vm1775, %v1760, %v1294
      %v1794 = vsel %vm1775, %v1761, %v1296
      %v1795 = vsel %vm1775, %v1762, %v1298
      %v1796 = vsel %vm1775, %v1763, %v1300
      %v1797 = vsel %vm1775, %v1764, %v1302
      %v1798 = vsel %vm1775, %v1765, %v1304
      %v1799 = vsel %vm1775, %v1766, %v1306
      %v1800 = vsel %vm1775, %v1767, %v1308
      %v1801 = vsel %vm1775, %v1768, %v1310
      %v1802 = vsel %vm1775, %v1769, %v1312
      %v1803 = vsel %vm1775, %v1770, %v1314
      %v1804 = vsel %vm1775, %v1771, %v1316
      %v1805 = vsel %vm1775, %v1772, %v1318
      %v1806 = vsel %vm1775, %v1773, %v1320
      %v1807 = vsel %vm1775, %v1774, %v1322
      %vm1808 = vcmask 228352
      %v1809 = vsel %vm1808, %v1776, %v1388
      %v1810 = vsel %vm1808, %v1777, %v1390
      %v1811 = vsel %vm1808, %v1778, %v1392
      %v1812 = vsel %vm1808, %v1779, %v1394
      %v1813 = vsel %vm1808, %v1780, %v1396
      %v1814 = vsel %vm1808, %v1781, %v1398
      %v1815 = vsel %vm1808, %v1782, %v1400
      %v1816 = vsel %vm1808, %v1783, %v1402
      %v1817 = vsel %vm1808, %v1784, %v1404
      %v1818 = vsel %vm1808, %v1785, %v1406
      %v1819 = vsel %vm1808, %v1786, %v1408
      %v1820 = vsel %vm1808, %v1787, %v1410
      %v1821 = vsel %vm1808, %v1788, %v1412
      %v1822 = vsel %vm1808, %v1789, %v1414
      %v1823 = vsel %vm1808, %v1790, %v1416
      %v1824 = vsel %vm1808, %v1791, %v1418
      %v1825 = vsel %vm1808, %v1792, %v1420
      %v1826 = vsel %vm1808, %v1793, %v1422
      %v1827 = vsel %vm1808, %v1794, %v1424
      %v1828 = vsel %vm1808, %v1795, %v1426
      %v1829 = vsel %vm1808, %v1796, %v1428
      %v1830 = vsel %vm1808, %v1797, %v1430
      %v1831 = vsel %vm1808, %v1798, %v1432
      %v1832 = vsel %vm1808, %v1799, %v1434
      %v1833 = vsel %vm1808, %v1800, %v1436
      %v1834 = vsel %vm1808, %v1801, %v1438
      %v1835 = vsel %vm1808, %v1802, %v1440
      %v1836 = vsel %vm1808, %v1803, %v1442
      %v1837 = vsel %vm1808, %v1804, %v1444
      %v1838 = vsel %vm1808, %v1805, %v1446
      %v1839 = vsel %vm1808, %v1806, %v1448
      %v1840 = vsel %vm1808, %v1807, %v1450
      %vm1841 = vcmask 261120
      %v1842 = vsel %vm1841, %v1809, %v1516
      %v1843 = vsel %vm1841, %v1810, %v1518
      %v1844 = vsel %vm1841, %v1811, %v1520
      %v1845 = vsel %vm1841, %v1812, %v1522
      %v1846 = vsel %vm1841, %v1813, %v1524
      %v1847 = vsel %vm1841, %v1814, %v1526
      %v1848 = vsel %vm1841, %v1815, %v1528
      %v1849 = vsel %vm1841, %v1816, %v1530
      %v1850 = vsel %vm1841, %v1817, %v1532
      %v1851 = vsel %vm1841, %v1818, %v1534
      %v1852 = vsel %vm1841, %v1819, %v1536
      %v1853 = vsel %vm1841, %v1820, %v1538
      %v1854 = vsel %vm1841, %v1821, %v1540
      %v1855 = vsel %vm1841, %v1822, %v1542
      %v1856 = vsel %vm1841, %v1823, %v1544
      %v1857 = vsel %vm1841, %v1824, %v1546
      %v1858 = vsel %vm1841, %v1825, %v1548
      %v1859 = vsel %vm1841, %v1826, %v1550
      %v1860 = vsel %vm1841, %v1827, %v1552
      %v1861 = vsel %vm1841, %v1828, %v1554
      %v1862 = vsel %vm1841, %v1829, %v1556
      %v1863 = vsel %vm1841, %v1830, %v1558
      %v1864 = vsel %vm1841, %v1831, %v1560
      %v1865 = vsel %vm1841, %v1832, %v1562
      %v1866 = vsel %vm1841, %v1833, %v1564
      %v1867 = vsel %vm1841, %v1834, %v1566
      %v1868 = vsel %vm1841, %v1835, %v1568
      %v1869 = vsel %vm1841, %v1836, %v1570
      %v1870 = vsel %vm1841, %v1837, %v1572
      %v1871 = vsel %vm1841, %v1838, %v1574
      %v1872 = vsel %vm1841, %v1839, %v1576
      %v1873 = vsel %vm1841, %v1840, %v1578
      %v1875 = vlaneseq
      %v1876 = vshrl.u32 %v1875, 7
      %v1877 = vsub.s32 0, %v1876
      %v1878 = vrot.slane %v297, %v1877
      %vm1880 = vcmask 293888
      %v1882 = vsel %vm1880, %v1842, 0
      %v1885 = vsel %vm1880, %v1843, 0
      %v1888 = vsel %vm1880, %v1844, 0
      %v1891 = vsel %vm1880, %v1845, 0
      %v1894 = vsel %vm1880, %v1846, 0
      %v1897 = vsel %vm1880, %v1847, 0
      %v1900 = vsel %vm1880, %v1848, 0
      %v1903 = vsel %vm1880, %v1849, 0
      %v1906 = vsel %vm1880, %v1850, 0
      %v1909 = vsel %vm1880, %v1851, 0
      %v1912 = vsel %vm1880, %v1852, 0
      %v1915 = vsel %vm1880, %v1853, 0
      %v1918 = vsel %vm1880, %v1854, 0
      %v1921 = vsel %vm1880, %v1855, 0
      %v1924 = vsel %vm1880, %v1856, 0
      %v1927 = vsel %vm1880, %v1857, 0
      %v1930 = vsel %vm1880, %v1858, 0
      %v1933 = vsel %vm1880, %v1859, 0
      %v1936 = vsel %vm1880, %v1860, 0
      %v1939 = vsel %vm1880, %v1861, 0
      %v1942 = vsel %vm1880, %v1862, 0
      %v1945 = vsel %vm1880, %v1863, 0
      %v1948 = vsel %vm1880, %v1864, 0
      %v1951 = vsel %vm1880, %v1865, 0
      %v1954 = vsel %vm1880, %v1866, 0
      %v1957 = vsel %vm1880, %v1867, 0
      %v1960 = vsel %vm1880, %v1868, 0
      %v1963 = vsel %vm1880, %v1869, 0
      %v1966 = vsel %vm1880, %v1870, 0
      %v1969 = vsel %vm1880, %v1871, 0
      %v1972 = vsel %vm1880, %v1872, 0
      %v1975 = vsel %vm1880, %v1873, 0
      %vm1977 = vcmask 1043456
      %v1979 = vsel %vm1977, %v296, 0
      %1981 = vmatprep.subr.mxu0 0.0
      %1982 = vmatpush1.msra.mxu0 %v292
      %1983 = vmatprep.subr.mxu0 0.0
      %1984 = vmatpush1.msra.mxu0 %v293
      %1985 = vmatprep.subr.mxu0 0.0
      %1986 = vmatpush1.msra.mxu0 %v294
      %1987 = vmatprep.subr.mxu0 0.0
      %1988 = vmatpush1.msra.mxu0 %v295
      %1989 = vmatprep.subr.mxu0 0.0
      %1990 = vmatpush1.msra.mxu0 %v1979
      %1991 = vmatprep.subr.mxu0 0.0
      %1992 = vmatpush1.msra.mxu0 0.0
      %1993 = vmatprep.subr.mxu0 0.0
      %1994 = vmatpush1.msra.mxu0 0.0
      %1995 = vmatprep.subr.mxu0 0.0
      %1996 = vmatpush1.msra.mxu0 0.0
      %1997 = vmatprep.subr.mxu0 0.0
      %1998 = vmatpush1.msra.mxu0 0.0
      %1999 = vmatprep.subr.mxu0 0.0
      %2000 = vmatpush1.msra.mxu0 0.0
      %2001 = vmatprep.subr.mxu0 0.0
      %2002 = vmatpush1.msra.mxu0 0.0
      %2003 = vmatprep.subr.mxu0 0.0
      %2004 = vmatpush1.msra.mxu0 0.0
      %2005 = vmatprep.subr.mxu0 0.0
      %2006 = vmatpush1.msra.mxu0 0.0
      %2007 = vmatprep.subr.mxu0 0.0
      %2008 = vmatpush1.msra.mxu0 0.0
      %2009 = vmatprep.subr.mxu0 0.0
      %2010 = vmatpush1.msra.mxu0 0.0
      %2011 = vmatprep.subr.mxu0 0.0
      %2012 = vmatpush1.msra.mxu0 0.0
      %2013 = vmatprep.subr.mxu0 0.0
      %2014 = vmatpush1.msra.mxu0 0.0
      %2015 = vmatprep.subr.mxu0 0.0
      %2016 = vmatpush1.msra.mxu0 0.0
      %2017 = vmatprep.subr.mxu0 0.0
      %2018 = vmatpush1.msra.mxu0 0.0
      %2019 = vmatprep.subr.mxu0 0.0
      %2020 = vmatpush1.msra.mxu0 0.0
      %2021 = vmatprep.subr.mxu0 0.0
      %2022 = vmatpush1.msra.mxu0 0.0
      %2023 = vmatprep.subr.mxu0 0.0
      %2024 = vmatpush1.msra.mxu0 0.0
      %2025 = vmatprep.subr.mxu0 0.0
      %2026 = vmatpush1.msra.mxu0 0.0
      %2027 = vmatprep.subr.mxu0 0.0
      %2028 = vmatpush1.msra.mxu0 0.0
      %2029 = vmatprep.subr.mxu0 0.0
      %2030 = vmatpush1.msra.mxu0 0.0
      %2031 = vmatprep.subr.mxu0 0.0
      %2032 = vmatpush1.msra.mxu0 0.0
      %2033 = vmatprep.subr.mxu0 0.0
      %2034 = vmatpush1.msra.mxu0 0.0
      %2035 = vmatprep.subr.mxu0 0.0
      %2036 = vmatpush1.msra.mxu0 0.0
      %2037 = vmatprep.subr.mxu0 0.0
      %2038 = vmatpush1.msra.mxu0 0.0
      %2039 = vmatprep.subr.mxu0 0.0
      %2040 = vmatpush1.msra.mxu0 0.0
      %2041 = vmatprep.subr.mxu0 0.0
      %2042 = vmatpush1.msra.mxu0 0.0
      %2043 = vmatprep.subr.mxu0 0.0
      %2044 = vmatpush1.msra.mxu0 0.0
      %2045 = vmatprep.mubr.f32.mxu0 0.0
      %2046 = vmatmul.mubr.f32.gmra.mrb[0].mxu0 %v1882
      %v2047 = vpop.f32.mrb[0].mxu0
      %v2048 = vadd.f32 %v1878, %v2047
      %v2049 = vpop.f32.mrb[0].mxu0
      %2050 = vmatprep.mubr.f32.mxu0 0.0
      %2051 = vmatmul.mubr.f32.gmra.mrb[0].mxu0 %v1885
      %v2052 = vpop.f32.mrb[0].mxu0
      %v2053 = vadd.f32 %v1878, %v2052
      %v2054 = vpop.f32.mrb[0].mxu0
      %2055 = vmatprep.mubr.f32.mxu0 0.0
      %2056 = vmatmul.mubr.f32.gmra.mrb[0].mxu0 %v1888
      %v2057 = vpop.f32.mrb[0].mxu0
      %v2058 = vadd.f32 %v1878, %v2057
      %v2059 = vpop.f32.mrb[0].mxu0
      %2060 = vmatprep.mubr.f32.mxu0 0.0
      %2061 = vmatmul.mubr.f32.gmra.mrb[0].mxu0 %v1891
      %v2062 = vpop.f32.mrb[0].mxu0
      %v2063 = vadd.f32 %v1878, %v2062
      %v2064 = vpop.f32.mrb[0].mxu0
      %2065 = vmatprep.mubr.f32.mxu0 0.0
      %2066 = vmatmul.mubr.f32.gmra.mrb[0].mxu0 %v1894
      %v2067 = vpop.f32.mrb[0].mxu0
      %v2068 = vadd.f32 %v1878, %v2067
      %v2069 = vpop.f32.mrb[0].mxu0
      %2070 = vmatprep.mubr.f32.mxu0 0.0
      %2071 = vmatmul.mubr.f32.gmra.mrb[0].mxu0 %v1897
      %v2072 = vpop.f32.mrb[0].mxu0
      %v2073 = vadd.f32 %v1878, %v2072
      %v2074 = vpop.f32.mrb[0].mxu0
      %2075 = vmatprep.mubr.f32.mxu0 0.0
      %2076 = vmatmul.mubr.f32.gmra.mrb[0].mxu0 %v1900
      %v2077 = vpop.f32.mrb[0].mxu0
      %v2078 = vadd.f32 %v1878, %v2077
      %v2079 = vpop.f32.mrb[0].mxu0
      %2080 = vmatprep.mubr.f32.mxu0 0.0
      %2081 = vmatmul.mubr.f32.gmra.mrb[0].mxu0 %v1903
      %v2082 = vpop.f32.mrb[0].mxu0
      %v2083 = vadd.f32 %v1878, %v2082
      %v2084 = vpop.f32.mrb[0].mxu0
      %2085 = vmatprep.mubr.f32.mxu0 0.0
      %2086 = vmatmul.mubr.f32.gmra.mrb[0].mxu0 %v1906
      %v2087 = vpop.f32.mrb[0].mxu0
      %v2088 = vadd.f32 %v1878, %v2087
      %v2089 = vpop.f32.mrb[0].mxu0
      %2090 = vmatprep.mubr.f32.mxu0 0.0
      %2091 = vmatmul.mubr.f32.gmra.mrb[0].mxu0 %v1909
      %v2092 = vpop.f32.mrb[0].mxu0
      %v2093 = vadd.f32 %v1878, %v2092
      %v2094 = vpop.f32.mrb[0].mxu0
      %2095 = vmatprep.mubr.f32.mxu0 0.0
      %2096 = vmatmul.mubr.f32.gmra.mrb[0].mxu0 %v1912
      %v2097 = vpop.f32.mrb[0].mxu0
      %v2098 = vadd.f32 %v1878, %v2097
      %v2099 = vpop.f32.mrb[0].mxu0
      %2100 = vmatprep.mubr.f32.mxu0 0.0
      %2101 = vmatmul.mubr.f32.gmra.mrb[0].mxu0 %v1915
      %v2102 = vpop.f32.mrb[0].mxu0
      %v2103 = vadd.f32 %v1878, %v2102
      %v2104 = vpop.f32.mrb[0].mxu0
      %2105 = vmatprep.mubr.f32.mxu0 0.0
      %2106 = vmatmul.mubr.f32.gmra.mrb[0].mxu0 %v1918
      %v2107 = vpop.f32.mrb[0].mxu0
      %v2108 = vadd.f32 %v1878, %v2107
      %v2109 = vpop.f32.mrb[0].mxu0
      %2110 = vmatprep.mubr.f32.mxu0 0.0
      %2111 = vmatmul.mubr.f32.gmra.mrb[0].mxu0 %v1921
      %v2112 = vpop.f32.mrb[0].mxu0
      %v2113 = vadd.f32 %v1878, %v2112
      %v2114 = vpop.f32.mrb[0].mxu0
      %2115 = vmatprep.mubr.f32.mxu0 0.0
      %2116 = vmatmul.mubr.f32.gmra.mrb[0].mxu0 %v1924
      %v2117 = vpop.f32.mrb[0].mxu0
      %v2118 = vadd.f32 %v1878, %v2117
      %v2119 = vpop.f32.mrb[0].mxu0
      %2120 = vmatprep.mubr.f32.mxu0 0.0
      %2121 = vmatmul.mubr.f32.gmra.mrb[0].mxu0 %v1927
      %v2122 = vpop.f32.mrb[0].mxu0
      %v2123 = vadd.f32 %v1878, %v2122
      %v2124 = vpop.f32.mrb[0].mxu0
      %2125 = vmatprep.mubr.f32.mxu0 0.0
      %2126 = vmatmul.mubr.f32.gmra.mrb[0].mxu0 %v1930
      %v2127 = vpop.f32.mrb[0].mxu0
      %v2128 = vadd.f32 %v1878, %v2127
      %v2129 = vpop.f32.mrb[0].mxu0
      %2130 = vmatprep.mubr.f32.mxu0 0.0
      %2131 = vmatmul.mubr.f32.gmra.mrb[0].mxu0 %v1933
      %v2132 = vpop.f32.mrb[0].mxu0
      %v2133 = vadd.f32 %v1878, %v2132
      %v2134 = vpop.f32.mrb[0].mxu0
      %2135 = vmatprep.mubr.f32.mxu0 0.0
      %2136 = vmatmul.mubr.f32.gmra.mrb[0].mxu0 %v1936
      %v2137 = vpop.f32.mrb[0].mxu0
      %v2138 = vadd.f32 %v1878, %v2137
      %v2139 = vpop.f32.mrb[0].mxu0
      %2140 = vmatprep.mubr.f32.mxu0 0.0
      %2141 = vmatmul.mubr.f32.gmra.mrb[0].mxu0 %v1939
      %v2142 = vpop.f32.mrb[0].mxu0
      %v2143 = vadd.f32 %v1878, %v2142
      %v2144 = vpop.f32.mrb[0].mxu0
      %2145 = vmatprep.mubr.f32.mxu0 0.0
      %2146 = vmatmul.mubr.f32.gmra.mrb[0].mxu0 %v1942
      %v2147 = vpop.f32.mrb[0].mxu0
      %v2148 = vadd.f32 %v1878, %v2147
      %v2149 = vpop.f32.mrb[0].mxu0
      %2150 = vmatprep.mubr.f32.mxu0 0.0
      %2151 = vmatmul.mubr.f32.gmra.mrb[0].mxu0 %v1945
      %v2152 = vpop.f32.mrb[0].mxu0
      %v2153 = vadd.f32 %v1878, %v2152
      %v2154 = vpop.f32.mrb[0].mxu0
      %2155 = vmatprep.mubr.f32.mxu0 0.0
      %2156 = vmatmul.mubr.f32.gmra.mrb[0].mxu0 %v1948
      %v2157 = vpop.f32.mrb[0].mxu0
      %v2158 = vadd.f32 %v1878, %v2157
      %v2159 = vpop.f32.mrb[0].mxu0
      %2160 = vmatprep.mubr.f32.mxu0 0.0
      %2161 = vmatmul.mubr.f32.gmra.mrb[0].mxu0 %v1951
      %v2162 = vpop.f32.mrb[0].mxu0
      %v2163 = vadd.f32 %v1878, %v2162
      %v2164 = vpop.f32.mrb[0].mxu0
      %2165 = vmatprep.mubr.f32.mxu0 0.0
      %2166 = vmatmul.mubr.f32.gmra.mrb[0].mxu0 %v1954
      %v2167 = vpop.f32.mrb[0].mxu0
      %v2168 = vadd.f32 %v1878, %v2167
      %v2169 = vpop.f32.mrb[0].mxu0
      %2170 = vmatprep.mubr.f32.mxu0 0.0
      %2171 = vmatmul.mubr.f32.gmra.mrb[0].mxu0 %v1957
      %v2172 = vpop.f32.mrb[0].mxu0
      %v2173 = vadd.f32 %v1878, %v2172
      %v2174 = vpop.f32.mrb[0].mxu0
      %2175 = vmatprep.mubr.f32.mxu0 0.0
      %2176 = vmatmul.mubr.f32.gmra.mrb[0].mxu0 %v1960
      %v2177 = vpop.f32.mrb[0].mxu0
      %v2178 = vadd.f32 %v1878, %v2177
      %v2179 = vpop.f32.mrb[0].mxu0
      %2180 = vmatprep.mubr.f32.mxu0 0.0
      %2181 = vmatmul.mubr.f32.gmra.mrb[0].mxu0 %v1963
      %v2182 = vpop.f32.mrb[0].mxu0
      %v2183 = vadd.f32 %v1878, %v2182
      %v2184 = vpop.f32.mrb[0].mxu0
      %2185 = vmatprep.mubr.f32.mxu0 0.0
      %2186 = vmatmul.mubr.f32.gmra.mrb[0].mxu0 %v1966
      %v2187 = vpop.f32.mrb[0].mxu0
      %v2188 = vadd.f32 %v1878, %v2187
      %v2189 = vpop.f32.mrb[0].mxu0
      %2190 = vmatprep.mubr.f32.mxu0 0.0
      %2191 = vmatmul.mubr.f32.gmra.mrb[0].mxu0 %v1969
      %v2192 = vpop.f32.mrb[0].mxu0
      %v2193 = vadd.f32 %v1878, %v2192
      %v2194 = vpop.f32.mrb[0].mxu0
      %2195 = vmatprep.mubr.f32.mxu0 0.0
      %2196 = vmatmul.mubr.f32.gmra.mrb[0].mxu0 %v1972
      %v2197 = vpop.f32.mrb[0].mxu0
      %v2198 = vadd.f32 %v1878, %v2197
      %v2199 = vpop.f32.mrb[0].mxu0
      %2200 = vmatprep.mubr.f32.mxu0 0.0
      %2201 = vmatmul.mubr.f32.gmra.mrb[0].mxu0 %v1975
      %v2202 = vpop.f32.mrb[0].mxu0
      %v2203 = vadd.f32 %v1878, %v2202
      %v2204 = vpop.f32.mrb[0].mxu0
      %2205 = vdwg.mxu0
      %v2206 = vmax.f32 %v2048, 0.0
      %v2207 = vmax.f32 %v2053, 0.0
      %v2208 = vmax.f32 %v2058, 0.0
      %v2209 = vmax.f32 %v2063, 0.0
      %v2210 = vmax.f32 %v2068, 0.0
      %v2211 = vmax.f32 %v2073, 0.0
      %v2212 = vmax.f32 %v2078, 0.0
      %v2213 = vmax.f32 %v2083, 0.0
      %v2214 = vmax.f32 %v2088, 0.0
      %v2215 = vmax.f32 %v2093, 0.0
      %v2216 = vmax.f32 %v2098, 0.0
      %v2217 = vmax.f32 %v2103, 0.0
      %v2218 = vmax.f32 %v2108, 0.0
      %v2219 = vmax.f32 %v2113, 0.0
      %v2220 = vmax.f32 %v2118, 0.0
      %v2221 = vmax.f32 %v2123, 0.0
      %v2222 = vmax.f32 %v2128, 0.0
      %v2223 = vmax.f32 %v2133, 0.0
      %v2224 = vmax.f32 %v2138, 0.0
      %v2225 = vmax.f32 %v2143, 0.0
      %v2226 = vmax.f32 %v2148, 0.0
      %v2227 = vmax.f32 %v2153, 0.0
      %v2228 = vmax.f32 %v2158, 0.0
      %v2229 = vmax.f32 %v2163, 0.0
      %v2230 = vmax.f32 %v2168, 0.0
      %v2231 = vmax.f32 %v2173, 0.0
      %v2232 = vmax.f32 %v2178, 0.0
      %v2233 = vmax.f32 %v2183, 0.0
      %v2234 = vmax.f32 %v2188, 0.0
      %v2235 = vmax.f32 %v2193, 0.0
      %v2236 = vmax.f32 %v2198, 0.0
      %v2237 = vmax.f32 %v2203, 0.0
      %2238 = vst.msk [vmem:[%s259 + $0x1] sm:$0xff] %vm171, %v2206
      %2239 = vst.msk [vmem:[%s259 + $0x9] sm:$0xff] %vm171, %v2207
      %2240 = vst.msk [vmem:[%s259 + $0x19] sm:$0xff] %vm171, %v2208
      %2241 = vst.msk [vmem:[%s259 + $0x21] sm:$0xff] %vm171, %v2209
      %2242 = vst.msk [vmem:[%s259 + $0x31] sm:$0xff] %vm171, %v2210
      %2243 = vst.msk [vmem:[%s259 + $0x39] sm:$0xff] %vm171, %v2211
      %2244 = vst.msk [vmem:[%s259 + $0x49] sm:$0xff] %vm171, %v2212
      %2245 = vst.msk [vmem:[%s259 + $0x51] sm:$0xff] %vm171, %v2213
      %2246 = vst.msk [vmem:[%s259 + $0x61] sm:$0xff] %vm171, %v2214
      %2247 = vst.msk [vmem:[%s259 + $0x69] sm:$0xff] %vm171, %v2215
      %2248 = vst.msk [vmem:[%s259 + $0x79] sm:$0xff] %vm171, %v2216
      %2249 = vst.msk [vmem:[%s259 + $0x81] sm:$0xff] %vm171, %v2217
      %2250 = vst.msk [vmem:[%s259 + $0x91] sm:$0xff] %vm171, %v2218
      %2251 = vst.msk [vmem:[%s259 + $0x99] sm:$0xff] %vm171, %v2219
      %2252 = vst.msk [vmem:[%s259 + $0xa9] sm:$0xff] %vm171, %v2220
      %2253 = vst.msk [vmem:[%s259 + $0xb1] sm:$0xff] %vm171, %v2221
      %2254 = vst.msk [vmem:[%s259 + $0xc1] sm:$0xff] %vm171, %v2222
      %2255 = vst.msk [vmem:[%s259 + $0xc9] sm:$0xff] %vm171, %v2223
      %2256 = vst.msk [vmem:[%s259 + $0xd9] sm:$0xff] %vm171, %v2224
      %2257 = vst.msk [vmem:[%s259 + $0xe1] sm:$0xff] %vm171, %v2225
      %2258 = vst.msk [vmem:[%s259 + $0xf1] sm:$0xff] %vm171, %v2226
      %2259 = vst.msk [vmem:[%s259 + $0xf9] sm:$0xff] %vm171, %v2227
      %2260 = vst.msk [vmem:[%s259 + $0x109] sm:$0xff] %vm171, %v2228
      %2261 = vst.msk [vmem:[%s259 + $0x111] sm:$0xff] %vm171, %v2229
      %2262 = vst.msk [vmem:[%s259 + $0x121] sm:$0xff] %vm171, %v2230
      %2263 = vst.msk [vmem:[%s259 + $0x129] sm:$0xff] %vm171, %v2231
      %2264 = vst.msk [vmem:[%s259 + $0x139] sm:$0xff] %vm171, %v2232
      %2265 = vst.msk [vmem:[%s259 + $0x141] sm:$0xff] %vm171, %v2233
      %2266 = vst.msk [vmem:[%s259 + $0x151] sm:$0xff] %vm171, %v2234
      %2267 = vst.msk [vmem:[%s259 + $0x159] sm:$0xff] %vm171, %v2235
      %2268 = vst.msk [vmem:[%s259 + $0x169] sm:$0xff] %vm171, %v2236
      %2269 = vst.msk [vmem:[%s259 + $0x171] sm:$0xff] %vm171, %v2237
      %s2270 = scalar_lea.vmem %s1, 40
      %v2271 = vld [vmem:[%s2270] sm:$0xff]
      %v2272 = vld [vmem:[%s2270 + $0x8] sm:$0xff]
      %v2273 = vld [vmem:[%s2270 + $0x10] sm:$0xff]
      %v2274 = vld [vmem:[%s2270 + $0x18] sm:$0xff]
      %v2275 = vld [vmem:[%s2270 + $0x20] sm:$0xf]
      %s2276 = scalar_lea.vmem %s2, 1
      %v2277 = vld [vmem:[%s2276] sm:$0x1]
      %v2278 = vld [vmem:[#allocation2] sm:$0xff]
      %v2279 = vld [vmem:[#allocation2 + $0x8] sm:$0xff]
      %v2280 = vld [vmem:[#allocation2 + $0x18] sm:$0xff]
      %v2281 = vld [vmem:[#allocation2 + $0x20] sm:$0xff]
      %v2282 = vld [vmem:[#allocation2 + $0x30] sm:$0xff]
      %v2283 = vld [vmem:[#allocation2 + $0x38] sm:$0xff]
      %v2284 = vld [vmem:[#allocation2 + $0x48] sm:$0xff]
      %v2285 = vld [vmem:[#allocation2 + $0x50] sm:$0xff]
      %v2286 = vld [vmem:[#allocation2 + $0x60] sm:$0xff]
      %v2287 = vld [vmem:[#allocation2 + $0x68] sm:$0xff]
      %v2288 = vld [vmem:[#allocation2 + $0x78] sm:$0xff]
      %v2289 = vld [vmem:[#allocation2 + $0x80] sm:$0xff]
      %v2290 = vld [vmem:[#allocation2 + $0x90] sm:$0xff]
      %v2291 = vld [vmem:[#allocation2 + $0x98] sm:$0xff]
      %v2292 = vld [vmem:[#allocation2 + $0xa8] sm:$0xff]
      %v2293 = vld [vmem:[#allocation2 + $0xb0] sm:$0xff]
      %v2294 = vld [vmem:[#allocation2 + $0xc0] sm:$0xff]
      %v2295 = vld [vmem:[#allocation2 + $0xc8] sm:$0xff]
      %v2296 = vld [vmem:[#allocation2 + $0xd8] sm:$0xff]
      %v2297 = vld [vmem:[#allocation2 + $0xe0] sm:$0xff]
      %v2298 = vld [vmem:[#allocation2 + $0xf0] sm:$0xff]
      %v2299 = vld [vmem:[#allocation2 + $0xf8] sm:$0xff]
      %v2300 = vld [vmem:[#allocation2 + $0x108] sm:$0xff]
      %v2301 = vld [vmem:[#allocation2 + $0x110] sm:$0xff]
      %v2302 = vld [vmem:[#allocation2 + $0x120] sm:$0xff]
      %v2303 = vld [vmem:[#allocation2 + $0x128] sm:$0xff]
      %v2304 = vld [vmem:[#allocation2 + $0x138] sm:$0xff]
      %v2305 = vld [vmem:[#allocation2 + $0x140] sm:$0xff]
      %v2306 = vld [vmem:[#allocation2 + $0x150] sm:$0xff]
      %v2307 = vld [vmem:[#allocation2 + $0x158] sm:$0xff]
      %v2308 = vld [vmem:[#allocation2 + $0x168] sm:$0xff]
      %v2309 = vld [vmem:[#allocation2 + $0x170] sm:$0xff]
      %v2310 = vld [vmem:[#allocation2 + $0x1] sm:$0xff]
      %v2311 = vld [vmem:[#allocation2 + $0x9] sm:$0xff]
      %v2312 = vld [vmem:[#allocation2 + $0x19] sm:$0xff]
      %v2313 = vld [vmem:[#allocation2 + $0x21] sm:$0xff]
      %v2314 = vld [vmem:[#allocation2 + $0x31] sm:$0xff]
      %v2315 = vld [vmem:[#allocation2 + $0x39] sm:$0xff]
      %v2316 = vld [vmem:[#allocation2 + $0x49] sm:$0xff]
      %v2317 = vld [vmem:[#allocation2 + $0x51] sm:$0xff]
      %v2318 = vld [vmem:[#allocation2 + $0x61] sm:$0xff]
      %v2319 = vld [vmem:[#allocation2 + $0x69] sm:$0xff]
      %v2320 = vld [vmem:[#allocation2 + $0x79] sm:$0xff]
      %v2321 = vld [vmem:[#allocation2 + $0x81] sm:$0xff]
      %v2322 = vld [vmem:[#allocation2 + $0x91] sm:$0xff]
      %v2323 = vld [vmem:[#allocation2 + $0x99] sm:$0xff]
      %v2324 = vld [vmem:[#allocation2 + $0xa9] sm:$0xff]
      %v2325 = vld [vmem:[#allocation2 + $0xb1] sm:$0xff]
      %v2326 = vld [vmem:[#allocation2 + $0xc1] sm:$0xff]
      %v2327 = vld [vmem:[#allocation2 + $0xc9] sm:$0xff]
      %v2328 = vld [vmem:[#allocation2 + $0xd9] sm:$0xff]
      %v2329 = vld [vmem:[#allocation2 + $0xe1] sm:$0xff]
      %v2330 = vld [vmem:[#allocation2 + $0xf1] sm:$0xff]
      %v2331 = vld [vmem:[#allocation2 + $0xf9] sm:$0xff]
      %v2332 = vld [vmem:[#allocation2 + $0x109] sm:$0xff]
      %v2333 = vld [vmem:[#allocation2 + $0x111] sm:$0xff]
      %v2334 = vld [vmem:[#allocation2 + $0x121] sm:$0xff]
      %v2335 = vld [vmem:[#allocation2 + $0x129] sm:$0xff]
      %v2336 = vld [vmem:[#allocation2 + $0x139] sm:$0xff]
      %v2337 = vld [vmem:[#allocation2 + $0x141] sm:$0xff]
      %v2338 = vld [vmem:[#allocation2 + $0x151] sm:$0xff]
      %v2339 = vld [vmem:[#allocation2 + $0x159] sm:$0xff]
      %v2340 = vld [vmem:[#allocation2 + $0x169] sm:$0xff]
      %v2341 = vld [vmem:[#allocation2 + $0x171] sm:$0xff]
      %v2342 = vld [vmem:[#allocation2 + $0x2] sm:$0xff]
      %v2343 = vld [vmem:[#allocation2 + $0xa] sm:$0xff]
      %v2344 = vld [vmem:[#allocation2 + $0x1a] sm:$0xff]
      %v2345 = vld [vmem:[#allocation2 + $0x22] sm:$0xff]
      %v2346 = vld [vmem:[#allocation2 + $0x32] sm:$0xff]
      %v2347 = vld [vmem:[#allocation2 + $0x3a] sm:$0xff]
      %v2348 = vld [vmem:[#allocation2 + $0x4a] sm:$0xff]
      %v2349 = vld [vmem:[#allocation2 + $0x52] sm:$0xff]
      %v2350 = vld [vmem:[#allocation2 + $0x62] sm:$0xff]
      %v2351 = vld [vmem:[#allocation2 + $0x6a] sm:$0xff]
      %v2352 = vld [vmem:[#allocation2 + $0x7a] sm:$0xff]
      %v2353 = vld [vmem:[#allocation2 + $0x82] sm:$0xff]
      %v2354 = vld [vmem:[#allocation2 + $0x92] sm:$0xff]
      %v2355 = vld [vmem:[#allocation2 + $0x9a] sm:$0xff]
      %v2356 = vld [vmem:[#allocation2 + $0xaa] sm:$0xff]
      %v2357 = vld [vmem:[#allocation2 + $0xb2] sm:$0xff]
      %v2358 = vld [vmem:[#allocation2 + $0xc2] sm:$0xff]
      %v2359 = vld [vmem:[#allocation2 + $0xca] sm:$0xff]
      %v2360 = vld [vmem:[#allocation2 + $0xda] sm:$0xff]
      %v2361 = vld [vmem:[#allocation2 + $0xe2] sm:$0xff]
      %v2362 = vld [vmem:[#allocation2 + $0xf2] sm:$0xff]
      %v2363 = vld [vmem:[#allocation2 + $0xfa] sm:$0xff]
      %v2364 = vld [vmem:[#allocation2 + $0x10a] sm:$0xff]
      %v2365 = vld [vmem:[#allocation2 + $0x112] sm:$0xff]
      %v2366 = vld [vmem:[#allocation2 + $0x122] sm:$0xff]
      %v2367 = vld [vmem:[#allocation2 + $0x12a] sm:$0xff]
      %v2368 = vld [vmem:[#allocation2 + $0x13a] sm:$0xff]
      %v2369 = vld [vmem:[#allocation2 + $0x142] sm:$0xff]
      %v2370 = vld [vmem:[#allocation2 + $0x152] sm:$0xff]
      %v2371 = vld [vmem:[#allocation2 + $0x15a] sm:$0xff]
      %v2372 = vld [vmem:[#allocation2 + $0x16a] sm:$0xff]
      %v2373 = vld [vmem:[#allocation2 + $0x172] sm:$0xff]
      %v2374 = vld [vmem:[%s259] sm:$0xff]
      %v2375 = vld [vmem:[%s259 + $0x8] sm:$0xff]
      %v2376 = vld [vmem:[%s259 + $0x18] sm:$0xff]
      %v2377 = vld [vmem:[%s259 + $0x20] sm:$0xff]
      %v2378 = vld [vmem:[%s259 + $0x30] sm:$0xff]
      %v2379 = vld [vmem:[%s259 + $0x38] sm:$0xff]
      %v2380 = vld [vmem:[%s259 + $0x48] sm:$0xff]
      %v2381 = vld [vmem:[%s259 + $0x50] sm:$0xff]
      %v2382 = vld [vmem:[%s259 + $0x60] sm:$0xff]
      %v2383 = vld [vmem:[%s259 + $0x68] sm:$0xff]
      %v2384 = vld [vmem:[%s259 + $0x78] sm:$0xff]
      %v2385 = vld [vmem:[%s259 + $0x80] sm:$0xff]
      %v2386 = vld [vmem:[%s259 + $0x90] sm:$0xff]
      %v2387 = vld [vmem:[%s259 + $0x98] sm:$0xff]
      %v2388 = vld [vmem:[%s259 + $0xa8] sm:$0xff]
      %v2389 = vld [vmem:[%s259 + $0xb0] sm:$0xff]
      %v2390 = vld [vmem:[%s259 + $0xc0] sm:$0xff]
      %v2391 = vld [vmem:[%s259 + $0xc8] sm:$0xff]
      %v2392 = vld [vmem:[%s259 + $0xd8] sm:$0xff]
      %v2393 = vld [vmem:[%s259 + $0xe0] sm:$0xff]
      %v2394 = vld [vmem:[%s259 + $0xf0] sm:$0xff]
      %v2395 = vld [vmem:[%s259 + $0xf8] sm:$0xff]
      %v2396 = vld [vmem:[%s259 + $0x108] sm:$0xff]
      %v2397 = vld [vmem:[%s259 + $0x110] sm:$0xff]
      %v2398 = vld [vmem:[%s259 + $0x120] sm:$0xff]
      %v2399 = vld [vmem:[%s259 + $0x128] sm:$0xff]
      %v2400 = vld [vmem:[%s259 + $0x138] sm:$0xff]
      %v2401 = vld [vmem:[%s259 + $0x140] sm:$0xff]
      %v2402 = vld [vmem:[%s259 + $0x150] sm:$0xff]
      %v2403 = vld [vmem:[%s259 + $0x158] sm:$0xff]
      %v2404 = vld [vmem:[%s259 + $0x168] sm:$0xff]
      %v2405 = vld [vmem:[%s259 + $0x170] sm:$0xff]
      %v2406 = vld [vmem:[%s259 + $0x1] sm:$0xff]
      %v2407 = vld [vmem:[%s259 + $0x9] sm:$0xff]
      %v2408 = vld [vmem:[%s259 + $0x19] sm:$0xff]
      %v2409 = vld [vmem:[%s259 + $0x21] sm:$0xff]
      %v2410 = vld [vmem:[%s259 + $0x31] sm:$0xff]
      %v2411 = vld [vmem:[%s259 + $0x39] sm:$0xff]
      %v2412 = vld [vmem:[%s259 + $0x49] sm:$0xff]
      %v2413 = vld [vmem:[%s259 + $0x51] sm:$0xff]
      %v2414 = vld [vmem:[%s259 + $0x61] sm:$0xff]
      %v2415 = vld [vmem:[%s259 + $0x69] sm:$0xff]
      %v2416 = vld [vmem:[%s259 + $0x79] sm:$0xff]
      %v2417 = vld [vmem:[%s259 + $0x81] sm:$0xff]
      %v2418 = vld [vmem:[%s259 + $0x91] sm:$0xff]
      %v2419 = vld [vmem:[%s259 + $0x99] sm:$0xff]
      %v2420 = vld [vmem:[%s259 + $0xa9] sm:$0xff]
      %v2421 = vld [vmem:[%s259 + $0xb1] sm:$0xff]
      %v2422 = vld [vmem:[%s259 + $0xc1] sm:$0xff]
      %v2423 = vld [vmem:[%s259 + $0xc9] sm:$0xff]
      %v2424 = vld [vmem:[%s259 + $0xd9] sm:$0xff]
      %v2425 = vld [vmem:[%s259 + $0xe1] sm:$0xff]
      %v2426 = vld [vmem:[%s259 + $0xf1] sm:$0xff]
      %v2427 = vld [vmem:[%s259 + $0xf9] sm:$0xff]
      %v2428 = vld [vmem:[%s259 + $0x109] sm:$0xff]
      %v2429 = vld [vmem:[%s259 + $0x111] sm:$0xff]
      %v2430 = vld [vmem:[%s259 + $0x121] sm:$0xff]
      %v2431 = vld [vmem:[%s259 + $0x129] sm:$0xff]
      %v2432 = vld [vmem:[%s259 + $0x139] sm:$0xff]
      %v2433 = vld [vmem:[%s259 + $0x141] sm:$0xff]
      %v2434 = vld [vmem:[%s259 + $0x151] sm:$0xff]
      %v2435 = vld [vmem:[%s259 + $0x159] sm:$0xff]
      %v2436 = vld [vmem:[%s259 + $0x169] sm:$0xff]
      %v2437 = vld [vmem:[%s259 + $0x171] sm:$0xff]
      %v2438 = vld [vmem:[%s259 + $0x2] sm:$0xff]
      %v2439 = vld [vmem:[%s259 + $0xa] sm:$0xff]
      %v2440 = vld [vmem:[%s259 + $0x1a] sm:$0xff]
      %v2441 = vld [vmem:[%s259 + $0x22] sm:$0xff]
      %v2442 = vld [vmem:[%s259 + $0x32] sm:$0xff]
      %v2443 = vld [vmem:[%s259 + $0x3a] sm:$0xff]
      %v2444 = vld [vmem:[%s259 + $0x4a] sm:$0xff]
      %v2445 = vld [vmem:[%s259 + $0x52] sm:$0xff]
      %v2446 = vld [vmem:[%s259 + $0x62] sm:$0xff]
      %v2447 = vld [vmem:[%s259 + $0x6a] sm:$0xff]
      %v2448 = vld [vmem:[%s259 + $0x7a] sm:$0xff]
      %v2449 = vld [vmem:[%s259 + $0x82] sm:$0xff]
      %v2450 = vld [vmem:[%s259 + $0x92] sm:$0xff]
      %v2451 = vld [vmem:[%s259 + $0x9a] sm:$0xff]
      %v2452 = vld [vmem:[%s259 + $0xaa] sm:$0xff]
      %v2453 = vld [vmem:[%s259 + $0xb2] sm:$0xff]
      %v2454 = vld [vmem:[%s259 + $0xc2] sm:$0xff]
      %v2455 = vld [vmem:[%s259 + $0xca] sm:$0xff]
      %v2456 = vld [vmem:[%s259 + $0xda] sm:$0xff]
      %v2457 = vld [vmem:[%s259 + $0xe2] sm:$0xff]
      %v2458 = vld [vmem:[%s259 + $0xf2] sm:$0xff]
      %v2459 = vld [vmem:[%s259 + $0xfa] sm:$0xff]
      %v2460 = vld [vmem:[%s259 + $0x10a] sm:$0xff]
      %v2461 = vld [vmem:[%s259 + $0x112] sm:$0xff]
      %v2462 = vld [vmem:[%s259 + $0x122] sm:$0xff]
      %v2463 = vld [vmem:[%s259 + $0x12a] sm:$0xff]
      %v2464 = vld [vmem:[%s259 + $0x13a] sm:$0xff]
      %v2465 = vld [vmem:[%s259 + $0x142] sm:$0xff]
      %v2466 = vld [vmem:[%s259 + $0x152] sm:$0xff]
      %v2467 = vld [vmem:[%s259 + $0x15a] sm:$0xff]
      %v2468 = vld [vmem:[%s259 + $0x16a] sm:$0xff]
      %v2469 = vld [vmem:[%s259 + $0x172] sm:$0xff]
      %v2470 = vld [vmem:[%s490] sm:$0xff]
      %v2471 = vld [vmem:[%s490 + $0x8] sm:$0xff]
      %v2472 = vld [vmem:[%s490 + $0x18] sm:$0xff]
      %v2473 = vld [vmem:[%s490 + $0x20] sm:$0xff]
      %v2474 = vld [vmem:[%s490 + $0x30] sm:$0xff]
      %v2475 = vld [vmem:[%s490 + $0x38] sm:$0xff]
      %v2476 = vld [vmem:[%s490 + $0x48] sm:$0xff]
      %v2477 = vld [vmem:[%s490 + $0x50] sm:$0xff]
      %v2478 = vld [vmem:[%s490 + $0x60] sm:$0xff]
      %v2479 = vld [vmem:[%s490 + $0x68] sm:$0xff]
      %v2480 = vld [vmem:[%s490 + $0x78] sm:$0xff]
      %v2481 = vld [vmem:[%s490 + $0x80] sm:$0xff]
      %v2482 = vld [vmem:[%s490 + $0x90] sm:$0xff]
      %v2483 = vld [vmem:[%s490 + $0x98] sm:$0xff]
      %v2484 = vld [vmem:[%s490 + $0xa8] sm:$0xff]
      %v2485 = vld [vmem:[%s490 + $0xb0] sm:$0xff]
      %v2486 = vld [vmem:[%s490 + $0xc0] sm:$0xff]
      %v2487 = vld [vmem:[%s490 + $0xc8] sm:$0xff]
      %v2488 = vld [vmem:[%s490 + $0xd8] sm:$0xff]
      %v2489 = vld [vmem:[%s490 + $0xe0] sm:$0xff]
      %v2490 = vld [vmem:[%s490 + $0xf0] sm:$0xff]
      %v2491 = vld [vmem:[%s490 + $0xf8] sm:$0xff]
      %v2492 = vld [vmem:[%s490 + $0x108] sm:$0xff]
      %v2493 = vld [vmem:[%s490 + $0x110] sm:$0xff]
      %v2494 = vld [vmem:[%s490 + $0x120] sm:$0xff]
      %v2495 = vld [vmem:[%s490 + $0x128] sm:$0xff]
      %v2496 = vld [vmem:[%s490 + $0x138] sm:$0xff]
      %v2497 = vld [vmem:[%s490 + $0x140] sm:$0xff]
      %v2498 = vld [vmem:[%s490 + $0x150] sm:$0xff]
      %v2499 = vld [vmem:[%s490 + $0x158] sm:$0xff]
      %v2500 = vld [vmem:[%s490 + $0x168] sm:$0xff]
      %v2501 = vld [vmem:[%s490 + $0x170] sm:$0xff]
      %v2502 = vld [vmem:[%s490 + $0x1] sm:$0xff]
      %v2503 = vld [vmem:[%s490 + $0x9] sm:$0xff]
      %v2504 = vld [vmem:[%s490 + $0x19] sm:$0xff]
      %v2505 = vld [vmem:[%s490 + $0x21] sm:$0xff]
      %v2506 = vld [vmem:[%s490 + $0x31] sm:$0xff]
      %v2507 = vld [vmem:[%s490 + $0x39] sm:$0xff]
      %v2508 = vld [vmem:[%s490 + $0x49] sm:$0xff]
      %v2509 = vld [vmem:[%s490 + $0x51] sm:$0xff]
      %v2510 = vld [vmem:[%s490 + $0x61] sm:$0xff]
      %v2511 = vld [vmem:[%s490 + $0x69] sm:$0xff]
      %v2512 = vld [vmem:[%s490 + $0x79] sm:$0xff]
      %v2513 = vld [vmem:[%s490 + $0x81] sm:$0xff]
      %v2514 = vld [vmem:[%s490 + $0x91] sm:$0xff]
      %v2515 = vld [vmem:[%s490 + $0x99] sm:$0xff]
      %v2516 = vld [vmem:[%s490 + $0xa9] sm:$0xff]
      %v2517 = vld [vmem:[%s490 + $0xb1] sm:$0xff]
      %v2518 = vld [vmem:[%s490 + $0xc1] sm:$0xff]
      %v2519 = vld [vmem:[%s490 + $0xc9] sm:$0xff]
      %v2520 = vld [vmem:[%s490 + $0xd9] sm:$0xff]
      %v2521 = vld [vmem:[%s490 + $0xe1] sm:$0xff]
      %v2522 = vld [vmem:[%s490 + $0xf1] sm:$0xff]
      %v2523 = vld [vmem:[%s490 + $0xf9] sm:$0xff]
      %v2524 = vld [vmem:[%s490 + $0x109] sm:$0xff]
      %v2525 = vld [vmem:[%s490 + $0x111] sm:$0xff]
      %v2526 = vld [vmem:[%s490 + $0x121] sm:$0xff]
      %v2527 = vld [vmem:[%s490 + $0x129] sm:$0xff]
      %v2528 = vld [vmem:[%s490 + $0x139] sm:$0xff]
      %v2529 = vld [vmem:[%s490 + $0x141] sm:$0xff]
      %v2530 = vld [vmem:[%s490 + $0x151] sm:$0xff]
      %v2531 = vld [vmem:[%s490 + $0x159] sm:$0xff]
      %v2532 = vld [vmem:[%s490 + $0x169] sm:$0xff]
      %v2533 = vld [vmem:[%s490 + $0x171] sm:$0xff]
      %v2534 = vld [vmem:[%s490 + $0x2] sm:$0xff]
      %v2535 = vld [vmem:[%s490 + $0xa] sm:$0xff]
      %v2536 = vld [vmem:[%s490 + $0x1a] sm:$0xff]
      %v2537 = vld [vmem:[%s490 + $0x22] sm:$0xff]
      %v2538 = vld [vmem:[%s490 + $0x32] sm:$0xff]
      %v2539 = vld [vmem:[%s490 + $0x3a] sm:$0xff]
      %v2540 = vld [vmem:[%s490 + $0x4a] sm:$0xff]
      %v2541 = vld [vmem:[%s490 + $0x52] sm:$0xff]
      %v2542 = vld [vmem:[%s490 + $0x62] sm:$0xff]
      %v2543 = vld [vmem:[%s490 + $0x6a] sm:$0xff]
      %v2544 = vld [vmem:[%s490 + $0x7a] sm:$0xff]
      %v2545 = vld [vmem:[%s490 + $0x82] sm:$0xff]
      %v2546 = vld [vmem:[%s490 + $0x92] sm:$0xff]
      %v2547 = vld [vmem:[%s490 + $0x9a] sm:$0xff]
      %v2548 = vld [vmem:[%s490 + $0xaa] sm:$0xff]
      %v2549 = vld [vmem:[%s490 + $0xb2] sm:$0xff]
      %v2550 = vld [vmem:[%s490 + $0xc2] sm:$0xff]
      %v2551 = vld [vmem:[%s490 + $0xca] sm:$0xff]
      %v2552 = vld [vmem:[%s490 + $0xda] sm:$0xff]
      %v2553 = vld [vmem:[%s490 + $0xe2] sm:$0xff]
      %v2554 = vld [vmem:[%s490 + $0xf2] sm:$0xff]
      %v2555 = vld [vmem:[%s490 + $0xfa] sm:$0xff]
      %v2556 = vld [vmem:[%s490 + $0x10a] sm:$0xff]
      %v2557 = vld [vmem:[%s490 + $0x112] sm:$0xff]
      %v2558 = vld [vmem:[%s490 + $0x122] sm:$0xff]
      %v2559 = vld [vmem:[%s490 + $0x12a] sm:$0xff]
      %v2560 = vld [vmem:[%s490 + $0x13a] sm:$0xff]
      %v2561 = vld [vmem:[%s490 + $0x142] sm:$0xff]
      %v2562 = vld [vmem:[%s490 + $0x152] sm:$0xff]
      %v2563 = vld [vmem:[%s490 + $0x15a] sm:$0xff]
      %v2564 = vld [vmem:[%s490 + $0x16a] sm:$0xff]
      %v2565 = vld [vmem:[%s490 + $0x172] sm:$0xff]
      %2598 = vrot.lane.b32.xlu0 %v2310, 4
      %v2599 = vpop.permute.xlu0 %2598
      %2600 = vrot.lane.b32.xlu0 %v2311, 4
      %v2601 = vpop.permute.xlu0 %2600
      %2602 = vrot.lane.b32.xlu0 %v2312, 4
      %v2603 = vpop.permute.xlu0 %2602
      %2604 = vrot.lane.b32.xlu0 %v2313, 4
      %v2605 = vpop.permute.xlu0 %2604
      %2606 = vrot.lane.b32.xlu0 %v2314, 4
      %v2607 = vpop.permute.xlu0 %2606
      %2608 = vrot.lane.b32.xlu0 %v2315, 4
      %v2609 = vpop.permute.xlu0 %2608
      %2610 = vrot.lane.b32.xlu0 %v2316, 4
      %v2611 = vpop.permute.xlu0 %2610
      %2612 = vrot.lane.b32.xlu0 %v2317, 4
      %v2613 = vpop.permute.xlu0 %2612
      %2614 = vrot.lane.b32.xlu0 %v2318, 4
      %v2615 = vpop.permute.xlu0 %2614
      %2616 = vrot.lane.b32.xlu0 %v2319, 4
      %v2617 = vpop.permute.xlu0 %2616
      %2618 = vrot.lane.b32.xlu0 %v2320, 4
      %v2619 = vpop.permute.xlu0 %2618
      %2620 = vrot.lane.b32.xlu0 %v2321, 4
      %v2621 = vpop.permute.xlu0 %2620
      %2622 = vrot.lane.b32.xlu0 %v2322, 4
      %v2623 = vpop.permute.xlu0 %2622
      %2624 = vrot.lane.b32.xlu0 %v2323, 4
      %v2625 = vpop.permute.xlu0 %2624
      %2626 = vrot.lane.b32.xlu0 %v2324, 4
      %v2627 = vpop.permute.xlu0 %2626
      %2628 = vrot.lane.b32.xlu0 %v2325, 4
      %v2629 = vpop.permute.xlu0 %2628
      %2630 = vrot.lane.b32.xlu0 %v2326, 4
      %v2631 = vpop.permute.xlu0 %2630
      %2632 = vrot.lane.b32.xlu0 %v2327, 4
      %v2633 = vpop.permute.xlu0 %2632
      %2634 = vrot.lane.b32.xlu0 %v2328, 4
      %v2635 = vpop.permute.xlu0 %2634
      %2636 = vrot.lane.b32.xlu0 %v2329, 4
      %v2637 = vpop.permute.xlu0 %2636
      %2638 = vrot.lane.b32.xlu0 %v2330, 4
      %v2639 = vpop.permute.xlu0 %2638
      %2640 = vrot.lane.b32.xlu0 %v2331, 4
      %v2641 = vpop.permute.xlu0 %2640
      %2642 = vrot.lane.b32.xlu0 %v2332, 4
      %v2643 = vpop.permute.xlu0 %2642
      %2644 = vrot.lane.b32.xlu0 %v2333, 4
      %v2645 = vpop.permute.xlu0 %2644
      %2646 = vrot.lane.b32.xlu0 %v2334, 4
      %v2647 = vpop.permute.xlu0 %2646
      %2648 = vrot.lane.b32.xlu0 %v2335, 4
      %v2649 = vpop.permute.xlu0 %2648
      %2650 = vrot.lane.b32.xlu0 %v2336, 4
      %v2651 = vpop.permute.xlu0 %2650
      %2652 = vrot.lane.b32.xlu0 %v2337, 4
      %v2653 = vpop.permute.xlu0 %2652
      %2654 = vrot.lane.b32.xlu0 %v2338, 4
      %v2655 = vpop.permute.xlu0 %2654
      %2656 = vrot.lane.b32.xlu0 %v2339, 4
      %v2657 = vpop.permute.xlu0 %2656
      %2658 = vrot.lane.b32.xlu0 %v2340, 4
      %v2659 = vpop.permute.xlu0 %2658
      %2660 = vrot.lane.b32.xlu0 %v2341, 4
      %v2661 = vpop.permute.xlu0 %2660
      %2726 = vrot.lane.b32.xlu0 %v2342, 8
      %v2727 = vpop.permute.xlu0 %2726
      %2728 = vrot.lane.b32.xlu0 %v2343, 8
      %v2729 = vpop.permute.xlu0 %2728
      %2730 = vrot.lane.b32.xlu0 %v2344, 8
      %v2731 = vpop.permute.xlu0 %2730
      %2732 = vrot.lane.b32.xlu0 %v2345, 8
      %v2733 = vpop.permute.xlu0 %2732
      %2734 = vrot.lane.b32.xlu0 %v2346, 8
      %v2735 = vpop.permute.xlu0 %2734
      %2736 = vrot.lane.b32.xlu0 %v2347, 8
      %v2737 = vpop.permute.xlu0 %2736
      %2738 = vrot.lane.b32.xlu0 %v2348, 8
      %v2739 = vpop.permute.xlu0 %2738
      %2740 = vrot.lane.b32.xlu0 %v2349, 8
      %v2741 = vpop.permute.xlu0 %2740
      %2742 = vrot.lane.b32.xlu0 %v2350, 8
      %v2743 = vpop.permute.xlu0 %2742
      %2744 = vrot.lane.b32.xlu0 %v2351, 8
      %v2745 = vpop.permute.xlu0 %2744
      %2746 = vrot.lane.b32.xlu0 %v2352, 8
      %v2747 = vpop.permute.xlu0 %2746
      %2748 = vrot.lane.b32.xlu0 %v2353, 8
      %v2749 = vpop.permute.xlu0 %2748
      %2750 = vrot.lane.b32.xlu0 %v2354, 8
      %v2751 = vpop.permute.xlu0 %2750
      %2752 = vrot.lane.b32.xlu0 %v2355, 8
      %v2753 = vpop.permute.xlu0 %2752
      %2754 = vrot.lane.b32.xlu0 %v2356, 8
      %v2755 = vpop.permute.xlu0 %2754
      %2756 = vrot.lane.b32.xlu0 %v2357, 8
      %v2757 = vpop.permute.xlu0 %2756
      %2758 = vrot.lane.b32.xlu0 %v2358, 8
      %v2759 = vpop.permute.xlu0 %2758
      %2760 = vrot.lane.b32.xlu0 %v2359, 8
      %v2761 = vpop.permute.xlu0 %2760
      %2762 = vrot.lane.b32.xlu0 %v2360, 8
      %v2763 = vpop.permute.xlu0 %2762
      %2764 = vrot.lane.b32.xlu0 %v2361, 8
      %v2765 = vpop.permute.xlu0 %2764
      %2766 = vrot.lane.b32.xlu0 %v2362, 8
      %v2767 = vpop.permute.xlu0 %2766
      %2768 = vrot.lane.b32.xlu0 %v2363, 8
      %v2769 = vpop.permute.xlu0 %2768
      %2770 = vrot.lane.b32.xlu0 %v2364, 8
      %v2771 = vpop.permute.xlu0 %2770
      %2772 = vrot.lane.b32.xlu0 %v2365, 8
      %v2773 = vpop.permute.xlu0 %2772
      %2774 = vrot.lane.b32.xlu0 %v2366, 8
      %v2775 = vpop.permute.xlu0 %2774
      %2776 = vrot.lane.b32.xlu0 %v2367, 8
      %v2777 = vpop.permute.xlu0 %2776
      %2778 = vrot.lane.b32.xlu0 %v2368, 8
      %v2779 = vpop.permute.xlu0 %2778
      %2780 = vrot.lane.b32.xlu0 %v2369, 8
      %v2781 = vpop.permute.xlu0 %2780
      %2782 = vrot.lane.b32.xlu0 %v2370, 8
      %v2783 = vpop.permute.xlu0 %2782
      %2784 = vrot.lane.b32.xlu0 %v2371, 8
      %v2785 = vpop.permute.xlu0 %2784
      %2786 = vrot.lane.b32.xlu0 %v2372, 8
      %v2787 = vpop.permute.xlu0 %2786
      %2788 = vrot.lane.b32.xlu0 %v2373, 8
      %v2789 = vpop.permute.xlu0 %2788
      %2854 = vrot.lane.b32.xlu0 %v2374, 12
      %v2855 = vpop.permute.xlu0 %2854
      %2856 = vrot.lane.b32.xlu0 %v2375, 12
      %v2857 = vpop.permute.xlu0 %2856
      %2858 = vrot.lane.b32.xlu0 %v2376, 12
      %v2859 = vpop.permute.xlu0 %2858
      %2860 = vrot.lane.b32.xlu0 %v2377, 12
      %v2861 = vpop.permute.xlu0 %2860
      %2862 = vrot.lane.b32.xlu0 %v2378, 12
      %v2863 = vpop.permute.xlu0 %2862
      %2864 = vrot.lane.b32.xlu0 %v2379, 12
      %v2865 = vpop.permute.xlu0 %2864
      %2866 = vrot.lane.b32.xlu0 %v2380, 12
      %v2867 = vpop.permute.xlu0 %2866
      %2868 = vrot.lane.b32.xlu0 %v2381, 12
      %v2869 = vpop.permute.xlu0 %2868
      %2870 = vrot.lane.b32.xlu0 %v2382, 12
      %v2871 = vpop.permute.xlu0 %2870
      %2872 = vrot.lane.b32.xlu0 %v2383, 12
      %v2873 = vpop.permute.xlu0 %2872
      %2874 = vrot.lane.b32.xlu0 %v2384, 12
      %v2875 = vpop.permute.xlu0 %2874
      %2876 = vrot.lane.b32.xlu0 %v2385, 12
      %v2877 = vpop.permute.xlu0 %2876
      %2878 = vrot.lane.b32.xlu0 %v2386, 12
      %v2879 = vpop.permute.xlu0 %2878
      %2880 = vrot.lane.b32.xlu0 %v2387, 12
      %v2881 = vpop.permute.xlu0 %2880
      %2882 = vrot.lane.b32.xlu0 %v2388, 12
      %v2883 = vpop.permute.xlu0 %2882
      %2884 = vrot.lane.b32.xlu0 %v2389, 12
      %v2885 = vpop.permute.xlu0 %2884
      %2886 = vrot.lane.b32.xlu0 %v2390, 12
      %v2887 = vpop.permute.xlu0 %2886
      %2888 = vrot.lane.b32.xlu0 %v2391, 12
      %v2889 = vpop.permute.xlu0 %2888
      %2890 = vrot.lane.b32.xlu0 %v2392, 12
      %v2891 = vpop.permute.xlu0 %2890
      %2892 = vrot.lane.b32.xlu0 %v2393, 12
      %v2893 = vpop.permute.xlu0 %2892
      %2894 = vrot.lane.b32.xlu0 %v2394, 12
      %v2895 = vpop.permute.xlu0 %2894
      %2896 = vrot.lane.b32.xlu0 %v2395, 12
      %v2897 = vpop.permute.xlu0 %2896
      %2898 = vrot.lane.b32.xlu0 %v2396, 12
      %v2899 = vpop.permute.xlu0 %2898
      %2900 = vrot.lane.b32.xlu0 %v2397, 12
      %v2901 = vpop.permute.xlu0 %2900
      %2902 = vrot.lane.b32.xlu0 %v2398, 12
      %v2903 = vpop.permute.xlu0 %2902
      %2904 = vrot.lane.b32.xlu0 %v2399, 12
      %v2905 = vpop.permute.xlu0 %2904
      %2906 = vrot.lane.b32.xlu0 %v2400, 12
      %v2907 = vpop.permute.xlu0 %2906
      %2908 = vrot.lane.b32.xlu0 %v2401, 12
      %v2909 = vpop.permute.xlu0 %2908
      %2910 = vrot.lane.b32.xlu0 %v2402, 12
      %v2911 = vpop.permute.xlu0 %2910
      %2912 = vrot.lane.b32.xlu0 %v2403, 12
      %v2913 = vpop.permute.xlu0 %2912
      %2914 = vrot.lane.b32.xlu0 %v2404, 12
      %v2915 = vpop.permute.xlu0 %2914
      %2916 = vrot.lane.b32.xlu0 %v2405, 12
      %v2917 = vpop.permute.xlu0 %2916
      %2982 = vrot.lane.b32.xlu0 %v2406, 16
      %v2983 = vpop.permute.xlu0 %2982
      %2984 = vrot.lane.b32.xlu0 %v2407, 16
      %v2985 = vpop.permute.xlu0 %2984
      %2986 = vrot.lane.b32.xlu0 %v2408, 16
      %v2987 = vpop.permute.xlu0 %2986
      %2988 = vrot.lane.b32.xlu0 %v2409, 16
      %v2989 = vpop.permute.xlu0 %2988
      %2990 = vrot.lane.b32.xlu0 %v2410, 16
      %v2991 = vpop.permute.xlu0 %2990
      %2992 = vrot.lane.b32.xlu0 %v2411, 16
      %v2993 = vpop.permute.xlu0 %2992
      %2994 = vrot.lane.b32.xlu0 %v2412, 16
      %v2995 = vpop.permute.xlu0 %2994
      %2996 = vrot.lane.b32.xlu0 %v2413, 16
      %v2997 = vpop.permute.xlu0 %2996
      %2998 = vrot.lane.b32.xlu0 %v2414, 16
      %v2999 = vpop.permute.xlu0 %2998
      %3000 = vrot.lane.b32.xlu0 %v2415, 16
      %v3001 = vpop.permute.xlu0 %3000
      %3002 = vrot.lane.b32.xlu0 %v2416, 16
      %v3003 = vpop.permute.xlu0 %3002
      %3004 = vrot.lane.b32.xlu0 %v2417, 16
      %v3005 = vpop.permute.xlu0 %3004
      %3006 = vrot.lane.b32.xlu0 %v2418, 16
      %v3007 = vpop.permute.xlu0 %3006
      %3008 = vrot.lane.b32.xlu0 %v2419, 16
      %v3009 = vpop.permute.xlu0 %3008
      %3010 = vrot.lane.b32.xlu0 %v2420, 16
      %v3011 = vpop.permute.xlu0 %3010
      %3012 = vrot.lane.b32.xlu0 %v2421, 16
      %v3013 = vpop.permute.xlu0 %3012
      %3014 = vrot.lane.b32.xlu0 %v2422, 16
      %v3015 = vpop.permute.xlu0 %3014
      %3016 = vrot.lane.b32.xlu0 %v2423, 16
      %v3017 = vpop.permute.xlu0 %3016
      %3018 = vrot.lane.b32.xlu0 %v2424, 16
      %v3019 = vpop.permute.xlu0 %3018
      %3020 = vrot.lane.b32.xlu0 %v2425, 16
      %v3021 = vpop.permute.xlu0 %3020
      %3022 = vrot.lane.b32.xlu0 %v2426, 16
      %v3023 = vpop.permute.xlu0 %3022
      %3024 = vrot.lane.b32.xlu0 %v2427, 16
      %v3025 = vpop.permute.xlu0 %3024
      %3026 = vrot.lane.b32.xlu0 %v2428, 16
      %v3027 = vpop.permute.xlu0 %3026
      %3028 = vrot.lane.b32.xlu0 %v2429, 16
      %v3029 = vpop.permute.xlu0 %3028
      %3030 = vrot.lane.b32.xlu0 %v2430, 16
      %v3031 = vpop.permute.xlu0 %3030
      %3032 = vrot.lane.b32.xlu0 %v2431, 16
      %v3033 = vpop.permute.xlu0 %3032
      %3034 = vrot.lane.b32.xlu0 %v2432, 16
      %v3035 = vpop.permute.xlu0 %3034
      %3036 = vrot.lane.b32.xlu0 %v2433, 16
      %v3037 = vpop.permute.xlu0 %3036
      %3038 = vrot.lane.b32.xlu0 %v2434, 16
      %v3039 = vpop.permute.xlu0 %3038
      %3040 = vrot.lane.b32.xlu0 %v2435, 16
      %v3041 = vpop.permute.xlu0 %3040
      %3042 = vrot.lane.b32.xlu0 %v2436, 16
      %v3043 = vpop.permute.xlu0 %3042
      %3044 = vrot.lane.b32.xlu0 %v2437, 16
      %v3045 = vpop.permute.xlu0 %3044
      %3110 = vrot.lane.b32.xlu0 %v2438, 20
      %v3111 = vpop.permute.xlu0 %3110
      %3112 = vrot.lane.b32.xlu0 %v2439, 20
      %v3113 = vpop.permute.xlu0 %3112
      %3114 = vrot.lane.b32.xlu0 %v2440, 20
      %v3115 = vpop.permute.xlu0 %3114
      %3116 = vrot.lane.b32.xlu0 %v2441, 20
      %v3117 = vpop.permute.xlu0 %3116
      %3118 = vrot.lane.b32.xlu0 %v2442, 20
      %v3119 = vpop.permute.xlu0 %3118
      %3120 = vrot.lane.b32.xlu0 %v2443, 20
      %v3121 = vpop.permute.xlu0 %3120
      %3122 = vrot.lane.b32.xlu0 %v2444, 20
      %v3123 = vpop.permute.xlu0 %3122
      %3124 = vrot.lane.b32.xlu0 %v2445, 20
      %v3125 = vpop.permute.xlu0 %3124
      %3126 = vrot.lane.b32.xlu0 %v2446, 20
      %v3127 = vpop.permute.xlu0 %3126
      %3128 = vrot.lane.b32.xlu0 %v2447, 20
      %v3129 = vpop.permute.xlu0 %3128
      %3130 = vrot.lane.b32.xlu0 %v2448, 20
      %v3131 = vpop.permute.xlu0 %3130
      %3132 = vrot.lane.b32.xlu0 %v2449, 20
      %v3133 = vpop.permute.xlu0 %3132
      %3134 = vrot.lane.b32.xlu0 %v2450, 20
      %v3135 = vpop.permute.xlu0 %3134
      %3136 = vrot.lane.b32.xlu0 %v2451, 20
      %v3137 = vpop.permute.xlu0 %3136
      %3138 = vrot.lane.b32.xlu0 %v2452, 20
      %v3139 = vpop.permute.xlu0 %3138
      %3140 = vrot.lane.b32.xlu0 %v2453, 20
      %v3141 = vpop.permute.xlu0 %3140
      %3142 = vrot.lane.b32.xlu0 %v2454, 20
      %v3143 = vpop.permute.xlu0 %3142
      %3144 = vrot.lane.b32.xlu0 %v2455, 20
      %v3145 = vpop.permute.xlu0 %3144
      %3146 = vrot.lane.b32.xlu0 %v2456, 20
      %v3147 = vpop.permute.xlu0 %3146
      %3148 = vrot.lane.b32.xlu0 %v2457, 20
      %v3149 = vpop.permute.xlu0 %3148
      %3150 = vrot.lane.b32.xlu0 %v2458, 20
      %v3151 = vpop.permute.xlu0 %3150
      %3152 = vrot.lane.b32.xlu0 %v2459, 20
      %v3153 = vpop.permute.xlu0 %3152
      %3154 = vrot.lane.b32.xlu0 %v2460, 20
      %v3155 = vpop.permute.xlu0 %3154
      %3156 = vrot.lane.b32.xlu0 %v2461, 20
      %v3157 = vpop.permute.xlu0 %3156
      %3158 = vrot.lane.b32.xlu0 %v2462, 20
      %v3159 = vpop.permute.xlu0 %3158
      %3160 = vrot.lane.b32.xlu0 %v2463, 20
      %v3161 = vpop.permute.xlu0 %3160
      %3162 = vrot.lane.b32.xlu0 %v2464, 20
      %v3163 = vpop.permute.xlu0 %3162
      %3164 = vrot.lane.b32.xlu0 %v2465, 20
      %v3165 = vpop.permute.xlu0 %3164
      %3166 = vrot.lane.b32.xlu0 %v2466, 20
      %v3167 = vpop.permute.xlu0 %3166
      %3168 = vrot.lane.b32.xlu0 %v2467, 20
      %v3169 = vpop.permute.xlu0 %3168
      %3170 = vrot.lane.b32.xlu0 %v2468, 20
      %v3171 = vpop.permute.xlu0 %3170
      %3172 = vrot.lane.b32.xlu0 %v2469, 20
      %v3173 = vpop.permute.xlu0 %3172
      %3238 = vrot.lane.b32.xlu0 %v2470, 24
      %v3239 = vpop.permute.xlu0 %3238
      %3240 = vrot.lane.b32.xlu0 %v2471, 24
      %v3241 = vpop.permute.xlu0 %3240
      %3242 = vrot.lane.b32.xlu0 %v2472, 24
      %v3243 = vpop.permute.xlu0 %3242
      %3244 = vrot.lane.b32.xlu0 %v2473, 24
      %v3245 = vpop.permute.xlu0 %3244
      %3246 = vrot.lane.b32.xlu0 %v2474, 24
      %v3247 = vpop.permute.xlu0 %3246
      %3248 = vrot.lane.b32.xlu0 %v2475, 24
      %v3249 = vpop.permute.xlu0 %3248
      %3250 = vrot.lane.b32.xlu0 %v2476, 24
      %v3251 = vpop.permute.xlu0 %3250
      %3252 = vrot.lane.b32.xlu0 %v2477, 24
      %v3253 = vpop.permute.xlu0 %3252
      %3254 = vrot.lane.b32.xlu0 %v2478, 24
      %v3255 = vpop.permute.xlu0 %3254
      %3256 = vrot.lane.b32.xlu0 %v2479, 24
      %v3257 = vpop.permute.xlu0 %3256
      %3258 = vrot.lane.b32.xlu0 %v2480, 24
      %v3259 = vpop.permute.xlu0 %3258
      %3260 = vrot.lane.b32.xlu0 %v2481, 24
      %v3261 = vpop.permute.xlu0 %3260
      %3262 = vrot.lane.b32.xlu0 %v2482, 24
      %v3263 = vpop.permute.xlu0 %3262
      %3264 = vrot.lane.b32.xlu0 %v2483, 24
      %v3265 = vpop.permute.xlu0 %3264
      %3266 = vrot.lane.b32.xlu0 %v2484, 24
      %v3267 = vpop.permute.xlu0 %3266
      %3268 = vrot.lane.b32.xlu0 %v2485, 24
      %v3269 = vpop.permute.xlu0 %3268
      %3270 = vrot.lane.b32.xlu0 %v2486, 24
      %v3271 = vpop.permute.xlu0 %3270
      %3272 = vrot.lane.b32.xlu0 %v2487, 24
      %v3273 = vpop.permute.xlu0 %3272
      %3274 = vrot.lane.b32.xlu0 %v2488, 24
      %v3275 = vpop.permute.xlu0 %3274
      %3276 = vrot.lane.b32.xlu0 %v2489, 24
      %v3277 = vpop.permute.xlu0 %3276
      %3278 = vrot.lane.b32.xlu0 %v2490, 24
      %v3279 = vpop.permute.xlu0 %3278
      %3280 = vrot.lane.b32.xlu0 %v2491, 24
      %v3281 = vpop.permute.xlu0 %3280
      %3282 = vrot.lane.b32.xlu0 %v2492, 24
      %v3283 = vpop.permute.xlu0 %3282
      %3284 = vrot.lane.b32.xlu0 %v2493, 24
      %v3285 = vpop.permute.xlu0 %3284
      %3286 = vrot.lane.b32.xlu0 %v2494, 24
      %v3287 = vpop.permute.xlu0 %3286
      %3288 = vrot.lane.b32.xlu0 %v2495, 24
      %v3289 = vpop.permute.xlu0 %3288
      %3290 = vrot.lane.b32.xlu0 %v2496, 24
      %v3291 = vpop.permute.xlu0 %3290
      %3292 = vrot.lane.b32.xlu0 %v2497, 24
      %v3293 = vpop.permute.xlu0 %3292
      %3294 = vrot.lane.b32.xlu0 %v2498, 24
      %v3295 = vpop.permute.xlu0 %3294
      %3296 = vrot.lane.b32.xlu0 %v2499, 24
      %v3297 = vpop.permute.xlu0 %3296
      %3298 = vrot.lane.b32.xlu0 %v2500, 24
      %v3299 = vpop.permute.xlu0 %3298
      %3300 = vrot.lane.b32.xlu0 %v2501, 24
      %v3301 = vpop.permute.xlu0 %3300
      %3366 = vrot.lane.b32.xlu0 %v2502, 28
      %v3367 = vpop.permute.xlu0 %3366
      %3368 = vrot.lane.b32.xlu0 %v2503, 28
      %v3369 = vpop.permute.xlu0 %3368
      %3370 = vrot.lane.b32.xlu0 %v2504, 28
      %v3371 = vpop.permute.xlu0 %3370
      %3372 = vrot.lane.b32.xlu0 %v2505, 28
      %v3373 = vpop.permute.xlu0 %3372
      %3374 = vrot.lane.b32.xlu0 %v2506, 28
      %v3375 = vpop.permute.xlu0 %3374
      %3376 = vrot.lane.b32.xlu0 %v2507, 28
      %v3377 = vpop.permute.xlu0 %3376
      %3378 = vrot.lane.b32.xlu0 %v2508, 28
      %v3379 = vpop.permute.xlu0 %3378
      %3380 = vrot.lane.b32.xlu0 %v2509, 28
      %v3381 = vpop.permute.xlu0 %3380
      %3382 = vrot.lane.b32.xlu0 %v2510, 28
      %v3383 = vpop.permute.xlu0 %3382
      %3384 = vrot.lane.b32.xlu0 %v2511, 28
      %v3385 = vpop.permute.xlu0 %3384
      %3386 = vrot.lane.b32.xlu0 %v2512, 28
      %v3387 = vpop.permute.xlu0 %3386
      %3388 = vrot.lane.b32.xlu0 %v2513, 28
      %v3389 = vpop.permute.xlu0 %3388
      %3390 = vrot.lane.b32.xlu0 %v2514, 28
      %v3391 = vpop.permute.xlu0 %3390
      %3392 = vrot.lane.b32.xlu0 %v2515, 28
      %v3393 = vpop.permute.xlu0 %3392
      %3394 = vrot.lane.b32.xlu0 %v2516, 28
      %v3395 = vpop.permute.xlu0 %3394
      %3396 = vrot.lane.b32.xlu0 %v2517, 28
      %v3397 = vpop.permute.xlu0 %3396
      %3398 = vrot.lane.b32.xlu0 %v2518, 28
      %v3399 = vpop.permute.xlu0 %3398
      %3400 = vrot.lane.b32.xlu0 %v2519, 28
      %v3401 = vpop.permute.xlu0 %3400
      %3402 = vrot.lane.b32.xlu0 %v2520, 28
      %v3403 = vpop.permute.xlu0 %3402
      %3404 = vrot.lane.b32.xlu0 %v2521, 28
      %v3405 = vpop.permute.xlu0 %3404
      %3406 = vrot.lane.b32.xlu0 %v2522, 28
      %v3407 = vpop.permute.xlu0 %3406
      %3408 = vrot.lane.b32.xlu0 %v2523, 28
      %v3409 = vpop.permute.xlu0 %3408
      %3410 = vrot.lane.b32.xlu0 %v2524, 28
      %v3411 = vpop.permute.xlu0 %3410
      %3412 = vrot.lane.b32.xlu0 %v2525, 28
      %v3413 = vpop.permute.xlu0 %3412
      %3414 = vrot.lane.b32.xlu0 %v2526, 28
      %v3415 = vpop.permute.xlu0 %3414
      %3416 = vrot.lane.b32.xlu0 %v2527, 28
      %v3417 = vpop.permute.xlu0 %3416
      %3418 = vrot.lane.b32.xlu0 %v2528, 28
      %v3419 = vpop.permute.xlu0 %3418
      %3420 = vrot.lane.b32.xlu0 %v2529, 28
      %v3421 = vpop.permute.xlu0 %3420
      %3422 = vrot.lane.b32.xlu0 %v2530, 28
      %v3423 = vpop.permute.xlu0 %3422
      %3424 = vrot.lane.b32.xlu0 %v2531, 28
      %v3425 = vpop.permute.xlu0 %3424
      %3426 = vrot.lane.b32.xlu0 %v2532, 28
      %v3427 = vpop.permute.xlu0 %3426
      %3428 = vrot.lane.b32.xlu0 %v2533, 28
      %v3429 = vpop.permute.xlu0 %3428
      %3494 = vrot.lane.b32.xlu0 %v2534, 32
      %v3495 = vpop.permute.xlu0 %3494
      %3496 = vrot.lane.b32.xlu0 %v2535, 32
      %v3497 = vpop.permute.xlu0 %3496
      %3498 = vrot.lane.b32.xlu0 %v2536, 32
      %v3499 = vpop.permute.xlu0 %3498
      %3500 = vrot.lane.b32.xlu0 %v2537, 32
      %v3501 = vpop.permute.xlu0 %3500
      %3502 = vrot.lane.b32.xlu0 %v2538, 32
      %v3503 = vpop.permute.xlu0 %3502
      %3504 = vrot.lane.b32.xlu0 %v2539, 32
      %v3505 = vpop.permute.xlu0 %3504
      %3506 = vrot.lane.b32.xlu0 %v2540, 32
      %v3507 = vpop.permute.xlu0 %3506
      %3508 = vrot.lane.b32.xlu0 %v2541, 32
      %v3509 = vpop.permute.xlu0 %3508
      %3510 = vrot.lane.b32.xlu0 %v2542, 32
      %v3511 = vpop.permute.xlu0 %3510
      %3512 = vrot.lane.b32.xlu0 %v2543, 32
      %v3513 = vpop.permute.xlu0 %3512
      %3514 = vrot.lane.b32.xlu0 %v2544, 32
      %v3515 = vpop.permute.xlu0 %3514
      %3516 = vrot.lane.b32.xlu0 %v2545, 32
      %v3517 = vpop.permute.xlu0 %3516
      %3518 = vrot.lane.b32.xlu0 %v2546, 32
      %v3519 = vpop.permute.xlu0 %3518
      %3520 = vrot.lane.b32.xlu0 %v2547, 32
      %v3521 = vpop.permute.xlu0 %3520
      %3522 = vrot.lane.b32.xlu0 %v2548, 32
      %v3523 = vpop.permute.xlu0 %3522
      %3524 = vrot.lane.b32.xlu0 %v2549, 32
      %v3525 = vpop.permute.xlu0 %3524
      %3526 = vrot.lane.b32.xlu0 %v2550, 32
      %v3527 = vpop.permute.xlu0 %3526
      %3528 = vrot.lane.b32.xlu0 %v2551, 32
      %v3529 = vpop.permute.xlu0 %3528
      %3530 = vrot.lane.b32.xlu0 %v2552, 32
      %v3531 = vpop.permute.xlu0 %3530
      %3532 = vrot.lane.b32.xlu0 %v2553, 32
      %v3533 = vpop.permute.xlu0 %3532
      %3534 = vrot.lane.b32.xlu0 %v2554, 32
      %v3535 = vpop.permute.xlu0 %3534
      %3536 = vrot.lane.b32.xlu0 %v2555, 32
      %v3537 = vpop.permute.xlu0 %3536
      %3538 = vrot.lane.b32.xlu0 %v2556, 32
      %v3539 = vpop.permute.xlu0 %3538
      %3540 = vrot.lane.b32.xlu0 %v2557, 32
      %v3541 = vpop.permute.xlu0 %3540
      %3542 = vrot.lane.b32.xlu0 %v2558, 32
      %v3543 = vpop.permute.xlu0 %3542
      %3544 = vrot.lane.b32.xlu0 %v2559, 32
      %v3545 = vpop.permute.xlu0 %3544
      %3546 = vrot.lane.b32.xlu0 %v2560, 32
      %v3547 = vpop.permute.xlu0 %3546
      %3548 = vrot.lane.b32.xlu0 %v2561, 32
      %v3549 = vpop.permute.xlu0 %3548
      %3550 = vrot.lane.b32.xlu0 %v2562, 32
      %v3551 = vpop.permute.xlu0 %3550
      %3552 = vrot.lane.b32.xlu0 %v2563, 32
      %v3553 = vpop.permute.xlu0 %3552
      %3554 = vrot.lane.b32.xlu0 %v2564, 32
      %v3555 = vpop.permute.xlu0 %3554
      %3556 = vrot.lane.b32.xlu0 %v2565, 32
      %v3557 = vpop.permute.xlu0 %3556
      %v3590 = vsel %vm171, %v2278, %v2599
      %v3591 = vsel %vm171, %v2279, %v2601
      %v3592 = vsel %vm171, %v2280, %v2603
      %v3593 = vsel %vm171, %v2281, %v2605
      %v3594 = vsel %vm171, %v2282, %v2607
      %v3595 = vsel %vm171, %v2283, %v2609
      %v3596 = vsel %vm171, %v2284, %v2611
      %v3597 = vsel %vm171, %v2285, %v2613
      %v3598 = vsel %vm171, %v2286, %v2615
      %v3599 = vsel %vm171, %v2287, %v2617
      %v3600 = vsel %vm171, %v2288, %v2619
      %v3601 = vsel %vm171, %v2289, %v2621
      %v3602 = vsel %vm171, %v2290, %v2623
      %v3603 = vsel %vm171, %v2291, %v2625
      %v3604 = vsel %vm171, %v2292, %v2627
      %v3605 = vsel %vm171, %v2293, %v2629
      %v3606 = vsel %vm171, %v2294, %v2631
      %v3607 = vsel %vm171, %v2295, %v2633
      %v3608 = vsel %vm171, %v2296, %v2635
      %v3609 = vsel %vm171, %v2297, %v2637
      %v3610 = vsel %vm171, %v2298, %v2639
      %v3611 = vsel %vm171, %v2299, %v2641
      %v3612 = vsel %vm171, %v2300, %v2643
      %v3613 = vsel %vm171, %v2301, %v2645
      %v3614 = vsel %vm171, %v2302, %v2647
      %v3615 = vsel %vm171, %v2303, %v2649
      %v3616 = vsel %vm171, %v2304, %v2651
      %v3617 = vsel %vm171, %v2305, %v2653
      %v3618 = vsel %vm171, %v2306, %v2655
      %v3619 = vsel %vm171, %v2307, %v2657
      %v3620 = vsel %vm171, %v2308, %v2659
      %v3621 = vsel %vm171, %v2309, %v2661
      %v3622 = vsel %vm1643, %v3590, %v2727
      %v3623 = vsel %vm1643, %v3591, %v2729
      %v3624 = vsel %vm1643, %v3592, %v2731
      %v3625 = vsel %vm1643, %v3593, %v2733
      %v3626 = vsel %vm1643, %v3594, %v2735
      %v3627 = vsel %vm1643, %v3595, %v2737
      %v3628 = vsel %vm1643, %v3596, %v2739
      %v3629 = vsel %vm1643, %v3597, %v2741
      %v3630 = vsel %vm1643, %v3598, %v2743
      %v3631 = vsel %vm1643, %v3599, %v2745
      %v3632 = vsel %vm1643, %v3600, %v2747
      %v3633 = vsel %vm1643, %v3601, %v2749
      %v3634 = vsel %vm1643, %v3602, %v2751
      %v3635 = vsel %vm1643, %v3603, %v2753
      %v3636 = vsel %vm1643, %v3604, %v2755
      %v3637 = vsel %vm1643, %v3605, %v2757
      %v3638 = vsel %vm1643, %v3606, %v2759
      %v3639 = vsel %vm1643, %v3607, %v2761
      %v3640 = vsel %vm1643, %v3608, %v2763
      %v3641 = vsel %vm1643, %v3609, %v2765
      %v3642 = vsel %vm1643, %v3610, %v2767
      %v3643 = vsel %vm1643, %v3611, %v2769
      %v3644 = vsel %vm1643, %v3612, %v2771
      %v3645 = vsel %vm1643, %v3613, %v2773
      %v3646 = vsel %vm1643, %v3614, %v2775
      %v3647 = vsel %vm1643, %v3615, %v2777
      %v3648 = vsel %vm1643, %v3616, %v2779
      %v3649 = vsel %vm1643, %v3617, %v2781
      %v3650 = vsel %vm1643, %v3618, %v2783
      %v3651 = vsel %vm1643, %v3619, %v2785
      %v3652 = vsel %vm1643, %v3620, %v2787
      %v3653 = vsel %vm1643, %v3621, %v2789
      %v3654 = vsel %vm1676, %v3622, %v2855
      %v3655 = vsel %vm1676, %v3623, %v2857
      %v3656 = vsel %vm1676, %v3624, %v2859
      %v3657 = vsel %vm1676, %v3625, %v2861
      %v3658 = vsel %vm1676, %v3626, %v2863
      %v3659 = vsel %vm1676, %v3627, %v2865
      %v3660 = vsel %vm1676, %v3628, %v2867
      %v3661 = vsel %vm1676, %v3629, %v2869
      %v3662 = vsel %vm1676, %v3630, %v2871
      %v3663 = vsel %vm1676, %v3631, %v2873
      %v3664 = vsel %vm1676, %v3632, %v2875
      %v3665 = vsel %vm1676, %v3633, %v2877
      %v3666 = vsel %vm1676, %v3634, %v2879
      %v3667 = vsel %vm1676, %v3635, %v2881
      %v3668 = vsel %vm1676, %v3636, %v2883
      %v3669 = vsel %vm1676, %v3637, %v2885
      %v3670 = vsel %vm1676, %v3638, %v2887
      %v3671 = vsel %vm1676, %v3639, %v2889
      %v3672 = vsel %vm1676, %v3640, %v2891
      %v3673 = vsel %vm1676, %v3641, %v2893
      %v3674 = vsel %vm1676, %v3642, %v2895
      %v3675 = vsel %vm1676, %v3643, %v2897
      %v3676 = vsel %vm1676, %v3644, %v2899
      %v3677 = vsel %vm1676, %v3645, %v2901
      %v3678 = vsel %vm1676, %v3646, %v2903
      %v3679 = vsel %vm1676, %v3647, %v2905
      %v3680 = vsel %vm1676, %v3648, %v2907
      %v3681 = vsel %vm1676, %v3649, %v2909
      %v3682 = vsel %vm1676, %v3650, %v2911
      %v3683 = vsel %vm1676, %v3651, %v2913
      %v3684 = vsel %vm1676, %v3652, %v2915
      %v3685 = vsel %vm1676, %v3653, %v2917
      %v3686 = vsel %vm1709, %v3654, %v2983
      %v3687 = vsel %vm1709, %v3655, %v2985
      %v3688 = vsel %vm1709, %v3656, %v2987
      %v3689 = vsel %vm1709, %v3657, %v2989
      %v3690 = vsel %vm1709, %v3658, %v2991
      %v3691 = vsel %vm1709, %v3659, %v2993
      %v3692 = vsel %vm1709, %v3660, %v2995
      %v3693 = vsel %vm1709, %v3661, %v2997
      %v3694 = vsel %vm1709, %v3662, %v2999
      %v3695 = vsel %vm1709, %v3663, %v3001
      %v3696 = vsel %vm1709, %v3664, %v3003
      %v3697 = vsel %vm1709, %v3665, %v3005
      %v3698 = vsel %vm1709, %v3666, %v3007
      %v3699 = vsel %vm1709, %v3667, %v3009
      %v3700 = vsel %vm1709, %v3668, %v3011
      %v3701 = vsel %vm1709, %v3669, %v3013
      %v3702 = vsel %vm1709, %v3670, %v3015
      %v3703 = vsel %vm1709, %v3671, %v3017
      %v3704 = vsel %vm1709, %v3672, %v3019
      %v3705 = vsel %vm1709, %v3673, %v3021
      %v3706 = vsel %vm1709, %v3674, %v3023
      %v3707 = vsel %vm1709, %v3675, %v3025
      %v3708 = vsel %vm1709, %v3676, %v3027
      %v3709 = vsel %vm1709, %v3677, %v3029
      %v3710 = vsel %vm1709, %v3678, %v3031
      %v3711 = vsel %vm1709, %v3679, %v3033
      %v3712 = vsel %vm1709, %v3680, %v3035
      %v3713 = vsel %vm1709, %v3681, %v3037
      %v3714 = vsel %vm1709, %v3682, %v3039
      %v3715 = vsel %vm1709, %v3683, %v3041
      %v3716 = vsel %vm1709, %v3684, %v3043
      %v3717 = vsel %vm1709, %v3685, %v3045
      %v3718 = vsel %vm1742, %v3686, %v3111
      %v3719 = vsel %vm1742, %v3687, %v3113
      %v3720 = vsel %vm1742, %v3688, %v3115
      %v3721 = vsel %vm1742, %v3689, %v3117
      %v3722 = vsel %vm1742, %v3690, %v3119
      %v3723 = vsel %vm1742, %v3691, %v3121
      %v3724 = vsel %vm1742, %v3692, %v3123
      %v3725 = vsel %vm1742, %v3693, %v3125
      %v3726 = vsel %vm1742, %v3694, %v3127
      %v3727 = vsel %vm1742, %v3695, %v3129
      %v3728 = vsel %vm1742, %v3696, %v3131
      %v3729 = vsel %vm1742, %v3697, %v3133
      %v3730 = vsel %vm1742, %v3698, %v3135
      %v3731 = vsel %vm1742, %v3699, %v3137
      %v3732 = vsel %vm1742, %v3700, %v3139
      %v3733 = vsel %vm1742, %v3701, %v3141
      %v3734 = vsel %vm1742, %v3702, %v3143
      %v3735 = vsel %vm1742, %v3703, %v3145
      %v3736 = vsel %vm1742, %v3704, %v3147
      %v3737 = vsel %vm1742, %v3705, %v3149
      %v3738 = vsel %vm1742, %v3706, %v3151
      %v3739 = vsel %vm1742, %v3707, %v3153
      %v3740 = vsel %vm1742, %v3708, %v3155
      %v3741 = vsel %vm1742, %v3709, %v3157
      %v3742 = vsel %vm1742, %v3710, %v3159
      %v3743 = vsel %vm1742, %v3711, %v3161
      %v3744 = vsel %vm1742, %v3712, %v3163
      %v3745 = vsel %vm1742, %v3713, %v3165
      %v3746 = vsel %vm1742, %v3714, %v3167
      %v3747 = vsel %vm1742, %v3715, %v3169
      %v3748 = vsel %vm1742, %v3716, %v3171
      %v3749 = vsel %vm1742, %v3717, %v3173
      %v3750 = vsel %vm1775, %v3718, %v3239
      %v3751 = vsel %vm1775, %v3719, %v3241
      %v3752 = vsel %vm1775, %v3720, %v3243
      %v3753 = vsel %vm1775, %v3721, %v3245
      %v3754 = vsel %vm1775, %v3722, %v3247
      %v3755 = vsel %vm1775, %v3723, %v3249
      %v3756 = vsel %vm1775, %v3724, %v3251
      %v3757 = vsel %vm1775, %v3725, %v3253
      %v3758 = vsel %vm1775, %v3726, %v3255
      %v3759 = vsel %vm1775, %v3727, %v3257
      %v3760 = vsel %vm1775, %v3728, %v3259
      %v3761 = vsel %vm1775, %v3729, %v3261
      %v3762 = vsel %vm1775, %v3730, %v3263
      %v3763 = vsel %vm1775, %v3731, %v3265
      %v3764 = vsel %vm1775, %v3732, %v3267
      %v3765 = vsel %vm1775, %v3733, %v3269
      %v3766 = vsel %vm1775, %v3734, %v3271
      %v3767 = vsel %vm1775, %v3735, %v3273
      %v3768 = vsel %vm1775, %v3736, %v3275
      %v3769 = vsel %vm1775, %v3737, %v3277
      %v3770 = vsel %vm1775, %v3738, %v3279
      %v3771 = vsel %vm1775, %v3739, %v3281
      %v3772 = vsel %vm1775, %v3740, %v3283
      %v3773 = vsel %vm1775, %v3741, %v3285
      %v3774 = vsel %vm1775, %v3742, %v3287
      %v3775 = vsel %vm1775, %v3743, %v3289
      %v3776 = vsel %vm1775, %v3744, %v3291
      %v3777 = vsel %vm1775, %v3745, %v3293
      %v3778 = vsel %vm1775, %v3746, %v3295
      %v3779 = vsel %vm1775, %v3747, %v3297
      %v3780 = vsel %vm1775, %v3748, %v3299
      %v3781 = vsel %vm1775, %v3749, %v3301
      %v3782 = vsel %vm1808, %v3750, %v3367
      %v3783 = vsel %vm1808, %v3751, %v3369
      %v3784 = vsel %vm1808, %v3752, %v3371
      %v3785 = vsel %vm1808, %v3753, %v3373
      %v3786 = vsel %vm1808, %v3754, %v3375
      %v3787 = vsel %vm1808, %v3755, %v3377
      %v3788 = vsel %vm1808, %v3756, %v3379
      %v3789 = vsel %vm1808, %v3757, %v3381
      %v3790 = vsel %vm1808, %v3758, %v3383
      %v3791 = vsel %vm1808, %v3759, %v3385
      %v3792 = vsel %vm1808, %v3760, %v3387
      %v3793 = vsel %vm1808, %v3761, %v3389
      %v3794 = vsel %vm1808, %v3762, %v3391
      %v3795 = vsel %vm1808, %v3763, %v3393
      %v3796 = vsel %vm1808, %v3764, %v3395
      %v3797 = vsel %vm1808, %v3765, %v3397
      %v3798 = vsel %vm1808, %v3766, %v3399
      %v3799 = vsel %vm1808, %v3767, %v3401
      %v3800 = vsel %vm1808, %v3768, %v3403
      %v3801 = vsel %vm1808, %v3769, %v3405
      %v3802 = vsel %vm1808, %v3770, %v3407
      %v3803 = vsel %vm1808, %v3771, %v3409
      %v3804 = vsel %vm1808, %v3772, %v3411
      %v3805 = vsel %vm1808, %v3773, %v3413
      %v3806 = vsel %vm1808, %v3774, %v3415
      %v3807 = vsel %vm1808, %v3775, %v3417
      %v3808 = vsel %vm1808, %v3776, %v3419
      %v3809 = vsel %vm1808, %v3777, %v3421
      %v3810 = vsel %vm1808, %v3778, %v3423
      %v3811 = vsel %vm1808, %v3779, %v3425
      %v3812 = vsel %vm1808, %v3780, %v3427
      %v3813 = vsel %vm1808, %v3781, %v3429
      %v3814 = vsel %vm1841, %v3782, %v3495
      %v3815 = vsel %vm1841, %v3783, %v3497
      %v3816 = vsel %vm1841, %v3784, %v3499
      %v3817 = vsel %vm1841, %v3785, %v3501
      %v3818 = vsel %vm1841, %v3786, %v3503
      %v3819 = vsel %vm1841, %v3787, %v3505
      %v3820 = vsel %vm1841, %v3788, %v3507
      %v3821 = vsel %vm1841, %v3789, %v3509
      %v3822 = vsel %vm1841, %v3790, %v3511
      %v3823 = vsel %vm1841, %v3791, %v3513
      %v3824 = vsel %vm1841, %v3792, %v3515
      %v3825 = vsel %vm1841, %v3793, %v3517
      %v3826 = vsel %vm1841, %v3794, %v3519
      %v3827 = vsel %vm1841, %v3795, %v3521
      %v3828 = vsel %vm1841, %v3796, %v3523
      %v3829 = vsel %vm1841, %v3797, %v3525
      %v3830 = vsel %vm1841, %v3798, %v3527
      %v3831 = vsel %vm1841, %v3799, %v3529
      %v3832 = vsel %vm1841, %v3800, %v3531
      %v3833 = vsel %vm1841, %v3801, %v3533
      %v3834 = vsel %vm1841, %v3802, %v3535
      %v3835 = vsel %vm1841, %v3803, %v3537
      %v3836 = vsel %vm1841, %v3804, %v3539
      %v3837 = vsel %vm1841, %v3805, %v3541
      %v3838 = vsel %vm1841, %v3806, %v3543
      %v3839 = vsel %vm1841, %v3807, %v3545
      %v3840 = vsel %vm1841, %v3808, %v3547
      %v3841 = vsel %vm1841, %v3809, %v3549
      %v3842 = vsel %vm1841, %v3810, %v3551
      %v3843 = vsel %vm1841, %v3811, %v3553
      %v3844 = vsel %vm1841, %v3812, %v3555
      %v3845 = vsel %vm1841, %v3813, %v3557
      %v3847 = vlaneseq
      %v3848 = vshrl.u32 %v3847, 7
      %v3849 = vsub.s32 0, %v3848
      %v3850 = vrot.slane %v2277, %v3849
      %v3853 = vsel %vm1880, %v3814, 0
      %v3856 = vsel %vm1880, %v3815, 0
      %v3859 = vsel %vm1880, %v3816, 0
      %v3862 = vsel %vm1880, %v3817, 0
      %v3865 = vsel %vm1880, %v3818, 0
      %v3868 = vsel %vm1880, %v3819, 0
      %v3871 = vsel %vm1880, %v3820, 0
      %v3874 = vsel %vm1880, %v3821, 0
      %v3877 = vsel %vm1880, %v3822, 0
      %v3880 = vsel %vm1880, %v3823, 0
      %v3883 = vsel %vm1880, %v3824, 0
      %v3886 = vsel %vm1880, %v3825, 0
      %v3889 = vsel %vm1880, %v3826, 0
      %v3892 = vsel %vm1880, %v3827, 0
      %v3895 = vsel %vm1880, %v3828, 0
      %v3898 = vsel %vm1880, %v3829, 0
      %v3901 = vsel %vm1880, %v3830, 0
      %v3904 = vsel %vm1880, %v3831, 0
      %v3907 = vsel %vm1880, %v3832, 0
      %v3910 = vsel %vm1880, %v3833, 0
      %v3913 = vsel %vm1880, %v3834, 0
      %v3916 = vsel %vm1880, %v3835, 0
      %v3919 = vsel %vm1880, %v3836, 0
      %v3922 = vsel %vm1880, %v3837, 0
      %v3925 = vsel %vm1880, %v3838, 0
      %v3928 = vsel %vm1880, %v3839, 0
      %v3931 = vsel %vm1880, %v3840, 0
      %v3934 = vsel %vm1880, %v3841, 0
      %v3937 = vsel %vm1880, %v3842, 0
      %v3940 = vsel %vm1880, %v3843, 0
      %v3943 = vsel %vm1880, %v3844, 0
      %v3946 = vsel %vm1880, %v3845, 0
      %v3949 = vsel %vm1977, %v2275, 0
      %3951 = vmatprep.subr.mxu0 0.0
      %3952 = vmatpush1.msra.mxu0 %v2271
      %3953 = vmatprep.subr.mxu0 0.0
      %3954 = vmatpush1.msra.mxu0 %v2272
      %3955 = vmatprep.subr.mxu0 0.0
      %3956 = vmatpush1.msra.mxu0 %v2273
      %3957 = vmatprep.subr.mxu0 0.0
      %3958 = vmatpush1.msra.mxu0 %v2274
      %3959 = vmatprep.subr.mxu0 0.0
      %3960 = vmatpush1.msra.mxu0 %v3949
      %3961 = vmatprep.subr.mxu0 0.0
      %3962 = vmatpush1.msra.mxu0 0.0
      %3963 = vmatprep.subr.mxu0 0.0
      %3964 = vmatpush1.msra.mxu0 0.0
      %3965 = vmatprep.subr.mxu0 0.0
      %3966 = vmatpush1.msra.mxu0 0.0
      %3967 = vmatprep.subr.mxu0 0.0
      %3968 = vmatpush1.msra.mxu0 0.0
      %3969 = vmatprep.subr.mxu0 0.0
      %3970 = vmatpush1.msra.mxu0 0.0
      %3971 = vmatprep.subr.mxu0 0.0
      %3972 = vmatpush1.msra.mxu0 0.0
      %3973 = vmatprep.subr.mxu0 0.0
      %3974 = vmatpush1.msra.mxu0 0.0
      %3975 = vmatprep.subr.mxu0 0.0
      %3976 = vmatpush1.msra.mxu0 0.0
      %3977 = vmatprep.subr.mxu0 0.0
      %3978 = vmatpush1.msra.mxu0 0.0
      %3979 = vmatprep.subr.mxu0 0.0
      %3980 = vmatpush1.msra.mxu0 0.0
      %3981 = vmatprep.subr.mxu0 0.0
      %3982 = vmatpush1.msra.mxu0 0.0
      %3983 = vmatprep.subr.mxu0 0.0
      %3984 = vmatpush1.msra.mxu0 0.0
      %3985 = vmatprep.subr.mxu0 0.0
      %3986 = vmatpush1.msra.mxu0 0.0
      %3987 = vmatprep.subr.mxu0 0.0
      %3988 = vmatpush1.msra.mxu0 0.0
      %3989 = vmatprep.subr.mxu0 0.0
      %3990 = vmatpush1.msra.mxu0 0.0
      %3991 = vmatprep.subr.mxu0 0.0
      %3992 = vmatpush1.msra.mxu0 0.0
      %3993 = vmatprep.subr.mxu0 0.0
      %3994 = vmatpush1.msra.mxu0 0.0
      %3995 = vmatprep.subr.mxu0 0.0
      %3996 = vmatpush1.msra.mxu0 0.0
      %3997 = vmatprep.subr.mxu0 0.0
      %3998 = vmatpush1.msra.mxu0 0.0
      %3999 = vmatprep.subr.mxu0 0.0
      %4000 = vmatpush1.msra.mxu0 0.0
      %4001 = vmatprep.subr.mxu0 0.0
      %4002 = vmatpush1.msra.mxu0 0.0
      %4003 = vmatprep.subr.mxu0 0.0
      %4004 = vmatpush1.msra.mxu0 0.0
      %4005 = vmatprep.subr.mxu0 0.0
      %4006 = vmatpush1.msra.mxu0 0.0
      %4007 = vmatprep.subr.mxu0 0.0
      %4008 = vmatpush1.msra.mxu0 0.0
      %4009 = vmatprep.subr.mxu0 0.0
      %4010 = vmatpush1.msra.mxu0 0.0
      %4011 = vmatprep.subr.mxu0 0.0
      %4012 = vmatpush1.msra.mxu0 0.0
      %4013 = vmatprep.subr.mxu0 0.0
      %4014 = vmatpush1.msra.mxu0 0.0
      %4015 = vmatprep.mubr.f32.mxu0 0.0
      %4016 = vmatmul.mubr.f32.gmra.mrb[0].mxu0 %v3853
      %v4017 = vpop.f32.mrb[0].mxu0
      %v4018 = vadd.f32 %v3850, %v4017
      %v4019 = vpop.f32.mrb[0].mxu0
      %4020 = vmatprep.mubr.f32.mxu0 0.0
      %4021 = vmatmul.mubr.f32.gmra.mrb[0].mxu0 %v3856
      %v4022 = vpop.f32.mrb[0].mxu0
      %v4023 = vadd.f32 %v3850, %v4022
      %v4024 = vpop.f32.mrb[0].mxu0
      %4025 = vmatprep.mubr.f32.mxu0 0.0
      %4026 = vmatmul.mubr.f32.gmra.mrb[0].mxu0 %v3859
      %v4027 = vpop.f32.mrb[0].mxu0
      %v4028 = vadd.f32 %v3850, %v4027
      %v4029 = vpop.f32.mrb[0].mxu0
      %4030 = vmatprep.mubr.f32.mxu0 0.0
      %4031 = vmatmul.mubr.f32.gmra.mrb[0].mxu0 %v3862
      %v4032 = vpop.f32.mrb[0].mxu0
      %v4033 = vadd.f32 %v3850, %v4032
      %v4034 = vpop.f32.mrb[0].mxu0
      %4035 = vmatprep.mubr.f32.mxu0 0.0
      %4036 = vmatmul.mubr.f32.gmra.mrb[0].mxu0 %v3865
      %v4037 = vpop.f32.mrb[0].mxu0
      %v4038 = vadd.f32 %v3850, %v4037
      %v4039 = vpop.f32.mrb[0].mxu0
      %4040 = vmatprep.mubr.f32.mxu0 0.0
      %4041 = vmatmul.mubr.f32.gmra.mrb[0].mxu0 %v3868
      %v4042 = vpop.f32.mrb[0].mxu0
      %v4043 = vadd.f32 %v3850, %v4042
      %v4044 = vpop.f32.mrb[0].mxu0
      %4045 = vmatprep.mubr.f32.mxu0 0.0
      %4046 = vmatmul.mubr.f32.gmra.mrb[0].mxu0 %v3871
      %v4047 = vpop.f32.mrb[0].mxu0
      %v4048 = vadd.f32 %v3850, %v4047
      %v4049 = vpop.f32.mrb[0].mxu0
      %4050 = vmatprep.mubr.f32.mxu0 0.0
      %4051 = vmatmul.mubr.f32.gmra.mrb[0].mxu0 %v3874
      %v4052 = vpop.f32.mrb[0].mxu0
      %v4053 = vadd.f32 %v3850, %v4052
      %v4054 = vpop.f32.mrb[0].mxu0
      %4055 = vmatprep.mubr.f32.mxu0 0.0
      %4056 = vmatmul.mubr.f32.gmra.mrb[0].mxu0 %v3877
      %v4057 = vpop.f32.mrb[0].mxu0
      %v4058 = vadd.f32 %v3850, %v4057
      %v4059 = vpop.f32.mrb[0].mxu0
      %4060 = vmatprep.mubr.f32.mxu0 0.0
      %4061 = vmatmul.mubr.f32.gmra.mrb[0].mxu0 %v3880
      %v4062 = vpop.f32.mrb[0].mxu0
      %v4063 = vadd.f32 %v3850, %v4062
      %v4064 = vpop.f32.mrb[0].mxu0
      %4065 = vmatprep.mubr.f32.mxu0 0.0
      %4066 = vmatmul.mubr.f32.gmra.mrb[0].mxu0 %v3883
      %v4067 = vpop.f32.mrb[0].mxu0
      %v4068 = vadd.f32 %v3850, %v4067
      %v4069 = vpop.f32.mrb[0].mxu0
      %4070 = vmatprep.mubr.f32.mxu0 0.0
      %4071 = vmatmul.mubr.f32.gmra.mrb[0].mxu0 %v3886
      %v4072 = vpop.f32.mrb[0].mxu0
      %v4073 = vadd.f32 %v3850, %v4072
      %v4074 = vpop.f32.mrb[0].mxu0
      %4075 = vmatprep.mubr.f32.mxu0 0.0
      %4076 = vmatmul.mubr.f32.gmra.mrb[0].mxu0 %v3889
      %v4077 = vpop.f32.mrb[0].mxu0
      %v4078 = vadd.f32 %v3850, %v4077
      %v4079 = vpop.f32.mrb[0].mxu0
      %4080 = vmatprep.mubr.f32.mxu0 0.0
      %4081 = vmatmul.mubr.f32.gmra.mrb[0].mxu0 %v3892
      %v4082 = vpop.f32.mrb[0].mxu0
      %v4083 = vadd.f32 %v3850, %v4082
      %v4084 = vpop.f32.mrb[0].mxu0
      %4085 = vmatprep.mubr.f32.mxu0 0.0
      %4086 = vmatmul.mubr.f32.gmra.mrb[0].mxu0 %v3895
      %v4087 = vpop.f32.mrb[0].mxu0
      %v4088 = vadd.f32 %v3850, %v4087
      %v4089 = vpop.f32.mrb[0].mxu0
      %4090 = vmatprep.mubr.f32.mxu0 0.0
      %4091 = vmatmul.mubr.f32.gmra.mrb[0].mxu0 %v3898
      %v4092 = vpop.f32.mrb[0].mxu0
      %v4093 = vadd.f32 %v3850, %v4092
      %v4094 = vpop.f32.mrb[0].mxu0
      %4095 = vmatprep.mubr.f32.mxu0 0.0
      %4096 = vmatmul.mubr.f32.gmra.mrb[0].mxu0 %v3901
      %v4097 = vpop.f32.mrb[0].mxu0
      %v4098 = vadd.f32 %v3850, %v4097
      %v4099 = vpop.f32.mrb[0].mxu0
      %4100 = vmatprep.mubr.f32.mxu0 0.0
      %4101 = vmatmul.mubr.f32.gmra.mrb[0].mxu0 %v3904
      %v4102 = vpop.f32.mrb[0].mxu0
      %v4103 = vadd.f32 %v3850, %v4102
      %v4104 = vpop.f32.mrb[0].mxu0
      %4105 = vmatprep.mubr.f32.mxu0 0.0
      %4106 = vmatmul.mubr.f32.gmra.mrb[0].mxu0 %v3907
      %v4107 = vpop.f32.mrb[0].mxu0
      %v4108 = vadd.f32 %v3850, %v4107
      %v4109 = vpop.f32.mrb[0].mxu0
      %4110 = vmatprep.mubr.f32.mxu0 0.0
      %4111 = vmatmul.mubr.f32.gmra.mrb[0].mxu0 %v3910
      %v4112 = vpop.f32.mrb[0].mxu0
      %v4113 = vadd.f32 %v3850, %v4112
      %v4114 = vpop.f32.mrb[0].mxu0
      %4115 = vmatprep.mubr.f32.mxu0 0.0
      %4116 = vmatmul.mubr.f32.gmra.mrb[0].mxu0 %v3913
      %v4117 = vpop.f32.mrb[0].mxu0
      %v4118 = vadd.f32 %v3850, %v4117
      %v4119 = vpop.f32.mrb[0].mxu0
      %4120 = vmatprep.mubr.f32.mxu0 0.0
      %4121 = vmatmul.mubr.f32.gmra.mrb[0].mxu0 %v3916
      %v4122 = vpop.f32.mrb[0].mxu0
      %v4123 = vadd.f32 %v3850, %v4122
      %v4124 = vpop.f32.mrb[0].mxu0
      %4125 = vmatprep.mubr.f32.mxu0 0.0
      %4126 = vmatmul.mubr.f32.gmra.mrb[0].mxu0 %v3919
      %v4127 = vpop.f32.mrb[0].mxu0
      %v4128 = vadd.f32 %v3850, %v4127
      %v4129 = vpop.f32.mrb[0].mxu0
      %4130 = vmatprep.mubr.f32.mxu0 0.0
      %4131 = vmatmul.mubr.f32.gmra.mrb[0].mxu0 %v3922
      %v4132 = vpop.f32.mrb[0].mxu0
      %v4133 = vadd.f32 %v3850, %v4132
      %v4134 = vpop.f32.mrb[0].mxu0
      %4135 = vmatprep.mubr.f32.mxu0 0.0
      %4136 = vmatmul.mubr.f32.gmra.mrb[0].mxu0 %v3925
      %v4137 = vpop.f32.mrb[0].mxu0
      %v4138 = vadd.f32 %v3850, %v4137
      %v4139 = vpop.f32.mrb[0].mxu0
      %4140 = vmatprep.mubr.f32.mxu0 0.0
      %4141 = vmatmul.mubr.f32.gmra.mrb[0].mxu0 %v3928
      %v4142 = vpop.f32.mrb[0].mxu0
      %v4143 = vadd.f32 %v3850, %v4142
      %v4144 = vpop.f32.mrb[0].mxu0
      %4145 = vmatprep.mubr.f32.mxu0 0.0
      %4146 = vmatmul.mubr.f32.gmra.mrb[0].mxu0 %v3931
      %v4147 = vpop.f32.mrb[0].mxu0
      %v4148 = vadd.f32 %v3850, %v4147
      %v4149 = vpop.f32.mrb[0].mxu0
      %4150 = vmatprep.mubr.f32.mxu0 0.0
      %4151 = vmatmul.mubr.f32.gmra.mrb[0].mxu0 %v3934
      %v4152 = vpop.f32.mrb[0].mxu0
      %v4153 = vadd.f32 %v3850, %v4152
      %v4154 = vpop.f32.mrb[0].mxu0
      %4155 = vmatprep.mubr.f32.mxu0 0.0
      %4156 = vmatmul.mubr.f32.gmra.mrb[0].mxu0 %v3937
      %v4157 = vpop.f32.mrb[0].mxu0
      %v4158 = vadd.f32 %v3850, %v4157
      %v4159 = vpop.f32.mrb[0].mxu0
      %4160 = vmatprep.mubr.f32.mxu0 0.0
      %4161 = vmatmul.mubr.f32.gmra.mrb[0].mxu0 %v3940
      %v4162 = vpop.f32.mrb[0].mxu0
      %v4163 = vadd.f32 %v3850, %v4162
      %v4164 = vpop.f32.mrb[0].mxu0
      %4165 = vmatprep.mubr.f32.mxu0 0.0
      %4166 = vmatmul.mubr.f32.gmra.mrb[0].mxu0 %v3943
      %v4167 = vpop.f32.mrb[0].mxu0
      %v4168 = vadd.f32 %v3850, %v4167
      %v4169 = vpop.f32.mrb[0].mxu0
      %4170 = vmatprep.mubr.f32.mxu0 0.0
      %4171 = vmatmul.mubr.f32.gmra.mrb[0].mxu0 %v3946
      %v4172 = vpop.f32.mrb[0].mxu0
      %v4173 = vadd.f32 %v3850, %v4172
      %v4174 = vpop.f32.mrb[0].mxu0
      %4175 = vdwg.mxu0
      %v4176 = vadd.f32 %v227, %v4018
      %v4177 = vadd.f32 %v228, %v4023
      %v4178 = vadd.f32 %v229, %v4028
      %v4179 = vadd.f32 %v230, %v4033
      %v4180 = vadd.f32 %v231, %v4038
      %v4181 = vadd.f32 %v232, %v4043
      %v4182 = vadd.f32 %v233, %v4048
      %v4183 = vadd.f32 %v234, %v4053
      %v4184 = vadd.f32 %v235, %v4058
      %v4185 = vadd.f32 %v236, %v4063
      %v4186 = vadd.f32 %v237, %v4068
      %v4187 = vadd.f32 %v238, %v4073
      %v4188 = vadd.f32 %v239, %v4078
      %v4189 = vadd.f32 %v240, %v4083
      %v4190 = vadd.f32 %v241, %v4088
      %v4191 = vadd.f32 %v242, %v4093
      %v4192 = vadd.f32 %v243, %v4098
      %v4193 = vadd.f32 %v244, %v4103
      %v4194 = vadd.f32 %v245, %v4108
      %v4195 = vadd.f32 %v246, %v4113
      %v4196 = vadd.f32 %v247, %v4118
      %v4197 = vadd.f32 %v248, %v4123
      %v4198 = vadd.f32 %v249, %v4128
      %v4199 = vadd.f32 %v250, %v4133
      %v4200 = vadd.f32 %v251, %v4138
      %v4201 = vadd.f32 %v252, %v4143
      %v4202 = vadd.f32 %v253, %v4148
      %v4203 = vadd.f32 %v254, %v4153
      %v4204 = vadd.f32 %v255, %v4158
      %v4205 = vadd.f32 %v256, %v4163
      %v4206 = vadd.f32 %v257, %v4168
      %v4207 = vadd.f32 %v258, %v4173
      %4208 = vst.msk [vmem:[%s259 + $0x1] sm:$0xff] %vm171, %v4176
      %4209 = vst.msk [vmem:[%s259 + $0x9] sm:$0xff] %vm171, %v4177
      %4210 = vst.msk [vmem:[%s259 + $0x19] sm:$0xff] %vm171, %v4178
      %4211 = vst.msk [vmem:[%s259 + $0x21] sm:$0xff] %vm171, %v4179
      %4212 = vst.msk [vmem:[%s259 + $0x31] sm:$0xff] %vm171, %v4180
      %4213 = vst.msk [vmem:[%s259 + $0x39] sm:$0xff] %vm171, %v4181
      %4214 = vst.msk [vmem:[%s259 + $0x49] sm:$0xff] %vm171, %v4182
      %4215 = vst.msk [vmem:[%s259 + $0x51] sm:$0xff] %vm171, %v4183
      %4216 = vst.msk [vmem:[%s259 + $0x61] sm:$0xff] %vm171, %v4184
      %4217 = vst.msk [vmem:[%s259 + $0x69] sm:$0xff] %vm171, %v4185
      %4218 = vst.msk [vmem:[%s259 + $0x79] sm:$0xff] %vm171, %v4186
      %4219 = vst.msk [vmem:[%s259 + $0x81] sm:$0xff] %vm171, %v4187
      %4220 = vst.msk [vmem:[%s259 + $0x91] sm:$0xff] %vm171, %v4188
      %4221 = vst.msk [vmem:[%s259 + $0x99] sm:$0xff] %vm171, %v4189
      %4222 = vst.msk [vmem:[%s259 + $0xa9] sm:$0xff] %vm171, %v4190
      %4223 = vst.msk [vmem:[%s259 + $0xb1] sm:$0xff] %vm171, %v4191
      %4224 = vst.msk [vmem:[%s259 + $0xc1] sm:$0xff] %vm171, %v4192
      %4225 = vst.msk [vmem:[%s259 + $0xc9] sm:$0xff] %vm171, %v4193
      %4226 = vst.msk [vmem:[%s259 + $0xd9] sm:$0xff] %vm171, %v4194
      %4227 = vst.msk [vmem:[%s259 + $0xe1] sm:$0xff] %vm171, %v4195
      %4228 = vst.msk [vmem:[%s259 + $0xf1] sm:$0xff] %vm171, %v4196
      %4229 = vst.msk [vmem:[%s259 + $0xf9] sm:$0xff] %vm171, %v4197
      %4230 = vst.msk [vmem:[%s259 + $0x109] sm:$0xff] %vm171, %v4198
      %4231 = vst.msk [vmem:[%s259 + $0x111] sm:$0xff] %vm171, %v4199
      %4232 = vst.msk [vmem:[%s259 + $0x121] sm:$0xff] %vm171, %v4200
      %4233 = vst.msk [vmem:[%s259 + $0x129] sm:$0xff] %vm171, %v4201
      %4234 = vst.msk [vmem:[%s259 + $0x139] sm:$0xff] %vm171, %v4202
      %4235 = vst.msk [vmem:[%s259 + $0x141] sm:$0xff] %vm171, %v4203
      %4236 = vst.msk [vmem:[%s259 + $0x151] sm:$0xff] %vm171, %v4204
      %4237 = vst.msk [vmem:[%s259 + $0x159] sm:$0xff] %vm171, %v4205
      %4238 = vst.msk [vmem:[%s259 + $0x169] sm:$0xff] %vm171, %v4206
      %4239 = vst.msk [vmem:[%s259 + $0x171] sm:$0xff] %vm171, %v4207
      %s4240 = scalar_lea.vmem %s1, 80
      %v4241 = vld [vmem:[%s4240] sm:$0xff]
      %v4242 = vld [vmem:[%s4240 + $0x8] sm:$0xff]
      %v4243 = vld [vmem:[%s4240 + $0x10] sm:$0xff]
      %v4244 = vld [vmem:[%s4240 + $0x18] sm:$0xff]
      %v4245 = vld [vmem:[%s4240 + $0x20] sm:$0xf]
      %s4246 = scalar_lea.vmem %s2, 2
      %v4247 = vld [vmem:[%s4246] sm:$0x1]
      %v4248 = vld [vmem:[#allocation2] sm:$0xff]
      %v4249 = vld [vmem:[#allocation2 + $0x8] sm:$0xff]
      %v4250 = vld [vmem:[#allocation2 + $0x18] sm:$0xff]
      %v4251 = vld [vmem:[#allocation2 + $0x20] sm:$0xff]
      %v4252 = vld [vmem:[#allocation2 + $0x30] sm:$0xff]
      %v4253 = vld [vmem:[#allocation2 + $0x38] sm:$0xff]
      %v4254 = vld [vmem:[#allocation2 + $0x48] sm:$0xff]
      %v4255 = vld [vmem:[#allocation2 + $0x50] sm:$0xff]
      %v4256 = vld [vmem:[#allocation2 + $0x60] sm:$0xff]
      %v4257 = vld [vmem:[#allocation2 + $0x68] sm:$0xff]
      %v4258 = vld [vmem:[#allocation2 + $0x78] sm:$0xff]
      %v4259 = vld [vmem:[#allocation2 + $0x80] sm:$0xff]
      %v4260 = vld [vmem:[#allocation2 + $0x90] sm:$0xff]
      %v4261 = vld [vmem:[#allocation2 + $0x98] sm:$0xff]
      %v4262 = vld [vmem:[#allocation2 + $0xa8] sm:$0xff]
      %v4263 = vld [vmem:[#allocation2 + $0xb0] sm:$0xff]
      %v4264 = vld [vmem:[#allocation2 + $0xc0] sm:$0xff]
      %v4265 = vld [vmem:[#allocation2 + $0xc8] sm:$0xff]
      %v4266 = vld [vmem:[#allocation2 + $0xd8] sm:$0xff]
      %v4267 = vld [vmem:[#allocation2 + $0xe0] sm:$0xff]
      %v4268 = vld [vmem:[#allocation2 + $0xf0] sm:$0xff]
      %v4269 = vld [vmem:[#allocation2 + $0xf8] sm:$0xff]
      %v4270 = vld [vmem:[#allocation2 + $0x108] sm:$0xff]
      %v4271 = vld [vmem:[#allocation2 + $0x110] sm:$0xff]
      %v4272 = vld [vmem:[#allocation2 + $0x120] sm:$0xff]
      %v4273 = vld [vmem:[#allocation2 + $0x128] sm:$0xff]
      %v4274 = vld [vmem:[#allocation2 + $0x138] sm:$0xff]
      %v4275 = vld [vmem:[#allocation2 + $0x140] sm:$0xff]
      %v4276 = vld [vmem:[#allocation2 + $0x150] sm:$0xff]
      %v4277 = vld [vmem:[#allocation2 + $0x158] sm:$0xff]
      %v4278 = vld [vmem:[#allocation2 + $0x168] sm:$0xff]
      %v4279 = vld [vmem:[#allocation2 + $0x170] sm:$0xff]
      %v4280 = vld [vmem:[#allocation2 + $0x1] sm:$0xff]
      %v4281 = vld [vmem:[#allocation2 + $0x9] sm:$0xff]
      %v4282 = vld [vmem:[#allocation2 + $0x19] sm:$0xff]
      %v4283 = vld [vmem:[#allocation2 + $0x21] sm:$0xff]
      %v4284 = vld [vmem:[#allocation2 + $0x31] sm:$0xff]
      %v4285 = vld [vmem:[#allocation2 + $0x39] sm:$0xff]
      %v4286 = vld [vmem:[#allocation2 + $0x49] sm:$0xff]
      %v4287 = vld [vmem:[#allocation2 + $0x51] sm:$0xff]
      %v4288 = vld [vmem:[#allocation2 + $0x61] sm:$0xff]
      %v4289 = vld [vmem:[#allocation2 + $0x69] sm:$0xff]
      %v4290 = vld [vmem:[#allocation2 + $0x79] sm:$0xff]
      %v4291 = vld [vmem:[#allocation2 + $0x81] sm:$0xff]
      %v4292 = vld [vmem:[#allocation2 + $0x91] sm:$0xff]
      %v4293 = vld [vmem:[#allocation2 + $0x99] sm:$0xff]
      %v4294 = vld [vmem:[#allocation2 + $0xa9] sm:$0xff]
      %v4295 = vld [vmem:[#allocation2 + $0xb1] sm:$0xff]
      %v4296 = vld [vmem:[#allocation2 + $0xc1] sm:$0xff]
      %v4297 = vld [vmem:[#allocation2 + $0xc9] sm:$0xff]
      %v4298 = vld [vmem:[#allocation2 + $0xd9] sm:$0xff]
      %v4299 = vld [vmem:[#allocation2 + $0xe1] sm:$0xff]
      %v4300 = vld [vmem:[#allocation2 + $0xf1] sm:$0xff]
      %v4301 = vld [vmem:[#allocation2 + $0xf9] sm:$0xff]
      %v4302 = vld [vmem:[#allocation2 + $0x109] sm:$0xff]
      %v4303 = vld [vmem:[#allocation2 + $0x111] sm:$0xff]
      %v4304 = vld [vmem:[#allocation2 + $0x121] sm:$0xff]
      %v4305 = vld [vmem:[#allocation2 + $0x129] sm:$0xff]
      %v4306 = vld [vmem:[#allocation2 + $0x139] sm:$0xff]
      %v4307 = vld [vmem:[#allocation2 + $0x141] sm:$0xff]
      %v4308 = vld [vmem:[#allocation2 + $0x151] sm:$0xff]
      %v4309 = vld [vmem:[#allocation2 + $0x159] sm:$0xff]
      %v4310 = vld [vmem:[#allocation2 + $0x169] sm:$0xff]
      %v4311 = vld [vmem:[#allocation2 + $0x171] sm:$0xff]
      %v4312 = vld [vmem:[#allocation2 + $0x2] sm:$0xff]
      %v4313 = vld [vmem:[#allocation2 + $0xa] sm:$0xff]
      %v4314 = vld [vmem:[#allocation2 + $0x1a] sm:$0xff]
      %v4315 = vld [vmem:[#allocation2 + $0x22] sm:$0xff]
      %v4316 = vld [vmem:[#allocation2 + $0x32] sm:$0xff]
      %v4317 = vld [vmem:[#allocation2 + $0x3a] sm:$0xff]
      %v4318 = vld [vmem:[#allocation2 + $0x4a] sm:$0xff]
      %v4319 = vld [vmem:[#allocation2 + $0x52] sm:$0xff]
      %v4320 = vld [vmem:[#allocation2 + $0x62] sm:$0xff]
      %v4321 = vld [vmem:[#allocation2 + $0x6a] sm:$0xff]
      %v4322 = vld [vmem:[#allocation2 + $0x7a] sm:$0xff]
      %v4323 = vld [vmem:[#allocation2 + $0x82] sm:$0xff]
      %v4324 = vld [vmem:[#allocation2 + $0x92] sm:$0xff]
      %v4325 = vld [vmem:[#allocation2 + $0x9a] sm:$0xff]
      %v4326 = vld [vmem:[#allocation2 + $0xaa] sm:$0xff]
      %v4327 = vld [vmem:[#allocation2 + $0xb2] sm:$0xff]
      %v4328 = vld [vmem:[#allocation2 + $0xc2] sm:$0xff]
      %v4329 = vld [vmem:[#allocation2 + $0xca] sm:$0xff]
      %v4330 = vld [vmem:[#allocation2 + $0xda] sm:$0xff]
      %v4331 = vld [vmem:[#allocation2 + $0xe2] sm:$0xff]
      %v4332 = vld [vmem:[#allocation2 + $0xf2] sm:$0xff]
      %v4333 = vld [vmem:[#allocation2 + $0xfa] sm:$0xff]
      %v4334 = vld [vmem:[#allocation2 + $0x10a] sm:$0xff]
      %v4335 = vld [vmem:[#allocation2 + $0x112] sm:$0xff]
      %v4336 = vld [vmem:[#allocation2 + $0x122] sm:$0xff]
      %v4337 = vld [vmem:[#allocation2 + $0x12a] sm:$0xff]
      %v4338 = vld [vmem:[#allocation2 + $0x13a] sm:$0xff]
      %v4339 = vld [vmem:[#allocation2 + $0x142] sm:$0xff]
      %v4340 = vld [vmem:[#allocation2 + $0x152] sm:$0xff]
      %v4341 = vld [vmem:[#allocation2 + $0x15a] sm:$0xff]
      %v4342 = vld [vmem:[#allocation2 + $0x16a] sm:$0xff]
      %v4343 = vld [vmem:[#allocation2 + $0x172] sm:$0xff]
      %v4344 = vld [vmem:[%s259] sm:$0xff]
      %v4345 = vld [vmem:[%s259 + $0x8] sm:$0xff]
      %v4346 = vld [vmem:[%s259 + $0x18] sm:$0xff]
      %v4347 = vld [vmem:[%s259 + $0x20] sm:$0xff]
      %v4348 = vld [vmem:[%s259 + $0x30] sm:$0xff]
      %v4349 = vld [vmem:[%s259 + $0x38] sm:$0xff]
      %v4350 = vld [vmem:[%s259 + $0x48] sm:$0xff]
      %v4351 = vld [vmem:[%s259 + $0x50] sm:$0xff]
      %v4352 = vld [vmem:[%s259 + $0x60] sm:$0xff]
      %v4353 = vld [vmem:[%s259 + $0x68] sm:$0xff]
      %v4354 = vld [vmem:[%s259 + $0x78] sm:$0xff]
      %v4355 = vld [vmem:[%s259 + $0x80] sm:$0xff]
      %v4356 = vld [vmem:[%s259 + $0x90] sm:$0xff]
      %v4357 = vld [vmem:[%s259 + $0x98] sm:$0xff]
      %v4358 = vld [vmem:[%s259 + $0xa8] sm:$0xff]
      %v4359 = vld [vmem:[%s259 + $0xb0] sm:$0xff]
      %v4360 = vld [vmem:[%s259 + $0xc0] sm:$0xff]
      %v4361 = vld [vmem:[%s259 + $0xc8] sm:$0xff]
      %v4362 = vld [vmem:[%s259 + $0xd8] sm:$0xff]
      %v4363 = vld [vmem:[%s259 + $0xe0] sm:$0xff]
      %v4364 = vld [vmem:[%s259 + $0xf0] sm:$0xff]
      %v4365 = vld [vmem:[%s259 + $0xf8] sm:$0xff]
      %v4366 = vld [vmem:[%s259 + $0x108] sm:$0xff]
      %v4367 = vld [vmem:[%s259 + $0x110] sm:$0xff]
      %v4368 = vld [vmem:[%s259 + $0x120] sm:$0xff]
      %v4369 = vld [vmem:[%s259 + $0x128] sm:$0xff]
      %v4370 = vld [vmem:[%s259 + $0x138] sm:$0xff]
      %v4371 = vld [vmem:[%s259 + $0x140] sm:$0xff]
      %v4372 = vld [vmem:[%s259 + $0x150] sm:$0xff]
      %v4373 = vld [vmem:[%s259 + $0x158] sm:$0xff]
      %v4374 = vld [vmem:[%s259 + $0x168] sm:$0xff]
      %v4375 = vld [vmem:[%s259 + $0x170] sm:$0xff]
      %v4376 = vld [vmem:[%s259 + $0x1] sm:$0xff]
      %v4377 = vld [vmem:[%s259 + $0x9] sm:$0xff]
      %v4378 = vld [vmem:[%s259 + $0x19] sm:$0xff]
      %v4379 = vld [vmem:[%s259 + $0x21] sm:$0xff]
      %v4380 = vld [vmem:[%s259 + $0x31] sm:$0xff]
      %v4381 = vld [vmem:[%s259 + $0x39] sm:$0xff]
      %v4382 = vld [vmem:[%s259 + $0x49] sm:$0xff]
      %v4383 = vld [vmem:[%s259 + $0x51] sm:$0xff]
      %v4384 = vld [vmem:[%s259 + $0x61] sm:$0xff]
      %v4385 = vld [vmem:[%s259 + $0x69] sm:$0xff]
      %v4386 = vld [vmem:[%s259 + $0x79] sm:$0xff]
      %v4387 = vld [vmem:[%s259 + $0x81] sm:$0xff]
      %v4388 = vld [vmem:[%s259 + $0x91] sm:$0xff]
      %v4389 = vld [vmem:[%s259 + $0x99] sm:$0xff]
      %v4390 = vld [vmem:[%s259 + $0xa9] sm:$0xff]
      %v4391 = vld [vmem:[%s259 + $0xb1] sm:$0xff]
      %v4392 = vld [vmem:[%s259 + $0xc1] sm:$0xff]
      %v4393 = vld [vmem:[%s259 + $0xc9] sm:$0xff]
      %v4394 = vld [vmem:[%s259 + $0xd9] sm:$0xff]
      %v4395 = vld [vmem:[%s259 + $0xe1] sm:$0xff]
      %v4396 = vld [vmem:[%s259 + $0xf1] sm:$0xff]
      %v4397 = vld [vmem:[%s259 + $0xf9] sm:$0xff]
      %v4398 = vld [vmem:[%s259 + $0x109] sm:$0xff]
      %v4399 = vld [vmem:[%s259 + $0x111] sm:$0xff]
      %v4400 = vld [vmem:[%s259 + $0x121] sm:$0xff]
      %v4401 = vld [vmem:[%s259 + $0x129] sm:$0xff]
      %v4402 = vld [vmem:[%s259 + $0x139] sm:$0xff]
      %v4403 = vld [vmem:[%s259 + $0x141] sm:$0xff]
      %v4404 = vld [vmem:[%s259 + $0x151] sm:$0xff]
      %v4405 = vld [vmem:[%s259 + $0x159] sm:$0xff]
      %v4406 = vld [vmem:[%s259 + $0x169] sm:$0xff]
      %v4407 = vld [vmem:[%s259 + $0x171] sm:$0xff]
      %v4408 = vld [vmem:[%s259 + $0x2] sm:$0xff]
      %v4409 = vld [vmem:[%s259 + $0xa] sm:$0xff]
      %v4410 = vld [vmem:[%s259 + $0x1a] sm:$0xff]
      %v4411 = vld [vmem:[%s259 + $0x22] sm:$0xff]
      %v4412 = vld [vmem:[%s259 + $0x32] sm:$0xff]
      %v4413 = vld [vmem:[%s259 + $0x3a] sm:$0xff]
      %v4414 = vld [vmem:[%s259 + $0x4a] sm:$0xff]
      %v4415 = vld [vmem:[%s259 + $0x52] sm:$0xff]
      %v4416 = vld [vmem:[%s259 + $0x62] sm:$0xff]
      %v4417 = vld [vmem:[%s259 + $0x6a] sm:$0xff]
      %v4418 = vld [vmem:[%s259 + $0x7a] sm:$0xff]
      %v4419 = vld [vmem:[%s259 + $0x82] sm:$0xff]
      %v4420 = vld [vmem:[%s259 + $0x92] sm:$0xff]
      %v4421 = vld [vmem:[%s259 + $0x9a] sm:$0xff]
      %v4422 = vld [vmem:[%s259 + $0xaa] sm:$0xff]
      %v4423 = vld [vmem:[%s259 + $0xb2] sm:$0xff]
      %v4424 = vld [vmem:[%s259 + $0xc2] sm:$0xff]
      %v4425 = vld [vmem:[%s259 + $0xca] sm:$0xff]
      %v4426 = vld [vmem:[%s259 + $0xda] sm:$0xff]
      %v4427 = vld [vmem:[%s259 + $0xe2] sm:$0xff]
      %v4428 = vld [vmem:[%s259 + $0xf2] sm:$0xff]
      %v4429 = vld [vmem:[%s259 + $0xfa] sm:$0xff]
      %v4430 = vld [vmem:[%s259 + $0x10a] sm:$0xff]
      %v4431 = vld [vmem:[%s259 + $0x112] sm:$0xff]
      %v4432 = vld [vmem:[%s259 + $0x122] sm:$0xff]
      %v4433 = vld [vmem:[%s259 + $0x12a] sm:$0xff]
      %v4434 = vld [vmem:[%s259 + $0x13a] sm:$0xff]
      %v4435 = vld [vmem:[%s259 + $0x142] sm:$0xff]
      %v4436 = vld [vmem:[%s259 + $0x152] sm:$0xff]
      %v4437 = vld [vmem:[%s259 + $0x15a] sm:$0xff]
      %v4438 = vld [vmem:[%s259 + $0x16a] sm:$0xff]
      %v4439 = vld [vmem:[%s259 + $0x172] sm:$0xff]
      %v4440 = vld [vmem:[%s490] sm:$0xff]
      %v4441 = vld [vmem:[%s490 + $0x8] sm:$0xff]
      %v4442 = vld [vmem:[%s490 + $0x18] sm:$0xff]
      %v4443 = vld [vmem:[%s490 + $0x20] sm:$0xff]
      %v4444 = vld [vmem:[%s490 + $0x30] sm:$0xff]
      %v4445 = vld [vmem:[%s490 + $0x38] sm:$0xff]
      %v4446 = vld [vmem:[%s490 + $0x48] sm:$0xff]
      %v4447 = vld [vmem:[%s490 + $0x50] sm:$0xff]
      %v4448 = vld [vmem:[%s490 + $0x60] sm:$0xff]
      %v4449 = vld [vmem:[%s490 + $0x68] sm:$0xff]
      %v4450 = vld [vmem:[%s490 + $0x78] sm:$0xff]
      %v4451 = vld [vmem:[%s490 + $0x80] sm:$0xff]
      %v4452 = vld [vmem:[%s490 + $0x90] sm:$0xff]
      %v4453 = vld [vmem:[%s490 + $0x98] sm:$0xff]
      %v4454 = vld [vmem:[%s490 + $0xa8] sm:$0xff]
      %v4455 = vld [vmem:[%s490 + $0xb0] sm:$0xff]
      %v4456 = vld [vmem:[%s490 + $0xc0] sm:$0xff]
      %v4457 = vld [vmem:[%s490 + $0xc8] sm:$0xff]
      %v4458 = vld [vmem:[%s490 + $0xd8] sm:$0xff]
      %v4459 = vld [vmem:[%s490 + $0xe0] sm:$0xff]
      %v4460 = vld [vmem:[%s490 + $0xf0] sm:$0xff]
      %v4461 = vld [vmem:[%s490 + $0xf8] sm:$0xff]
      %v4462 = vld [vmem:[%s490 + $0x108] sm:$0xff]
      %v4463 = vld [vmem:[%s490 + $0x110] sm:$0xff]
      %v4464 = vld [vmem:[%s490 + $0x120] sm:$0xff]
      %v4465 = vld [vmem:[%s490 + $0x128] sm:$0xff]
      %v4466 = vld [vmem:[%s490 + $0x138] sm:$0xff]
      %v4467 = vld [vmem:[%s490 + $0x140] sm:$0xff]
      %v4468 = vld [vmem:[%s490 + $0x150] sm:$0xff]
      %v4469 = vld [vmem:[%s490 + $0x158] sm:$0xff]
      %v4470 = vld [vmem:[%s490 + $0x168] sm:$0xff]
      %v4471 = vld [vmem:[%s490 + $0x170] sm:$0xff]
      %v4472 = vld [vmem:[%s490 + $0x1] sm:$0xff]
      %v4473 = vld [vmem:[%s490 + $0x9] sm:$0xff]
      %v4474 = vld [vmem:[%s490 + $0x19] sm:$0xff]
      %v4475 = vld [vmem:[%s490 + $0x21] sm:$0xff]
      %v4476 = vld [vmem:[%s490 + $0x31] sm:$0xff]
      %v4477 = vld [vmem:[%s490 + $0x39] sm:$0xff]
      %v4478 = vld [vmem:[%s490 + $0x49] sm:$0xff]
      %v4479 = vld [vmem:[%s490 + $0x51] sm:$0xff]
      %v4480 = vld [vmem:[%s490 + $0x61] sm:$0xff]
      %v4481 = vld [vmem:[%s490 + $0x69] sm:$0xff]
      %v4482 = vld [vmem:[%s490 + $0x79] sm:$0xff]
      %v4483 = vld [vmem:[%s490 + $0x81] sm:$0xff]
      %v4484 = vld [vmem:[%s490 + $0x91] sm:$0xff]
      %v4485 = vld [vmem:[%s490 + $0x99] sm:$0xff]
      %v4486 = vld [vmem:[%s490 + $0xa9] sm:$0xff]
      %v4487 = vld [vmem:[%s490 + $0xb1] sm:$0xff]
      %v4488 = vld [vmem:[%s490 + $0xc1] sm:$0xff]
      %v4489 = vld [vmem:[%s490 + $0xc9] sm:$0xff]
      %v4490 = vld [vmem:[%s490 + $0xd9] sm:$0xff]
      %v4491 = vld [vmem:[%s490 + $0xe1] sm:$0xff]
      %v4492 = vld [vmem:[%s490 + $0xf1] sm:$0xff]
      %v4493 = vld [vmem:[%s490 + $0xf9] sm:$0xff]
      %v4494 = vld [vmem:[%s490 + $0x109] sm:$0xff]
      %v4495 = vld [vmem:[%s490 + $0x111] sm:$0xff]
      %v4496 = vld [vmem:[%s490 + $0x121] sm:$0xff]
      %v4497 = vld [vmem:[%s490 + $0x129] sm:$0xff]
      %v4498 = vld [vmem:[%s490 + $0x139] sm:$0xff]
      %v4499 = vld [vmem:[%s490 + $0x141] sm:$0xff]
      %v4500 = vld [vmem:[%s490 + $0x151] sm:$0xff]
      %v4501 = vld [vmem:[%s490 + $0x159] sm:$0xff]
      %v4502 = vld [vmem:[%s490 + $0x169] sm:$0xff]
      %v4503 = vld [vmem:[%s490 + $0x171] sm:$0xff]
      %v4504 = vld [vmem:[%s490 + $0x2] sm:$0xff]
      %v4505 = vld [vmem:[%s490 + $0xa] sm:$0xff]
      %v4506 = vld [vmem:[%s490 + $0x1a] sm:$0xff]
      %v4507 = vld [vmem:[%s490 + $0x22] sm:$0xff]
      %v4508 = vld [vmem:[%s490 + $0x32] sm:$0xff]
      %v4509 = vld [vmem:[%s490 + $0x3a] sm:$0xff]
      %v4510 = vld [vmem:[%s490 + $0x4a] sm:$0xff]
      %v4511 = vld [vmem:[%s490 + $0x52] sm:$0xff]
      %v4512 = vld [vmem:[%s490 + $0x62] sm:$0xff]
      %v4513 = vld [vmem:[%s490 + $0x6a] sm:$0xff]
      %v4514 = vld [vmem:[%s490 + $0x7a] sm:$0xff]
      %v4515 = vld [vmem:[%s490 + $0x82] sm:$0xff]
      %v4516 = vld [vmem:[%s490 + $0x92] sm:$0xff]
      %v4517 = vld [vmem:[%s490 + $0x9a] sm:$0xff]
      %v4518 = vld [vmem:[%s490 + $0xaa] sm:$0xff]
      %v4519 = vld [vmem:[%s490 + $0xb2] sm:$0xff]
      %v4520 = vld [vmem:[%s490 + $0xc2] sm:$0xff]
      %v4521 = vld [vmem:[%s490 + $0xca] sm:$0xff]
      %v4522 = vld [vmem:[%s490 + $0xda] sm:$0xff]
      %v4523 = vld [vmem:[%s490 + $0xe2] sm:$0xff]
      %v4524 = vld [vmem:[%s490 + $0xf2] sm:$0xff]
      %v4525 = vld [vmem:[%s490 + $0xfa] sm:$0xff]
      %v4526 = vld [vmem:[%s490 + $0x10a] sm:$0xff]
      %v4527 = vld [vmem:[%s490 + $0x112] sm:$0xff]
      %v4528 = vld [vmem:[%s490 + $0x122] sm:$0xff]
      %v4529 = vld [vmem:[%s490 + $0x12a] sm:$0xff]
      %v4530 = vld [vmem:[%s490 + $0x13a] sm:$0xff]
      %v4531 = vld [vmem:[%s490 + $0x142] sm:$0xff]
      %v4532 = vld [vmem:[%s490 + $0x152] sm:$0xff]
      %v4533 = vld [vmem:[%s490 + $0x15a] sm:$0xff]
      %v4534 = vld [vmem:[%s490 + $0x16a] sm:$0xff]
      %v4535 = vld [vmem:[%s490 + $0x172] sm:$0xff]
      %4568 = vrot.lane.b32.xlu0 %v4280, 4
      %v4569 = vpop.permute.xlu0 %4568
      %4570 = vrot.lane.b32.xlu0 %v4281, 4
      %v4571 = vpop.permute.xlu0 %4570
      %4572 = vrot.lane.b32.xlu0 %v4282, 4
      %v4573 = vpop.permute.xlu0 %4572
      %4574 = vrot.lane.b32.xlu0 %v4283, 4
      %v4575 = vpop.permute.xlu0 %4574
      %4576 = vrot.lane.b32.xlu0 %v4284, 4
      %v4577 = vpop.permute.xlu0 %4576
      %4578 = vrot.lane.b32.xlu0 %v4285, 4
      %v4579 = vpop.permute.xlu0 %4578
      %4580 = vrot.lane.b32.xlu0 %v4286, 4
      %v4581 = vpop.permute.xlu0 %4580
      %4582 = vrot.lane.b32.xlu0 %v4287, 4
      %v4583 = vpop.permute.xlu0 %4582
      %4584 = vrot.lane.b32.xlu0 %v4288, 4
      %v4585 = vpop.permute.xlu0 %4584
      %4586 = vrot.lane.b32.xlu0 %v4289, 4
      %v4587 = vpop.permute.xlu0 %4586
      %4588 = vrot.lane.b32.xlu0 %v4290, 4
      %v4589 = vpop.permute.xlu0 %4588
      %4590 = vrot.lane.b32.xlu0 %v4291, 4
      %v4591 = vpop.permute.xlu0 %4590
      %4592 = vrot.lane.b32.xlu0 %v4292, 4
      %v4593 = vpop.permute.xlu0 %4592
      %4594 = vrot.lane.b32.xlu0 %v4293, 4
      %v4595 = vpop.permute.xlu0 %4594
      %4596 = vrot.lane.b32.xlu0 %v4294, 4
      %v4597 = vpop.permute.xlu0 %4596
      %4598 = vrot.lane.b32.xlu0 %v4295, 4
      %v4599 = vpop.permute.xlu0 %4598
      %4600 = vrot.lane.b32.xlu0 %v4296, 4
      %v4601 = vpop.permute.xlu0 %4600
      %4602 = vrot.lane.b32.xlu0 %v4297, 4
      %v4603 = vpop.permute.xlu0 %4602
      %4604 = vrot.lane.b32.xlu0 %v4298, 4
      %v4605 = vpop.permute.xlu0 %4604
      %4606 = vrot.lane.b32.xlu0 %v4299, 4
      %v4607 = vpop.permute.xlu0 %4606
      %4608 = vrot.lane.b32.xlu0 %v4300, 4
      %v4609 = vpop.permute.xlu0 %4608
      %4610 = vrot.lane.b32.xlu0 %v4301, 4
      %v4611 = vpop.permute.xlu0 %4610
      %4612 = vrot.lane.b32.xlu0 %v4302, 4
      %v4613 = vpop.permute.xlu0 %4612
      %4614 = vrot.lane.b32.xlu0 %v4303, 4
      %v4615 = vpop.permute.xlu0 %4614
      %4616 = vrot.lane.b32.xlu0 %v4304, 4
      %v4617 = vpop.permute.xlu0 %4616
      %4618 = vrot.lane.b32.xlu0 %v4305, 4
      %v4619 = vpop.permute.xlu0 %4618
      %4620 = vrot.lane.b32.xlu0 %v4306, 4
      %v4621 = vpop.permute.xlu0 %4620
      %4622 = vrot.lane.b32.xlu0 %v4307, 4
      %v4623 = vpop.permute.xlu0 %4622
      %4624 = vrot.lane.b32.xlu0 %v4308, 4
      %v4625 = vpop.permute.xlu0 %4624
      %4626 = vrot.lane.b32.xlu0 %v4309, 4
      %v4627 = vpop.permute.xlu0 %4626
      %4628 = vrot.lane.b32.xlu0 %v4310, 4
      %v4629 = vpop.permute.xlu0 %4628
      %4630 = vrot.lane.b32.xlu0 %v4311, 4
      %v4631 = vpop.permute.xlu0 %4630
      %4696 = vrot.lane.b32.xlu0 %v4312, 8
      %v4697 = vpop.permute.xlu0 %4696
      %4698 = vrot.lane.b32.xlu0 %v4313, 8
      %v4699 = vpop.permute.xlu0 %4698
      %4700 = vrot.lane.b32.xlu0 %v4314, 8
      %v4701 = vpop.permute.xlu0 %4700
      %4702 = vrot.lane.b32.xlu0 %v4315, 8
      %v4703 = vpop.permute.xlu0 %4702
      %4704 = vrot.lane.b32.xlu0 %v4316, 8
      %v4705 = vpop.permute.xlu0 %4704
      %4706 = vrot.lane.b32.xlu0 %v4317, 8
      %v4707 = vpop.permute.xlu0 %4706
      %4708 = vrot.lane.b32.xlu0 %v4318, 8
      %v4709 = vpop.permute.xlu0 %4708
      %4710 = vrot.lane.b32.xlu0 %v4319, 8
      %v4711 = vpop.permute.xlu0 %4710
      %4712 = vrot.lane.b32.xlu0 %v4320, 8
      %v4713 = vpop.permute.xlu0 %4712
      %4714 = vrot.lane.b32.xlu0 %v4321, 8
      %v4715 = vpop.permute.xlu0 %4714
      %4716 = vrot.lane.b32.xlu0 %v4322, 8
      %v4717 = vpop.permute.xlu0 %4716
      %4718 = vrot.lane.b32.xlu0 %v4323, 8
      %v4719 = vpop.permute.xlu0 %4718
      %4720 = vrot.lane.b32.xlu0 %v4324, 8
      %v4721 = vpop.permute.xlu0 %4720
      %4722 = vrot.lane.b32.xlu0 %v4325, 8
      %v4723 = vpop.permute.xlu0 %4722
      %4724 = vrot.lane.b32.xlu0 %v4326, 8
      %v4725 = vpop.permute.xlu0 %4724
      %4726 = vrot.lane.b32.xlu0 %v4327, 8
      %v4727 = vpop.permute.xlu0 %4726
      %4728 = vrot.lane.b32.xlu0 %v4328, 8
      %v4729 = vpop.permute.xlu0 %4728
      %4730 = vrot.lane.b32.xlu0 %v4329, 8
      %v4731 = vpop.permute.xlu0 %4730
      %4732 = vrot.lane.b32.xlu0 %v4330, 8
      %v4733 = vpop.permute.xlu0 %4732
      %4734 = vrot.lane.b32.xlu0 %v4331, 8
      %v4735 = vpop.permute.xlu0 %4734
      %4736 = vrot.lane.b32.xlu0 %v4332, 8
      %v4737 = vpop.permute.xlu0 %4736
      %4738 = vrot.lane.b32.xlu0 %v4333, 8
      %v4739 = vpop.permute.xlu0 %4738
      %4740 = vrot.lane.b32.xlu0 %v4334, 8
      %v4741 = vpop.permute.xlu0 %4740
      %4742 = vrot.lane.b32.xlu0 %v4335, 8
      %v4743 = vpop.permute.xlu0 %4742
      %4744 = vrot.lane.b32.xlu0 %v4336, 8
      %v4745 = vpop.permute.xlu0 %4744
      %4746 = vrot.lane.b32.xlu0 %v4337, 8
      %v4747 = vpop.permute.xlu0 %4746
      %4748 = vrot.lane.b32.xlu0 %v4338, 8
      %v4749 = vpop.permute.xlu0 %4748
      %4750 = vrot.lane.b32.xlu0 %v4339, 8
      %v4751 = vpop.permute.xlu0 %4750
      %4752 = vrot.lane.b32.xlu0 %v4340, 8
      %v4753 = vpop.permute.xlu0 %4752
      %4754 = vrot.lane.b32.xlu0 %v4341, 8
      %v4755 = vpop.permute.xlu0 %4754
      %4756 = vrot.lane.b32.xlu0 %v4342, 8
      %v4757 = vpop.permute.xlu0 %4756
      %4758 = vrot.lane.b32.xlu0 %v4343, 8
      %v4759 = vpop.permute.xlu0 %4758
      %4824 = vrot.lane.b32.xlu0 %v4344, 12
      %v4825 = vpop.permute.xlu0 %4824
      %4826 = vrot.lane.b32.xlu0 %v4345, 12
      %v4827 = vpop.permute.xlu0 %4826
      %4828 = vrot.lane.b32.xlu0 %v4346, 12
      %v4829 = vpop.permute.xlu0 %4828
      %4830 = vrot.lane.b32.xlu0 %v4347, 12
      %v4831 = vpop.permute.xlu0 %4830
      %4832 = vrot.lane.b32.xlu0 %v4348, 12
      %v4833 = vpop.permute.xlu0 %4832
      %4834 = vrot.lane.b32.xlu0 %v4349, 12
      %v4835 = vpop.permute.xlu0 %4834
      %4836 = vrot.lane.b32.xlu0 %v4350, 12
      %v4837 = vpop.permute.xlu0 %4836
      %4838 = vrot.lane.b32.xlu0 %v4351, 12
      %v4839 = vpop.permute.xlu0 %4838
      %4840 = vrot.lane.b32.xlu0 %v4352, 12
      %v4841 = vpop.permute.xlu0 %4840
      %4842 = vrot.lane.b32.xlu0 %v4353, 12
      %v4843 = vpop.permute.xlu0 %4842
      %4844 = vrot.lane.b32.xlu0 %v4354, 12
      %v4845 = vpop.permute.xlu0 %4844
      %4846 = vrot.lane.b32.xlu0 %v4355, 12
      %v4847 = vpop.permute.xlu0 %4846
      %4848 = vrot.lane.b32.xlu0 %v4356, 12
      %v4849 = vpop.permute.xlu0 %4848
      %4850 = vrot.lane.b32.xlu0 %v4357, 12
      %v4851 = vpop.permute.xlu0 %4850
      %4852 = vrot.lane.b32.xlu0 %v4358, 12
      %v4853 = vpop.permute.xlu0 %4852
      %4854 = vrot.lane.b32.xlu0 %v4359, 12
      %v4855 = vpop.permute.xlu0 %4854
      %4856 = vrot.lane.b32.xlu0 %v4360, 12
      %v4857 = vpop.permute.xlu0 %4856
      %4858 = vrot.lane.b32.xlu0 %v4361, 12
      %v4859 = vpop.permute.xlu0 %4858
      %4860 = vrot.lane.b32.xlu0 %v4362, 12
      %v4861 = vpop.permute.xlu0 %4860
      %4862 = vrot.lane.b32.xlu0 %v4363, 12
      %v4863 = vpop.permute.xlu0 %4862
      %4864 = vrot.lane.b32.xlu0 %v4364, 12
      %v4865 = vpop.permute.xlu0 %4864
      %4866 = vrot.lane.b32.xlu0 %v4365, 12
      %v4867 = vpop.permute.xlu0 %4866
      %4868 = vrot.lane.b32.xlu0 %v4366, 12
      %v4869 = vpop.permute.xlu0 %4868
      %4870 = vrot.lane.b32.xlu0 %v4367, 12
      %v4871 = vpop.permute.xlu0 %4870
      %4872 = vrot.lane.b32.xlu0 %v4368, 12
      %v4873 = vpop.permute.xlu0 %4872
      %4874 = vrot.lane.b32.xlu0 %v4369, 12
      %v4875 = vpop.permute.xlu0 %4874
      %4876 = vrot.lane.b32.xlu0 %v4370, 12
      %v4877 = vpop.permute.xlu0 %4876
      %4878 = vrot.lane.b32.xlu0 %v4371, 12
      %v4879 = vpop.permute.xlu0 %4878
      %4880 = vrot.lane.b32.xlu0 %v4372, 12
      %v4881 = vpop.permute.xlu0 %4880
      %4882 = vrot.lane.b32.xlu0 %v4373, 12
      %v4883 = vpop.permute.xlu0 %4882
      %4884 = vrot.lane.b32.xlu0 %v4374, 12
      %v4885 = vpop.permute.xlu0 %4884
      %4886 = vrot.lane.b32.xlu0 %v4375, 12
      %v4887 = vpop.permute.xlu0 %4886
      %4952 = vrot.lane.b32.xlu0 %v4376, 16
      %v4953 = vpop.permute.xlu0 %4952
      %4954 = vrot.lane.b32.xlu0 %v4377, 16
      %v4955 = vpop.permute.xlu0 %4954
      %4956 = vrot.lane.b32.xlu0 %v4378, 16
      %v4957 = vpop.permute.xlu0 %4956
      %4958 = vrot.lane.b32.xlu0 %v4379, 16
      %v4959 = vpop.permute.xlu0 %4958
      %4960 = vrot.lane.b32.xlu0 %v4380, 16
      %v4961 = vpop.permute.xlu0 %4960
      %4962 = vrot.lane.b32.xlu0 %v4381, 16
      %v4963 = vpop.permute.xlu0 %4962
      %4964 = vrot.lane.b32.xlu0 %v4382, 16
      %v4965 = vpop.permute.xlu0 %4964
      %4966 = vrot.lane.b32.xlu0 %v4383, 16
      %v4967 = vpop.permute.xlu0 %4966
      %4968 = vrot.lane.b32.xlu0 %v4384, 16
      %v4969 = vpop.permute.xlu0 %4968
      %4970 = vrot.lane.b32.xlu0 %v4385, 16
      %v4971 = vpop.permute.xlu0 %4970
      %4972 = vrot.lane.b32.xlu0 %v4386, 16
      %v4973 = vpop.permute.xlu0 %4972
      %4974 = vrot.lane.b32.xlu0 %v4387, 16
      %v4975 = vpop.permute.xlu0 %4974
      %4976 = vrot.lane.b32.xlu0 %v4388, 16
      %v4977 = vpop.permute.xlu0 %4976
      %4978 = vrot.lane.b32.xlu0 %v4389, 16
      %v4979 = vpop.permute.xlu0 %4978
      %4980 = vrot.lane.b32.xlu0 %v4390, 16
      %v4981 = vpop.permute.xlu0 %4980
      %4982 = vrot.lane.b32.xlu0 %v4391, 16
      %v4983 = vpop.permute.xlu0 %4982
      %4984 = vrot.lane.b32.xlu0 %v4392, 16
      %v4985 = vpop.permute.xlu0 %4984
      %4986 = vrot.lane.b32.xlu0 %v4393, 16
      %v4987 = vpop.permute.xlu0 %4986
      %4988 = vrot.lane.b32.xlu0 %v4394, 16
      %v4989 = vpop.permute.xlu0 %4988
      %4990 = vrot.lane.b32.xlu0 %v4395, 16
      %v4991 = vpop.permute.xlu0 %4990
      %4992 = vrot.lane.b32.xlu0 %v4396, 16
      %v4993 = vpop.permute.xlu0 %4992
      %4994 = vrot.lane.b32.xlu0 %v4397, 16
      %v4995 = vpop.permute.xlu0 %4994
      %4996 = vrot.lane.b32.xlu0 %v4398, 16
      %v4997 = vpop.permute.xlu0 %4996
      %4998 = vrot.lane.b32.xlu0 %v4399, 16
      %v4999 = vpop.permute.xlu0 %4998
      %5000 = vrot.lane.b32.xlu0 %v4400, 16
      %v5001 = vpop.permute.xlu0 %5000
      %5002 = vrot.lane.b32.xlu0 %v4401, 16
      %v5003 = vpop.permute.xlu0 %5002
      %5004 = vrot.lane.b32.xlu0 %v4402, 16
      %v5005 = vpop.permute.xlu0 %5004
      %5006 = vrot.lane.b32.xlu0 %v4403, 16
      %v5007 = vpop.permute.xlu0 %5006
      %5008 = vrot.lane.b32.xlu0 %v4404, 16
      %v5009 = vpop.permute.xlu0 %5008
      %5010 = vrot.lane.b32.xlu0 %v4405, 16
      %v5011 = vpop.permute.xlu0 %5010
      %5012 = vrot.lane.b32.xlu0 %v4406, 16
      %v5013 = vpop.permute.xlu0 %5012
      %5014 = vrot.lane.b32.xlu0 %v4407, 16
      %v5015 = vpop.permute.xlu0 %5014
      %5080 = vrot.lane.b32.xlu0 %v4408, 20
      %v5081 = vpop.permute.xlu0 %5080
      %5082 = vrot.lane.b32.xlu0 %v4409, 20
      %v5083 = vpop.permute.xlu0 %5082
      %5084 = vrot.lane.b32.xlu0 %v4410, 20
      %v5085 = vpop.permute.xlu0 %5084
      %5086 = vrot.lane.b32.xlu0 %v4411, 20
      %v5087 = vpop.permute.xlu0 %5086
      %5088 = vrot.lane.b32.xlu0 %v4412, 20
      %v5089 = vpop.permute.xlu0 %5088
      %5090 = vrot.lane.b32.xlu0 %v4413, 20
      %v5091 = vpop.permute.xlu0 %5090
      %5092 = vrot.lane.b32.xlu0 %v4414, 20
      %v5093 = vpop.permute.xlu0 %5092
      %5094 = vrot.lane.b32.xlu0 %v4415, 20
      %v5095 = vpop.permute.xlu0 %5094
      %5096 = vrot.lane.b32.xlu0 %v4416, 20
      %v5097 = vpop.permute.xlu0 %5096
      %5098 = vrot.lane.b32.xlu0 %v4417, 20
      %v5099 = vpop.permute.xlu0 %5098
      %5100 = vrot.lane.b32.xlu0 %v4418, 20
      %v5101 = vpop.permute.xlu0 %5100
      %5102 = vrot.lane.b32.xlu0 %v4419, 20
      %v5103 = vpop.permute.xlu0 %5102
      %5104 = vrot.lane.b32.xlu0 %v4420, 20
      %v5105 = vpop.permute.xlu0 %5104
      %5106 = vrot.lane.b32.xlu0 %v4421, 20
      %v5107 = vpop.permute.xlu0 %5106
      %5108 = vrot.lane.b32.xlu0 %v4422, 20
      %v5109 = vpop.permute.xlu0 %5108
      %5110 = vrot.lane.b32.xlu0 %v4423, 20
      %v5111 = vpop.permute.xlu0 %5110
      %5112 = vrot.lane.b32.xlu0 %v4424, 20
      %v5113 = vpop.permute.xlu0 %5112
      %5114 = vrot.lane.b32.xlu0 %v4425, 20
      %v5115 = vpop.permute.xlu0 %5114
      %5116 = vrot.lane.b32.xlu0 %v4426, 20
      %v5117 = vpop.permute.xlu0 %5116
      %5118 = vrot.lane.b32.xlu0 %v4427, 20
      %v5119 = vpop.permute.xlu0 %5118
      %5120 = vrot.lane.b32.xlu0 %v4428, 20
      %v5121 = vpop.permute.xlu0 %5120
      %5122 = vrot.lane.b32.xlu0 %v4429, 20
      %v5123 = vpop.permute.xlu0 %5122
      %5124 = vrot.lane.b32.xlu0 %v4430, 20
      %v5125 = vpop.permute.xlu0 %5124
      %5126 = vrot.lane.b32.xlu0 %v4431, 20
      %v5127 = vpop.permute.xlu0 %5126
      %5128 = vrot.lane.b32.xlu0 %v4432, 20
      %v5129 = vpop.permute.xlu0 %5128
      %5130 = vrot.lane.b32.xlu0 %v4433, 20
      %v5131 = vpop.permute.xlu0 %5130
      %5132 = vrot.lane.b32.xlu0 %v4434, 20
      %v5133 = vpop.permute.xlu0 %5132
      %5134 = vrot.lane.b32.xlu0 %v4435, 20
      %v5135 = vpop.permute.xlu0 %5134
      %5136 = vrot.lane.b32.xlu0 %v4436, 20
      %v5137 = vpop.permute.xlu0 %5136
      %5138 = vrot.lane.b32.xlu0 %v4437, 20
      %v5139 = vpop.permute.xlu0 %5138
      %5140 = vrot.lane.b32.xlu0 %v4438, 20
      %v5141 = vpop.permute.xlu0 %5140
      %5142 = vrot.lane.b32.xlu0 %v4439, 20
      %v5143 = vpop.permute.xlu0 %5142
      %5208 = vrot.lane.b32.xlu0 %v4440, 24
      %v5209 = vpop.permute.xlu0 %5208
      %5210 = vrot.lane.b32.xlu0 %v4441, 24
      %v5211 = vpop.permute.xlu0 %5210
      %5212 = vrot.lane.b32.xlu0 %v4442, 24
      %v5213 = vpop.permute.xlu0 %5212
      %5214 = vrot.lane.b32.xlu0 %v4443, 24
      %v5215 = vpop.permute.xlu0 %5214
      %5216 = vrot.lane.b32.xlu0 %v4444, 24
      %v5217 = vpop.permute.xlu0 %5216
      %5218 = vrot.lane.b32.xlu0 %v4445, 24
      %v5219 = vpop.permute.xlu0 %5218
      %5220 = vrot.lane.b32.xlu0 %v4446, 24
      %v5221 = vpop.permute.xlu0 %5220
      %5222 = vrot.lane.b32.xlu0 %v4447, 24
      %v5223 = vpop.permute.xlu0 %5222
      %5224 = vrot.lane.b32.xlu0 %v4448, 24
      %v5225 = vpop.permute.xlu0 %5224
      %5226 = vrot.lane.b32.xlu0 %v4449, 24
      %v5227 = vpop.permute.xlu0 %5226
      %5228 = vrot.lane.b32.xlu0 %v4450, 24
      %v5229 = vpop.permute.xlu0 %5228
      %5230 = vrot.lane.b32.xlu0 %v4451, 24
      %v5231 = vpop.permute.xlu0 %5230
      %5232 = vrot.lane.b32.xlu0 %v4452, 24
      %v5233 = vpop.permute.xlu0 %5232
      %5234 = vrot.lane.b32.xlu0 %v4453, 24
      %v5235 = vpop.permute.xlu0 %5234
      %5236 = vrot.lane.b32.xlu0 %v4454, 24
      %v5237 = vpop.permute.xlu0 %5236
      %5238 = vrot.lane.b32.xlu0 %v4455, 24
      %v5239 = vpop.permute.xlu0 %5238
      %5240 = vrot.lane.b32.xlu0 %v4456, 24
      %v5241 = vpop.permute.xlu0 %5240
      %5242 = vrot.lane.b32.xlu0 %v4457, 24
      %v5243 = vpop.permute.xlu0 %5242
      %5244 = vrot.lane.b32.xlu0 %v4458, 24
      %v5245 = vpop.permute.xlu0 %5244
      %5246 = vrot.lane.b32.xlu0 %v4459, 24
      %v5247 = vpop.permute.xlu0 %5246
      %5248 = vrot.lane.b32.xlu0 %v4460, 24
      %v5249 = vpop.permute.xlu0 %5248
      %5250 = vrot.lane.b32.xlu0 %v4461, 24
      %v5251 = vpop.permute.xlu0 %5250
      %5252 = vrot.lane.b32.xlu0 %v4462, 24
      %v5253 = vpop.permute.xlu0 %5252
      %5254 = vrot.lane.b32.xlu0 %v4463, 24
      %v5255 = vpop.permute.xlu0 %5254
      %5256 = vrot.lane.b32.xlu0 %v4464, 24
      %v5257 = vpop.permute.xlu0 %5256
      %5258 = vrot.lane.b32.xlu0 %v4465, 24
      %v5259 = vpop.permute.xlu0 %5258
      %5260 = vrot.lane.b32.xlu0 %v4466, 24
      %v5261 = vpop.permute.xlu0 %5260
      %5262 = vrot.lane.b32.xlu0 %v4467, 24
      %v5263 = vpop.permute.xlu0 %5262
      %5264 = vrot.lane.b32.xlu0 %v4468, 24
      %v5265 = vpop.permute.xlu0 %5264
      %5266 = vrot.lane.b32.xlu0 %v4469, 24
      %v5267 = vpop.permute.xlu0 %5266
      %5268 = vrot.lane.b32.xlu0 %v4470, 24
      %v5269 = vpop.permute.xlu0 %5268
      %5270 = vrot.lane.b32.xlu0 %v4471, 24
      %v5271 = vpop.permute.xlu0 %5270
      %5336 = vrot.lane.b32.xlu0 %v4472, 28
      %v5337 = vpop.permute.xlu0 %5336
      %5338 = vrot.lane.b32.xlu0 %v4473, 28
      %v5339 = vpop.permute.xlu0 %5338
      %5340 = vrot.lane.b32.xlu0 %v4474, 28
      %v5341 = vpop.permute.xlu0 %5340
      %5342 = vrot.lane.b32.xlu0 %v4475, 28
      %v5343 = vpop.permute.xlu0 %5342
      %5344 = vrot.lane.b32.xlu0 %v4476, 28
      %v5345 = vpop.permute.xlu0 %5344
      %5346 = vrot.lane.b32.xlu0 %v4477, 28
      %v5347 = vpop.permute.xlu0 %5346
      %5348 = vrot.lane.b32.xlu0 %v4478, 28
      %v5349 = vpop.permute.xlu0 %5348
      %5350 = vrot.lane.b32.xlu0 %v4479, 28
      %v5351 = vpop.permute.xlu0 %5350
      %5352 = vrot.lane.b32.xlu0 %v4480, 28
      %v5353 = vpop.permute.xlu0 %5352
      %5354 = vrot.lane.b32.xlu0 %v4481, 28
      %v5355 = vpop.permute.xlu0 %5354
      %5356 = vrot.lane.b32.xlu0 %v4482, 28
      %v5357 = vpop.permute.xlu0 %5356
      %5358 = vrot.lane.b32.xlu0 %v4483, 28
      %v5359 = vpop.permute.xlu0 %5358
      %5360 = vrot.lane.b32.xlu0 %v4484, 28
      %v5361 = vpop.permute.xlu0 %5360
      %5362 = vrot.lane.b32.xlu0 %v4485, 28
      %v5363 = vpop.permute.xlu0 %5362
      %5364 = vrot.lane.b32.xlu0 %v4486, 28
      %v5365 = vpop.permute.xlu0 %5364
      %5366 = vrot.lane.b32.xlu0 %v4487, 28
      %v5367 = vpop.permute.xlu0 %5366
      %5368 = vrot.lane.b32.xlu0 %v4488, 28
      %v5369 = vpop.permute.xlu0 %5368
      %5370 = vrot.lane.b32.xlu0 %v4489, 28
      %v5371 = vpop.permute.xlu0 %5370
      %5372 = vrot.lane.b32.xlu0 %v4490, 28
      %v5373 = vpop.permute.xlu0 %5372
      %5374 = vrot.lane.b32.xlu0 %v4491, 28
      %v5375 = vpop.permute.xlu0 %5374
      %5376 = vrot.lane.b32.xlu0 %v4492, 28
      %v5377 = vpop.permute.xlu0 %5376
      %5378 = vrot.lane.b32.xlu0 %v4493, 28
      %v5379 = vpop.permute.xlu0 %5378
      %5380 = vrot.lane.b32.xlu0 %v4494, 28
      %v5381 = vpop.permute.xlu0 %5380
      %5382 = vrot.lane.b32.xlu0 %v4495, 28
      %v5383 = vpop.permute.xlu0 %5382
      %5384 = vrot.lane.b32.xlu0 %v4496, 28
      %v5385 = vpop.permute.xlu0 %5384
      %5386 = vrot.lane.b32.xlu0 %v4497, 28
      %v5387 = vpop.permute.xlu0 %5386
      %5388 = vrot.lane.b32.xlu0 %v4498, 28
      %v5389 = vpop.permute.xlu0 %5388
      %5390 = vrot.lane.b32.xlu0 %v4499, 28
      %v5391 = vpop.permute.xlu0 %5390
      %5392 = vrot.lane.b32.xlu0 %v4500, 28
      %v5393 = vpop.permute.xlu0 %5392
      %5394 = vrot.lane.b32.xlu0 %v4501, 28
      %v5395 = vpop.permute.xlu0 %5394
      %5396 = vrot.lane.b32.xlu0 %v4502, 28
      %v5397 = vpop.permute.xlu0 %5396
      %5398 = vrot.lane.b32.xlu0 %v4503, 28
      %v5399 = vpop.permute.xlu0 %5398
      %5464 = vrot.lane.b32.xlu0 %v4504, 32
      %v5465 = vpop.permute.xlu0 %5464
      %5466 = vrot.lane.b32.xlu0 %v4505, 32
      %v5467 = vpop.permute.xlu0 %5466
      %5468 = vrot.lane.b32.xlu0 %v4506, 32
      %v5469 = vpop.permute.xlu0 %5468
      %5470 = vrot.lane.b32.xlu0 %v4507, 32
      %v5471 = vpop.permute.xlu0 %5470
      %5472 = vrot.lane.b32.xlu0 %v4508, 32
      %v5473 = vpop.permute.xlu0 %5472
      %5474 = vrot.lane.b32.xlu0 %v4509, 32
      %v5475 = vpop.permute.xlu0 %5474
      %5476 = vrot.lane.b32.xlu0 %v4510, 32
      %v5477 = vpop.permute.xlu0 %5476
      %5478 = vrot.lane.b32.xlu0 %v4511, 32
      %v5479 = vpop.permute.xlu0 %5478
      %5480 = vrot.lane.b32.xlu0 %v4512, 32
      %v5481 = vpop.permute.xlu0 %5480
      %5482 = vrot.lane.b32.xlu0 %v4513, 32
      %v5483 = vpop.permute.xlu0 %5482
      %5484 = vrot.lane.b32.xlu0 %v4514, 32
      %v5485 = vpop.permute.xlu0 %5484
      %5486 = vrot.lane.b32.xlu0 %v4515, 32
      %v5487 = vpop.permute.xlu0 %5486
      %5488 = vrot.lane.b32.xlu0 %v4516, 32
      %v5489 = vpop.permute.xlu0 %5488
      %5490 = vrot.lane.b32.xlu0 %v4517, 32
      %v5491 = vpop.permute.xlu0 %5490
      %5492 = vrot.lane.b32.xlu0 %v4518, 32
      %v5493 = vpop.permute.xlu0 %5492
      %5494 = vrot.lane.b32.xlu0 %v4519, 32
      %v5495 = vpop.permute.xlu0 %5494
      %5496 = vrot.lane.b32.xlu0 %v4520, 32
      %v5497 = vpop.permute.xlu0 %5496
      %5498 = vrot.lane.b32.xlu0 %v4521, 32
      %v5499 = vpop.permute.xlu0 %5498
      %5500 = vrot.lane.b32.xlu0 %v4522, 32
      %v5501 = vpop.permute.xlu0 %5500
      %5502 = vrot.lane.b32.xlu0 %v4523, 32
      %v5503 = vpop.permute.xlu0 %5502
      %5504 = vrot.lane.b32.xlu0 %v4524, 32
      %v5505 = vpop.permute.xlu0 %5504
      %5506 = vrot.lane.b32.xlu0 %v4525, 32
      %v5507 = vpop.permute.xlu0 %5506
      %5508 = vrot.lane.b32.xlu0 %v4526, 32
      %v5509 = vpop.permute.xlu0 %5508
      %5510 = vrot.lane.b32.xlu0 %v4527, 32
      %v5511 = vpop.permute.xlu0 %5510
      %5512 = vrot.lane.b32.xlu0 %v4528, 32
      %v5513 = vpop.permute.xlu0 %5512
      %5514 = vrot.lane.b32.xlu0 %v4529, 32
      %v5515 = vpop.permute.xlu0 %5514
      %5516 = vrot.lane.b32.xlu0 %v4530, 32
      %v5517 = vpop.permute.xlu0 %5516
      %5518 = vrot.lane.b32.xlu0 %v4531, 32
      %v5519 = vpop.permute.xlu0 %5518
      %5520 = vrot.lane.b32.xlu0 %v4532, 32
      %v5521 = vpop.permute.xlu0 %5520
      %5522 = vrot.lane.b32.xlu0 %v4533, 32
      %v5523 = vpop.permute.xlu0 %5522
      %5524 = vrot.lane.b32.xlu0 %v4534, 32
      %v5525 = vpop.permute.xlu0 %5524
      %5526 = vrot.lane.b32.xlu0 %v4535, 32
      %v5527 = vpop.permute.xlu0 %5526
      %v5560 = vsel %vm171, %v4248, %v4569
      %v5561 = vsel %vm171, %v4249, %v4571
      %v5562 = vsel %vm171, %v4250, %v4573
      %v5563 = vsel %vm171, %v4251, %v4575
      %v5564 = vsel %vm171, %v4252, %v4577
      %v5565 = vsel %vm171, %v4253, %v4579
      %v5566 = vsel %vm171, %v4254, %v4581
      %v5567 = vsel %vm171, %v4255, %v4583
      %v5568 = vsel %vm171, %v4256, %v4585
      %v5569 = vsel %vm171, %v4257, %v4587
      %v5570 = vsel %vm171, %v4258, %v4589
      %v5571 = vsel %vm171, %v4259, %v4591
      %v5572 = vsel %vm171, %v4260, %v4593
      %v5573 = vsel %vm171, %v4261, %v4595
      %v5574 = vsel %vm171, %v4262, %v4597
      %v5575 = vsel %vm171, %v4263, %v4599
      %v5576 = vsel %vm171, %v4264, %v4601
      %v5577 = vsel %vm171, %v4265, %v4603
      %v5578 = vsel %vm171, %v4266, %v4605
      %v5579 = vsel %vm171, %v4267, %v4607
      %v5580 = vsel %vm171, %v4268, %v4609
      %v5581 = vsel %vm171, %v4269, %v4611
      %v5582 = vsel %vm171, %v4270, %v4613
      %v5583 = vsel %vm171, %v4271, %v4615
      %v5584 = vsel %vm171, %v4272, %v4617
      %v5585 = vsel %vm171, %v4273, %v4619
      %v5586 = vsel %vm171, %v4274, %v4621
      %v5587 = vsel %vm171, %v4275, %v4623
      %v5588 = vsel %vm171, %v4276, %v4625
      %v5589 = vsel %vm171, %v4277, %v4627
      %v5590 = vsel %vm171, %v4278, %v4629
      %v5591 = vsel %vm171, %v4279, %v4631
      %v5592 = vsel %vm1643, %v5560, %v4697
      %v5593 = vsel %vm1643, %v5561, %v4699
      %v5594 = vsel %vm1643, %v5562, %v4701
      %v5595 = vsel %vm1643, %v5563, %v4703
      %v5596 = vsel %vm1643, %v5564, %v4705
      %v5597 = vsel %vm1643, %v5565, %v4707
      %v5598 = vsel %vm1643, %v5566, %v4709
      %v5599 = vsel %vm1643, %v5567, %v4711
      %v5600 = vsel %vm1643, %v5568, %v4713
      %v5601 = vsel %vm1643, %v5569, %v4715
      %v5602 = vsel %vm1643, %v5570, %v4717
      %v5603 = vsel %vm1643, %v5571, %v4719
      %v5604 = vsel %vm1643, %v5572, %v4721
      %v5605 = vsel %vm1643, %v5573, %v4723
      %v5606 = vsel %vm1643, %v5574, %v4725
      %v5607 = vsel %vm1643, %v5575, %v4727
      %v5608 = vsel %vm1643, %v5576, %v4729
      %v5609 = vsel %vm1643, %v5577, %v4731
      %v5610 = vsel %vm1643, %v5578, %v4733
      %v5611 = vsel %vm1643, %v5579, %v4735
      %v5612 = vsel %vm1643, %v5580, %v4737
      %v5613 = vsel %vm1643, %v5581, %v4739
      %v5614 = vsel %vm1643, %v5582, %v4741
      %v5615 = vsel %vm1643, %v5583, %v4743
      %v5616 = vsel %vm1643, %v5584, %v4745
      %v5617 = vsel %vm1643, %v5585, %v4747
      %v5618 = vsel %vm1643, %v5586, %v4749
      %v5619 = vsel %vm1643, %v5587, %v4751
      %v5620 = vsel %vm1643, %v5588, %v4753
      %v5621 = vsel %vm1643, %v5589, %v4755
      %v5622 = vsel %vm1643, %v5590, %v4757
      %v5623 = vsel %vm1643, %v5591, %v4759
      %v5624 = vsel %vm1676, %v5592, %v4825
      %v5625 = vsel %vm1676, %v5593, %v4827
      %v5626 = vsel %vm1676, %v5594, %v4829
      %v5627 = vsel %vm1676, %v5595, %v4831
      %v5628 = vsel %vm1676, %v5596, %v4833
      %v5629 = vsel %vm1676, %v5597, %v4835
      %v5630 = vsel %vm1676, %v5598, %v4837
      %v5631 = vsel %vm1676, %v5599, %v4839
      %v5632 = vsel %vm1676, %v5600, %v4841
      %v5633 = vsel %vm1676, %v5601, %v4843
      %v5634 = vsel %vm1676, %v5602, %v4845
      %v5635 = vsel %vm1676, %v5603, %v4847
      %v5636 = vsel %vm1676, %v5604, %v4849
      %v5637 = vsel %vm1676, %v5605, %v4851
      %v5638 = vsel %vm1676, %v5606, %v4853
      %v5639 = vsel %vm1676, %v5607, %v4855
      %v5640 = vsel %vm1676, %v5608, %v4857
      %v5641 = vsel %vm1676, %v5609, %v4859
      %v5642 = vsel %vm1676, %v5610, %v4861
      %v5643 = vsel %vm1676, %v5611, %v4863
      %v5644 = vsel %vm1676, %v5612, %v4865
      %v5645 = vsel %vm1676, %v5613, %v4867
      %v5646 = vsel %vm1676, %v5614, %v4869
      %v5647 = vsel %vm1676, %v5615, %v4871
      %v5648 = vsel %vm1676, %v5616, %v4873
      %v5649 = vsel %vm1676, %v5617, %v4875
      %v5650 = vsel %vm1676, %v5618, %v4877
      %v5651 = vsel %vm1676, %v5619, %v4879
      %v5652 = vsel %vm1676, %v5620, %v4881
      %v5653 = vsel %vm1676, %v5621, %v4883
      %v5654 = vsel %vm1676, %v5622, %v4885
      %v5655 = vsel %vm1676, %v5623, %v4887
      %v5656 = vsel %vm1709, %v5624, %v4953
      %v5657 = vsel %vm1709, %v5625, %v4955
      %v5658 = vsel %vm1709, %v5626, %v4957
      %v5659 = vsel %vm1709, %v5627, %v4959
      %v5660 = vsel %vm1709, %v5628, %v4961
      %v5661 = vsel %vm1709, %v5629, %v4963
      %v5662 = vsel %vm1709, %v5630, %v4965
      %v5663 = vsel %vm1709, %v5631, %v4967
      %v5664 = vsel %vm1709, %v5632, %v4969
      %v5665 = vsel %vm1709, %v5633, %v4971
      %v5666 = vsel %vm1709, %v5634, %v4973
      %v5667 = vsel %vm1709, %v5635, %v4975
      %v5668 = vsel %vm1709, %v5636, %v4977
      %v5669 = vsel %vm1709, %v5637, %v4979
      %v5670 = vsel %vm1709, %v5638, %v4981
      %v5671 = vsel %vm1709, %v5639, %v4983
      %v5672 = vsel %vm1709, %v5640, %v4985
      %v5673 = vsel %vm1709, %v5641, %v4987
      %v5674 = vsel %vm1709, %v5642, %v4989
      %v5675 = vsel %vm1709, %v5643, %v4991
      %v5676 = vsel %vm1709, %v5644, %v4993
      %v5677 = vsel %vm1709, %v5645, %v4995
      %v5678 = vsel %vm1709, %v5646, %v4997
      %v5679 = vsel %vm1709, %v5647, %v4999
      %v5680 = vsel %vm1709, %v5648, %v5001
      %v5681 = vsel %vm1709, %v5649, %v5003
      %v5682 = vsel %vm1709, %v5650, %v5005
      %v5683 = vsel %vm1709, %v5651, %v5007
      %v5684 = vsel %vm1709, %v5652, %v5009
      %v5685 = vsel %vm1709, %v5653, %v5011
      %v5686 = vsel %vm1709, %v5654, %v5013
      %v5687 = vsel %vm1709, %v5655, %v5015
      %v5688 = vsel %vm1742, %v5656, %v5081
      %v5689 = vsel %vm1742, %v5657, %v5083
      %v5690 = vsel %vm1742, %v5658, %v5085
      %v5691 = vsel %vm1742, %v5659, %v5087
      %v5692 = vsel %vm1742, %v5660, %v5089
      %v5693 = vsel %vm1742, %v5661, %v5091
      %v5694 = vsel %vm1742, %v5662, %v5093
      %v5695 = vsel %vm1742, %v5663, %v5095
      %v5696 = vsel %vm1742, %v5664, %v5097
      %v5697 = vsel %vm1742, %v5665, %v5099
      %v5698 = vsel %vm1742, %v5666, %v5101
      %v5699 = vsel %vm1742, %v5667, %v5103
      %v5700 = vsel %vm1742, %v5668, %v5105
      %v5701 = vsel %vm1742, %v5669, %v5107
      %v5702 = vsel %vm1742, %v5670, %v5109
      %v5703 = vsel %vm1742, %v5671, %v5111
      %v5704 = vsel %vm1742, %v5672, %v5113
      %v5705 = vsel %vm1742, %v5673, %v5115
      %v5706 = vsel %vm1742, %v5674, %v5117
      %v5707 = vsel %vm1742, %v5675, %v5119
      %v5708 = vsel %vm1742, %v5676, %v5121
      %v5709 = vsel %vm1742, %v5677, %v5123
      %v5710 = vsel %vm1742, %v5678, %v5125
      %v5711 = vsel %vm1742, %v5679, %v5127
      %v5712 = vsel %vm1742, %v5680, %v5129
      %v5713 = vsel %vm1742, %v5681, %v5131
      %v5714 = vsel %vm1742, %v5682, %v5133
      %v5715 = vsel %vm1742, %v5683, %v5135
      %v5716 = vsel %vm1742, %v5684, %v5137
      %v5717 = vsel %vm1742, %v5685, %v5139
      %v5718 = vsel %vm1742, %v5686, %v5141
      %v5719 = vsel %vm1742, %v5687, %v5143
      %v5720 = vsel %vm1775, %v5688, %v5209
      %v5721 = vsel %vm1775, %v5689, %v5211
      %v5722 = vsel %vm1775, %v5690, %v5213
      %v5723 = vsel %vm1775, %v5691, %v5215
      %v5724 = vsel %vm1775, %v5692, %v5217
      %v5725 = vsel %vm1775, %v5693, %v5219
      %v5726 = vsel %vm1775, %v5694, %v5221
      %v5727 = vsel %vm1775, %v5695, %v5223
      %v5728 = vsel %vm1775, %v5696, %v5225
      %v5729 = vsel %vm1775, %v5697, %v5227
      %v5730 = vsel %vm1775, %v5698, %v5229
      %v5731 = vsel %vm1775, %v5699, %v5231
      %v5732 = vsel %vm1775, %v5700, %v5233
      %v5733 = vsel %vm1775, %v5701, %v5235
      %v5734 = vsel %vm1775, %v5702, %v5237
      %v5735 = vsel %vm1775, %v5703, %v5239
      %v5736 = vsel %vm1775, %v5704, %v5241
      %v5737 = vsel %vm1775, %v5705, %v5243
      %v5738 = vsel %vm1775, %v5706, %v5245
      %v5739 = vsel %vm1775, %v5707, %v5247
      %v5740 = vsel %vm1775, %v5708, %v5249
      %v5741 = vsel %vm1775, %v5709, %v5251
      %v5742 = vsel %vm1775, %v5710, %v5253
      %v5743 = vsel %vm1775, %v5711, %v5255
      %v5744 = vsel %vm1775, %v5712, %v5257
      %v5745 = vsel %vm1775, %v5713, %v5259
      %v5746 = vsel %vm1775, %v5714, %v5261
      %v5747 = vsel %vm1775, %v5715, %v5263
      %v5748 = vsel %vm1775, %v5716, %v5265
      %v5749 = vsel %vm1775, %v5717, %v5267
      %v5750 = vsel %vm1775, %v5718, %v5269
      %v5751 = vsel %vm1775, %v5719, %v5271
      %v5752 = vsel %vm1808, %v5720, %v5337
      %v5753 = vsel %vm1808, %v5721, %v5339
      %v5754 = vsel %vm1808, %v5722, %v5341
      %v5755 = vsel %vm1808, %v5723, %v5343
      %v5756 = vsel %vm1808, %v5724, %v5345
      %v5757 = vsel %vm1808, %v5725, %v5347
      %v5758 = vsel %vm1808, %v5726, %v5349
      %v5759 = vsel %vm1808, %v5727, %v5351
      %v5760 = vsel %vm1808, %v5728, %v5353
      %v5761 = vsel %vm1808, %v5729, %v5355
      %v5762 = vsel %vm1808, %v5730, %v5357
      %v5763 = vsel %vm1808, %v5731, %v5359
      %v5764 = vsel %vm1808, %v5732, %v5361
      %v5765 = vsel %vm1808, %v5733, %v5363
      %v5766 = vsel %vm1808, %v5734, %v5365
      %v5767 = vsel %vm1808, %v5735, %v5367
      %v5768 = vsel %vm1808, %v5736, %v5369
      %v5769 = vsel %vm1808, %v5737, %v5371
      %v5770 = vsel %vm1808, %v5738, %v5373
      %v5771 = vsel %vm1808, %v5739, %v5375
      %v5772 = vsel %vm1808, %v5740, %v5377
      %v5773 = vsel %vm1808, %v5741, %v5379
      %v5774 = vsel %vm1808, %v5742, %v5381
      %v5775 = vsel %vm1808, %v5743, %v5383
      %v5776 = vsel %vm1808, %v5744, %v5385
      %v5777 = vsel %vm1808, %v5745, %v5387
      %v5778 = vsel %vm1808, %v5746, %v5389
      %v5779 = vsel %vm1808, %v5747, %v5391
      %v5780 = vsel %vm1808, %v5748, %v5393
      %v5781 = vsel %vm1808, %v5749, %v5395
      %v5782 = vsel %vm1808, %v5750, %v5397
      %v5783 = vsel %vm1808, %v5751, %v5399
      %v5784 = vsel %vm1841, %v5752, %v5465
      %v5785 = vsel %vm1841, %v5753, %v5467
      %v5786 = vsel %vm1841, %v5754, %v5469
      %v5787 = vsel %vm1841, %v5755, %v5471
      %v5788 = vsel %vm1841, %v5756, %v5473
      %v5789 = vsel %vm1841, %v5757, %v5475
      %v5790 = vsel %vm1841, %v5758, %v5477
      %v5791 = vsel %vm1841, %v5759, %v5479
      %v5792 = vsel %vm1841, %v5760, %v5481
      %v5793 = vsel %vm1841, %v5761, %v5483
      %v5794 = vsel %vm1841, %v5762, %v5485
      %v5795 = vsel %vm1841, %v5763, %v5487
      %v5796 = vsel %vm1841, %v5764, %v5489
      %v5797 = vsel %vm1841, %v5765, %v5491
      %v5798 = vsel %vm1841, %v5766, %v5493
      %v5799 = vsel %vm1841, %v5767, %v5495
      %v5800 = vsel %vm1841, %v5768, %v5497
      %v5801 = vsel %vm1841, %v5769, %v5499
      %v5802 = vsel %vm1841, %v5770, %v5501
      %v5803 = vsel %vm1841, %v5771, %v5503
      %v5804 = vsel %vm1841, %v5772, %v5505
      %v5805 = vsel %vm1841, %v5773, %v5507
      %v5806 = vsel %vm1841, %v5774, %v5509
      %v5807 = vsel %vm1841, %v5775, %v5511
      %v5808 = vsel %vm1841, %v5776, %v5513
      %v5809 = vsel %vm1841, %v5777, %v5515
      %v5810 = vsel %vm1841, %v5778, %v5517
      %v5811 = vsel %vm1841, %v5779, %v5519
      %v5812 = vsel %vm1841, %v5780, %v5521
      %v5813 = vsel %vm1841, %v5781, %v5523
      %v5814 = vsel %vm1841, %v5782, %v5525
      %v5815 = vsel %vm1841, %v5783, %v5527
      %v5817 = vlaneseq
      %v5818 = vshrl.u32 %v5817, 7
      %v5819 = vsub.s32 0, %v5818
      %v5820 = vrot.slane %v4247, %v5819
      %v5823 = vsel %vm1880, %v5784, 0
      %v5826 = vsel %vm1880, %v5785, 0
      %v5829 = vsel %vm1880, %v5786, 0
      %v5832 = vsel %vm1880, %v5787, 0
      %v5835 = vsel %vm1880, %v5788, 0
      %v5838 = vsel %vm1880, %v5789, 0
      %v5841 = vsel %vm1880, %v5790, 0
      %v5844 = vsel %vm1880, %v5791, 0
      %v5847 = vsel %vm1880, %v5792, 0
      %v5850 = vsel %vm1880, %v5793, 0
      %v5853 = vsel %vm1880, %v5794, 0
      %v5856 = vsel %vm1880, %v5795, 0
      %v5859 = vsel %vm1880, %v5796, 0
      %v5862 = vsel %vm1880, %v5797, 0
      %v5865 = vsel %vm1880, %v5798, 0
      %v5868 = vsel %vm1880, %v5799, 0
      %v5871 = vsel %vm1880, %v5800, 0
      %v5874 = vsel %vm1880, %v5801, 0
      %v5877 = vsel %vm1880, %v5802, 0
      %v5880 = vsel %vm1880, %v5803, 0
      %v5883 = vsel %vm1880, %v5804, 0
      %v5886 = vsel %vm1880, %v5805, 0
      %v5889 = vsel %vm1880, %v5806, 0
      %v5892 = vsel %vm1880, %v5807, 0
      %v5895 = vsel %vm1880, %v5808, 0
      %v5898 = vsel %vm1880, %v5809, 0
      %v5901 = vsel %vm1880, %v5810, 0
      %v5904 = vsel %vm1880, %v5811, 0
      %v5907 = vsel %vm1880, %v5812, 0
      %v5910 = vsel %vm1880, %v5813, 0
      %v5913 = vsel %vm1880, %v5814, 0
      %v5916 = vsel %vm1880, %v5815, 0
      %v5919 = vsel %vm1977, %v4245, 0
      %5921 = vmatprep.subr.mxu0 0.0
      %5922 = vmatpush1.msra.mxu0 %v4241
      %5923 = vmatprep.subr.mxu0 0.0
      %5924 = vmatpush1.msra.mxu0 %v4242
      %5925 = vmatprep.subr.mxu0 0.0
      %5926 = vmatpush1.msra.mxu0 %v4243
      %5927 = vmatprep.subr.mxu0 0.0
      %5928 = vmatpush1.msra.mxu0 %v4244
      %5929 = vmatprep.subr.mxu0 0.0
      %5930 = vmatpush1.msra.mxu0 %v5919
      %5931 = vmatprep.subr.mxu0 0.0
      %5932 = vmatpush1.msra.mxu0 0.0
      %5933 = vmatprep.subr.mxu0 0.0
      %5934 = vmatpush1.msra.mxu0 0.0
      %5935 = vmatprep.subr.mxu0 0.0
      %5936 = vmatpush1.msra.mxu0 0.0
      %5937 = vmatprep.subr.mxu0 0.0
      %5938 = vmatpush1.msra.mxu0 0.0
      %5939 = vmatprep.subr.mxu0 0.0
      %5940 = vmatpush1.msra.mxu0 0.0
      %5941 = vmatprep.subr.mxu0 0.0
      %5942 = vmatpush1.msra.mxu0 0.0
      %5943 = vmatprep.subr.mxu0 0.0
      %5944 = vmatpush1.msra.mxu0 0.0
      %5945 = vmatprep.subr.mxu0 0.0
      %5946 = vmatpush1.msra.mxu0 0.0
      %5947 = vmatprep.subr.mxu0 0.0
      %5948 = vmatpush1.msra.mxu0 0.0
      %5949 = vmatprep.subr.mxu0 0.0
      %5950 = vmatpush1.msra.mxu0 0.0
      %5951 = vmatprep.subr.mxu0 0.0
      %5952 = vmatpush1.msra.mxu0 0.0
      %5953 = vmatprep.subr.mxu0 0.0
      %5954 = vmatpush1.msra.mxu0 0.0
      %5955 = vmatprep.subr.mxu0 0.0
      %5956 = vmatpush1.msra.mxu0 0.0
      %5957 = vmatprep.subr.mxu0 0.0
      %5958 = vmatpush1.msra.mxu0 0.0
      %5959 = vmatprep.subr.mxu0 0.0
      %5960 = vmatpush1.msra.mxu0 0.0
      %5961 = vmatprep.subr.mxu0 0.0
      %5962 = vmatpush1.msra.mxu0 0.0
      %5963 = vmatprep.subr.mxu0 0.0
      %5964 = vmatpush1.msra.mxu0 0.0
      %5965 = vmatprep.subr.mxu0 0.0
      %5966 = vmatpush1.msra.mxu0 0.0
      %5967 = vmatprep.subr.mxu0 0.0
      %5968 = vmatpush1.msra.mxu0 0.0
      %5969 = vmatprep.subr.mxu0 0.0
      %5970 = vmatpush1.msra.mxu0 0.0
      %5971 = vmatprep.subr.mxu0 0.0
      %5972 = vmatpush1.msra.mxu0 0.0
      %5973 = vmatprep.subr.mxu0 0.0
      %5974 = vmatpush1.msra.mxu0 0.0
      %5975 = vmatprep.subr.mxu0 0.0
      %5976 = vmatpush1.msra.mxu0 0.0
      %5977 = vmatprep.subr.mxu0 0.0
      %5978 = vmatpush1.msra.mxu0 0.0
      %5979 = vmatprep.subr.mxu0 0.0
      %5980 = vmatpush1.msra.mxu0 0.0
      %5981 = vmatprep.subr.mxu0 0.0
      %5982 = vmatpush1.msra.mxu0 0.0
      %5983 = vmatprep.subr.mxu0 0.0
      %5984 = vmatpush1.msra.mxu0 0.0
      %5985 = vmatprep.mubr.f32.mxu0 0.0
      %5986 = vmatmul.mubr.f32.gmra.mrb[0].mxu0 %v5823
      %v5987 = vpop.f32.mrb[0].mxu0
      %v5988 = vadd.f32 %v5820, %v5987
      %v5989 = vpop.f32.mrb[0].mxu0
      %5990 = vmatprep.mubr.f32.mxu0 0.0
      %5991 = vmatmul.mubr.f32.gmra.mrb[0].mxu0 %v5826
      %v5992 = vpop.f32.mrb[0].mxu0
      %v5993 = vadd.f32 %v5820, %v5992
      %v5994 = vpop.f32.mrb[0].mxu0
      %5995 = vmatprep.mubr.f32.mxu0 0.0
      %5996 = vmatmul.mubr.f32.gmra.mrb[0].mxu0 %v5829
      %v5997 = vpop.f32.mrb[0].mxu0
      %v5998 = vadd.f32 %v5820, %v5997
      %v5999 = vpop.f32.mrb[0].mxu0
      %6000 = vmatprep.mubr.f32.mxu0 0.0
      %6001 = vmatmul.mubr.f32.gmra.mrb[0].mxu0 %v5832
      %v6002 = vpop.f32.mrb[0].mxu0
      %v6003 = vadd.f32 %v5820, %v6002
      %v6004 = vpop.f32.mrb[0].mxu0
      %6005 = vmatprep.mubr.f32.mxu0 0.0
      %6006 = vmatmul.mubr.f32.gmra.mrb[0].mxu0 %v5835
      %v6007 = vpop.f32.mrb[0].mxu0
      %v6008 = vadd.f32 %v5820, %v6007
      %v6009 = vpop.f32.mrb[0].mxu0
      %6010 = vmatprep.mubr.f32.mxu0 0.0
      %6011 = vmatmul.mubr.f32.gmra.mrb[0].mxu0 %v5838
      %v6012 = vpop.f32.mrb[0].mxu0
      %v6013 = vadd.f32 %v5820, %v6012
      %v6014 = vpop.f32.mrb[0].mxu0
      %6015 = vmatprep.mubr.f32.mxu0 0.0
      %6016 = vmatmul.mubr.f32.gmra.mrb[0].mxu0 %v5841
      %v6017 = vpop.f32.mrb[0].mxu0
      %v6018 = vadd.f32 %v5820, %v6017
      %v6019 = vpop.f32.mrb[0].mxu0
      %6020 = vmatprep.mubr.f32.mxu0 0.0
      %6021 = vmatmul.mubr.f32.gmra.mrb[0].mxu0 %v5844
      %v6022 = vpop.f32.mrb[0].mxu0
      %v6023 = vadd.f32 %v5820, %v6022
      %v6024 = vpop.f32.mrb[0].mxu0
      %6025 = vmatprep.mubr.f32.mxu0 0.0
      %6026 = vmatmul.mubr.f32.gmra.mrb[0].mxu0 %v5847
      %v6027 = vpop.f32.mrb[0].mxu0
      %v6028 = vadd.f32 %v5820, %v6027
      %v6029 = vpop.f32.mrb[0].mxu0
      %6030 = vmatprep.mubr.f32.mxu0 0.0
      %6031 = vmatmul.mubr.f32.gmra.mrb[0].mxu0 %v5850
      %v6032 = vpop.f32.mrb[0].mxu0
      %v6033 = vadd.f32 %v5820, %v6032
      %v6034 = vpop.f32.mrb[0].mxu0
      %6035 = vmatprep.mubr.f32.mxu0 0.0
      %6036 = vmatmul.mubr.f32.gmra.mrb[0].mxu0 %v5853
      %v6037 = vpop.f32.mrb[0].mxu0
      %v6038 = vadd.f32 %v5820, %v6037
      %v6039 = vpop.f32.mrb[0].mxu0
      %6040 = vmatprep.mubr.f32.mxu0 0.0
      %6041 = vmatmul.mubr.f32.gmra.mrb[0].mxu0 %v5856
      %v6042 = vpop.f32.mrb[0].mxu0
      %v6043 = vadd.f32 %v5820, %v6042
      %v6044 = vpop.f32.mrb[0].mxu0
      %6045 = vmatprep.mubr.f32.mxu0 0.0
      %6046 = vmatmul.mubr.f32.gmra.mrb[0].mxu0 %v5859
      %v6047 = vpop.f32.mrb[0].mxu0
      %v6048 = vadd.f32 %v5820, %v6047
      %v6049 = vpop.f32.mrb[0].mxu0
      %6050 = vmatprep.mubr.f32.mxu0 0.0
      %6051 = vmatmul.mubr.f32.gmra.mrb[0].mxu0 %v5862
      %v6052 = vpop.f32.mrb[0].mxu0
      %v6053 = vadd.f32 %v5820, %v6052
      %v6054 = vpop.f32.mrb[0].mxu0
      %6055 = vmatprep.mubr.f32.mxu0 0.0
      %6056 = vmatmul.mubr.f32.gmra.mrb[0].mxu0 %v5865
      %v6057 = vpop.f32.mrb[0].mxu0
      %v6058 = vadd.f32 %v5820, %v6057
      %v6059 = vpop.f32.mrb[0].mxu0
      %6060 = vmatprep.mubr.f32.mxu0 0.0
      %6061 = vmatmul.mubr.f32.gmra.mrb[0].mxu0 %v5868
      %v6062 = vpop.f32.mrb[0].mxu0
      %v6063 = vadd.f32 %v5820, %v6062
      %v6064 = vpop.f32.mrb[0].mxu0
      %6065 = vmatprep.mubr.f32.mxu0 0.0
      %6066 = vmatmul.mubr.f32.gmra.mrb[0].mxu0 %v5871
      %v6067 = vpop.f32.mrb[0].mxu0
      %v6068 = vadd.f32 %v5820, %v6067
      %v6069 = vpop.f32.mrb[0].mxu0
      %6070 = vmatprep.mubr.f32.mxu0 0.0
      %6071 = vmatmul.mubr.f32.gmra.mrb[0].mxu0 %v5874
      %v6072 = vpop.f32.mrb[0].mxu0
      %v6073 = vadd.f32 %v5820, %v6072
      %v6074 = vpop.f32.mrb[0].mxu0
      %6075 = vmatprep.mubr.f32.mxu0 0.0
      %6076 = vmatmul.mubr.f32.gmra.mrb[0].mxu0 %v5877
      %v6077 = vpop.f32.mrb[0].mxu0
      %v6078 = vadd.f32 %v5820, %v6077
      %v6079 = vpop.f32.mrb[0].mxu0
      %6080 = vmatprep.mubr.f32.mxu0 0.0
      %6081 = vmatmul.mubr.f32.gmra.mrb[0].mxu0 %v5880
      %v6082 = vpop.f32.mrb[0].mxu0
      %v6083 = vadd.f32 %v5820, %v6082
      %v6084 = vpop.f32.mrb[0].mxu0
      %6085 = vmatprep.mubr.f32.mxu0 0.0
      %6086 = vmatmul.mubr.f32.gmra.mrb[0].mxu0 %v5883
      %v6087 = vpop.f32.mrb[0].mxu0
      %v6088 = vadd.f32 %v5820, %v6087
      %v6089 = vpop.f32.mrb[0].mxu0
      %6090 = vmatprep.mubr.f32.mxu0 0.0
      %6091 = vmatmul.mubr.f32.gmra.mrb[0].mxu0 %v5886
      %v6092 = vpop.f32.mrb[0].mxu0
      %v6093 = vadd.f32 %v5820, %v6092
      %v6094 = vpop.f32.mrb[0].mxu0
      %6095 = vmatprep.mubr.f32.mxu0 0.0
      %6096 = vmatmul.mubr.f32.gmra.mrb[0].mxu0 %v5889
      %v6097 = vpop.f32.mrb[0].mxu0
      %v6098 = vadd.f32 %v5820, %v6097
      %v6099 = vpop.f32.mrb[0].mxu0
      %6100 = vmatprep.mubr.f32.mxu0 0.0
      %6101 = vmatmul.mubr.f32.gmra.mrb[0].mxu0 %v5892
      %v6102 = vpop.f32.mrb[0].mxu0
      %v6103 = vadd.f32 %v5820, %v6102
      %v6104 = vpop.f32.mrb[0].mxu0
      %6105 = vmatprep.mubr.f32.mxu0 0.0
      %6106 = vmatmul.mubr.f32.gmra.mrb[0].mxu0 %v5895
      %v6107 = vpop.f32.mrb[0].mxu0
      %v6108 = vadd.f32 %v5820, %v6107
      %v6109 = vpop.f32.mrb[0].mxu0
      %6110 = vmatprep.mubr.f32.mxu0 0.0
      %6111 = vmatmul.mubr.f32.gmra.mrb[0].mxu0 %v5898
      %v6112 = vpop.f32.mrb[0].mxu0
      %v6113 = vadd.f32 %v5820, %v6112
      %v6114 = vpop.f32.mrb[0].mxu0
      %6115 = vmatprep.mubr.f32.mxu0 0.0
      %6116 = vmatmul.mubr.f32.gmra.mrb[0].mxu0 %v5901
      %v6117 = vpop.f32.mrb[0].mxu0
      %v6118 = vadd.f32 %v5820, %v6117
      %v6119 = vpop.f32.mrb[0].mxu0
      %6120 = vmatprep.mubr.f32.mxu0 0.0
      %6121 = vmatmul.mubr.f32.gmra.mrb[0].mxu0 %v5904
      %v6122 = vpop.f32.mrb[0].mxu0
      %v6123 = vadd.f32 %v5820, %v6122
      %v6124 = vpop.f32.mrb[0].mxu0
      %6125 = vmatprep.mubr.f32.mxu0 0.0
      %6126 = vmatmul.mubr.f32.gmra.mrb[0].mxu0 %v5907
      %v6127 = vpop.f32.mrb[0].mxu0
      %v6128 = vadd.f32 %v5820, %v6127
      %v6129 = vpop.f32.mrb[0].mxu0
      %6130 = vmatprep.mubr.f32.mxu0 0.0
      %6131 = vmatmul.mubr.f32.gmra.mrb[0].mxu0 %v5910
      %v6132 = vpop.f32.mrb[0].mxu0
      %v6133 = vadd.f32 %v5820, %v6132
      %v6134 = vpop.f32.mrb[0].mxu0
      %6135 = vmatprep.mubr.f32.mxu0 0.0
      %6136 = vmatmul.mubr.f32.gmra.mrb[0].mxu0 %v5913
      %v6137 = vpop.f32.mrb[0].mxu0
      %v6138 = vadd.f32 %v5820, %v6137
      %v6139 = vpop.f32.mrb[0].mxu0
      %6140 = vmatprep.mubr.f32.mxu0 0.0
      %6141 = vmatmul.mubr.f32.gmra.mrb[0].mxu0 %v5916
      %v6142 = vpop.f32.mrb[0].mxu0
      %v6143 = vadd.f32 %v5820, %v6142
      %v6144 = vpop.f32.mrb[0].mxu0
      %6145 = vdwg.mxu0
      %v6146 = vmax.f32 %v5988, 0.0
      %v6147 = vmax.f32 %v5993, 0.0
      %v6148 = vmax.f32 %v5998, 0.0
      %v6149 = vmax.f32 %v6003, 0.0
      %v6150 = vmax.f32 %v6008, 0.0
      %v6151 = vmax.f32 %v6013, 0.0
      %v6152 = vmax.f32 %v6018, 0.0
      %v6153 = vmax.f32 %v6023, 0.0
      %v6154 = vmax.f32 %v6028, 0.0
      %v6155 = vmax.f32 %v6033, 0.0
      %v6156 = vmax.f32 %v6038, 0.0
      %v6157 = vmax.f32 %v6043, 0.0
      %v6158 = vmax.f32 %v6048, 0.0
      %v6159 = vmax.f32 %v6053, 0.0
      %v6160 = vmax.f32 %v6058, 0.0
      %v6161 = vmax.f32 %v6063, 0.0
      %v6162 = vmax.f32 %v6068, 0.0
      %v6163 = vmax.f32 %v6073, 0.0
      %v6164 = vmax.f32 %v6078, 0.0
      %v6165 = vmax.f32 %v6083, 0.0
      %v6166 = vmax.f32 %v6088, 0.0
      %v6167 = vmax.f32 %v6093, 0.0
      %v6168 = vmax.f32 %v6098, 0.0
      %v6169 = vmax.f32 %v6103, 0.0
      %v6170 = vmax.f32 %v6108, 0.0
      %v6171 = vmax.f32 %v6113, 0.0
      %v6172 = vmax.f32 %v6118, 0.0
      %v6173 = vmax.f32 %v6123, 0.0
      %v6174 = vmax.f32 %v6128, 0.0
      %v6175 = vmax.f32 %v6133, 0.0
      %v6176 = vmax.f32 %v6138, 0.0
      %v6177 = vmax.f32 %v6143, 0.0
      %6178 = vst.msk [vmem:[%s259 + $0x1] sm:$0xff] %vm171, %v6146
      %6179 = vst.msk [vmem:[%s259 + $0x9] sm:$0xff] %vm171, %v6147
      %6180 = vst.msk [vmem:[%s259 + $0x19] sm:$0xff] %vm171, %v6148
      %6181 = vst.msk [vmem:[%s259 + $0x21] sm:$0xff] %vm171, %v6149
      %6182 = vst.msk [vmem:[%s259 + $0x31] sm:$0xff] %vm171, %v6150
      %6183 = vst.msk [vmem:[%s259 + $0x39] sm:$0xff] %vm171, %v6151
      %6184 = vst.msk [vmem:[%s259 + $0x49] sm:$0xff] %vm171, %v6152
      %6185 = vst.msk [vmem:[%s259 + $0x51] sm:$0xff] %vm171, %v6153
      %6186 = vst.msk [vmem:[%s259 + $0x61] sm:$0xff] %vm171, %v6154
      %6187 = vst.msk [vmem:[%s259 + $0x69] sm:$0xff] %vm171, %v6155
      %6188 = vst.msk [vmem:[%s259 + $0x79] sm:$0xff] %vm171, %v6156
      %6189 = vst.msk [vmem:[%s259 + $0x81] sm:$0xff] %vm171, %v6157
      %6190 = vst.msk [vmem:[%s259 + $0x91] sm:$0xff] %vm171, %v6158
      %6191 = vst.msk [vmem:[%s259 + $0x99] sm:$0xff] %vm171, %v6159
      %6192 = vst.msk [vmem:[%s259 + $0xa9] sm:$0xff] %vm171, %v6160
      %6193 = vst.msk [vmem:[%s259 + $0xb1] sm:$0xff] %vm171, %v6161
      %6194 = vst.msk [vmem:[%s259 + $0xc1] sm:$0xff] %vm171, %v6162
      %6195 = vst.msk [vmem:[%s259 + $0xc9] sm:$0xff] %vm171, %v6163
      %6196 = vst.msk [vmem:[%s259 + $0xd9] sm:$0xff] %vm171, %v6164
      %6197 = vst.msk [vmem:[%s259 + $0xe1] sm:$0xff] %vm171, %v6165
      %6198 = vst.msk [vmem:[%s259 + $0xf1] sm:$0xff] %vm171, %v6166
      %6199 = vst.msk [vmem:[%s259 + $0xf9] sm:$0xff] %vm171, %v6167
      %6200 = vst.msk [vmem:[%s259 + $0x109] sm:$0xff] %vm171, %v6168
      %6201 = vst.msk [vmem:[%s259 + $0x111] sm:$0xff] %vm171, %v6169
      %6202 = vst.msk [vmem:[%s259 + $0x121] sm:$0xff] %vm171, %v6170
      %6203 = vst.msk [vmem:[%s259 + $0x129] sm:$0xff] %vm171, %v6171
      %6204 = vst.msk [vmem:[%s259 + $0x139] sm:$0xff] %vm171, %v6172
      %6205 = vst.msk [vmem:[%s259 + $0x141] sm:$0xff] %vm171, %v6173
      %6206 = vst.msk [vmem:[%s259 + $0x151] sm:$0xff] %vm171, %v6174
      %6207 = vst.msk [vmem:[%s259 + $0x159] sm:$0xff] %vm171, %v6175
      %6208 = vst.msk [vmem:[%s259 + $0x169] sm:$0xff] %vm171, %v6176
      %6209 = vst.msk [vmem:[%s259 + $0x171] sm:$0xff] %vm171, %v6177
      %s6210 = scalar_lea.vmem %s1, 120
      %v6211 = vld [vmem:[%s6210] sm:$0xff]
      %v6212 = vld [vmem:[%s6210 + $0x8] sm:$0xff]
      %v6213 = vld [vmem:[%s6210 + $0x10] sm:$0xff]
      %v6214 = vld [vmem:[%s6210 + $0x18] sm:$0xff]
      %v6215 = vld [vmem:[%s6210 + $0x20] sm:$0xf]
      %s6216 = scalar_lea.vmem %s2, 3
      %v6217 = vld [vmem:[%s6216] sm:$0x1]
      %v6218 = vld [vmem:[#allocation2] sm:$0xff]
      %v6219 = vld [vmem:[#allocation2 + $0x8] sm:$0xff]
      %v6220 = vld [vmem:[#allocation2 + $0x18] sm:$0xff]
      %v6221 = vld [vmem:[#allocation2 + $0x20] sm:$0xff]
      %v6222 = vld [vmem:[#allocation2 + $0x30] sm:$0xff]
      %v6223 = vld [vmem:[#allocation2 + $0x38] sm:$0xff]
      %v6224 = vld [vmem:[#allocation2 + $0x48] sm:$0xff]
      %v6225 = vld [vmem:[#allocation2 + $0x50] sm:$0xff]
      %v6226 = vld [vmem:[#allocation2 + $0x60] sm:$0xff]
      %v6227 = vld [vmem:[#allocation2 + $0x68] sm:$0xff]
      %v6228 = vld [vmem:[#allocation2 + $0x78] sm:$0xff]
      %v6229 = vld [vmem:[#allocation2 + $0x80] sm:$0xff]
      %v6230 = vld [vmem:[#allocation2 + $0x90] sm:$0xff]
      %v6231 = vld [vmem:[#allocation2 + $0x98] sm:$0xff]
      %v6232 = vld [vmem:[#allocation2 + $0xa8] sm:$0xff]
      %v6233 = vld [vmem:[#allocation2 + $0xb0] sm:$0xff]
      %v6234 = vld [vmem:[#allocation2 + $0xc0] sm:$0xff]
      %v6235 = vld [vmem:[#allocation2 + $0xc8] sm:$0xff]
      %v6236 = vld [vmem:[#allocation2 + $0xd8] sm:$0xff]
      %v6237 = vld [vmem:[#allocation2 + $0xe0] sm:$0xff]
      %v6238 = vld [vmem:[#allocation2 + $0xf0] sm:$0xff]
      %v6239 = vld [vmem:[#allocation2 + $0xf8] sm:$0xff]
      %v6240 = vld [vmem:[#allocation2 + $0x108] sm:$0xff]
      %v6241 = vld [vmem:[#allocation2 + $0x110] sm:$0xff]
      %v6242 = vld [vmem:[#allocation2 + $0x120] sm:$0xff]
      %v6243 = vld [vmem:[#allocation2 + $0x128] sm:$0xff]
      %v6244 = vld [vmem:[#allocation2 + $0x138] sm:$0xff]
      %v6245 = vld [vmem:[#allocation2 + $0x140] sm:$0xff]
      %v6246 = vld [vmem:[#allocation2 + $0x150] sm:$0xff]
      %v6247 = vld [vmem:[#allocation2 + $0x158] sm:$0xff]
      %v6248 = vld [vmem:[#allocation2 + $0x168] sm:$0xff]
      %v6249 = vld [vmem:[#allocation2 + $0x170] sm:$0xff]
      %v6250 = vld [vmem:[#allocation2 + $0x1] sm:$0xff]
      %v6251 = vld [vmem:[#allocation2 + $0x9] sm:$0xff]
      %v6252 = vld [vmem:[#allocation2 + $0x19] sm:$0xff]
      %v6253 = vld [vmem:[#allocation2 + $0x21] sm:$0xff]
      %v6254 = vld [vmem:[#allocation2 + $0x31] sm:$0xff]
      %v6255 = vld [vmem:[#allocation2 + $0x39] sm:$0xff]
      %v6256 = vld [vmem:[#allocation2 + $0x49] sm:$0xff]
      %v6257 = vld [vmem:[#allocation2 + $0x51] sm:$0xff]
      %v6258 = vld [vmem:[#allocation2 + $0x61] sm:$0xff]
      %v6259 = vld [vmem:[#allocation2 + $0x69] sm:$0xff]
      %v6260 = vld [vmem:[#allocation2 + $0x79] sm:$0xff]
      %v6261 = vld [vmem:[#allocation2 + $0x81] sm:$0xff]
      %v6262 = vld [vmem:[#allocation2 + $0x91] sm:$0xff]
      %v6263 = vld [vmem:[#allocation2 + $0x99] sm:$0xff]
      %v6264 = vld [vmem:[#allocation2 + $0xa9] sm:$0xff]
      %v6265 = vld [vmem:[#allocation2 + $0xb1] sm:$0xff]
      %v6266 = vld [vmem:[#allocation2 + $0xc1] sm:$0xff]
      %v6267 = vld [vmem:[#allocation2 + $0xc9] sm:$0xff]
      %v6268 = vld [vmem:[#allocation2 + $0xd9] sm:$0xff]
      %v6269 = vld [vmem:[#allocation2 + $0xe1] sm:$0xff]
      %v6270 = vld [vmem:[#allocation2 + $0xf1] sm:$0xff]
      %v6271 = vld [vmem:[#allocation2 + $0xf9] sm:$0xff]
      %v6272 = vld [vmem:[#allocation2 + $0x109] sm:$0xff]
      %v6273 = vld [vmem:[#allocation2 + $0x111] sm:$0xff]
      %v6274 = vld [vmem:[#allocation2 + $0x121] sm:$0xff]
      %v6275 = vld [vmem:[#allocation2 + $0x129] sm:$0xff]
      %v6276 = vld [vmem:[#allocation2 + $0x139] sm:$0xff]
      %v6277 = vld [vmem:[#allocation2 + $0x141] sm:$0xff]
      %v6278 = vld [vmem:[#allocation2 + $0x151] sm:$0xff]
      %v6279 = vld [vmem:[#allocation2 + $0x159] sm:$0xff]
      %v6280 = vld [vmem:[#allocation2 + $0x169] sm:$0xff]
      %v6281 = vld [vmem:[#allocation2 + $0x171] sm:$0xff]
      %v6282 = vld [vmem:[#allocation2 + $0x2] sm:$0xff]
      %v6283 = vld [vmem:[#allocation2 + $0xa] sm:$0xff]
      %v6284 = vld [vmem:[#allocation2 + $0x1a] sm:$0xff]
      %v6285 = vld [vmem:[#allocation2 + $0x22] sm:$0xff]
      %v6286 = vld [vmem:[#allocation2 + $0x32] sm:$0xff]
      %v6287 = vld [vmem:[#allocation2 + $0x3a] sm:$0xff]
      %v6288 = vld [vmem:[#allocation2 + $0x4a] sm:$0xff]
      %v6289 = vld [vmem:[#allocation2 + $0x52] sm:$0xff]
      %v6290 = vld [vmem:[#allocation2 + $0x62] sm:$0xff]
      %v6291 = vld [vmem:[#allocation2 + $0x6a] sm:$0xff]
      %v6292 = vld [vmem:[#allocation2 + $0x7a] sm:$0xff]
      %v6293 = vld [vmem:[#allocation2 + $0x82] sm:$0xff]
      %v6294 = vld [vmem:[#allocation2 + $0x92] sm:$0xff]
      %v6295 = vld [vmem:[#allocation2 + $0x9a] sm:$0xff]
      %v6296 = vld [vmem:[#allocation2 + $0xaa] sm:$0xff]
      %v6297 = vld [vmem:[#allocation2 + $0xb2] sm:$0xff]
      %v6298 = vld [vmem:[#allocation2 + $0xc2] sm:$0xff]
      %v6299 = vld [vmem:[#allocation2 + $0xca] sm:$0xff]
      %v6300 = vld [vmem:[#allocation2 + $0xda] sm:$0xff]
      %v6301 = vld [vmem:[#allocation2 + $0xe2] sm:$0xff]
      %v6302 = vld [vmem:[#allocation2 + $0xf2] sm:$0xff]
      %v6303 = vld [vmem:[#allocation2 + $0xfa] sm:$0xff]
      %v6304 = vld [vmem:[#allocation2 + $0x10a] sm:$0xff]
      %v6305 = vld [vmem:[#allocation2 + $0x112] sm:$0xff]
      %v6306 = vld [vmem:[#allocation2 + $0x122] sm:$0xff]
      %v6307 = vld [vmem:[#allocation2 + $0x12a] sm:$0xff]
      %v6308 = vld [vmem:[#allocation2 + $0x13a] sm:$0xff]
      %v6309 = vld [vmem:[#allocation2 + $0x142] sm:$0xff]
      %v6310 = vld [vmem:[#allocation2 + $0x152] sm:$0xff]
      %v6311 = vld [vmem:[#allocation2 + $0x15a] sm:$0xff]
      %v6312 = vld [vmem:[#allocation2 + $0x16a] sm:$0xff]
      %v6313 = vld [vmem:[#allocation2 + $0x172] sm:$0xff]
      %v6314 = vld [vmem:[%s259] sm:$0xff]
      %v6315 = vld [vmem:[%s259 + $0x8] sm:$0xff]
      %v6316 = vld [vmem:[%s259 + $0x18] sm:$0xff]
      %v6317 = vld [vmem:[%s259 + $0x20] sm:$0xff]
      %v6318 = vld [vmem:[%s259 + $0x30] sm:$0xff]
      %v6319 = vld [vmem:[%s259 + $0x38] sm:$0xff]
      %v6320 = vld [vmem:[%s259 + $0x48] sm:$0xff]
      %v6321 = vld [vmem:[%s259 + $0x50] sm:$0xff]
      %v6322 = vld [vmem:[%s259 + $0x60] sm:$0xff]
      %v6323 = vld [vmem:[%s259 + $0x68] sm:$0xff]
      %v6324 = vld [vmem:[%s259 + $0x78] sm:$0xff]
      %v6325 = vld [vmem:[%s259 + $0x80] sm:$0xff]
      %v6326 = vld [vmem:[%s259 + $0x90] sm:$0xff]
      %v6327 = vld [vmem:[%s259 + $0x98] sm:$0xff]
      %v6328 = vld [vmem:[%s259 + $0xa8] sm:$0xff]
      %v6329 = vld [vmem:[%s259 + $0xb0] sm:$0xff]
      %v6330 = vld [vmem:[%s259 + $0xc0] sm:$0xff]
      %v6331 = vld [vmem:[%s259 + $0xc8] sm:$0xff]
      %v6332 = vld [vmem:[%s259 + $0xd8] sm:$0xff]
      %v6333 = vld [vmem:[%s259 + $0xe0] sm:$0xff]
      %v6334 = vld [vmem:[%s259 + $0xf0] sm:$0xff]
      %v6335 = vld [vmem:[%s259 + $0xf8] sm:$0xff]
      %v6336 = vld [vmem:[%s259 + $0x108] sm:$0xff]
      %v6337 = vld [vmem:[%s259 + $0x110] sm:$0xff]
      %v6338 = vld [vmem:[%s259 + $0x120] sm:$0xff]
      %v6339 = vld [vmem:[%s259 + $0x128] sm:$0xff]
      %v6340 = vld [vmem:[%s259 + $0x138] sm:$0xff]
      %v6341 = vld [vmem:[%s259 + $0x140] sm:$0xff]
      %v6342 = vld [vmem:[%s259 + $0x150] sm:$0xff]
      %v6343 = vld [vmem:[%s259 + $0x158] sm:$0xff]
      %v6344 = vld [vmem:[%s259 + $0x168] sm:$0xff]
      %v6345 = vld [vmem:[%s259 + $0x170] sm:$0xff]
      %v6346 = vld [vmem:[%s259 + $0x1] sm:$0xff]
      %v6347 = vld [vmem:[%s259 + $0x9] sm:$0xff]
      %v6348 = vld [vmem:[%s259 + $0x19] sm:$0xff]
      %v6349 = vld [vmem:[%s259 + $0x21] sm:$0xff]
      %v6350 = vld [vmem:[%s259 + $0x31] sm:$0xff]
      %v6351 = vld [vmem:[%s259 + $0x39] sm:$0xff]
      %v6352 = vld [vmem:[%s259 + $0x49] sm:$0xff]
      %v6353 = vld [vmem:[%s259 + $0x51] sm:$0xff]
      %v6354 = vld [vmem:[%s259 + $0x61] sm:$0xff]
      %v6355 = vld [vmem:[%s259 + $0x69] sm:$0xff]
      %v6356 = vld [vmem:[%s259 + $0x79] sm:$0xff]
      %v6357 = vld [vmem:[%s259 + $0x81] sm:$0xff]
      %v6358 = vld [vmem:[%s259 + $0x91] sm:$0xff]
      %v6359 = vld [vmem:[%s259 + $0x99] sm:$0xff]
      %v6360 = vld [vmem:[%s259 + $0xa9] sm:$0xff]
      %v6361 = vld [vmem:[%s259 + $0xb1] sm:$0xff]
      %v6362 = vld [vmem:[%s259 + $0xc1] sm:$0xff]
      %v6363 = vld [vmem:[%s259 + $0xc9] sm:$0xff]
      %v6364 = vld [vmem:[%s259 + $0xd9] sm:$0xff]
      %v6365 = vld [vmem:[%s259 + $0xe1] sm:$0xff]
      %v6366 = vld [vmem:[%s259 + $0xf1] sm:$0xff]
      %v6367 = vld [vmem:[%s259 + $0xf9] sm:$0xff]
      %v6368 = vld [vmem:[%s259 + $0x109] sm:$0xff]
      %v6369 = vld [vmem:[%s259 + $0x111] sm:$0xff]
      %v6370 = vld [vmem:[%s259 + $0x121] sm:$0xff]
      %v6371 = vld [vmem:[%s259 + $0x129] sm:$0xff]
      %v6372 = vld [vmem:[%s259 + $0x139] sm:$0xff]
      %v6373 = vld [vmem:[%s259 + $0x141] sm:$0xff]
      %v6374 = vld [vmem:[%s259 + $0x151] sm:$0xff]
      %v6375 = vld [vmem:[%s259 + $0x159] sm:$0xff]
      %v6376 = vld [vmem:[%s259 + $0x169] sm:$0xff]
      %v6377 = vld [vmem:[%s259 + $0x171] sm:$0xff]
      %v6378 = vld [vmem:[%s259 + $0x2] sm:$0xff]
      %v6379 = vld [vmem:[%s259 + $0xa] sm:$0xff]
      %v6380 = vld [vmem:[%s259 + $0x1a] sm:$0xff]
      %v6381 = vld [vmem:[%s259 + $0x22] sm:$0xff]
      %v6382 = vld [vmem:[%s259 + $0x32] sm:$0xff]
      %v6383 = vld [vmem:[%s259 + $0x3a] sm:$0xff]
      %v6384 = vld [vmem:[%s259 + $0x4a] sm:$0xff]
      %v6385 = vld [vmem:[%s259 + $0x52] sm:$0xff]
      %v6386 = vld [vmem:[%s259 + $0x62] sm:$0xff]
      %v6387 = vld [vmem:[%s259 + $0x6a] sm:$0xff]
      %v6388 = vld [vmem:[%s259 + $0x7a] sm:$0xff]
      %v6389 = vld [vmem:[%s259 + $0x82] sm:$0xff]
      %v6390 = vld [vmem:[%s259 + $0x92] sm:$0xff]
      %v6391 = vld [vmem:[%s259 + $0x9a] sm:$0xff]
      %v6392 = vld [vmem:[%s259 + $0xaa] sm:$0xff]
      %v6393 = vld [vmem:[%s259 + $0xb2] sm:$0xff]
      %v6394 = vld [vmem:[%s259 + $0xc2] sm:$0xff]
      %v6395 = vld [vmem:[%s259 + $0xca] sm:$0xff]
      %v6396 = vld [vmem:[%s259 + $0xda] sm:$0xff]
      %v6397 = vld [vmem:[%s259 + $0xe2] sm:$0xff]
      %v6398 = vld [vmem:[%s259 + $0xf2] sm:$0xff]
      %v6399 = vld [vmem:[%s259 + $0xfa] sm:$0xff]
      %v6400 = vld [vmem:[%s259 + $0x10a] sm:$0xff]
      %v6401 = vld [vmem:[%s259 + $0x112] sm:$0xff]
      %v6402 = vld [vmem:[%s259 + $0x122] sm:$0xff]
      %v6403 = vld [vmem:[%s259 + $0x12a] sm:$0xff]
      %v6404 = vld [vmem:[%s259 + $0x13a] sm:$0xff]
      %v6405 = vld [vmem:[%s259 + $0x142] sm:$0xff]
      %v6406 = vld [vmem:[%s259 + $0x152] sm:$0xff]
      %v6407 = vld [vmem:[%s259 + $0x15a] sm:$0xff]
      %v6408 = vld [vmem:[%s259 + $0x16a] sm:$0xff]
      %v6409 = vld [vmem:[%s259 + $0x172] sm:$0xff]
      %v6410 = vld [vmem:[%s490] sm:$0xff]
      %v6411 = vld [vmem:[%s490 + $0x8] sm:$0xff]
      %v6412 = vld [vmem:[%s490 + $0x18] sm:$0xff]
      %v6413 = vld [vmem:[%s490 + $0x20] sm:$0xff]
      %v6414 = vld [vmem:[%s490 + $0x30] sm:$0xff]
      %v6415 = vld [vmem:[%s490 + $0x38] sm:$0xff]
      %v6416 = vld [vmem:[%s490 + $0x48] sm:$0xff]
      %v6417 = vld [vmem:[%s490 + $0x50] sm:$0xff]
      %v6418 = vld [vmem:[%s490 + $0x60] sm:$0xff]
      %v6419 = vld [vmem:[%s490 + $0x68] sm:$0xff]
      %v6420 = vld [vmem:[%s490 + $0x78] sm:$0xff]
      %v6421 = vld [vmem:[%s490 + $0x80] sm:$0xff]
      %v6422 = vld [vmem:[%s490 + $0x90] sm:$0xff]
      %v6423 = vld [vmem:[%s490 + $0x98] sm:$0xff]
      %v6424 = vld [vmem:[%s490 + $0xa8] sm:$0xff]
      %v6425 = vld [vmem:[%s490 + $0xb0] sm:$0xff]
      %v6426 = vld [vmem:[%s490 + $0xc0] sm:$0xff]
      %v6427 = vld [vmem:[%s490 + $0xc8] sm:$0xff]
      %v6428 = vld [vmem:[%s490 + $0xd8] sm:$0xff]
      %v6429 = vld [vmem:[%s490 + $0xe0] sm:$0xff]
      %v6430 = vld [vmem:[%s490 + $0xf0] sm:$0xff]
      %v6431 = vld [vmem:[%s490 + $0xf8] sm:$0xff]
      %v6432 = vld [vmem:[%s490 + $0x108] sm:$0xff]
      %v6433 = vld [vmem:[%s490 + $0x110] sm:$0xff]
      %v6434 = vld [vmem:[%s490 + $0x120] sm:$0xff]
      %v6435 = vld [vmem:[%s490 + $0x128] sm:$0xff]
      %v6436 = vld [vmem:[%s490 + $0x138] sm:$0xff]
      %v6437 = vld [vmem:[%s490 + $0x140] sm:$0xff]
      %v6438 = vld [vmem:[%s490 + $0x150] sm:$0xff]
      %v6439 = vld [vmem:[%s490 + $0x158] sm:$0xff]
      %v6440 = vld [vmem:[%s490 + $0x168] sm:$0xff]
      %v6441 = vld [vmem:[%s490 + $0x170] sm:$0xff]
      %v6442 = vld [vmem:[%s490 + $0x1] sm:$0xff]
      %v6443 = vld [vmem:[%s490 + $0x9] sm:$0xff]
      %v6444 = vld [vmem:[%s490 + $0x19] sm:$0xff]
      %v6445 = vld [vmem:[%s490 + $0x21] sm:$0xff]
      %v6446 = vld [vmem:[%s490 + $0x31] sm:$0xff]
      %v6447 = vld [vmem:[%s490 + $0x39] sm:$0xff]
      %v6448 = vld [vmem:[%s490 + $0x49] sm:$0xff]
      %v6449 = vld [vmem:[%s490 + $0x51] sm:$0xff]
      %v6450 = vld [vmem:[%s490 + $0x61] sm:$0xff]
      %v6451 = vld [vmem:[%s490 + $0x69] sm:$0xff]
      %v6452 = vld [vmem:[%s490 + $0x79] sm:$0xff]
      %v6453 = vld [vmem:[%s490 + $0x81] sm:$0xff]
      %v6454 = vld [vmem:[%s490 + $0x91] sm:$0xff]
      %v6455 = vld [vmem:[%s490 + $0x99] sm:$0xff]
      %v6456 = vld [vmem:[%s490 + $0xa9] sm:$0xff]
      %v6457 = vld [vmem:[%s490 + $0xb1] sm:$0xff]
      %v6458 = vld [vmem:[%s490 + $0xc1] sm:$0xff]
      %v6459 = vld [vmem:[%s490 + $0xc9] sm:$0xff]
      %v6460 = vld [vmem:[%s490 + $0xd9] sm:$0xff]
      %v6461 = vld [vmem:[%s490 + $0xe1] sm:$0xff]
      %v6462 = vld [vmem:[%s490 + $0xf1] sm:$0xff]
      %v6463 = vld [vmem:[%s490 + $0xf9] sm:$0xff]
      %v6464 = vld [vmem:[%s490 + $0x109] sm:$0xff]
      %v6465 = vld [vmem:[%s490 + $0x111] sm:$0xff]
      %v6466 = vld [vmem:[%s490 + $0x121] sm:$0xff]
      %v6467 = vld [vmem:[%s490 + $0x129] sm:$0xff]
      %v6468 = vld [vmem:[%s490 + $0x139] sm:$0xff]
      %v6469 = vld [vmem:[%s490 + $0x141] sm:$0xff]
      %v6470 = vld [vmem:[%s490 + $0x151] sm:$0xff]
      %v6471 = vld [vmem:[%s490 + $0x159] sm:$0xff]
      %v6472 = vld [vmem:[%s490 + $0x169] sm:$0xff]
      %v6473 = vld [vmem:[%s490 + $0x171] sm:$0xff]
      %v6474 = vld [vmem:[%s490 + $0x2] sm:$0xff]
      %v6475 = vld [vmem:[%s490 + $0xa] sm:$0xff]
      %v6476 = vld [vmem:[%s490 + $0x1a] sm:$0xff]
      %v6477 = vld [vmem:[%s490 + $0x22] sm:$0xff]
      %v6478 = vld [vmem:[%s490 + $0x32] sm:$0xff]
      %v6479 = vld [vmem:[%s490 + $0x3a] sm:$0xff]
      %v6480 = vld [vmem:[%s490 + $0x4a] sm:$0xff]
      %v6481 = vld [vmem:[%s490 + $0x52] sm:$0xff]
      %v6482 = vld [vmem:[%s490 + $0x62] sm:$0xff]
      %v6483 = vld [vmem:[%s490 + $0x6a] sm:$0xff]
      %v6484 = vld [vmem:[%s490 + $0x7a] sm:$0xff]
      %v6485 = vld [vmem:[%s490 + $0x82] sm:$0xff]
      %v6486 = vld [vmem:[%s490 + $0x92] sm:$0xff]
      %v6487 = vld [vmem:[%s490 + $0x9a] sm:$0xff]
      %v6488 = vld [vmem:[%s490 + $0xaa] sm:$0xff]
      %v6489 = vld [vmem:[%s490 + $0xb2] sm:$0xff]
      %v6490 = vld [vmem:[%s490 + $0xc2] sm:$0xff]
      %v6491 = vld [vmem:[%s490 + $0xca] sm:$0xff]
      %v6492 = vld [vmem:[%s490 + $0xda] sm:$0xff]
      %v6493 = vld [vmem:[%s490 + $0xe2] sm:$0xff]
      %v6494 = vld [vmem:[%s490 + $0xf2] sm:$0xff]
      %v6495 = vld [vmem:[%s490 + $0xfa] sm:$0xff]
      %v6496 = vld [vmem:[%s490 + $0x10a] sm:$0xff]
      %v6497 = vld [vmem:[%s490 + $0x112] sm:$0xff]
      %v6498 = vld [vmem:[%s490 + $0x122] sm:$0xff]
      %v6499 = vld [vmem:[%s490 + $0x12a] sm:$0xff]
      %v6500 = vld [vmem:[%s490 + $0x13a] sm:$0xff]
      %v6501 = vld [vmem:[%s490 + $0x142] sm:$0xff]
      %v6502 = vld [vmem:[%s490 + $0x152] sm:$0xff]
      %v6503 = vld [vmem:[%s490 + $0x15a] sm:$0xff]
      %v6504 = vld [vmem:[%s490 + $0x16a] sm:$0xff]
      %v6505 = vld [vmem:[%s490 + $0x172] sm:$0xff]
      %6538 = vrot.lane.b32.xlu0 %v6250, 4
      %v6539 = vpop.permute.xlu0 %6538
      %6540 = vrot.lane.b32.xlu0 %v6251, 4
      %v6541 = vpop.permute.xlu0 %6540
      %6542 = vrot.lane.b32.xlu0 %v6252, 4
      %v6543 = vpop.permute.xlu0 %6542
      %6544 = vrot.lane.b32.xlu0 %v6253, 4
      %v6545 = vpop.permute.xlu0 %6544
      %6546 = vrot.lane.b32.xlu0 %v6254, 4
      %v6547 = vpop.permute.xlu0 %6546
      %6548 = vrot.lane.b32.xlu0 %v6255, 4
      %v6549 = vpop.permute.xlu0 %6548
      %6550 = vrot.lane.b32.xlu0 %v6256, 4
      %v6551 = vpop.permute.xlu0 %6550
      %6552 = vrot.lane.b32.xlu0 %v6257, 4
      %v6553 = vpop.permute.xlu0 %6552
      %6554 = vrot.lane.b32.xlu0 %v6258, 4
      %v6555 = vpop.permute.xlu0 %6554
      %6556 = vrot.lane.b32.xlu0 %v6259, 4
      %v6557 = vpop.permute.xlu0 %6556
      %6558 = vrot.lane.b32.xlu0 %v6260, 4
      %v6559 = vpop.permute.xlu0 %6558
      %6560 = vrot.lane.b32.xlu0 %v6261, 4
      %v6561 = vpop.permute.xlu0 %6560
      %6562 = vrot.lane.b32.xlu0 %v6262, 4
      %v6563 = vpop.permute.xlu0 %6562
      %6564 = vrot.lane.b32.xlu0 %v6263, 4
      %v6565 = vpop.permute.xlu0 %6564
      %6566 = vrot.lane.b32.xlu0 %v6264, 4
      %v6567 = vpop.permute.xlu0 %6566
      %6568 = vrot.lane.b32.xlu0 %v6265, 4
      %v6569 = vpop.permute.xlu0 %6568
      %6570 = vrot.lane.b32.xlu0 %v6266, 4
      %v6571 = vpop.permute.xlu0 %6570
      %6572 = vrot.lane.b32.xlu0 %v6267, 4
      %v6573 = vpop.permute.xlu0 %6572
      %6574 = vrot.lane.b32.xlu0 %v6268, 4
      %v6575 = vpop.permute.xlu0 %6574
      %6576 = vrot.lane.b32.xlu0 %v6269, 4
      %v6577 = vpop.permute.xlu0 %6576
      %6578 = vrot.lane.b32.xlu0 %v6270, 4
      %v6579 = vpop.permute.xlu0 %6578
      %6580 = vrot.lane.b32.xlu0 %v6271, 4
      %v6581 = vpop.permute.xlu0 %6580
      %6582 = vrot.lane.b32.xlu0 %v6272, 4
      %v6583 = vpop.permute.xlu0 %6582
      %6584 = vrot.lane.b32.xlu0 %v6273, 4
      %v6585 = vpop.permute.xlu0 %6584
      %6586 = vrot.lane.b32.xlu0 %v6274, 4
      %v6587 = vpop.permute.xlu0 %6586
      %6588 = vrot.lane.b32.xlu0 %v6275, 4
      %v6589 = vpop.permute.xlu0 %6588
      %6590 = vrot.lane.b32.xlu0 %v6276, 4
      %v6591 = vpop.permute.xlu0 %6590
      %6592 = vrot.lane.b32.xlu0 %v6277, 4
      %v6593 = vpop.permute.xlu0 %6592
      %6594 = vrot.lane.b32.xlu0 %v6278, 4
      %v6595 = vpop.permute.xlu0 %6594
      %6596 = vrot.lane.b32.xlu0 %v6279, 4
      %v6597 = vpop.permute.xlu0 %6596
      %6598 = vrot.lane.b32.xlu0 %v6280, 4
      %v6599 = vpop.permute.xlu0 %6598
      %6600 = vrot.lane.b32.xlu0 %v6281, 4
      %v6601 = vpop.permute.xlu0 %6600
      %6666 = vrot.lane.b32.xlu0 %v6282, 8
      %v6667 = vpop.permute.xlu0 %6666
      %6668 = vrot.lane.b32.xlu0 %v6283, 8
      %v6669 = vpop.permute.xlu0 %6668
      %6670 = vrot.lane.b32.xlu0 %v6284, 8
      %v6671 = vpop.permute.xlu0 %6670
      %6672 = vrot.lane.b32.xlu0 %v6285, 8
      %v6673 = vpop.permute.xlu0 %6672
      %6674 = vrot.lane.b32.xlu0 %v6286, 8
      %v6675 = vpop.permute.xlu0 %6674
      %6676 = vrot.lane.b32.xlu0 %v6287, 8
      %v6677 = vpop.permute.xlu0 %6676
      %6678 = vrot.lane.b32.xlu0 %v6288, 8
      %v6679 = vpop.permute.xlu0 %6678
      %6680 = vrot.lane.b32.xlu0 %v6289, 8
      %v6681 = vpop.permute.xlu0 %6680
      %6682 = vrot.lane.b32.xlu0 %v6290, 8
      %v6683 = vpop.permute.xlu0 %6682
      %6684 = vrot.lane.b32.xlu0 %v6291, 8
      %v6685 = vpop.permute.xlu0 %6684
      %6686 = vrot.lane.b32.xlu0 %v6292, 8
      %v6687 = vpop.permute.xlu0 %6686
      %6688 = vrot.lane.b32.xlu0 %v6293, 8
      %v6689 = vpop.permute.xlu0 %6688
      %6690 = vrot.lane.b32.xlu0 %v6294, 8
      %v6691 = vpop.permute.xlu0 %6690
      %6692 = vrot.lane.b32.xlu0 %v6295, 8
      %v6693 = vpop.permute.xlu0 %6692
      %6694 = vrot.lane.b32.xlu0 %v6296, 8
      %v6695 = vpop.permute.xlu0 %6694
      %6696 = vrot.lane.b32.xlu0 %v6297, 8
      %v6697 = vpop.permute.xlu0 %6696
      %6698 = vrot.lane.b32.xlu0 %v6298, 8
      %v6699 = vpop.permute.xlu0 %6698
      %6700 = vrot.lane.b32.xlu0 %v6299, 8
      %v6701 = vpop.permute.xlu0 %6700
      %6702 = vrot.lane.b32.xlu0 %v6300, 8
      %v6703 = vpop.permute.xlu0 %6702
      %6704 = vrot.lane.b32.xlu0 %v6301, 8
      %v6705 = vpop.permute.xlu0 %6704
      %6706 = vrot.lane.b32.xlu0 %v6302, 8
      %v6707 = vpop.permute.xlu0 %6706
      %6708 = vrot.lane.b32.xlu0 %v6303, 8
      %v6709 = vpop.permute.xlu0 %6708
      %6710 = vrot.lane.b32.xlu0 %v6304, 8
      %v6711 = vpop.permute.xlu0 %6710
      %6712 = vrot.lane.b32.xlu0 %v6305, 8
      %v6713 = vpop.permute.xlu0 %6712
      %6714 = vrot.lane.b32.xlu0 %v6306, 8
      %v6715 = vpop.permute.xlu0 %6714
      %6716 = vrot.lane.b32.xlu0 %v6307, 8
      %v6717 = vpop.permute.xlu0 %6716
      %6718 = vrot.lane.b32.xlu0 %v6308, 8
      %v6719 = vpop.permute.xlu0 %6718
      %6720 = vrot.lane.b32.xlu0 %v6309, 8
      %v6721 = vpop.permute.xlu0 %6720
      %6722 = vrot.lane.b32.xlu0 %v6310, 8
      %v6723 = vpop.permute.xlu0 %6722
      %6724 = vrot.lane.b32.xlu0 %v6311, 8
      %v6725 = vpop.permute.xlu0 %6724
      %6726 = vrot.lane.b32.xlu0 %v6312, 8
      %v6727 = vpop.permute.xlu0 %6726
      %6728 = vrot.lane.b32.xlu0 %v6313, 8
      %v6729 = vpop.permute.xlu0 %6728
      %6794 = vrot.lane.b32.xlu0 %v6314, 12
      %v6795 = vpop.permute.xlu0 %6794
      %6796 = vrot.lane.b32.xlu0 %v6315, 12
      %v6797 = vpop.permute.xlu0 %6796
      %6798 = vrot.lane.b32.xlu0 %v6316, 12
      %v6799 = vpop.permute.xlu0 %6798
      %6800 = vrot.lane.b32.xlu0 %v6317, 12
      %v6801 = vpop.permute.xlu0 %6800
      %6802 = vrot.lane.b32.xlu0 %v6318, 12
      %v6803 = vpop.permute.xlu0 %6802
      %6804 = vrot.lane.b32.xlu0 %v6319, 12
      %v6805 = vpop.permute.xlu0 %6804
      %6806 = vrot.lane.b32.xlu0 %v6320, 12
      %v6807 = vpop.permute.xlu0 %6806
      %6808 = vrot.lane.b32.xlu0 %v6321, 12
      %v6809 = vpop.permute.xlu0 %6808
      %6810 = vrot.lane.b32.xlu0 %v6322, 12
      %v6811 = vpop.permute.xlu0 %6810
      %6812 = vrot.lane.b32.xlu0 %v6323, 12
      %v6813 = vpop.permute.xlu0 %6812
      %6814 = vrot.lane.b32.xlu0 %v6324, 12
      %v6815 = vpop.permute.xlu0 %6814
      %6816 = vrot.lane.b32.xlu0 %v6325, 12
      %v6817 = vpop.permute.xlu0 %6816
      %6818 = vrot.lane.b32.xlu0 %v6326, 12
      %v6819 = vpop.permute.xlu0 %6818
      %6820 = vrot.lane.b32.xlu0 %v6327, 12
      %v6821 = vpop.permute.xlu0 %6820
      %6822 = vrot.lane.b32.xlu0 %v6328, 12
      %v6823 = vpop.permute.xlu0 %6822
      %6824 = vrot.lane.b32.xlu0 %v6329, 12
      %v6825 = vpop.permute.xlu0 %6824
      %6826 = vrot.lane.b32.xlu0 %v6330, 12
      %v6827 = vpop.permute.xlu0 %6826
      %6828 = vrot.lane.b32.xlu0 %v6331, 12
      %v6829 = vpop.permute.xlu0 %6828
      %6830 = vrot.lane.b32.xlu0 %v6332, 12
      %v6831 = vpop.permute.xlu0 %6830
      %6832 = vrot.lane.b32.xlu0 %v6333, 12
      %v6833 = vpop.permute.xlu0 %6832
      %6834 = vrot.lane.b32.xlu0 %v6334, 12
      %v6835 = vpop.permute.xlu0 %6834
      %6836 = vrot.lane.b32.xlu0 %v6335, 12
      %v6837 = vpop.permute.xlu0 %6836
      %6838 = vrot.lane.b32.xlu0 %v6336, 12
      %v6839 = vpop.permute.xlu0 %6838
      %6840 = vrot.lane.b32.xlu0 %v6337, 12
      %v6841 = vpop.permute.xlu0 %6840
      %6842 = vrot.lane.b32.xlu0 %v6338, 12
      %v6843 = vpop.permute.xlu0 %6842
      %6844 = vrot.lane.b32.xlu0 %v6339, 12
      %v6845 = vpop.permute.xlu0 %6844
      %6846 = vrot.lane.b32.xlu0 %v6340, 12
      %v6847 = vpop.permute.xlu0 %6846
      %6848 = vrot.lane.b32.xlu0 %v6341, 12
      %v6849 = vpop.permute.xlu0 %6848
      %6850 = vrot.lane.b32.xlu0 %v6342, 12
      %v6851 = vpop.permute.xlu0 %6850
      %6852 = vrot.lane.b32.xlu0 %v6343, 12
      %v6853 = vpop.permute.xlu0 %6852
      %6854 = vrot.lane.b32.xlu0 %v6344, 12
      %v6855 = vpop.permute.xlu0 %6854
      %6856 = vrot.lane.b32.xlu0 %v6345, 12
      %v6857 = vpop.permute.xlu0 %6856
      %6922 = vrot.lane.b32.xlu0 %v6346, 16
      %v6923 = vpop.permute.xlu0 %6922
      %6924 = vrot.lane.b32.xlu0 %v6347, 16
      %v6925 = vpop.permute.xlu0 %6924
      %6926 = vrot.lane.b32.xlu0 %v6348, 16
      %v6927 = vpop.permute.xlu0 %6926
      %6928 = vrot.lane.b32.xlu0 %v6349, 16
      %v6929 = vpop.permute.xlu0 %6928
      %6930 = vrot.lane.b32.xlu0 %v6350, 16
      %v6931 = vpop.permute.xlu0 %6930
      %6932 = vrot.lane.b32.xlu0 %v6351, 16
      %v6933 = vpop.permute.xlu0 %6932
      %6934 = vrot.lane.b32.xlu0 %v6352, 16
      %v6935 = vpop.permute.xlu0 %6934
      %6936 = vrot.lane.b32.xlu0 %v6353, 16
      %v6937 = vpop.permute.xlu0 %6936
      %6938 = vrot.lane.b32.xlu0 %v6354, 16
      %v6939 = vpop.permute.xlu0 %6938
      %6940 = vrot.lane.b32.xlu0 %v6355, 16
      %v6941 = vpop.permute.xlu0 %6940
      %6942 = vrot.lane.b32.xlu0 %v6356, 16
      %v6943 = vpop.permute.xlu0 %6942
      %6944 = vrot.lane.b32.xlu0 %v6357, 16
      %v6945 = vpop.permute.xlu0 %6944
      %6946 = vrot.lane.b32.xlu0 %v6358, 16
      %v6947 = vpop.permute.xlu0 %6946
      %6948 = vrot.lane.b32.xlu0 %v6359, 16
      %v6949 = vpop.permute.xlu0 %6948
      %6950 = vrot.lane.b32.xlu0 %v6360, 16
      %v6951 = vpop.permute.xlu0 %6950
      %6952 = vrot.lane.b32.xlu0 %v6361, 16
      %v6953 = vpop.permute.xlu0 %6952
      %6954 = vrot.lane.b32.xlu0 %v6362, 16
      %v6955 = vpop.permute.xlu0 %6954
      %6956 = vrot.lane.b32.xlu0 %v6363, 16
      %v6957 = vpop.permute.xlu0 %6956
      %6958 = vrot.lane.b32.xlu0 %v6364, 16
      %v6959 = vpop.permute.xlu0 %6958
      %6960 = vrot.lane.b32.xlu0 %v6365, 16
      %v6961 = vpop.permute.xlu0 %6960
      %6962 = vrot.lane.b32.xlu0 %v6366, 16
      %v6963 = vpop.permute.xlu0 %6962
      %6964 = vrot.lane.b32.xlu0 %v6367, 16
      %v6965 = vpop.permute.xlu0 %6964
      %6966 = vrot.lane.b32.xlu0 %v6368, 16
      %v6967 = vpop.permute.xlu0 %6966
      %6968 = vrot.lane.b32.xlu0 %v6369, 16
      %v6969 = vpop.permute.xlu0 %6968
      %6970 = vrot.lane.b32.xlu0 %v6370, 16
      %v6971 = vpop.permute.xlu0 %6970
      %6972 = vrot.lane.b32.xlu0 %v6371, 16
      %v6973 = vpop.permute.xlu0 %6972
      %6974 = vrot.lane.b32.xlu0 %v6372, 16
      %v6975 = vpop.permute.xlu0 %6974
      %6976 = vrot.lane.b32.xlu0 %v6373, 16
      %v6977 = vpop.permute.xlu0 %6976
      %6978 = vrot.lane.b32.xlu0 %v6374, 16
      %v6979 = vpop.permute.xlu0 %6978
      %6980 = vrot.lane.b32.xlu0 %v6375, 16
      %v6981 = vpop.permute.xlu0 %6980
      %6982 = vrot.lane.b32.xlu0 %v6376, 16
      %v6983 = vpop.permute.xlu0 %6982
      %6984 = vrot.lane.b32.xlu0 %v6377, 16
      %v6985 = vpop.permute.xlu0 %6984
      %7050 = vrot.lane.b32.xlu0 %v6378, 20
      %v7051 = vpop.permute.xlu0 %7050
      %7052 = vrot.lane.b32.xlu0 %v6379, 20
      %v7053 = vpop.permute.xlu0 %7052
      %7054 = vrot.lane.b32.xlu0 %v6380, 20
      %v7055 = vpop.permute.xlu0 %7054
      %7056 = vrot.lane.b32.xlu0 %v6381, 20
      %v7057 = vpop.permute.xlu0 %7056
      %7058 = vrot.lane.b32.xlu0 %v6382, 20
      %v7059 = vpop.permute.xlu0 %7058
      %7060 = vrot.lane.b32.xlu0 %v6383, 20
      %v7061 = vpop.permute.xlu0 %7060
      %7062 = vrot.lane.b32.xlu0 %v6384, 20
      %v7063 = vpop.permute.xlu0 %7062
      %7064 = vrot.lane.b32.xlu0 %v6385, 20
      %v7065 = vpop.permute.xlu0 %7064
      %7066 = vrot.lane.b32.xlu0 %v6386, 20
      %v7067 = vpop.permute.xlu0 %7066
      %7068 = vrot.lane.b32.xlu0 %v6387, 20
      %v7069 = vpop.permute.xlu0 %7068
      %7070 = vrot.lane.b32.xlu0 %v6388, 20
      %v7071 = vpop.permute.xlu0 %7070
      %7072 = vrot.lane.b32.xlu0 %v6389, 20
      %v7073 = vpop.permute.xlu0 %7072
      %7074 = vrot.lane.b32.xlu0 %v6390, 20
      %v7075 = vpop.permute.xlu0 %7074
      %7076 = vrot.lane.b32.xlu0 %v6391, 20
      %v7077 = vpop.permute.xlu0 %7076
      %7078 = vrot.lane.b32.xlu0 %v6392, 20
      %v7079 = vpop.permute.xlu0 %7078
      %7080 = vrot.lane.b32.xlu0 %v6393, 20
      %v7081 = vpop.permute.xlu0 %7080
      %7082 = vrot.lane.b32.xlu0 %v6394, 20
      %v7083 = vpop.permute.xlu0 %7082
      %7084 = vrot.lane.b32.xlu0 %v6395, 20
      %v7085 = vpop.permute.xlu0 %7084
      %7086 = vrot.lane.b32.xlu0 %v6396, 20
      %v7087 = vpop.permute.xlu0 %7086
      %7088 = vrot.lane.b32.xlu0 %v6397, 20
      %v7089 = vpop.permute.xlu0 %7088
      %7090 = vrot.lane.b32.xlu0 %v6398, 20
      %v7091 = vpop.permute.xlu0 %7090
      %7092 = vrot.lane.b32.xlu0 %v6399, 20
      %v7093 = vpop.permute.xlu0 %7092
      %7094 = vrot.lane.b32.xlu0 %v6400, 20
      %v7095 = vpop.permute.xlu0 %7094
      %7096 = vrot.lane.b32.xlu0 %v6401, 20
      %v7097 = vpop.permute.xlu0 %7096
      %7098 = vrot.lane.b32.xlu0 %v6402, 20
      %v7099 = vpop.permute.xlu0 %7098
      %7100 = vrot.lane.b32.xlu0 %v6403, 20
      %v7101 = vpop.permute.xlu0 %7100
      %7102 = vrot.lane.b32.xlu0 %v6404, 20
      %v7103 = vpop.permute.xlu0 %7102
      %7104 = vrot.lane.b32.xlu0 %v6405, 20
      %v7105 = vpop.permute.xlu0 %7104
      %7106 = vrot.lane.b32.xlu0 %v6406, 20
      %v7107 = vpop.permute.xlu0 %7106
      %7108 = vrot.lane.b32.xlu0 %v6407, 20
      %v7109 = vpop.permute.xlu0 %7108
      %7110 = vrot.lane.b32.xlu0 %v6408, 20
      %v7111 = vpop.permute.xlu0 %7110
      %7112 = vrot.lane.b32.xlu0 %v6409, 20
      %v7113 = vpop.permute.xlu0 %7112
      %7178 = vrot.lane.b32.xlu0 %v6410, 24
      %v7179 = vpop.permute.xlu0 %7178
      %7180 = vrot.lane.b32.xlu0 %v6411, 24
      %v7181 = vpop.permute.xlu0 %7180
      %7182 = vrot.lane.b32.xlu0 %v6412, 24
      %v7183 = vpop.permute.xlu0 %7182
      %7184 = vrot.lane.b32.xlu0 %v6413, 24
      %v7185 = vpop.permute.xlu0 %7184
      %7186 = vrot.lane.b32.xlu0 %v6414, 24
      %v7187 = vpop.permute.xlu0 %7186
      %7188 = vrot.lane.b32.xlu0 %v6415, 24
      %v7189 = vpop.permute.xlu0 %7188
      %7190 = vrot.lane.b32.xlu0 %v6416, 24
      %v7191 = vpop.permute.xlu0 %7190
      %7192 = vrot.lane.b32.xlu0 %v6417, 24
      %v7193 = vpop.permute.xlu0 %7192
      %7194 = vrot.lane.b32.xlu0 %v6418, 24
      %v7195 = vpop.permute.xlu0 %7194
      %7196 = vrot.lane.b32.xlu0 %v6419, 24
      %v7197 = vpop.permute.xlu0 %7196
      %7198 = vrot.lane.b32.xlu0 %v6420, 24
      %v7199 = vpop.permute.xlu0 %7198
      %7200 = vrot.lane.b32.xlu0 %v6421, 24
      %v7201 = vpop.permute.xlu0 %7200
      %7202 = vrot.lane.b32.xlu0 %v6422, 24
      %v7203 = vpop.permute.xlu0 %7202
      %7204 = vrot.lane.b32.xlu0 %v6423, 24
      %v7205 = vpop.permute.xlu0 %7204
      %7206 = vrot.lane.b32.xlu0 %v6424, 24
      %v7207 = vpop.permute.xlu0 %7206
      %7208 = vrot.lane.b32.xlu0 %v6425, 24
      %v7209 = vpop.permute.xlu0 %7208
      %7210 = vrot.lane.b32.xlu0 %v6426, 24
      %v7211 = vpop.permute.xlu0 %7210
      %7212 = vrot.lane.b32.xlu0 %v6427, 24
      %v7213 = vpop.permute.xlu0 %7212
      %7214 = vrot.lane.b32.xlu0 %v6428, 24
      %v7215 = vpop.permute.xlu0 %7214
      %7216 = vrot.lane.b32.xlu0 %v6429, 24
      %v7217 = vpop.permute.xlu0 %7216
      %7218 = vrot.lane.b32.xlu0 %v6430, 24
      %v7219 = vpop.permute.xlu0 %7218
      %7220 = vrot.lane.b32.xlu0 %v6431, 24
      %v7221 = vpop.permute.xlu0 %7220
      %7222 = vrot.lane.b32.xlu0 %v6432, 24
      %v7223 = vpop.permute.xlu0 %7222
      %7224 = vrot.lane.b32.xlu0 %v6433, 24
      %v7225 = vpop.permute.xlu0 %7224
      %7226 = vrot.lane.b32.xlu0 %v6434, 24
      %v7227 = vpop.permute.xlu0 %7226
      %7228 = vrot.lane.b32.xlu0 %v6435, 24
      %v7229 = vpop.permute.xlu0 %7228
      %7230 = vrot.lane.b32.xlu0 %v6436, 24
      %v7231 = vpop.permute.xlu0 %7230
      %7232 = vrot.lane.b32.xlu0 %v6437, 24
      %v7233 = vpop.permute.xlu0 %7232
      %7234 = vrot.lane.b32.xlu0 %v6438, 24
      %v7235 = vpop.permute.xlu0 %7234
      %7236 = vrot.lane.b32.xlu0 %v6439, 24
      %v7237 = vpop.permute.xlu0 %7236
      %7238 = vrot.lane.b32.xlu0 %v6440, 24
      %v7239 = vpop.permute.xlu0 %7238
      %7240 = vrot.lane.b32.xlu0 %v6441, 24
      %v7241 = vpop.permute.xlu0 %7240
      %7306 = vrot.lane.b32.xlu0 %v6442, 28
      %v7307 = vpop.permute.xlu0 %7306
      %7308 = vrot.lane.b32.xlu0 %v6443, 28
      %v7309 = vpop.permute.xlu0 %7308
      %7310 = vrot.lane.b32.xlu0 %v6444, 28
      %v7311 = vpop.permute.xlu0 %7310
      %7312 = vrot.lane.b32.xlu0 %v6445, 28
      %v7313 = vpop.permute.xlu0 %7312
      %7314 = vrot.lane.b32.xlu0 %v6446, 28
      %v7315 = vpop.permute.xlu0 %7314
      %7316 = vrot.lane.b32.xlu0 %v6447, 28
      %v7317 = vpop.permute.xlu0 %7316
      %7318 = vrot.lane.b32.xlu0 %v6448, 28
      %v7319 = vpop.permute.xlu0 %7318
      %7320 = vrot.lane.b32.xlu0 %v6449, 28
      %v7321 = vpop.permute.xlu0 %7320
      %7322 = vrot.lane.b32.xlu0 %v6450, 28
      %v7323 = vpop.permute.xlu0 %7322
      %7324 = vrot.lane.b32.xlu0 %v6451, 28
      %v7325 = vpop.permute.xlu0 %7324
      %7326 = vrot.lane.b32.xlu0 %v6452, 28
      %v7327 = vpop.permute.xlu0 %7326
      %7328 = vrot.lane.b32.xlu0 %v6453, 28
      %v7329 = vpop.permute.xlu0 %7328
      %7330 = vrot.lane.b32.xlu0 %v6454, 28
      %v7331 = vpop.permute.xlu0 %7330
      %7332 = vrot.lane.b32.xlu0 %v6455, 28
      %v7333 = vpop.permute.xlu0 %7332
      %7334 = vrot.lane.b32.xlu0 %v6456, 28
      %v7335 = vpop.permute.xlu0 %7334
      %7336 = vrot.lane.b32.xlu0 %v6457, 28
      %v7337 = vpop.permute.xlu0 %7336
      %7338 = vrot.lane.b32.xlu0 %v6458, 28
      %v7339 = vpop.permute.xlu0 %7338
      %7340 = vrot.lane.b32.xlu0 %v6459, 28
      %v7341 = vpop.permute.xlu0 %7340
      %7342 = vrot.lane.b32.xlu0 %v6460, 28
      %v7343 = vpop.permute.xlu0 %7342
      %7344 = vrot.lane.b32.xlu0 %v6461, 28
      %v7345 = vpop.permute.xlu0 %7344
      %7346 = vrot.lane.b32.xlu0 %v6462, 28
      %v7347 = vpop.permute.xlu0 %7346
      %7348 = vrot.lane.b32.xlu0 %v6463, 28
      %v7349 = vpop.permute.xlu0 %7348
      %7350 = vrot.lane.b32.xlu0 %v6464, 28
      %v7351 = vpop.permute.xlu0 %7350
      %7352 = vrot.lane.b32.xlu0 %v6465, 28
      %v7353 = vpop.permute.xlu0 %7352
      %7354 = vrot.lane.b32.xlu0 %v6466, 28
      %v7355 = vpop.permute.xlu0 %7354
      %7356 = vrot.lane.b32.xlu0 %v6467, 28
      %v7357 = vpop.permute.xlu0 %7356
      %7358 = vrot.lane.b32.xlu0 %v6468, 28
      %v7359 = vpop.permute.xlu0 %7358
      %7360 = vrot.lane.b32.xlu0 %v6469, 28
      %v7361 = vpop.permute.xlu0 %7360
      %7362 = vrot.lane.b32.xlu0 %v6470, 28
      %v7363 = vpop.permute.xlu0 %7362
      %7364 = vrot.lane.b32.xlu0 %v6471, 28
      %v7365 = vpop.permute.xlu0 %7364
      %7366 = vrot.lane.b32.xlu0 %v6472, 28
      %v7367 = vpop.permute.xlu0 %7366
      %7368 = vrot.lane.b32.xlu0 %v6473, 28
      %v7369 = vpop.permute.xlu0 %7368
      %7434 = vrot.lane.b32.xlu0 %v6474, 32
      %v7435 = vpop.permute.xlu0 %7434
      %7436 = vrot.lane.b32.xlu0 %v6475, 32
      %v7437 = vpop.permute.xlu0 %7436
      %7438 = vrot.lane.b32.xlu0 %v6476, 32
      %v7439 = vpop.permute.xlu0 %7438
      %7440 = vrot.lane.b32.xlu0 %v6477, 32
      %v7441 = vpop.permute.xlu0 %7440
      %7442 = vrot.lane.b32.xlu0 %v6478, 32
      %v7443 = vpop.permute.xlu0 %7442
      %7444 = vrot.lane.b32.xlu0 %v6479, 32
      %v7445 = vpop.permute.xlu0 %7444
      %7446 = vrot.lane.b32.xlu0 %v6480, 32
      %v7447 = vpop.permute.xlu0 %7446
      %7448 = vrot.lane.b32.xlu0 %v6481, 32
      %v7449 = vpop.permute.xlu0 %7448
      %7450 = vrot.lane.b32.xlu0 %v6482, 32
      %v7451 = vpop.permute.xlu0 %7450
      %7452 = vrot.lane.b32.xlu0 %v6483, 32
      %v7453 = vpop.permute.xlu0 %7452
      %7454 = vrot.lane.b32.xlu0 %v6484, 32
      %v7455 = vpop.permute.xlu0 %7454
      %7456 = vrot.lane.b32.xlu0 %v6485, 32
      %v7457 = vpop.permute.xlu0 %7456
      %7458 = vrot.lane.b32.xlu0 %v6486, 32
      %v7459 = vpop.permute.xlu0 %7458
      %7460 = vrot.lane.b32.xlu0 %v6487, 32
      %v7461 = vpop.permute.xlu0 %7460
      %7462 = vrot.lane.b32.xlu0 %v6488, 32
      %v7463 = vpop.permute.xlu0 %7462
      %7464 = vrot.lane.b32.xlu0 %v6489, 32
      %v7465 = vpop.permute.xlu0 %7464
      %7466 = vrot.lane.b32.xlu0 %v6490, 32
      %v7467 = vpop.permute.xlu0 %7466
      %7468 = vrot.lane.b32.xlu0 %v6491, 32
      %v7469 = vpop.permute.xlu0 %7468
      %7470 = vrot.lane.b32.xlu0 %v6492, 32
      %v7471 = vpop.permute.xlu0 %7470
      %7472 = vrot.lane.b32.xlu0 %v6493, 32
      %v7473 = vpop.permute.xlu0 %7472
      %7474 = vrot.lane.b32.xlu0 %v6494, 32
      %v7475 = vpop.permute.xlu0 %7474
      %7476 = vrot.lane.b32.xlu0 %v6495, 32
      %v7477 = vpop.permute.xlu0 %7476
      %7478 = vrot.lane.b32.xlu0 %v6496, 32
      %v7479 = vpop.permute.xlu0 %7478
      %7480 = vrot.lane.b32.xlu0 %v6497, 32
      %v7481 = vpop.permute.xlu0 %7480
      %7482 = vrot.lane.b32.xlu0 %v6498, 32
      %v7483 = vpop.permute.xlu0 %7482
      %7484 = vrot.lane.b32.xlu0 %v6499, 32
      %v7485 = vpop.permute.xlu0 %7484
      %7486 = vrot.lane.b32.xlu0 %v6500, 32
      %v7487 = vpop.permute.xlu0 %7486
      %7488 = vrot.lane.b32.xlu0 %v6501, 32
      %v7489 = vpop.permute.xlu0 %7488
      %7490 = vrot.lane.b32.xlu0 %v6502, 32
      %v7491 = vpop.permute.xlu0 %7490
      %7492 = vrot.lane.b32.xlu0 %v6503, 32
      %v7493 = vpop.permute.xlu0 %7492
      %7494 = vrot.lane.b32.xlu0 %v6504, 32
      %v7495 = vpop.permute.xlu0 %7494
      %7496 = vrot.lane.b32.xlu0 %v6505, 32
      %v7497 = vpop.permute.xlu0 %7496
      %v7530 = vsel %vm171, %v6218, %v6539
      %v7531 = vsel %vm171, %v6219, %v6541
      %v7532 = vsel %vm171, %v6220, %v6543
      %v7533 = vsel %vm171, %v6221, %v6545
      %v7534 = vsel %vm171, %v6222, %v6547
      %v7535 = vsel %vm171, %v6223, %v6549
      %v7536 = vsel %vm171, %v6224, %v6551
      %v7537 = vsel %vm171, %v6225, %v6553
      %v7538 = vsel %vm171, %v6226, %v6555
      %v7539 = vsel %vm171, %v6227, %v6557
      %v7540 = vsel %vm171, %v6228, %v6559
      %v7541 = vsel %vm171, %v6229, %v6561
      %v7542 = vsel %vm171, %v6230, %v6563
      %v7543 = vsel %vm171, %v6231, %v6565
      %v7544 = vsel %vm171, %v6232, %v6567
      %v7545 = vsel %vm171, %v6233, %v6569
      %v7546 = vsel %vm171, %v6234, %v6571
      %v7547 = vsel %vm171, %v6235, %v6573
      %v7548 = vsel %vm171, %v6236, %v6575
      %v7549 = vsel %vm171, %v6237, %v6577
      %v7550 = vsel %vm171, %v6238, %v6579
      %v7551 = vsel %vm171, %v6239, %v6581
      %v7552 = vsel %vm171, %v6240, %v6583
      %v7553 = vsel %vm171, %v6241, %v6585
      %v7554 = vsel %vm171, %v6242, %v6587
      %v7555 = vsel %vm171, %v6243, %v6589
      %v7556 = vsel %vm171, %v6244, %v6591
      %v7557 = vsel %vm171, %v6245, %v6593
      %v7558 = vsel %vm171, %v6246, %v6595
      %v7559 = vsel %vm171, %v6247, %v6597
      %v7560 = vsel %vm171, %v6248, %v6599
      %v7561 = vsel %vm171, %v6249, %v6601
      %v7562 = vsel %vm1643, %v7530, %v6667
      %v7563 = vsel %vm1643, %v7531, %v6669
      %v7564 = vsel %vm1643, %v7532, %v6671
      %v7565 = vsel %vm1643, %v7533, %v6673
      %v7566 = vsel %vm1643, %v7534, %v6675
      %v7567 = vsel %vm1643, %v7535, %v6677
      %v7568 = vsel %vm1643, %v7536, %v6679
      %v7569 = vsel %vm1643, %v7537, %v6681
      %v7570 = vsel %vm1643, %v7538, %v6683
      %v7571 = vsel %vm1643, %v7539, %v6685
      %v7572 = vsel %vm1643, %v7540, %v6687
      %v7573 = vsel %vm1643, %v7541, %v6689
      %v7574 = vsel %vm1643, %v7542, %v6691
      %v7575 = vsel %vm1643, %v7543, %v6693
      %v7576 = vsel %vm1643, %v7544, %v6695
      %v7577 = vsel %vm1643, %v7545, %v6697
      %v7578 = vsel %vm1643, %v7546, %v6699
      %v7579 = vsel %vm1643, %v7547, %v6701
      %v7580 = vsel %vm1643, %v7548, %v6703
      %v7581 = vsel %vm1643, %v7549, %v6705
      %v7582 = vsel %vm1643, %v7550, %v6707
      %v7583 = vsel %vm1643, %v7551, %v6709
      %v7584 = vsel %vm1643, %v7552, %v6711
      %v7585 = vsel %vm1643, %v7553, %v6713
      %v7586 = vsel %vm1643, %v7554, %v6715
      %v7587 = vsel %vm1643, %v7555, %v6717
      %v7588 = vsel %vm1643, %v7556, %v6719
      %v7589 = vsel %vm1643, %v7557, %v6721
      %v7590 = vsel %vm1643, %v7558, %v6723
      %v7591 = vsel %vm1643, %v7559, %v6725
      %v7592 = vsel %vm1643, %v7560, %v6727
      %v7593 = vsel %vm1643, %v7561, %v6729
      %v7594 = vsel %vm1676, %v7562, %v6795
      %v7595 = vsel %vm1676, %v7563, %v6797
      %v7596 = vsel %vm1676, %v7564, %v6799
      %v7597 = vsel %vm1676, %v7565, %v6801
      %v7598 = vsel %vm1676, %v7566, %v6803
      %v7599 = vsel %vm1676, %v7567, %v6805
      %v7600 = vsel %vm1676, %v7568, %v6807
      %v7601 = vsel %vm1676, %v7569, %v6809
      %v7602 = vsel %vm1676, %v7570, %v6811
      %v7603 = vsel %vm1676, %v7571, %v6813
      %v7604 = vsel %vm1676, %v7572, %v6815
      %v7605 = vsel %vm1676, %v7573, %v6817
      %v7606 = vsel %vm1676, %v7574, %v6819
      %v7607 = vsel %vm1676, %v7575, %v6821
      %v7608 = vsel %vm1676, %v7576, %v6823
      %v7609 = vsel %vm1676, %v7577, %v6825
      %v7610 = vsel %vm1676, %v7578, %v6827
      %v7611 = vsel %vm1676, %v7579, %v6829
      %v7612 = vsel %vm1676, %v7580, %v6831
      %v7613 = vsel %vm1676, %v7581, %v6833
      %v7614 = vsel %vm1676, %v7582, %v6835
      %v7615 = vsel %vm1676, %v7583, %v6837
      %v7616 = vsel %vm1676, %v7584, %v6839
      %v7617 = vsel %vm1676, %v7585, %v6841
      %v7618 = vsel %vm1676, %v7586, %v6843
      %v7619 = vsel %vm1676, %v7587, %v6845
      %v7620 = vsel %vm1676, %v7588, %v6847
      %v7621 = vsel %vm1676, %v7589, %v6849
      %v7622 = vsel %vm1676, %v7590, %v6851
      %v7623 = vsel %vm1676, %v7591, %v6853
      %v7624 = vsel %vm1676, %v7592, %v6855
      %v7625 = vsel %vm1676, %v7593, %v6857
      %v7626 = vsel %vm1709, %v7594, %v6923
      %v7627 = vsel %vm1709, %v7595, %v6925
      %v7628 = vsel %vm1709, %v7596, %v6927
      %v7629 = vsel %vm1709, %v7597, %v6929
      %v7630 = vsel %vm1709, %v7598, %v6931
      %v7631 = vsel %vm1709, %v7599, %v6933
      %v7632 = vsel %vm1709, %v7600, %v6935
      %v7633 = vsel %vm1709, %v7601, %v6937
      %v7634 = vsel %vm1709, %v7602, %v6939
      %v7635 = vsel %vm1709, %v7603, %v6941
      %v7636 = vsel %vm1709, %v7604, %v6943
      %v7637 = vsel %vm1709, %v7605, %v6945
      %v7638 = vsel %vm1709, %v7606, %v6947
      %v7639 = vsel %vm1709, %v7607, %v6949
      %v7640 = vsel %vm1709, %v7608, %v6951
      %v7641 = vsel %vm1709, %v7609, %v6953
      %v7642 = vsel %vm1709, %v7610, %v6955
      %v7643 = vsel %vm1709, %v7611, %v6957
      %v7644 = vsel %vm1709, %v7612, %v6959
      %v7645 = vsel %vm1709, %v7613, %v6961
      %v7646 = vsel %vm1709, %v7614, %v6963
      %v7647 = vsel %vm1709, %v7615, %v6965
      %v7648 = vsel %vm1709, %v7616, %v6967
      %v7649 = vsel %vm1709, %v7617, %v6969
      %v7650 = vsel %vm1709, %v7618, %v6971
      %v7651 = vsel %vm1709, %v7619, %v6973
      %v7652 = vsel %vm1709, %v7620, %v6975
      %v7653 = vsel %vm1709, %v7621, %v6977
      %v7654 = vsel %vm1709, %v7622, %v6979
      %v7655 = vsel %vm1709, %v7623, %v6981
      %v7656 = vsel %vm1709, %v7624, %v6983
      %v7657 = vsel %vm1709, %v7625, %v6985
      %v7658 = vsel %vm1742, %v7626, %v7051
      %v7659 = vsel %vm1742, %v7627, %v7053
      %v7660 = vsel %vm1742, %v7628, %v7055
      %v7661 = vsel %vm1742, %v7629, %v7057
      %v7662 = vsel %vm1742, %v7630, %v7059
      %v7663 = vsel %vm1742, %v7631, %v7061
      %v7664 = vsel %vm1742, %v7632, %v7063
      %v7665 = vsel %vm1742, %v7633, %v7065
      %v7666 = vsel %vm1742, %v7634, %v7067
      %v7667 = vsel %vm1742, %v7635, %v7069
      %v7668 = vsel %vm1742, %v7636, %v7071
      %v7669 = vsel %vm1742, %v7637, %v7073
      %v7670 = vsel %vm1742, %v7638, %v7075
      %v7671 = vsel %vm1742, %v7639, %v7077
      %v7672 = vsel %vm1742, %v7640, %v7079
      %v7673 = vsel %vm1742, %v7641, %v7081
      %v7674 = vsel %vm1742, %v7642, %v7083
      %v7675 = vsel %vm1742, %v7643, %v7085
      %v7676 = vsel %vm1742, %v7644, %v7087
      %v7677 = vsel %vm1742, %v7645, %v7089
      %v7678 = vsel %vm1742, %v7646, %v7091
      %v7679 = vsel %vm1742, %v7647, %v7093
      %v7680 = vsel %vm1742, %v7648, %v7095
      %v7681 = vsel %vm1742, %v7649, %v7097
      %v7682 = vsel %vm1742, %v7650, %v7099
      %v7683 = vsel %vm1742, %v7651, %v7101
      %v7684 = vsel %vm1742, %v7652, %v7103
      %v7685 = vsel %vm1742, %v7653, %v7105
      %v7686 = vsel %vm1742, %v7654, %v7107
      %v7687 = vsel %vm1742, %v7655, %v7109
      %v7688 = vsel %vm1742, %v7656, %v7111
      %v7689 = vsel %vm1742, %v7657, %v7113
      %v7690 = vsel %vm1775, %v7658, %v7179
      %v7691 = vsel %vm1775, %v7659, %v7181
      %v7692 = vsel %vm1775, %v7660, %v7183
      %v7693 = vsel %vm1775, %v7661, %v7185
      %v7694 = vsel %vm1775, %v7662, %v7187
      %v7695 = vsel %vm1775, %v7663, %v7189
      %v7696 = vsel %vm1775, %v7664, %v7191
      %v7697 = vsel %vm1775, %v7665, %v7193
      %v7698 = vsel %vm1775, %v7666, %v7195
      %v7699 = vsel %vm1775, %v7667, %v7197
      %v7700 = vsel %vm1775, %v7668, %v7199
      %v7701 = vsel %vm1775, %v7669, %v7201
      %v7702 = vsel %vm1775, %v7670, %v7203
      %v7703 = vsel %vm1775, %v7671, %v7205
      %v7704 = vsel %vm1775, %v7672, %v7207
      %v7705 = vsel %vm1775, %v7673, %v7209
      %v7706 = vsel %vm1775, %v7674, %v7211
      %v7707 = vsel %vm1775, %v7675, %v7213
      %v7708 = vsel %vm1775, %v7676, %v7215
      %v7709 = vsel %vm1775, %v7677, %v7217
      %v7710 = vsel %vm1775, %v7678, %v7219
      %v7711 = vsel %vm1775, %v7679, %v7221
      %v7712 = vsel %vm1775, %v7680, %v7223
      %v7713 = vsel %vm1775, %v7681, %v7225
      %v7714 = vsel %vm1775, %v7682, %v7227
      %v7715 = vsel %vm1775, %v7683, %v7229
      %v7716 = vsel %vm1775, %v7684, %v7231
      %v7717 = vsel %vm1775, %v7685, %v7233
      %v7718 = vsel %vm1775, %v7686, %v7235
      %v7719 = vsel %vm1775, %v7687, %v7237
      %v7720 = vsel %vm1775, %v7688, %v7239
      %v7721 = vsel %vm1775, %v7689, %v7241
      %v7722 = vsel %vm1808, %v7690, %v7307
      %v7723 = vsel %vm1808, %v7691, %v7309
      %v7724 = vsel %vm1808, %v7692, %v7311
      %v7725 = vsel %vm1808, %v7693, %v7313
      %v7726 = vsel %vm1808, %v7694, %v7315
      %v7727 = vsel %vm1808, %v7695, %v7317
      %v7728 = vsel %vm1808, %v7696, %v7319
      %v7729 = vsel %vm1808, %v7697, %v7321
      %v7730 = vsel %vm1808, %v7698, %v7323
      %v7731 = vsel %vm1808, %v7699, %v7325
      %v7732 = vsel %vm1808, %v7700, %v7327
      %v7733 = vsel %vm1808, %v7701, %v7329
      %v7734 = vsel %vm1808, %v7702, %v7331
      %v7735 = vsel %vm1808, %v7703, %v7333
      %v7736 = vsel %vm1808, %v7704, %v7335
      %v7737 = vsel %vm1808, %v7705, %v7337
      %v7738 = vsel %vm1808, %v7706, %v7339
      %v7739 = vsel %vm1808, %v7707, %v7341
      %v7740 = vsel %vm1808, %v7708, %v7343
      %v7741 = vsel %vm1808, %v7709, %v7345
      %v7742 = vsel %vm1808, %v7710, %v7347
      %v7743 = vsel %vm1808, %v7711, %v7349
      %v7744 = vsel %vm1808, %v7712, %v7351
      %v7745 = vsel %vm1808, %v7713, %v7353
      %v7746 = vsel %vm1808, %v7714, %v7355
      %v7747 = vsel %vm1808, %v7715, %v7357
      %v7748 = vsel %vm1808, %v7716, %v7359
      %v7749 = vsel %vm1808, %v7717, %v7361
      %v7750 = vsel %vm1808, %v7718, %v7363
      %v7751 = vsel %vm1808, %v7719, %v7365
      %v7752 = vsel %vm1808, %v7720, %v7367
      %v7753 = vsel %vm1808, %v7721, %v7369
      %v7754 = vsel %vm1841, %v7722, %v7435
      %v7755 = vsel %vm1841, %v7723, %v7437
      %v7756 = vsel %vm1841, %v7724, %v7439
      %v7757 = vsel %vm1841, %v7725, %v7441
      %v7758 = vsel %vm1841, %v7726, %v7443
      %v7759 = vsel %vm1841, %v7727, %v7445
      %v7760 = vsel %vm1841, %v7728, %v7447
      %v7761 = vsel %vm1841, %v7729, %v7449
      %v7762 = vsel %vm1841, %v7730, %v7451
      %v7763 = vsel %vm1841, %v7731, %v7453
      %v7764 = vsel %vm1841, %v7732, %v7455
      %v7765 = vsel %vm1841, %v7733, %v7457
      %v7766 = vsel %vm1841, %v7734, %v7459
      %v7767 = vsel %vm1841, %v7735, %v7461
      %v7768 = vsel %vm1841, %v7736, %v7463
      %v7769 = vsel %vm1841, %v7737, %v7465
      %v7770 = vsel %vm1841, %v7738, %v7467
      %v7771 = vsel %vm1841, %v7739, %v7469
      %v7772 = vsel %vm1841, %v7740, %v7471
      %v7773 = vsel %vm1841, %v7741, %v7473
      %v7774 = vsel %vm1841, %v7742, %v7475
      %v7775 = vsel %vm1841, %v7743, %v7477
      %v7776 = vsel %vm1841, %v7744, %v7479
      %v7777 = vsel %vm1841, %v7745, %v7481
      %v7778 = vsel %vm1841, %v7746, %v7483
      %v7779 = vsel %vm1841, %v7747, %v7485
      %v7780 = vsel %vm1841, %v7748, %v7487
      %v7781 = vsel %vm1841, %v7749, %v7489
      %v7782 = vsel %vm1841, %v7750, %v7491
      %v7783 = vsel %vm1841, %v7751, %v7493
      %v7784 = vsel %vm1841, %v7752, %v7495
      %v7785 = vsel %vm1841, %v7753, %v7497
      %v7787 = vlaneseq
      %v7788 = vshrl.u32 %v7787, 7
      %v7789 = vsub.s32 0, %v7788
      %v7790 = vrot.slane %v6217, %v7789
      %v7793 = vsel %vm1880, %v7754, 0
      %v7796 = vsel %vm1880, %v7755, 0
      %v7799 = vsel %vm1880, %v7756, 0
      %v7802 = vsel %vm1880, %v7757, 0
      %v7805 = vsel %vm1880, %v7758, 0
      %v7808 = vsel %vm1880, %v7759, 0
      %v7811 = vsel %vm1880, %v7760, 0
      %v7814 = vsel %vm1880, %v7761, 0
      %v7817 = vsel %vm1880, %v7762, 0
      %v7820 = vsel %vm1880, %v7763, 0
      %v7823 = vsel %vm1880, %v7764, 0
      %v7826 = vsel %vm1880, %v7765, 0
      %v7829 = vsel %vm1880, %v7766, 0
      %v7832 = vsel %vm1880, %v7767, 0
      %v7835 = vsel %vm1880, %v7768, 0
      %v7838 = vsel %vm1880, %v7769, 0
      %v7841 = vsel %vm1880, %v7770, 0
      %v7844 = vsel %vm1880, %v7771, 0
      %v7847 = vsel %vm1880, %v7772, 0
      %v7850 = vsel %vm1880, %v7773, 0
      %v7853 = vsel %vm1880, %v7774, 0
      %v7856 = vsel %vm1880, %v7775, 0
      %v7859 = vsel %vm1880, %v7776, 0
      %v7862 = vsel %vm1880, %v7777, 0
      %v7865 = vsel %vm1880, %v7778, 0
      %v7868 = vsel %vm1880, %v7779, 0
      %v7871 = vsel %vm1880, %v7780, 0
      %v7874 = vsel %vm1880, %v7781, 0
      %v7877 = vsel %vm1880, %v7782, 0
      %v7880 = vsel %vm1880, %v7783, 0
      %v7883 = vsel %vm1880, %v7784, 0
      %v7886 = vsel %vm1880, %v7785, 0
      %v7889 = vsel %vm1977, %v6215, 0
      %7891 = vmatprep.subr.mxu0 0.0
      %7892 = vmatpush1.msra.mxu0 %v6211
      %7893 = vmatprep.subr.mxu0 0.0
      %7894 = vmatpush1.msra.mxu0 %v6212
      %7895 = vmatprep.subr.mxu0 0.0
      %7896 = vmatpush1.msra.mxu0 %v6213
      %7897 = vmatprep.subr.mxu0 0.0
      %7898 = vmatpush1.msra.mxu0 %v6214
      %7899 = vmatprep.subr.mxu0 0.0
      %7900 = vmatpush1.msra.mxu0 %v7889
      %7901 = vmatprep.subr.mxu0 0.0
      %7902 = vmatpush1.msra.mxu0 0.0
      %7903 = vmatprep.subr.mxu0 0.0
      %7904 = vmatpush1.msra.mxu0 0.0
      %7905 = vmatprep.subr.mxu0 0.0
      %7906 = vmatpush1.msra.mxu0 0.0
      %7907 = vmatprep.subr.mxu0 0.0
      %7908 = vmatpush1.msra.mxu0 0.0
      %7909 = vmatprep.subr.mxu0 0.0
      %7910 = vmatpush1.msra.mxu0 0.0
      %7911 = vmatprep.subr.mxu0 0.0
      %7912 = vmatpush1.msra.mxu0 0.0
      %7913 = vmatprep.subr.mxu0 0.0
      %7914 = vmatpush1.msra.mxu0 0.0
      %7915 = vmatprep.subr.mxu0 0.0
      %7916 = vmatpush1.msra.mxu0 0.0
      %7917 = vmatprep.subr.mxu0 0.0
      %7918 = vmatpush1.msra.mxu0 0.0
      %7919 = vmatprep.subr.mxu0 0.0
      %7920 = vmatpush1.msra.mxu0 0.0
      %7921 = vmatprep.subr.mxu0 0.0
      %7922 = vmatpush1.msra.mxu0 0.0
      %7923 = vmatprep.subr.mxu0 0.0
      %7924 = vmatpush1.msra.mxu0 0.0
      %7925 = vmatprep.subr.mxu0 0.0
      %7926 = vmatpush1.msra.mxu0 0.0
      %7927 = vmatprep.subr.mxu0 0.0
      %7928 = vmatpush1.msra.mxu0 0.0
      %7929 = vmatprep.subr.mxu0 0.0
      %7930 = vmatpush1.msra.mxu0 0.0
      %7931 = vmatprep.subr.mxu0 0.0
      %7932 = vmatpush1.msra.mxu0 0.0
      %7933 = vmatprep.subr.mxu0 0.0
      %7934 = vmatpush1.msra.mxu0 0.0
      %7935 = vmatprep.subr.mxu0 0.0
      %7936 = vmatpush1.msra.mxu0 0.0
      %7937 = vmatprep.subr.mxu0 0.0
      %7938 = vmatpush1.msra.mxu0 0.0
      %7939 = vmatprep.subr.mxu0 0.0
      %7940 = vmatpush1.msra.mxu0 0.0
      %7941 = vmatprep.subr.mxu0 0.0
      %7942 = vmatpush1.msra.mxu0 0.0
      %7943 = vmatprep.subr.mxu0 0.0
      %7944 = vmatpush1.msra.mxu0 0.0
      %7945 = vmatprep.subr.mxu0 0.0
      %7946 = vmatpush1.msra.mxu0 0.0
      %7947 = vmatprep.subr.mxu0 0.0
      %7948 = vmatpush1.msra.mxu0 0.0
      %7949 = vmatprep.subr.mxu0 0.0
      %7950 = vmatpush1.msra.mxu0 0.0
      %7951 = vmatprep.subr.mxu0 0.0
      %7952 = vmatpush1.msra.mxu0 0.0
      %7953 = vmatprep.subr.mxu0 0.0
      %7954 = vmatpush1.msra.mxu0 0.0
      %7955 = vmatprep.mubr.f32.mxu0 0.0
      %7956 = vmatmul.mubr.f32.gmra.mrb[0].mxu0 %v7793
      %v7957 = vpop.f32.mrb[0].mxu0
      %v7958 = vadd.f32 %v7790, %v7957
      %v7959 = vpop.f32.mrb[0].mxu0
      %7960 = vmatprep.mubr.f32.mxu0 0.0
      %7961 = vmatmul.mubr.f32.gmra.mrb[0].mxu0 %v7796
      %v7962 = vpop.f32.mrb[0].mxu0
      %v7963 = vadd.f32 %v7790, %v7962
      %v7964 = vpop.f32.mrb[0].mxu0
      %7965 = vmatprep.mubr.f32.mxu0 0.0
      %7966 = vmatmul.mubr.f32.gmra.mrb[0].mxu0 %v7799
      %v7967 = vpop.f32.mrb[0].mxu0
      %v7968 = vadd.f32 %v7790, %v7967
      %v7969 = vpop.f32.mrb[0].mxu0
      %7970 = vmatprep.mubr.f32.mxu0 0.0
      %7971 = vmatmul.mubr.f32.gmra.mrb[0].mxu0 %v7802
      %v7972 = vpop.f32.mrb[0].mxu0
      %v7973 = vadd.f32 %v7790, %v7972
      %v7974 = vpop.f32.mrb[0].mxu0
      %7975 = vmatprep.mubr.f32.mxu0 0.0
      %7976 = vmatmul.mubr.f32.gmra.mrb[0].mxu0 %v7805
      %v7977 = vpop.f32.mrb[0].mxu0
      %v7978 = vadd.f32 %v7790, %v7977
      %v7979 = vpop.f32.mrb[0].mxu0
      %7980 = vmatprep.mubr.f32.mxu0 0.0
      %7981 = vmatmul.mubr.f32.gmra.mrb[0].mxu0 %v7808
      %v7982 = vpop.f32.mrb[0].mxu0
      %v7983 = vadd.f32 %v7790, %v7982
      %v7984 = vpop.f32.mrb[0].mxu0
      %7985 = vmatprep.mubr.f32.mxu0 0.0
      %7986 = vmatmul.mubr.f32.gmra.mrb[0].mxu0 %v7811
      %v7987 = vpop.f32.mrb[0].mxu0
      %v7988 = vadd.f32 %v7790, %v7987
      %v7989 = vpop.f32.mrb[0].mxu0
      %7990 = vmatprep.mubr.f32.mxu0 0.0
      %7991 = vmatmul.mubr.f32.gmra.mrb[0].mxu0 %v7814
      %v7992 = vpop.f32.mrb[0].mxu0
      %v7993 = vadd.f32 %v7790, %v7992
      %v7994 = vpop.f32.mrb[0].mxu0
      %7995 = vmatprep.mubr.f32.mxu0 0.0
      %7996 = vmatmul.mubr.f32.gmra.mrb[0].mxu0 %v7817
      %v7997 = vpop.f32.mrb[0].mxu0
      %v7998 = vadd.f32 %v7790, %v7997
      %v7999 = vpop.f32.mrb[0].mxu0
      %8000 = vmatprep.mubr.f32.mxu0 0.0
      %8001 = vmatmul.mubr.f32.gmra.mrb[0].mxu0 %v7820
      %v8002 = vpop.f32.mrb[0].mxu0
      %v8003 = vadd.f32 %v7790, %v8002
      %v8004 = vpop.f32.mrb[0].mxu0
      %8005 = vmatprep.mubr.f32.mxu0 0.0
      %8006 = vmatmul.mubr.f32.gmra.mrb[0].mxu0 %v7823
      %v8007 = vpop.f32.mrb[0].mxu0
      %v8008 = vadd.f32 %v7790, %v8007
      %v8009 = vpop.f32.mrb[0].mxu0
      %8010 = vmatprep.mubr.f32.mxu0 0.0
      %8011 = vmatmul.mubr.f32.gmra.mrb[0].mxu0 %v7826
      %v8012 = vpop.f32.mrb[0].mxu0
      %v8013 = vadd.f32 %v7790, %v8012
      %v8014 = vpop.f32.mrb[0].mxu0
      %8015 = vmatprep.mubr.f32.mxu0 0.0
      %8016 = vmatmul.mubr.f32.gmra.mrb[0].mxu0 %v7829
      %v8017 = vpop.f32.mrb[0].mxu0
      %v8018 = vadd.f32 %v7790, %v8017
      %v8019 = vpop.f32.mrb[0].mxu0
      %8020 = vmatprep.mubr.f32.mxu0 0.0
      %8021 = vmatmul.mubr.f32.gmra.mrb[0].mxu0 %v7832
      %v8022 = vpop.f32.mrb[0].mxu0
      %v8023 = vadd.f32 %v7790, %v8022
      %v8024 = vpop.f32.mrb[0].mxu0
      %8025 = vmatprep.mubr.f32.mxu0 0.0
      %8026 = vmatmul.mubr.f32.gmra.mrb[0].mxu0 %v7835
      %v8027 = vpop.f32.mrb[0].mxu0
      %v8028 = vadd.f32 %v7790, %v8027
      %v8029 = vpop.f32.mrb[0].mxu0
      %8030 = vmatprep.mubr.f32.mxu0 0.0
      %8031 = vmatmul.mubr.f32.gmra.mrb[0].mxu0 %v7838
      %v8032 = vpop.f32.mrb[0].mxu0
      %v8033 = vadd.f32 %v7790, %v8032
      %v8034 = vpop.f32.mrb[0].mxu0
      %8035 = vmatprep.mubr.f32.mxu0 0.0
      %8036 = vmatmul.mubr.f32.gmra.mrb[0].mxu0 %v7841
      %v8037 = vpop.f32.mrb[0].mxu0
      %v8038 = vadd.f32 %v7790, %v8037
      %v8039 = vpop.f32.mrb[0].mxu0
      %8040 = vmatprep.mubr.f32.mxu0 0.0
      %8041 = vmatmul.mubr.f32.gmra.mrb[0].mxu0 %v7844
      %v8042 = vpop.f32.mrb[0].mxu0
      %v8043 = vadd.f32 %v7790, %v8042
      %v8044 = vpop.f32.mrb[0].mxu0
      %8045 = vmatprep.mubr.f32.mxu0 0.0
      %8046 = vmatmul.mubr.f32.gmra.mrb[0].mxu0 %v7847
      %v8047 = vpop.f32.mrb[0].mxu0
      %v8048 = vadd.f32 %v7790, %v8047
      %v8049 = vpop.f32.mrb[0].mxu0
      %8050 = vmatprep.mubr.f32.mxu0 0.0
      %8051 = vmatmul.mubr.f32.gmra.mrb[0].mxu0 %v7850
      %v8052 = vpop.f32.mrb[0].mxu0
      %v8053 = vadd.f32 %v7790, %v8052
      %v8054 = vpop.f32.mrb[0].mxu0
      %8055 = vmatprep.mubr.f32.mxu0 0.0
      %8056 = vmatmul.mubr.f32.gmra.mrb[0].mxu0 %v7853
      %v8057 = vpop.f32.mrb[0].mxu0
      %v8058 = vadd.f32 %v7790, %v8057
      %v8059 = vpop.f32.mrb[0].mxu0
      %8060 = vmatprep.mubr.f32.mxu0 0.0
      %8061 = vmatmul.mubr.f32.gmra.mrb[0].mxu0 %v7856
      %v8062 = vpop.f32.mrb[0].mxu0
      %v8063 = vadd.f32 %v7790, %v8062
      %v8064 = vpop.f32.mrb[0].mxu0
      %8065 = vmatprep.mubr.f32.mxu0 0.0
      %8066 = vmatmul.mubr.f32.gmra.mrb[0].mxu0 %v7859
      %v8067 = vpop.f32.mrb[0].mxu0
      %v8068 = vadd.f32 %v7790, %v8067
      %v8069 = vpop.f32.mrb[0].mxu0
      %8070 = vmatprep.mubr.f32.mxu0 0.0
      %8071 = vmatmul.mubr.f32.gmra.mrb[0].mxu0 %v7862
      %v8072 = vpop.f32.mrb[0].mxu0
      %v8073 = vadd.f32 %v7790, %v8072
      %v8074 = vpop.f32.mrb[0].mxu0
      %8075 = vmatprep.mubr.f32.mxu0 0.0
      %8076 = vmatmul.mubr.f32.gmra.mrb[0].mxu0 %v7865
      %v8077 = vpop.f32.mrb[0].mxu0
      %v8078 = vadd.f32 %v7790, %v8077
      %v8079 = vpop.f32.mrb[0].mxu0
      %8080 = vmatprep.mubr.f32.mxu0 0.0
      %8081 = vmatmul.mubr.f32.gmra.mrb[0].mxu0 %v7868
      %v8082 = vpop.f32.mrb[0].mxu0
      %v8083 = vadd.f32 %v7790, %v8082
      %v8084 = vpop.f32.mrb[0].mxu0
      %8085 = vmatprep.mubr.f32.mxu0 0.0
      %8086 = vmatmul.mubr.f32.gmra.mrb[0].mxu0 %v7871
      %v8087 = vpop.f32.mrb[0].mxu0
      %v8088 = vadd.f32 %v7790, %v8087
      %v8089 = vpop.f32.mrb[0].mxu0
      %8090 = vmatprep.mubr.f32.mxu0 0.0
      %8091 = vmatmul.mubr.f32.gmra.mrb[0].mxu0 %v7874
      %v8092 = vpop.f32.mrb[0].mxu0
      %v8093 = vadd.f32 %v7790, %v8092
      %v8094 = vpop.f32.mrb[0].mxu0
      %8095 = vmatprep.mubr.f32.mxu0 0.0
      %8096 = vmatmul.mubr.f32.gmra.mrb[0].mxu0 %v7877
      %v8097 = vpop.f32.mrb[0].mxu0
      %v8098 = vadd.f32 %v7790, %v8097
      %v8099 = vpop.f32.mrb[0].mxu0
      %8100 = vmatprep.mubr.f32.mxu0 0.0
      %8101 = vmatmul.mubr.f32.gmra.mrb[0].mxu0 %v7880
      %v8102 = vpop.f32.mrb[0].mxu0
      %v8103 = vadd.f32 %v7790, %v8102
      %v8104 = vpop.f32.mrb[0].mxu0
      %8105 = vmatprep.mubr.f32.mxu0 0.0
      %8106 = vmatmul.mubr.f32.gmra.mrb[0].mxu0 %v7883
      %v8107 = vpop.f32.mrb[0].mxu0
      %v8108 = vadd.f32 %v7790, %v8107
      %v8109 = vpop.f32.mrb[0].mxu0
      %8110 = vmatprep.mubr.f32.mxu0 0.0
      %8111 = vmatmul.mubr.f32.gmra.mrb[0].mxu0 %v7886
      %v8112 = vpop.f32.mrb[0].mxu0
      %v8113 = vadd.f32 %v7790, %v8112
      %v8114 = vpop.f32.mrb[0].mxu0
      %8115 = vdwg.mxu0
      %v8116 = vadd.f32 %v4176, %v7958
      %v8117 = vadd.f32 %v4177, %v7963
      %v8118 = vadd.f32 %v4178, %v7968
      %v8119 = vadd.f32 %v4179, %v7973
      %v8120 = vadd.f32 %v4180, %v7978
      %v8121 = vadd.f32 %v4181, %v7983
      %v8122 = vadd.f32 %v4182, %v7988
      %v8123 = vadd.f32 %v4183, %v7993
      %v8124 = vadd.f32 %v4184, %v7998
      %v8125 = vadd.f32 %v4185, %v8003
      %v8126 = vadd.f32 %v4186, %v8008
      %v8127 = vadd.f32 %v4187, %v8013
      %v8128 = vadd.f32 %v4188, %v8018
      %v8129 = vadd.f32 %v4189, %v8023
      %v8130 = vadd.f32 %v4190, %v8028
      %v8131 = vadd.f32 %v4191, %v8033
      %v8132 = vadd.f32 %v4192, %v8038
      %v8133 = vadd.f32 %v4193, %v8043
      %v8134 = vadd.f32 %v4194, %v8048
      %v8135 = vadd.f32 %v4195, %v8053
      %v8136 = vadd.f32 %v4196, %v8058
      %v8137 = vadd.f32 %v4197, %v8063
      %v8138 = vadd.f32 %v4198, %v8068
      %v8139 = vadd.f32 %v4199, %v8073
      %v8140 = vadd.f32 %v4200, %v8078
      %v8141 = vadd.f32 %v4201, %v8083
      %v8142 = vadd.f32 %v4202, %v8088
      %v8143 = vadd.f32 %v4203, %v8093
      %v8144 = vadd.f32 %v4204, %v8098
      %v8145 = vadd.f32 %v4205, %v8103
      %v8146 = vadd.f32 %v4206, %v8108
      %v8147 = vadd.f32 %v4207, %v8113
      %8148 = vst.msk [vmem:[%s170] sm:$0xff] %vm171, %v8116
      %8149 = vst.msk [vmem:[%s170 + $0x8] sm:$0xff] %vm171, %v8117
      %8150 = vst.msk [vmem:[%s170 + $0x10] sm:$0xff] %vm171, %v8118
      %8151 = vst.msk [vmem:[%s170 + $0x18] sm:$0xff] %vm171, %v8119
      %8152 = vst.msk [vmem:[%s170 + $0x20] sm:$0xff] %vm171, %v8120
      %8153 = vst.msk [vmem:[%s170 + $0x28] sm:$0xff] %vm171, %v8121
      %8154 = vst.msk [vmem:[%s170 + $0x30] sm:$0xff] %vm171, %v8122
      %8155 = vst.msk [vmem:[%s170 + $0x38] sm:$0xff] %vm171, %v8123
      %8156 = vst.msk [vmem:[%s170 + $0x40] sm:$0xff] %vm171, %v8124
      %8157 = vst.msk [vmem:[%s170 + $0x48] sm:$0xff] %vm171, %v8125
      %8158 = vst.msk [vmem:[%s170 + $0x50] sm:$0xff] %vm171, %v8126
      %8159 = vst.msk [vmem:[%s170 + $0x58] sm:$0xff] %vm171, %v8127
      %8160 = vst.msk [vmem:[%s170 + $0x60] sm:$0xff] %vm171, %v8128
      %8161 = vst.msk [vmem:[%s170 + $0x68] sm:$0xff] %vm171, %v8129
      %8162 = vst.msk [vmem:[%s170 + $0x70] sm:$0xff] %vm171, %v8130
      %8163 = vst.msk [vmem:[%s170 + $0x78] sm:$0xff] %vm171, %v8131
      %8164 = vst.msk [vmem:[%s170 + $0x80] sm:$0xff] %vm171, %v8132
      %8165 = vst.msk [vmem:[%s170 + $0x88] sm:$0xff] %vm171, %v8133
      %8166 = vst.msk [vmem:[%s170 + $0x90] sm:$0xff] %vm171, %v8134
      %8167 = vst.msk [vmem:[%s170 + $0x98] sm:$0xff] %vm171, %v8135
      %8168 = vst.msk [vmem:[%s170 + $0xa0] sm:$0xff] %vm171, %v8136
      %8169 = vst.msk [vmem:[%s170 + $0xa8] sm:$0xff] %vm171, %v8137
      %8170 = vst.msk [vmem:[%s170 + $0xb0] sm:$0xff] %vm171, %v8138
      %8171 = vst.msk [vmem:[%s170 + $0xb8] sm:$0xff] %vm171, %v8139
      %8172 = vst.msk [vmem:[%s170 + $0xc0] sm:$0xff] %vm171, %v8140
      %8173 = vst.msk [vmem:[%s170 + $0xc8] sm:$0xff] %vm171, %v8141
      %8174 = vst.msk [vmem:[%s170 + $0xd0] sm:$0xff] %vm171, %v8142
      %8175 = vst.msk [vmem:[%s170 + $0xd8] sm:$0xff] %vm171, %v8143
      %8176 = vst.msk [vmem:[%s170 + $0xe0] sm:$0xff] %vm171, %v8144
      %8177 = vst.msk [vmem:[%s170 + $0xe8] sm:$0xff] %vm171, %v8145
      %8178 = vst.msk [vmem:[%s170 + $0xf0] sm:$0xff] %vm171, %v8146
      %8179 = vst.msk [vmem:[%s170 + $0xf8] sm:$0xff] %vm171, %v8147
      %p8180 = scmp.lt.s32.totalorder %s14, 1
      %s8181 = scalar_select %p8180, %s14, 1
      %s8182 = smul.addr %s8181, 32
      %s8183 = smul.addr %s8182, 8
      %s8184 = scalar_lea.vmem %s3, %s8183
      // Predicated region
      $region33: #{projnet_m_forward.1} parent=31 // pred_check
        %p8185 = pneg %p100
      $region34: #{projnet_m_forward.1} parent=31 // pred_check_branch
        %8187 = sbr.rel (%p8185) target = $region36
      $region35: #{projnet_m_forward.1} parent=31 // pred_region
        _
      $region36: #{projnet_m_forward.1} parent=31 // pred_fallthru
        _
    $region32: #{projnet_m_forward.1} parent=5 // pred_fallthru
      _
    %p8188 = scmp.le.s32.totalorder 2, %s9
    // Predicated region
    $region37: #{projnet_m_forward.1} parent=5 // pred_check
      %p8189 = pneg %p8188
    $region38: #{projnet_m_forward.1} parent=5 // pred_check_branch
      %8191 = sbr.rel (%p8189) target = $region40
    $region39: #{projnet_m_forward.1} parent=5 // pred_region
      %s8192 = ssub.s32 %s9, 2
      // Predicated region
      $region41: #{projnet_m_forward.1} parent=39 // pred_check
        %p8193 = pneg %p106
      $region42: #{projnet_m_forward.1} parent=39 // pred_check_branch
        %8195 = sbr.rel (%p8193) target = $region44
      $region43: #{projnet_m_forward.1} parent=39 // pred_region
        %p8196 = scmp.lt.s32.totalorder %s15, 1
        %s8197 = scalar_select %p8196, %s15, 1
        %s8198 = smul.addr %s8197, 32
        %s8199 = smul.addr %s8198, 8
        %s8200 = scalar_lea.vmem %s3, %s8199
      $region44: #{projnet_m_forward.1} parent=39 // pred_fallthru
        _
    $region40: #{projnet_m_forward.1} parent=5 // pred_fallthru
      _
  $region6: #{projnet_m_forward.1} parent=0 // loop_footer
    %s13 = sadd.s32 1, %s9
  $region7: #{projnet_m_forward.1} parent=0 // loop_footer_branch
    %8 = sbr.rel target = $region3
  $region8: #{projnet_m_forward.1} parent=0 // loop_exit
    _

</llo_original>
